<compile_context>
chip_gen: v7x
topology: tpu7x:2x2x1
jax: 0.10.0
libtpu: 0.0.40
codegen_flags: <defaults>
</compile_context>

<pallas_src>
import jax
import jax.numpy as jnp
import numpy as np
from jax.experimental import pallas as pl
from jax.experimental.pallas import tpu as pltpu


# ---------------------------------------------------------------------------
# Layout / padding constants (lane dims are multiples of 128).
# ---------------------------------------------------------------------------
_B = 8               # images per grid step
_K1S = 512           # conv1 stacked K: 5 taps * (32*3=96 cols) = 480 -> 512
_HP1 = 384           # conv1 pooled half-width: 14*20 = 280 valid cols -> 384
_N1 = 2 * _HP1       # conv1 output columns (W-parity-major): 768
_HP2 = 256           # conv2 pooled half-width: 5*50 = 250 valid cols -> 256
_N2 = 2 * _HP2       # conv2 output columns: 512
_F1 = 512            # fc1 outputs: 500 -> 512
_F2 = 128            # fc2 outputs: 10 -> 128


def _build_row_idx():
    """Input-row gather table for the H-only im2col of conv1.

    Slab row j (0..31) of an image, tap ki (0..4) -> input image row.
    Rows 0..13  : even conv1 output rows (2*j)      -> input row 2*j + ki
    Rows 16..29 : odd  conv1 output rows (2*j'+1)   -> input row 2*j' + 1 + ki
    Rows 14,15,30,31 : padding -> index 32 (an all-zero row appended in the
    wrapper), so the corresponding matmul output rows are exactly zero.
    """
    idx = np.full((32, 5), 32, np.int32)
    for j in range(14):
        for ki in range(5):
            idx[j, ki] = 2 * j + ki
            idx[16 + j, ki] = 2 * j + 1 + ki
    return idx


_ROW_IDX = _build_row_idx()


# ---------------------------------------------------------------------------
# Fused forward kernel: B images per grid step, all weights VMEM resident.
# ---------------------------------------------------------------------------
def _lenet_kernel(x_ref, w1_ref, b1_ref, w2_ref, b2_ref,
                  fc1w_ref, fc1b_ref, fc2w_ref, fc2b_ref, out_ref):
    f32 = jnp.float32
    B = _B

    # ---- conv1: ONE RHS-stationary MXU pass.  LHS (B*32, 512) was built in
    # ---- the wrapper (5 H-taps stacked along K, output rows parity-major),
    # ---- RHS is the stacked block-Toeplitz weight (512, 768).
    a1 = jnp.dot(x_ref[...], w1_ref[...], preferred_element_type=f32)
    a1 = a1.reshape(B, 32, _N1)
    # 2x2 max-pool over H: rows 0..13 (even) vs 16..29 (odd) of each 32-row
    # slab; rows 14,15,30,31 are exact zeros -> both pool slices are aligned.
    hmax = jnp.maximum(a1[:, 0:16, :], a1[:, 16:32, :])          # (B, 16, 768)
    # pool over W (column layout is W-parity-major), then bias + ReLU
    # (bias add and ReLU commute with max).
    wmax = jnp.maximum(hmax[:, :, :_HP1], hmax[:, :, _HP1:])      # (B, 16, 384)
    p1 = jnp.maximum(wmax + b1_ref[...], 0.0)                     # rows 14,15 junk (never read below)

    # ---- conv2: 5 RHS-stationary dots, M = B*16.  Window ki = rows
    # ---- ki..ki+15 of each image slab (only rows 0..9 of the result, which
    # ---- use p1 rows <= 13, are consumed by the pooling below).
    p1x = jnp.concatenate([p1, p1[:, 0:8, :]], axis=1)            # (B, 24, 384), tail unused
    acc2 = jnp.dot(p1.reshape(B * 16, _HP1), w2_ref[0],
                   preferred_element_type=f32)                    # (B*16, 512)
    for ki in range(1, 5):
        acc2 = acc2 + jnp.dot(p1x[:, ki:ki + 16, :].reshape(B * 16, _HP1),
                              w2_ref[ki], preferred_element_type=f32)
    acc2 = acc2.reshape(B, 16, _N2)
    wp2 = jnp.maximum(acc2[:, :, :_HP2], acc2[:, :, _HP2:])       # W-pooled conv2, (B, 16, 256)

    # ---- 2x2 H-pool + bias + ReLU fused into fc1 (5 dots, M = B); the NCHW
    # ---- flatten permutation is folded into fc1's weight rows at prep time.
    acc1 = None
    for i in range(5):
        row = jnp.maximum(wp2[:, 2 * i, :], wp2[:, 2 * i + 1, :])  # (B, 256)
        row = jnp.maximum(row + b2_ref[...], 0.0)
        d = jnp.dot(row, fc1w_ref[i], preferred_element_type=f32)  # (B, 512)
        acc1 = d if acc1 is None else acc1 + d
    h1 = jnp.maximum(acc1 + fc1b_ref[...], 0.0)                    # (B, 512)

    # ---- fc2 (lane-padded to 128 -> dense (8, 128) store; sliced in wrapper).
    out = jnp.dot(h1, fc2w_ref[...], preferred_element_type=f32) + fc2b_ref[...]
    out_ref[...] = out.astype(out_ref.dtype)


# ---------------------------------------------------------------------------
# One-time parameter repacking (block-Toeplitz conv weights, padded / permuted
# fc weights).  Pure numpy; runs once outside the forward hot path.
# ---------------------------------------------------------------------------
def prepare_params(params):
    c1 = np.asarray(params["conv1_w"], np.float32)   # (20, 3, 5, 5)  OIHW
    c1b = np.asarray(params["conv1_b"], np.float32)
    c2 = np.asarray(params["conv2_w"], np.float32)   # (50, 20, 5, 5)
    c2b = np.asarray(params["conv2_b"], np.float32)
    f1 = np.asarray(params["fc1_w"], np.float32)     # (500, 1250)
    f1b = np.asarray(params["fc1_b"], np.float32)
    f2 = np.asarray(params["fc2_w"], np.float32)     # (10, 500)
    f2b = np.asarray(params["fc2_b"], np.float32)

    # conv1: single block-Toeplitz matrix, the 5 H-taps stacked along K.
    # Row ki*96 + wi*3 + c_in  ->  column (ow%2)*384 + (ow//2)*20 + c_out.
    w1 = np.zeros((_K1S, _N1), np.float32)
    for ki in range(5):
        for kj in range(5):
            for ow in range(28):
                rows = ki * 96 + (ow + kj) * 3 + np.arange(3)
                cols = (ow % 2) * _HP1 + (ow // 2) * 20 + np.arange(20)
                w1[np.ix_(rows, cols)] += c1[:, :, ki, kj].T
    b1 = np.zeros((1, _HP1), np.float32)
    b1[0, :14 * 20] = np.tile(c1b, 14)

    # conv2: one (384, 512) block-Toeplitz matrix per H-tap.
    w2 = np.zeros((5, _HP1, _N2), np.float32)
    for ki in range(5):
        for kj in range(5):
            for ow in range(10):
                rows = (ow + kj) * 20 + np.arange(20)
                cols = (ow % 2) * _HP2 + (ow // 2) * 50 + np.arange(50)
                w2[ki][np.ix_(rows, cols)] += c2[:, :, ki, kj].T
    b2 = np.zeros((1, _HP2), np.float32)
    b2[0, :5 * 50] = np.tile(c2b, 5)

    # fc1: fold PyTorch's (c, h, w) flatten into the kernel's (h, w, c) layout.
    w_fc1 = f1.reshape(500, 50, 5, 5).transpose(2, 3, 1, 0).reshape(5, 250, 500)
    w_fc1 = np.pad(w_fc1, ((0, 0), (0, _HP2 - 250), (0, _F1 - 500)))
    b_fc1 = np.pad(f1b, (0, _F1 - 500)).reshape(1, _F1)
    w_fc2 = np.pad(f2.T, ((0, _F1 - 500), (0, _F2 - 10)))          # (512, 128)
    b_fc2 = np.pad(f2b, (0, _F2 - 10)).reshape(1, _F2)

    prep = {"w1": w1, "b1": b1, "w2": w2, "b2": b2,
            "fc1_w": w_fc1, "fc1_b": b_fc1, "fc2_w": w_fc2, "fc2_b": b_fc2}
    return {k: jnp.asarray(v) for k, v in prep.items()}


# ---------------------------------------------------------------------------
# Forward wrapper
# ---------------------------------------------------------------------------
def lenet_forward(x_nchw, prep):
    N = x_nchw.shape[0]
    n_pad = -(-N // _B) * _B                                  # pad batch to a multiple of B

    # NCHW -> NHWC -> row-major (H, W*C), then the H-only im2col gather that
    # feeds conv1 as a single matmul (taps stacked along K, output rows
    # pre-split into even / odd halves of each 32-row slab).
    x = jnp.transpose(x_nchw, (0, 2, 3, 1)).reshape(N, 32, 96).astype(jnp.float32)
    if n_pad != N:
        x = jnp.pad(x, ((0, n_pad - N), (0, 0), (0, 0)))
    xz = jnp.pad(x, ((0, 0), (0, 1), (0, 0)))                 # append a zero row (index 32)
    xg = xz[:, _ROW_IDX, :]                                   # (n_pad, 32, 5, 96)
    xg = xg.reshape(n_pad, 32, 5 * 96)
    xg = jnp.pad(xg, ((0, 0), (0, 0), (0, _K1S - 5 * 96)))    # K: 480 -> 512
    xg = xg.reshape(n_pad * 32, _K1S)

    grid_spec = pltpu.PrefetchScalarGridSpec(
        num_scalar_prefetch=0,
        grid=(n_pad // _B,),
        in_specs=[
            pl.BlockSpec((_B * 32, _K1S), lambda g: (g, 0)),       # im2col'd images
            pl.BlockSpec((_K1S, _N1), lambda g: (0, 0)),           # conv1 Toeplitz (stacked)
            pl.BlockSpec((1, _HP1), lambda g: (0, 0)),             # conv1 bias
            pl.BlockSpec((5, _HP1, _N2), lambda g: (0, 0, 0)),     # conv2 Toeplitz
            pl.BlockSpec((1, _HP2), lambda g: (0, 0)),             # conv2 bias
            pl.BlockSpec((5, _HP2, _F1), lambda g: (0, 0, 0)),     # fc1 weights
            pl.BlockSpec((1, _F1), lambda g: (0, 0)),              # fc1 bias
            pl.BlockSpec((_F1, _F2), lambda g: (0, 0)),            # fc2 weights
            pl.BlockSpec((1, _F2), lambda g: (0, 0)),              # fc2 bias
        ],
        out_specs=pl.BlockSpec((_B, _F2), lambda g: (g, 0)),
    )
    out = pl.pallas_call(
        _lenet_kernel,
        out_shape=jax.ShapeDtypeStruct((n_pad, _F2), jnp.float32),
        grid_spec=grid_spec,
        compiler_params=pltpu.CompilerParams(
            dimension_semantics=("parallel",),
            vmem_limit_bytes=32 * 1024 * 1024,
        ),
    )(xg, prep["w1"], prep["b1"], prep["w2"], prep["b2"],
      prep["fc1_w"], prep["fc1_b"], prep["fc2_w"], prep["fc2_b"])
    return out[:N, :10]


# ---------------------------------------------------------------------------
# Pure-JAX reference (PyTorch semantics) and parameter init
# ---------------------------------------------------------------------------
def lenet_reference(x, params):
    dn = ("NCHW", "OIHW", "NCHW")
    y = jax.lax.conv_general_dilated(x, params["conv1_w"], (1, 1), "VALID",
                                     dimension_numbers=dn)
    y = jax.nn.relu(y + params["conv1_b"][None, :, None, None])
    y = jax.lax.reduce_window(y, -jnp.inf, jax.lax.max,
                              (1, 1, 2, 2), (1, 1, 2, 2), "VALID")
    y = jax.lax.conv_general_dilated(y, params["conv2_w"], (1, 1), "VALID",
                                     dimension_numbers=dn)
    y = jax.nn.relu(y + params["conv2_b"][None, :, None, None])
    y = jax.lax.reduce_window(y, -jnp.inf, jax.lax.max,
                              (1, 1, 2, 2), (1, 1, 2, 2), "VALID")
    y = y.reshape(y.shape[0], -1)
    y = jax.nn.relu(y @ params["fc1_w"].T + params["fc1_b"])
    return y @ params["fc2_w"].T + params["fc2_b"]


def init_params(key):
    ks = jax.random.split(key, 8)
    s = 0.05
    return {
        "conv1_w": s * jax.random.normal(ks[0], (20, 3, 5, 5), jnp.float32),
        "conv1_b": s * jax.random.normal(ks[1], (20,), jnp.float32),
        "conv2_w": s * jax.random.normal(ks[2], (50, 20, 5, 5), jnp.float32),
        "conv2_b": s * jax.random.normal(ks[3], (50,), jnp.float32),
        "fc1_w": s * jax.random.normal(ks[4], (500, 5 * 5 * 50), jnp.float32),
        "fc1_b": s * jax.random.normal(ks[5], (500,), jnp.float32),
        "fc2_w": s * jax.random.normal(ks[6], (10, 500), jnp.float32),
        "fc2_b": s * jax.random.normal(ks[7], (10,), jnp.float32),
    }


if __name__ == "__main__":
    key = jax.random.PRNGKey(0)
    k_params, k_x = jax.random.split(key)
    params = init_params(k_params)
    prep = prepare_params(params)          # one-time weight repack (not hot path)
    # LeNet's 5*5*50 flatten implies 32x32 (CIFAR) input; small batch
    # (the wrapper pads the batch up to a multiple of _B internally).
    x = jax.random.normal(k_x, (2, 3, 32, 32), jnp.float32)

    fwd = jax.jit(lenet_forward)
    out = jax.block_until_ready(fwd(x, prep))
    assert out.shape == (2, 10) and out.dtype == jnp.float32

    ref = jax.block_until_ready(lenet_reference(x, params))
    err = float(jnp.max(jnp.abs(out - ref)))
    # Measured f32 error is ~1e-5; the loose bound only guards against XLA
    # default-precision differences in the reference convs across generations.
    assert jnp.allclose(out, ref, atol=2e-2, rtol=2e-2), f"max abs err {err}"

    print("KERNEL_OK")
</pallas_src>

<mosaic_0001>
module attributes {stable_mosaic.version = 11 : i64} {
  func.func @_lenet_kernel(%arg0: i32, %arg1: memref<256x512xf32, #tpu.memory_space<vmem>>, %arg2: memref<512x768xf32, #tpu.memory_space<vmem>>, %arg3: memref<1x384xf32, #tpu.memory_space<vmem>>, %arg4: memref<5x384x512xf32, #tpu.memory_space<vmem>>, %arg5: memref<1x256xf32, #tpu.memory_space<vmem>>, %arg6: memref<5x256x512xf32, #tpu.memory_space<vmem>>, %arg7: memref<1x512xf32, #tpu.memory_space<vmem>>, %arg8: memref<512x128xf32, #tpu.memory_space<vmem>>, %arg9: memref<1x128xf32, #tpu.memory_space<vmem>>, %arg10: memref<8x128xf32, #tpu.memory_space<vmem>>) attributes {dimension_semantics = [#tpu.dimension_semantics<parallel>], iteration_bounds = array<i64: 1>, scalar_prefetch = 0 : i64, scratch_operands = 0 : i64, tpu.core_type = #tpu.core_type<tc>, window_params = [{transform_indices = @transform_0, window_bounds = array<i64: 256, 512>}, {pipeline_mode = #tpu.pipeline_mode<synchronous>, transform_indices = @transform_1, window_bounds = array<i64: 512, 768>}, {pipeline_mode = #tpu.pipeline_mode<synchronous>, transform_indices = @transform_2, window_bounds = array<i64: 1, 384>}, {pipeline_mode = #tpu.pipeline_mode<synchronous>, transform_indices = @transform_3, window_bounds = array<i64: 5, 384, 512>}, {pipeline_mode = #tpu.pipeline_mode<synchronous>, transform_indices = @transform_4, window_bounds = array<i64: 1, 256>}, {pipeline_mode = #tpu.pipeline_mode<synchronous>, transform_indices = @transform_5, window_bounds = array<i64: 5, 256, 512>}, {pipeline_mode = #tpu.pipeline_mode<synchronous>, transform_indices = @transform_6, window_bounds = array<i64: 1, 512>}, {pipeline_mode = #tpu.pipeline_mode<synchronous>, transform_indices = @transform_7, window_bounds = array<i64: 512, 128>}, {pipeline_mode = #tpu.pipeline_mode<synchronous>, transform_indices = @transform_8, window_bounds = array<i64: 1, 128>}, {transform_indices = @transform_9, window_bounds = array<i64: 8, 128>}]} {
    %c0 = arith.constant 0 : index
    %c0_0 = arith.constant 0 : index
    %0 = vector.load %arg1[%c0, %c0_0] : memref<256x512xf32, #tpu.memory_space<vmem>>, vector<256x512xf32>
    %c0_1 = arith.constant 0 : index
    %c0_2 = arith.constant 0 : index
    %1 = vector.load %arg2[%c0_1, %c0_2] : memref<512x768xf32, #tpu.memory_space<vmem>>, vector<512x768xf32>
    %cst = arith.constant dense<0.000000e+00> : vector<256x768xf32>
    %2 = tpu.matmul %0, %1, %cst {dimension_numbers = #tpu.dot_dimension_numbers<[1], [0], [0], [1], [0, 0, 1, 1], [], []>} : vector<256x512xf32>, vector<512x768xf32>, vector<256x768xf32> -> vector<256x768xf32>
    %3 = vector.shape_cast %2 : vector<256x768xf32> to vector<8x32x768xf32>
    %4 = vector.extract_strided_slice %3 {offsets = [0, 0, 0], sizes = [8, 16, 768], strides = [1, 1, 1]} : vector<8x32x768xf32> to vector<8x16x768xf32>
    %5 = vector.extract_strided_slice %3 {offsets = [0, 16, 0], sizes = [8, 16, 768], strides = [1, 1, 1]} : vector<8x32x768xf32> to vector<8x16x768xf32>
    %6 = arith.maximumf %4, %5 : vector<8x16x768xf32>
    %7 = vector.extract_strided_slice %6 {offsets = [0, 0, 0], sizes = [8, 16, 384], strides = [1, 1, 1]} : vector<8x16x768xf32> to vector<8x16x384xf32>
    %8 = vector.extract_strided_slice %6 {offsets = [0, 0, 384], sizes = [8, 16, 384], strides = [1, 1, 1]} : vector<8x16x768xf32> to vector<8x16x384xf32>
    %9 = arith.maximumf %7, %8 : vector<8x16x384xf32>
    %c0_3 = arith.constant 0 : index
    %c0_4 = arith.constant 0 : index
    %10 = vector.load %arg3[%c0_3, %c0_4] : memref<1x384xf32, #tpu.memory_space<vmem>>, vector<1x384xf32>
    %11 = vector.shape_cast %10 : vector<1x384xf32> to vector<1x1x384xf32>
    %12 = vector.broadcast %11 : vector<1x1x384xf32> to vector<8x16x384xf32>
    %13 = arith.addf %9, %12 : vector<8x16x384xf32>
    %cst_5 = arith.constant 0.000000e+00 : f32
    %14 = vector.broadcast %cst_5 : f32 to vector<8x16x384xf32>
    %15 = arith.maximumf %13, %14 : vector<8x16x384xf32>
    %16 = vector.extract_strided_slice %15 {offsets = [0, 0, 0], sizes = [8, 8, 384], strides = [1, 1, 1]} : vector<8x16x384xf32> to vector<8x8x384xf32>
    %17 = tpu.concatenate %15, %16 in 1 : vector<8x16x384xf32>, vector<8x8x384xf32> -> vector<8x24x384xf32>
    %18 = vector.shape_cast %15 : vector<8x16x384xf32> to vector<128x384xf32>
    %c0_6 = arith.constant 0 : index
    %c0_7 = arith.constant 0 : index
    %c0_8 = arith.constant 0 : index
    %19 = vector.load %arg4[%c0_6, %c0_7, %c0_8] : memref<5x384x512xf32, #tpu.memory_space<vmem>>, vector<1x384x512xf32>
    %20 = vector.shape_cast %19 : vector<1x384x512xf32> to vector<384x512xf32>
    %cst_9 = arith.constant dense<0.000000e+00> : vector<128x512xf32>
    %21 = tpu.matmul %18, %20, %cst_9 {dimension_numbers = #tpu.dot_dimension_numbers<[1], [0], [0], [1], [0, 0, 1, 1], [], []>} : vector<128x384xf32>, vector<384x512xf32>, vector<128x512xf32> -> vector<128x512xf32>
    %22 = vector.extract_strided_slice %17 {offsets = [0, 1, 0], sizes = [8, 16, 384], strides = [1, 1, 1]} : vector<8x24x384xf32> to vector<8x16x384xf32>
    %23 = vector.shape_cast %22 : vector<8x16x384xf32> to vector<128x384xf32>
    %c1 = arith.constant 1 : index
    %c0_10 = arith.constant 0 : index
    %c0_11 = arith.constant 0 : index
    %24 = vector.load %arg4[%c1, %c0_10, %c0_11] : memref<5x384x512xf32, #tpu.memory_space<vmem>>, vector<1x384x512xf32>
    %25 = vector.shape_cast %24 : vector<1x384x512xf32> to vector<384x512xf32>
    %cst_12 = arith.constant dense<0.000000e+00> : vector<128x512xf32>
    %26 = tpu.matmul %23, %25, %cst_12 {dimension_numbers = #tpu.dot_dimension_numbers<[1], [0], [0], [1], [0, 0, 1, 1], [], []>} : vector<128x384xf32>, vector<384x512xf32>, vector<128x512xf32> -> vector<128x512xf32>
    %27 = arith.addf %21, %26 : vector<128x512xf32>
    %28 = vector.extract_strided_slice %17 {offsets = [0, 2, 0], sizes = [8, 16, 384], strides = [1, 1, 1]} : vector<8x24x384xf32> to vector<8x16x384xf32>
    %29 = vector.shape_cast %28 : vector<8x16x384xf32> to vector<128x384xf32>
    %c2 = arith.constant 2 : index
    %c0_13 = arith.constant 0 : index
    %c0_14 = arith.constant 0 : index
    %30 = vector.load %arg4[%c2, %c0_13, %c0_14] : memref<5x384x512xf32, #tpu.memory_space<vmem>>, vector<1x384x512xf32>
    %31 = vector.shape_cast %30 : vector<1x384x512xf32> to vector<384x512xf32>
    %cst_15 = arith.constant dense<0.000000e+00> : vector<128x512xf32>
    %32 = tpu.matmul %29, %31, %cst_15 {dimension_numbers = #tpu.dot_dimension_numbers<[1], [0], [0], [1], [0, 0, 1, 1], [], []>} : vector<128x384xf32>, vector<384x512xf32>, vector<128x512xf32> -> vector<128x512xf32>
    %33 = arith.addf %27, %32 : vector<128x512xf32>
    %34 = vector.extract_strided_slice %17 {offsets = [0, 3, 0], sizes = [8, 16, 384], strides = [1, 1, 1]} : vector<8x24x384xf32> to vector<8x16x384xf32>
    %35 = vector.shape_cast %34 : vector<8x16x384xf32> to vector<128x384xf32>
    %c3 = arith.constant 3 : index
    %c0_16 = arith.constant 0 : index
    %c0_17 = arith.constant 0 : index
    %36 = vector.load %arg4[%c3, %c0_16, %c0_17] : memref<5x384x512xf32, #tpu.memory_space<vmem>>, vector<1x384x512xf32>
    %37 = vector.shape_cast %36 : vector<1x384x512xf32> to vector<384x512xf32>
    %cst_18 = arith.constant dense<0.000000e+00> : vector<128x512xf32>
    %38 = tpu.matmul %35, %37, %cst_18 {dimension_numbers = #tpu.dot_dimension_numbers<[1], [0], [0], [1], [0, 0, 1, 1], [], []>} : vector<128x384xf32>, vector<384x512xf32>, vector<128x512xf32> -> vector<128x512xf32>
    %39 = arith.addf %33, %38 : vector<128x512xf32>
    %40 = vector.extract_strided_slice %17 {offsets = [0, 4, 0], sizes = [8, 16, 384], strides = [1, 1, 1]} : vector<8x24x384xf32> to vector<8x16x384xf32>
    %41 = vector.shape_cast %40 : vector<8x16x384xf32> to vector<128x384xf32>
    %c4 = arith.constant 4 : index
    %c0_19 = arith.constant 0 : index
    %c0_20 = arith.constant 0 : index
    %42 = vector.load %arg4[%c4, %c0_19, %c0_20] : memref<5x384x512xf32, #tpu.memory_space<vmem>>, vector<1x384x512xf32>
    %43 = vector.shape_cast %42 : vector<1x384x512xf32> to vector<384x512xf32>
    %cst_21 = arith.constant dense<0.000000e+00> : vector<128x512xf32>
    %44 = tpu.matmul %41, %43, %cst_21 {dimension_numbers = #tpu.dot_dimension_numbers<[1], [0], [0], [1], [0, 0, 1, 1], [], []>} : vector<128x384xf32>, vector<384x512xf32>, vector<128x512xf32> -> vector<128x512xf32>
    %45 = arith.addf %39, %44 : vector<128x512xf32>
    %46 = vector.shape_cast %45 : vector<128x512xf32> to vector<8x16x512xf32>
    %47 = vector.extract_strided_slice %46 {offsets = [0, 0, 0], sizes = [8, 16, 256], strides = [1, 1, 1]} : vector<8x16x512xf32> to vector<8x16x256xf32>
    %48 = vector.extract_strided_slice %46 {offsets = [0, 0, 256], sizes = [8, 16, 256], strides = [1, 1, 1]} : vector<8x16x512xf32> to vector<8x16x256xf32>
    %49 = arith.maximumf %47, %48 : vector<8x16x256xf32>
    %50 = vector.extract_strided_slice %49 {offsets = [0, 0, 0], sizes = [8, 1, 256], strides = [1, 1, 1]} : vector<8x16x256xf32> to vector<8x1x256xf32>
    %51 = vector.shape_cast %50 : vector<8x1x256xf32> to vector<8x256xf32>
    %52 = vector.extract_strided_slice %49 {offsets = [0, 1, 0], sizes = [8, 1, 256], strides = [1, 1, 1]} : vector<8x16x256xf32> to vector<8x1x256xf32>
    %53 = vector.shape_cast %52 : vector<8x1x256xf32> to vector<8x256xf32>
    %54 = arith.maximumf %51, %53 : vector<8x256xf32>
    %c0_22 = arith.constant 0 : index
    %c0_23 = arith.constant 0 : index
    %55 = vector.load %arg5[%c0_22, %c0_23] : memref<1x256xf32, #tpu.memory_space<vmem>>, vector<1x256xf32>
    %56 = vector.broadcast %55 : vector<1x256xf32> to vector<8x256xf32>
    %57 = arith.addf %54, %56 : vector<8x256xf32>
    %cst_24 = arith.constant 0.000000e+00 : f32
    %58 = vector.broadcast %cst_24 : f32 to vector<8x256xf32>
    %59 = arith.maximumf %57, %58 : vector<8x256xf32>
    %c0_25 = arith.constant 0 : index
    %c0_26 = arith.constant 0 : index
    %c0_27 = arith.constant 0 : index
    %60 = vector.load %arg6[%c0_25, %c0_26, %c0_27] : memref<5x256x512xf32, #tpu.memory_space<vmem>>, vector<1x256x512xf32>
    %61 = vector.shape_cast %60 : vector<1x256x512xf32> to vector<256x512xf32>
    %cst_28 = arith.constant dense<0.000000e+00> : vector<8x512xf32>
    %62 = tpu.matmul %59, %61, %cst_28 {dimension_numbers = #tpu.dot_dimension_numbers<[1], [0], [0], [1], [0, 0, 1, 1], [], []>} : vector<8x256xf32>, vector<256x512xf32>, vector<8x512xf32> -> vector<8x512xf32>
    %63 = vector.extract_strided_slice %49 {offsets = [0, 2, 0], sizes = [8, 1, 256], strides = [1, 1, 1]} : vector<8x16x256xf32> to vector<8x1x256xf32>
    %64 = vector.shape_cast %63 : vector<8x1x256xf32> to vector<8x256xf32>
    %65 = vector.extract_strided_slice %49 {offsets = [0, 3, 0], sizes = [8, 1, 256], strides = [1, 1, 1]} : vector<8x16x256xf32> to vector<8x1x256xf32>
    %66 = vector.shape_cast %65 : vector<8x1x256xf32> to vector<8x256xf32>
    %67 = arith.maximumf %64, %66 : vector<8x256xf32>
    %c0_29 = arith.constant 0 : index
    %c0_30 = arith.constant 0 : index
    %68 = vector.load %arg5[%c0_29, %c0_30] : memref<1x256xf32, #tpu.memory_space<vmem>>, vector<1x256xf32>
    %69 = vector.broadcast %68 : vector<1x256xf32> to vector<8x256xf32>
    %70 = arith.addf %67, %69 : vector<8x256xf32>
    %cst_31 = arith.constant 0.000000e+00 : f32
    %71 = vector.broadcast %cst_31 : f32 to vector<8x256xf32>
    %72 = arith.maximumf %70, %71 : vector<8x256xf32>
    %c1_32 = arith.constant 1 : index
    %c0_33 = arith.constant 0 : index
    %c0_34 = arith.constant 0 : index
    %73 = vector.load %arg6[%c1_32, %c0_33, %c0_34] : memref<5x256x512xf32, #tpu.memory_space<vmem>>, vector<1x256x512xf32>
    %74 = vector.shape_cast %73 : vector<1x256x512xf32> to vector<256x512xf32>
    %cst_35 = arith.constant dense<0.000000e+00> : vector<8x512xf32>
    %75 = tpu.matmul %72, %74, %cst_35 {dimension_numbers = #tpu.dot_dimension_numbers<[1], [0], [0], [1], [0, 0, 1, 1], [], []>} : vector<8x256xf32>, vector<256x512xf32>, vector<8x512xf32> -> vector<8x512xf32>
    %76 = arith.addf %62, %75 : vector<8x512xf32>
    %77 = vector.extract_strided_slice %49 {offsets = [0, 4, 0], sizes = [8, 1, 256], strides = [1, 1, 1]} : vector<8x16x256xf32> to vector<8x1x256xf32>
    %78 = vector.shape_cast %77 : vector<8x1x256xf32> to vector<8x256xf32>
    %79 = vector.extract_strided_slice %49 {offsets = [0, 5, 0], sizes = [8, 1, 256], strides = [1, 1, 1]} : vector<8x16x256xf32> to vector<8x1x256xf32>
    %80 = vector.shape_cast %79 : vector<8x1x256xf32> to vector<8x256xf32>
    %81 = arith.maximumf %78, %80 : vector<8x256xf32>
    %c0_36 = arith.constant 0 : index
    %c0_37 = arith.constant 0 : index
    %82 = vector.load %arg5[%c0_36, %c0_37] : memref<1x256xf32, #tpu.memory_space<vmem>>, vector<1x256xf32>
    %83 = vector.broadcast %82 : vector<1x256xf32> to vector<8x256xf32>
    %84 = arith.addf %81, %83 : vector<8x256xf32>
    %cst_38 = arith.constant 0.000000e+00 : f32
    %85 = vector.broadcast %cst_38 : f32 to vector<8x256xf32>
    %86 = arith.maximumf %84, %85 : vector<8x256xf32>
    %c2_39 = arith.constant 2 : index
    %c0_40 = arith.constant 0 : index
    %c0_41 = arith.constant 0 : index
    %87 = vector.load %arg6[%c2_39, %c0_40, %c0_41] : memref<5x256x512xf32, #tpu.memory_space<vmem>>, vector<1x256x512xf32>
    %88 = vector.shape_cast %87 : vector<1x256x512xf32> to vector<256x512xf32>
    %cst_42 = arith.constant dense<0.000000e+00> : vector<8x512xf32>
    %89 = tpu.matmul %86, %88, %cst_42 {dimension_numbers = #tpu.dot_dimension_numbers<[1], [0], [0], [1], [0, 0, 1, 1], [], []>} : vector<8x256xf32>, vector<256x512xf32>, vector<8x512xf32> -> vector<8x512xf32>
    %90 = arith.addf %76, %89 : vector<8x512xf32>
    %91 = vector.extract_strided_slice %49 {offsets = [0, 6, 0], sizes = [8, 1, 256], strides = [1, 1, 1]} : vector<8x16x256xf32> to vector<8x1x256xf32>
    %92 = vector.shape_cast %91 : vector<8x1x256xf32> to vector<8x256xf32>
    %93 = vector.extract_strided_slice %49 {offsets = [0, 7, 0], sizes = [8, 1, 256], strides = [1, 1, 1]} : vector<8x16x256xf32> to vector<8x1x256xf32>
    %94 = vector.shape_cast %93 : vector<8x1x256xf32> to vector<8x256xf32>
    %95 = arith.maximumf %92, %94 : vector<8x256xf32>
    %c0_43 = arith.constant 0 : index
    %c0_44 = arith.constant 0 : index
    %96 = vector.load %arg5[%c0_43, %c0_44] : memref<1x256xf32, #tpu.memory_space<vmem>>, vector<1x256xf32>
    %97 = vector.broadcast %96 : vector<1x256xf32> to vector<8x256xf32>
    %98 = arith.addf %95, %97 : vector<8x256xf32>
    %cst_45 = arith.constant 0.000000e+00 : f32
    %99 = vector.broadcast %cst_45 : f32 to vector<8x256xf32>
    %100 = arith.maximumf %98, %99 : vector<8x256xf32>
    %c3_46 = arith.constant 3 : index
    %c0_47 = arith.constant 0 : index
    %c0_48 = arith.constant 0 : index
    %101 = vector.load %arg6[%c3_46, %c0_47, %c0_48] : memref<5x256x512xf32, #tpu.memory_space<vmem>>, vector<1x256x512xf32>
    %102 = vector.shape_cast %101 : vector<1x256x512xf32> to vector<256x512xf32>
    %cst_49 = arith.constant dense<0.000000e+00> : vector<8x512xf32>
    %103 = tpu.matmul %100, %102, %cst_49 {dimension_numbers = #tpu.dot_dimension_numbers<[1], [0], [0], [1], [0, 0, 1, 1], [], []>} : vector<8x256xf32>, vector<256x512xf32>, vector<8x512xf32> -> vector<8x512xf32>
    %104 = arith.addf %90, %103 : vector<8x512xf32>
    %105 = vector.extract_strided_slice %49 {offsets = [0, 8, 0], sizes = [8, 1, 256], strides = [1, 1, 1]} : vector<8x16x256xf32> to vector<8x1x256xf32>
    %106 = vector.shape_cast %105 : vector<8x1x256xf32> to vector<8x256xf32>
    %107 = vector.extract_strided_slice %49 {offsets = [0, 9, 0], sizes = [8, 1, 256], strides = [1, 1, 1]} : vector<8x16x256xf32> to vector<8x1x256xf32>
    %108 = vector.shape_cast %107 : vector<8x1x256xf32> to vector<8x256xf32>
    %109 = arith.maximumf %106, %108 : vector<8x256xf32>
    %c0_50 = arith.constant 0 : index
    %c0_51 = arith.constant 0 : index
    %110 = vector.load %arg5[%c0_50, %c0_51] : memref<1x256xf32, #tpu.memory_space<vmem>>, vector<1x256xf32>
    %111 = vector.broadcast %110 : vector<1x256xf32> to vector<8x256xf32>
    %112 = arith.addf %109, %111 : vector<8x256xf32>
    %cst_52 = arith.constant 0.000000e+00 : f32
    %113 = vector.broadcast %cst_52 : f32 to vector<8x256xf32>
    %114 = arith.maximumf %112, %113 : vector<8x256xf32>
    %c4_53 = arith.constant 4 : index
    %c0_54 = arith.constant 0 : index
    %c0_55 = arith.constant 0 : index
    %115 = vector.load %arg6[%c4_53, %c0_54, %c0_55] : memref<5x256x512xf32, #tpu.memory_space<vmem>>, vector<1x256x512xf32>
    %116 = vector.shape_cast %115 : vector<1x256x512xf32> to vector<256x512xf32>
    %cst_56 = arith.constant dense<0.000000e+00> : vector<8x512xf32>
    %117 = tpu.matmul %114, %116, %cst_56 {dimension_numbers = #tpu.dot_dimension_numbers<[1], [0], [0], [1], [0, 0, 1, 1], [], []>} : vector<8x256xf32>, vector<256x512xf32>, vector<8x512xf32> -> vector<8x512xf32>
    %118 = arith.addf %104, %117 : vector<8x512xf32>
    %c0_57 = arith.constant 0 : index
    %c0_58 = arith.constant 0 : index
    %119 = vector.load %arg7[%c0_57, %c0_58] : memref<1x512xf32, #tpu.memory_space<vmem>>, vector<1x512xf32>
    %120 = vector.broadcast %119 : vector<1x512xf32> to vector<8x512xf32>
    %121 = arith.addf %118, %120 : vector<8x512xf32>
    %cst_59 = arith.constant 0.000000e+00 : f32
    %122 = vector.broadcast %cst_59 : f32 to vector<8x512xf32>
    %123 = arith.maximumf %121, %122 : vector<8x512xf32>
    %c0_60 = arith.constant 0 : index
    %c0_61 = arith.constant 0 : index
    %124 = vector.load %arg8[%c0_60, %c0_61] : memref<512x128xf32, #tpu.memory_space<vmem>>, vector<512x128xf32>
    %cst_62 = arith.constant dense<0.000000e+00> : vector<8x128xf32>
    %125 = tpu.matmul %123, %124, %cst_62 {dimension_numbers = #tpu.dot_dimension_numbers<[1], [0], [0], [1], [0, 0, 1, 1], [], []>} : vector<8x512xf32>, vector<512x128xf32>, vector<8x128xf32> -> vector<8x128xf32>
    %c0_63 = arith.constant 0 : index
    %c0_64 = arith.constant 0 : index
    %126 = vector.load %arg9[%c0_63, %c0_64] : memref<1x128xf32, #tpu.memory_space<vmem>>, vector<1x128xf32>
    %127 = vector.broadcast %126 : vector<1x128xf32> to vector<8x128xf32>
    %128 = arith.addf %125, %127 : vector<8x128xf32>
    %c0_65 = arith.constant 0 : index
    %c0_66 = arith.constant 0 : index
    %129 = vector.load %arg10[%c0_65, %c0_66] : memref<8x128xf32, #tpu.memory_space<vmem>>, vector<8x128xf32>
    tpu.vector_store %arg10[%c0_65, %c0_66], %128 {strides = array<i32>} : memref<8x128xf32, #tpu.memory_space<vmem>>, vector<8x128xf32>,
    return
  }
  func.func @transform_0(%arg0: i32) -> (i32, i32) {
    %c0_i32 = arith.constant 0 : i32
    %c0_i32_0 = arith.constant 0 : i32
    return %arg0, %c0_i32 : i32, i32
  }
  func.func @transform_1(%arg0: i32) -> (i32, i32) {
    %c0_i32 = arith.constant 0 : i32
    %c0_i32_0 = arith.constant 0 : i32
    %c0_i32_1 = arith.constant 0 : i32
    return %c0_i32, %c0_i32_0 : i32, i32
  }
  func.func @transform_2(%arg0: i32) -> (i32, i32) {
    %c0_i32 = arith.constant 0 : i32
    %c0_i32_0 = arith.constant 0 : i32
    %c0_i32_1 = arith.constant 0 : i32
    return %c0_i32, %c0_i32_0 : i32, i32
  }
  func.func @transform_3(%arg0: i32) -> (i32, i32, i32) {
    %c0_i32 = arith.constant 0 : i32
    %c0_i32_0 = arith.constant 0 : i32
    %c0_i32_1 = arith.constant 0 : i32
    %c0_i32_2 = arith.constant 0 : i32
    return %c0_i32, %c0_i32_0, %c0_i32_1 : i32, i32, i32
  }
  func.func @transform_4(%arg0: i32) -> (i32, i32) {
    %c0_i32 = arith.constant 0 : i32
    %c0_i32_0 = arith.constant 0 : i32
    %c0_i32_1 = arith.constant 0 : i32
    return %c0_i32, %c0_i32_0 : i32, i32
  }
  func.func @transform_5(%arg0: i32) -> (i32, i32, i32) {
    %c0_i32 = arith.constant 0 : i32
    %c0_i32_0 = arith.constant 0 : i32
    %c0_i32_1 = arith.constant 0 : i32
    %c0_i32_2 = arith.constant 0 : i32
    return %c0_i32, %c0_i32_0, %c0_i32_1 : i32, i32, i32
  }
  func.func @transform_6(%arg0: i32) -> (i32, i32) {
    %c0_i32 = arith.constant 0 : i32
    %c0_i32_0 = arith.constant 0 : i32
    %c0_i32_1 = arith.constant 0 : i32
    return %c0_i32, %c0_i32_0 : i32, i32
  }
  func.func @transform_7(%arg0: i32) -> (i32, i32) {
    %c0_i32 = arith.constant 0 : i32
    %c0_i32_0 = arith.constant 0 : i32
    %c0_i32_1 = arith.constant 0 : i32
    return %c0_i32, %c0_i32_0 : i32, i32
  }
  func.func @transform_8(%arg0: i32) -> (i32, i32) {
    %c0_i32 = arith.constant 0 : i32
    %c0_i32_0 = arith.constant 0 : i32
    %c0_i32_1 = arith.constant 0 : i32
    return %c0_i32, %c0_i32_0 : i32, i32
  }
  func.func @transform_9(%arg0: i32) -> (i32, i32) {
    %c0_i32 = arith.constant 0 : i32
    %c0_i32_0 = arith.constant 0 : i32
    return %arg0, %c0_i32 : i32, i32
  }
}

</mosaic_0001>

<llo_original>
// kernel: lenet_forward.1
$region0: #{lenet_forward.1}
  #allocation0 [shape = 'u32[]', space=smem, size = 0x4, offset = 0x4, fixed_abs, tag = 'smem constant byte address 0x4 - core index']
  #allocation1 [shape = 'u32[144,128]{1,0:T(1,128)}', space=vmem, size = 0x12000, scoped, tag = 'internal scratch']
  %s0 = inlined_call_operand.vmem [shape: f32[256,512], index: 0, kind: input, shape index: {}]
  %s1 = inlined_call_operand.hbm [shape: f32[512,768], index: 1, kind: input, shape index: {}]
  %s2 = inlined_call_operand.vmem [shape: f32[1,384], index: 2, kind: input, shape index: {}]
  %s3 = inlined_call_operand.vmem [shape: f32[5,384,512], index: 3, kind: input, shape index: {}]
  %s4 = inlined_call_operand.vmem [shape: f32[1,256], index: 4, kind: input, shape index: {}]
  %s5 = inlined_call_operand.vmem [shape: f32[5,256,512], index: 5, kind: input, shape index: {}]
  %s6 = inlined_call_operand.vmem [shape: f32[1,512], index: 6, kind: input, shape index: {}]
  %s7 = inlined_call_operand.vmem [shape: f32[512,128], index: 7, kind: input, shape index: {}]
  %s8 = inlined_call_operand.vmem [shape: f32[1,128], index: 8, kind: input, shape index: {}]
  %s9 = inlined_call_operand.vmem [shape: f32[8,128], index: 9, kind: output, shape index: {}]
  %s10 = sld [smem:[#allocation0]]
  $region50: #{lenet_forward.1} parent=0
    _
  %s12 = ssub.s32 1, %s10
  %s13 = scalar_select 0, %s12, %s10
  $region1: #{lenet_forward.1} parent=0
    #allocation2 [shape = 'u8[1572864]{0}', space=vmem, size = 0x180000, scoped, tag = 'input window, operand 1, single buffered']
    #allocation3 [shape = 's32[1]{0}', space=sflag, size = 0x4, scoped, tag = 'scoped memory for lenet_forward.1']
    %14 = vsyncpa [#allocation3], 0
    // Predicated region
    $region2: #{lenet_forward.1} parent=1 // pred_check
      _
    $region3: #{lenet_forward.1} parent=1 // pred_check_branch
      %16 = sbr.rel (0) target = $region5
    $region4: #{lenet_forward.1} parent=1 // pred_region
      _
    $region5: #{lenet_forward.1} parent=1 // pred_fallthru
      _
    // Predicated region
    $region6: #{lenet_forward.1} parent=1 // pred_check
      _
    $region7: #{lenet_forward.1} parent=1 // pred_check_branch
      %18 = sbr.rel (0) target = $region9
    $region8: #{lenet_forward.1} parent=1 // pred_region
      %s20 = ssub.s32 49152, 49152
      %21 = vsyncadd [#allocation3], %s20
      %s22 = sshll.u32 [#allocation2], 4
      %s23 = int_to_ptr.vmem [resolvable:$true] %s22
      %28 = dma.hbm_to_vmem [thread:$0]  %s1, 49152, %s23, [#allocation3], 768, 768, 48
    $region9: #{lenet_forward.1} parent=1 // pred_fallthru
      _
    // Predicated region
    $region10: #{lenet_forward.1} parent=1 // pred_check
      _
    $region11: #{lenet_forward.1} parent=1 // pred_check_branch
      %30 = sbr.rel (0) target = $region13
    $region12: #{lenet_forward.1} parent=1 // pred_region
      _
    $region13: #{lenet_forward.1} parent=1 // pred_fallthru
      _
    // Predicated region
    $region14: #{lenet_forward.1} parent=1 // pred_check
      _
    $region15: #{lenet_forward.1} parent=1 // pred_check_branch
      %32 = sbr.rel (0) target = $region17
    $region16: #{lenet_forward.1} parent=1 // pred_region
      _
    $region17: #{lenet_forward.1} parent=1 // pred_fallthru
      _
    // Predicated region
    $region18: #{lenet_forward.1} parent=1 // pred_check
      _
    $region19: #{lenet_forward.1} parent=1 // pred_check_branch
      %34 = sbr.rel (0) target = $region21
    $region20: #{lenet_forward.1} parent=1 // pred_region
      _
    $region21: #{lenet_forward.1} parent=1 // pred_fallthru
      _
    // Predicated region
    $region22: #{lenet_forward.1} parent=1 // pred_check
      _
    $region23: #{lenet_forward.1} parent=1 // pred_check_branch
      %36 = sbr.rel (0) target = $region25
    $region24: #{lenet_forward.1} parent=1 // pred_region
      _
    $region25: #{lenet_forward.1} parent=1 // pred_fallthru
      _
    // Predicated region
    $region26: #{lenet_forward.1} parent=1 // pred_check
      _
    $region27: #{lenet_forward.1} parent=1 // pred_check_branch
      %38 = sbr.rel (0) target = $region29
    $region28: #{lenet_forward.1} parent=1 // pred_region
      _
    $region29: #{lenet_forward.1} parent=1 // pred_fallthru
      _
    // Predicated region
    $region30: #{lenet_forward.1} parent=1 // pred_check
      _
    $region31: #{lenet_forward.1} parent=1 // pred_check_branch
      %40 = sbr.rel (0) target = $region33
    $region32: #{lenet_forward.1} parent=1 // pred_region
      _
    $region33: #{lenet_forward.1} parent=1 // pred_fallthru
      _
    // Predicated region
    $region34: #{lenet_forward.1} parent=1 // pred_check
      _
    $region35: #{lenet_forward.1} parent=1 // pred_check_branch
      %42 = sbr.rel (0) target = $region37
    $region36: #{lenet_forward.1} parent=1 // pred_region
      _
    $region37: #{lenet_forward.1} parent=1 // pred_fallthru
      _
    // Predicated region
    $region38: #{lenet_forward.1} parent=1 // pred_check
      _
    $region39: #{lenet_forward.1} parent=1 // pred_check_branch
      %44 = sbr.rel (0) target = $region41
    $region40: #{lenet_forward.1} parent=1 // pred_region
      %45 = dma.done [#allocation3], 49152
    $region41: #{lenet_forward.1} parent=1 // pred_fallthru
      _
    %v46 = vld [vmem:[%s0] sm:$0xff]
    %v47 = vld [vmem:[%s0 + $0x8] sm:$0xff]
    %v48 = vld [vmem:[%s0 + $0x10] sm:$0xff]
    %v49 = vld [vmem:[%s0 + $0x18] sm:$0xff]
    %v50 = vld [vmem:[%s0 + $0x20] sm:$0xff]
    %v51 = vld [vmem:[%s0 + $0x28] sm:$0xff]
    %v52 = vld [vmem:[%s0 + $0x30] sm:$0xff]
    %v53 = vld [vmem:[%s0 + $0x38] sm:$0xff]
    %v54 = vld [vmem:[%s0 + $0x40] sm:$0xff]
    %v55 = vld [vmem:[%s0 + $0x48] sm:$0xff]
    %v56 = vld [vmem:[%s0 + $0x50] sm:$0xff]
    %v57 = vld [vmem:[%s0 + $0x58] sm:$0xff]
    %v58 = vld [vmem:[%s0 + $0x60] sm:$0xff]
    %v59 = vld [vmem:[%s0 + $0x68] sm:$0xff]
    %v60 = vld [vmem:[%s0 + $0x70] sm:$0xff]
    %v61 = vld [vmem:[%s0 + $0x78] sm:$0xff]
    %v62 = vld [vmem:[%s0 + $0x80] sm:$0xff]
    %v63 = vld [vmem:[%s0 + $0x88] sm:$0xff]
    %v64 = vld [vmem:[%s0 + $0x90] sm:$0xff]
    %v65 = vld [vmem:[%s0 + $0x98] sm:$0xff]
    %v66 = vld [vmem:[%s0 + $0xa0] sm:$0xff]
    %v67 = vld [vmem:[%s0 + $0xa8] sm:$0xff]
    %v68 = vld [vmem:[%s0 + $0xb0] sm:$0xff]
    %v69 = vld [vmem:[%s0 + $0xb8] sm:$0xff]
    %v70 = vld [vmem:[%s0 + $0xc0] sm:$0xff]
    %v71 = vld [vmem:[%s0 + $0xc8] sm:$0xff]
    %v72 = vld [vmem:[%s0 + $0xd0] sm:$0xff]
    %v73 = vld [vmem:[%s0 + $0xd8] sm:$0xff]
    %v74 = vld [vmem:[%s0 + $0xe0] sm:$0xff]
    %v75 = vld [vmem:[%s0 + $0xe8] sm:$0xff]
    %v76 = vld [vmem:[%s0 + $0xf0] sm:$0xff]
    %v77 = vld [vmem:[%s0 + $0xf8] sm:$0xff]
    %v78 = vld [vmem:[%s0 + $0x100] sm:$0xff]
    %v79 = vld [vmem:[%s0 + $0x108] sm:$0xff]
    %v80 = vld [vmem:[%s0 + $0x110] sm:$0xff]
    %v81 = vld [vmem:[%s0 + $0x118] sm:$0xff]
    %v82 = vld [vmem:[%s0 + $0x120] sm:$0xff]
    %v83 = vld [vmem:[%s0 + $0x128] sm:$0xff]
    %v84 = vld [vmem:[%s0 + $0x130] sm:$0xff]
    %v85 = vld [vmem:[%s0 + $0x138] sm:$0xff]
    %v86 = vld [vmem:[%s0 + $0x140] sm:$0xff]
    %v87 = vld [vmem:[%s0 + $0x148] sm:$0xff]
    %v88 = vld [vmem:[%s0 + $0x150] sm:$0xff]
    %v89 = vld [vmem:[%s0 + $0x158] sm:$0xff]
    %v90 = vld [vmem:[%s0 + $0x160] sm:$0xff]
    %v91 = vld [vmem:[%s0 + $0x168] sm:$0xff]
    %v92 = vld [vmem:[%s0 + $0x170] sm:$0xff]
    %v93 = vld [vmem:[%s0 + $0x178] sm:$0xff]
    %v94 = vld [vmem:[%s0 + $0x180] sm:$0xff]
    %v95 = vld [vmem:[%s0 + $0x188] sm:$0xff]
    %v96 = vld [vmem:[%s0 + $0x190] sm:$0xff]
    %v97 = vld [vmem:[%s0 + $0x198] sm:$0xff]
    %v98 = vld [vmem:[%s0 + $0x1a0] sm:$0xff]
    %v99 = vld [vmem:[%s0 + $0x1a8] sm:$0xff]
    %v100 = vld [vmem:[%s0 + $0x1b0] sm:$0xff]
    %v101 = vld [vmem:[%s0 + $0x1b8] sm:$0xff]
    %v102 = vld [vmem:[%s0 + $0x1c0] sm:$0xff]
    %v103 = vld [vmem:[%s0 + $0x1c8] sm:$0xff]
    %v104 = vld [vmem:[%s0 + $0x1d0] sm:$0xff]
    %v105 = vld [vmem:[%s0 + $0x1d8] sm:$0xff]
    %v106 = vld [vmem:[%s0 + $0x1e0] sm:$0xff]
    %v107 = vld [vmem:[%s0 + $0x1e8] sm:$0xff]
    %v108 = vld [vmem:[%s0 + $0x1f0] sm:$0xff]
    %v109 = vld [vmem:[%s0 + $0x1f8] sm:$0xff]
    %v110 = vld [vmem:[%s0 + $0x200] sm:$0xff]
    %v111 = vld [vmem:[%s0 + $0x208] sm:$0xff]
    %v112 = vld [vmem:[%s0 + $0x210] sm:$0xff]
    %v113 = vld [vmem:[%s0 + $0x218] sm:$0xff]
    %v114 = vld [vmem:[%s0 + $0x220] sm:$0xff]
    %v115 = vld [vmem:[%s0 + $0x228] sm:$0xff]
    %v116 = vld [vmem:[%s0 + $0x230] sm:$0xff]
    %v117 = vld [vmem:[%s0 + $0x238] sm:$0xff]
    %v118 = vld [vmem:[%s0 + $0x240] sm:$0xff]
    %v119 = vld [vmem:[%s0 + $0x248] sm:$0xff]
    %v120 = vld [vmem:[%s0 + $0x250] sm:$0xff]
    %v121 = vld [vmem:[%s0 + $0x258] sm:$0xff]
    %v122 = vld [vmem:[%s0 + $0x260] sm:$0xff]
    %v123 = vld [vmem:[%s0 + $0x268] sm:$0xff]
    %v124 = vld [vmem:[%s0 + $0x270] sm:$0xff]
    %v125 = vld [vmem:[%s0 + $0x278] sm:$0xff]
    %v126 = vld [vmem:[%s0 + $0x280] sm:$0xff]
    %v127 = vld [vmem:[%s0 + $0x288] sm:$0xff]
    %v128 = vld [vmem:[%s0 + $0x290] sm:$0xff]
    %v129 = vld [vmem:[%s0 + $0x298] sm:$0xff]
    %v130 = vld [vmem:[%s0 + $0x2a0] sm:$0xff]
    %v131 = vld [vmem:[%s0 + $0x2a8] sm:$0xff]
    %v132 = vld [vmem:[%s0 + $0x2b0] sm:$0xff]
    %v133 = vld [vmem:[%s0 + $0x2b8] sm:$0xff]
    %v134 = vld [vmem:[%s0 + $0x2c0] sm:$0xff]
    %v135 = vld [vmem:[%s0 + $0x2c8] sm:$0xff]
    %v136 = vld [vmem:[%s0 + $0x2d0] sm:$0xff]
    %v137 = vld [vmem:[%s0 + $0x2d8] sm:$0xff]
    %v138 = vld [vmem:[%s0 + $0x2e0] sm:$0xff]
    %v139 = vld [vmem:[%s0 + $0x2e8] sm:$0xff]
    %v140 = vld [vmem:[%s0 + $0x2f0] sm:$0xff]
    %v141 = vld [vmem:[%s0 + $0x2f8] sm:$0xff]
    %v142 = vld [vmem:[%s0 + $0x300] sm:$0xff]
    %v143 = vld [vmem:[%s0 + $0x308] sm:$0xff]
    %v144 = vld [vmem:[%s0 + $0x310] sm:$0xff]
    %v145 = vld [vmem:[%s0 + $0x318] sm:$0xff]
    %v146 = vld [vmem:[%s0 + $0x320] sm:$0xff]
    %v147 = vld [vmem:[%s0 + $0x328] sm:$0xff]
    %v148 = vld [vmem:[%s0 + $0x330] sm:$0xff]
    %v149 = vld [vmem:[%s0 + $0x338] sm:$0xff]
    %v150 = vld [vmem:[%s0 + $0x340] sm:$0xff]
    %v151 = vld [vmem:[%s0 + $0x348] sm:$0xff]
    %v152 = vld [vmem:[%s0 + $0x350] sm:$0xff]
    %v153 = vld [vmem:[%s0 + $0x358] sm:$0xff]
    %v154 = vld [vmem:[%s0 + $0x360] sm:$0xff]
    %v155 = vld [vmem:[%s0 + $0x368] sm:$0xff]
    %v156 = vld [vmem:[%s0 + $0x370] sm:$0xff]
    %v157 = vld [vmem:[%s0 + $0x378] sm:$0xff]
    %v158 = vld [vmem:[%s0 + $0x380] sm:$0xff]
    %v159 = vld [vmem:[%s0 + $0x388] sm:$0xff]
    %v160 = vld [vmem:[%s0 + $0x390] sm:$0xff]
    %v161 = vld [vmem:[%s0 + $0x398] sm:$0xff]
    %v162 = vld [vmem:[%s0 + $0x3a0] sm:$0xff]
    %v163 = vld [vmem:[%s0 + $0x3a8] sm:$0xff]
    %v164 = vld [vmem:[%s0 + $0x3b0] sm:$0xff]
    %v165 = vld [vmem:[%s0 + $0x3b8] sm:$0xff]
    %v166 = vld [vmem:[%s0 + $0x3c0] sm:$0xff]
    %v167 = vld [vmem:[%s0 + $0x3c8] sm:$0xff]
    %v168 = vld [vmem:[%s0 + $0x3d0] sm:$0xff]
    %v169 = vld [vmem:[%s0 + $0x3d8] sm:$0xff]
    %v170 = vld [vmem:[%s0 + $0x3e0] sm:$0xff]
    %v171 = vld [vmem:[%s0 + $0x3e8] sm:$0xff]
    %v172 = vld [vmem:[%s0 + $0x3f0] sm:$0xff]
    %v173 = vld [vmem:[%s0 + $0x3f8] sm:$0xff]
    %v174 = vld [vmem:[#allocation2] sm:$0xff]
    %v175 = vld [vmem:[#allocation2 + $0x8] sm:$0xff]
    %v176 = vld [vmem:[#allocation2 + $0x10] sm:$0xff]
    %v177 = vld [vmem:[#allocation2 + $0x18] sm:$0xff]
    %v178 = vld [vmem:[#allocation2 + $0x20] sm:$0xff]
    %v179 = vld [vmem:[#allocation2 + $0x28] sm:$0xff]
    %v180 = vld [vmem:[#allocation2 + $0x30] sm:$0xff]
    %v181 = vld [vmem:[#allocation2 + $0x38] sm:$0xff]
    %v182 = vld [vmem:[#allocation2 + $0x40] sm:$0xff]
    %v183 = vld [vmem:[#allocation2 + $0x48] sm:$0xff]
    %v184 = vld [vmem:[#allocation2 + $0x50] sm:$0xff]
    %v185 = vld [vmem:[#allocation2 + $0x58] sm:$0xff]
    %v186 = vld [vmem:[#allocation2 + $0x60] sm:$0xff]
    %v187 = vld [vmem:[#allocation2 + $0x68] sm:$0xff]
    %v188 = vld [vmem:[#allocation2 + $0x70] sm:$0xff]
    %v189 = vld [vmem:[#allocation2 + $0x78] sm:$0xff]
    %v190 = vld [vmem:[#allocation2 + $0x80] sm:$0xff]
    %v191 = vld [vmem:[#allocation2 + $0x88] sm:$0xff]
    %v192 = vld [vmem:[#allocation2 + $0x90] sm:$0xff]
    %v193 = vld [vmem:[#allocation2 + $0x98] sm:$0xff]
    %v194 = vld [vmem:[#allocation2 + $0xa0] sm:$0xff]
    %v195 = vld [vmem:[#allocation2 + $0xa8] sm:$0xff]
    %v196 = vld [vmem:[#allocation2 + $0xb0] sm:$0xff]
    %v197 = vld [vmem:[#allocation2 + $0xb8] sm:$0xff]
    %v198 = vld [vmem:[#allocation2 + $0xc0] sm:$0xff]
    %v199 = vld [vmem:[#allocation2 + $0xc8] sm:$0xff]
    %v200 = vld [vmem:[#allocation2 + $0xd0] sm:$0xff]
    %v201 = vld [vmem:[#allocation2 + $0xd8] sm:$0xff]
    %v202 = vld [vmem:[#allocation2 + $0xe0] sm:$0xff]
    %v203 = vld [vmem:[#allocation2 + $0xe8] sm:$0xff]
    %v204 = vld [vmem:[#allocation2 + $0xf0] sm:$0xff]
    %v205 = vld [vmem:[#allocation2 + $0xf8] sm:$0xff]
    %v206 = vld [vmem:[#allocation2 + $0x100] sm:$0xff]
    %v207 = vld [vmem:[#allocation2 + $0x108] sm:$0xff]
    %v208 = vld [vmem:[#allocation2 + $0x110] sm:$0xff]
    %v209 = vld [vmem:[#allocation2 + $0x118] sm:$0xff]
    %v210 = vld [vmem:[#allocation2 + $0x120] sm:$0xff]
    %v211 = vld [vmem:[#allocation2 + $0x128] sm:$0xff]
    %v212 = vld [vmem:[#allocation2 + $0x130] sm:$0xff]
    %v213 = vld [vmem:[#allocation2 + $0x138] sm:$0xff]
    %v214 = vld [vmem:[#allocation2 + $0x140] sm:$0xff]
    %v215 = vld [vmem:[#allocation2 + $0x148] sm:$0xff]
    %v216 = vld [vmem:[#allocation2 + $0x150] sm:$0xff]
    %v217 = vld [vmem:[#allocation2 + $0x158] sm:$0xff]
    %v218 = vld [vmem:[#allocation2 + $0x160] sm:$0xff]
    %v219 = vld [vmem:[#allocation2 + $0x168] sm:$0xff]
    %v220 = vld [vmem:[#allocation2 + $0x170] sm:$0xff]
    %v221 = vld [vmem:[#allocation2 + $0x178] sm:$0xff]
    %v222 = vld [vmem:[#allocation2 + $0x180] sm:$0xff]
    %v223 = vld [vmem:[#allocation2 + $0x188] sm:$0xff]
    %v224 = vld [vmem:[#allocation2 + $0x190] sm:$0xff]
    %v225 = vld [vmem:[#allocation2 + $0x198] sm:$0xff]
    %v226 = vld [vmem:[#allocation2 + $0x1a0] sm:$0xff]
    %v227 = vld [vmem:[#allocation2 + $0x1a8] sm:$0xff]
    %v228 = vld [vmem:[#allocation2 + $0x1b0] sm:$0xff]
    %v229 = vld [vmem:[#allocation2 + $0x1b8] sm:$0xff]
    %v230 = vld [vmem:[#allocation2 + $0x1c0] sm:$0xff]
    %v231 = vld [vmem:[#allocation2 + $0x1c8] sm:$0xff]
    %v232 = vld [vmem:[#allocation2 + $0x1d0] sm:$0xff]
    %v233 = vld [vmem:[#allocation2 + $0x1d8] sm:$0xff]
    %v234 = vld [vmem:[#allocation2 + $0x1e0] sm:$0xff]
    %v235 = vld [vmem:[#allocation2 + $0x1e8] sm:$0xff]
    %v236 = vld [vmem:[#allocation2 + $0x1f0] sm:$0xff]
    %v237 = vld [vmem:[#allocation2 + $0x1f8] sm:$0xff]
    %v238 = vld [vmem:[#allocation2 + $0x200] sm:$0xff]
    %v239 = vld [vmem:[#allocation2 + $0x208] sm:$0xff]
    %v240 = vld [vmem:[#allocation2 + $0x210] sm:$0xff]
    %v241 = vld [vmem:[#allocation2 + $0x218] sm:$0xff]
    %v242 = vld [vmem:[#allocation2 + $0x220] sm:$0xff]
    %v243 = vld [vmem:[#allocation2 + $0x228] sm:$0xff]
    %v244 = vld [vmem:[#allocation2 + $0x230] sm:$0xff]
    %v245 = vld [vmem:[#allocation2 + $0x238] sm:$0xff]
    %v246 = vld [vmem:[#allocation2 + $0x240] sm:$0xff]
    %v247 = vld [vmem:[#allocation2 + $0x248] sm:$0xff]
    %v248 = vld [vmem:[#allocation2 + $0x250] sm:$0xff]
    %v249 = vld [vmem:[#allocation2 + $0x258] sm:$0xff]
    %v250 = vld [vmem:[#allocation2 + $0x260] sm:$0xff]
    %v251 = vld [vmem:[#allocation2 + $0x268] sm:$0xff]
    %v252 = vld [vmem:[#allocation2 + $0x270] sm:$0xff]
    %v253 = vld [vmem:[#allocation2 + $0x278] sm:$0xff]
    %v254 = vld [vmem:[#allocation2 + $0x280] sm:$0xff]
    %v255 = vld [vmem:[#allocation2 + $0x288] sm:$0xff]
    %v256 = vld [vmem:[#allocation2 + $0x290] sm:$0xff]
    %v257 = vld [vmem:[#allocation2 + $0x298] sm:$0xff]
    %v258 = vld [vmem:[#allocation2 + $0x2a0] sm:$0xff]
    %v259 = vld [vmem:[#allocation2 + $0x2a8] sm:$0xff]
    %v260 = vld [vmem:[#allocation2 + $0x2b0] sm:$0xff]
    %v261 = vld [vmem:[#allocation2 + $0x2b8] sm:$0xff]
    %v262 = vld [vmem:[#allocation2 + $0x2c0] sm:$0xff]
    %v263 = vld [vmem:[#allocation2 + $0x2c8] sm:$0xff]
    %v264 = vld [vmem:[#allocation2 + $0x2d0] sm:$0xff]
    %v265 = vld [vmem:[#allocation2 + $0x2d8] sm:$0xff]
    %v266 = vld [vmem:[#allocation2 + $0x2e0] sm:$0xff]
    %v267 = vld [vmem:[#allocation2 + $0x2e8] sm:$0xff]
    %v268 = vld [vmem:[#allocation2 + $0x2f0] sm:$0xff]
    %v269 = vld [vmem:[#allocation2 + $0x2f8] sm:$0xff]
    %v270 = vld [vmem:[#allocation2 + $0x300] sm:$0xff]
    %v271 = vld [vmem:[#allocation2 + $0x308] sm:$0xff]
    %v272 = vld [vmem:[#allocation2 + $0x310] sm:$0xff]
    %v273 = vld [vmem:[#allocation2 + $0x318] sm:$0xff]
    %v274 = vld [vmem:[#allocation2 + $0x320] sm:$0xff]
    %v275 = vld [vmem:[#allocation2 + $0x328] sm:$0xff]
    %v276 = vld [vmem:[#allocation2 + $0x330] sm:$0xff]
    %v277 = vld [vmem:[#allocation2 + $0x338] sm:$0xff]
    %v278 = vld [vmem:[#allocation2 + $0x340] sm:$0xff]
    %v279 = vld [vmem:[#allocation2 + $0x348] sm:$0xff]
    %v280 = vld [vmem:[#allocation2 + $0x350] sm:$0xff]
    %v281 = vld [vmem:[#allocation2 + $0x358] sm:$0xff]
    %v282 = vld [vmem:[#allocation2 + $0x360] sm:$0xff]
    %v283 = vld [vmem:[#allocation2 + $0x368] sm:$0xff]
    %v284 = vld [vmem:[#allocation2 + $0x370] sm:$0xff]
    %v285 = vld [vmem:[#allocation2 + $0x378] sm:$0xff]
    %v286 = vld [vmem:[#allocation2 + $0x380] sm:$0xff]
    %v287 = vld [vmem:[#allocation2 + $0x388] sm:$0xff]
    %v288 = vld [vmem:[#allocation2 + $0x390] sm:$0xff]
    %v289 = vld [vmem:[#allocation2 + $0x398] sm:$0xff]
    %v290 = vld [vmem:[#allocation2 + $0x3a0] sm:$0xff]
    %v291 = vld [vmem:[#allocation2 + $0x3a8] sm:$0xff]
    %v292 = vld [vmem:[#allocation2 + $0x3b0] sm:$0xff]
    %v293 = vld [vmem:[#allocation2 + $0x3b8] sm:$0xff]
    %v294 = vld [vmem:[#allocation2 + $0x3c0] sm:$0xff]
    %v295 = vld [vmem:[#allocation2 + $0x3c8] sm:$0xff]
    %v296 = vld [vmem:[#allocation2 + $0x3d0] sm:$0xff]
    %v297 = vld [vmem:[#allocation2 + $0x3d8] sm:$0xff]
    %v298 = vld [vmem:[#allocation2 + $0x3e0] sm:$0xff]
    %v299 = vld [vmem:[#allocation2 + $0x3e8] sm:$0xff]
    %v300 = vld [vmem:[#allocation2 + $0x3f0] sm:$0xff]
    %v301 = vld [vmem:[#allocation2 + $0x3f8] sm:$0xff]
    %v302 = vld [vmem:[#allocation2 + $0x400] sm:$0xff]
    %v303 = vld [vmem:[#allocation2 + $0x408] sm:$0xff]
    %v304 = vld [vmem:[#allocation2 + $0x410] sm:$0xff]
    %v305 = vld [vmem:[#allocation2 + $0x418] sm:$0xff]
    %v306 = vld [vmem:[#allocation2 + $0x420] sm:$0xff]
    %v307 = vld [vmem:[#allocation2 + $0x428] sm:$0xff]
    %v308 = vld [vmem:[#allocation2 + $0x430] sm:$0xff]
    %v309 = vld [vmem:[#allocation2 + $0x438] sm:$0xff]
    %v310 = vld [vmem:[#allocation2 + $0x440] sm:$0xff]
    %v311 = vld [vmem:[#allocation2 + $0x448] sm:$0xff]
    %v312 = vld [vmem:[#allocation2 + $0x450] sm:$0xff]
    %v313 = vld [vmem:[#allocation2 + $0x458] sm:$0xff]
    %v314 = vld [vmem:[#allocation2 + $0x460] sm:$0xff]
    %v315 = vld [vmem:[#allocation2 + $0x468] sm:$0xff]
    %v316 = vld [vmem:[#allocation2 + $0x470] sm:$0xff]
    %v317 = vld [vmem:[#allocation2 + $0x478] sm:$0xff]
    %v318 = vld [vmem:[#allocation2 + $0x480] sm:$0xff]
    %v319 = vld [vmem:[#allocation2 + $0x488] sm:$0xff]
    %v320 = vld [vmem:[#allocation2 + $0x490] sm:$0xff]
    %v321 = vld [vmem:[#allocation2 + $0x498] sm:$0xff]
    %v322 = vld [vmem:[#allocation2 + $0x4a0] sm:$0xff]
    %v323 = vld [vmem:[#allocation2 + $0x4a8] sm:$0xff]
    %v324 = vld [vmem:[#allocation2 + $0x4b0] sm:$0xff]
    %v325 = vld [vmem:[#allocation2 + $0x4b8] sm:$0xff]
    %v326 = vld [vmem:[#allocation2 + $0x4c0] sm:$0xff]
    %v327 = vld [vmem:[#allocation2 + $0x4c8] sm:$0xff]
    %v328 = vld [vmem:[#allocation2 + $0x4d0] sm:$0xff]
    %v329 = vld [vmem:[#allocation2 + $0x4d8] sm:$0xff]
    %v330 = vld [vmem:[#allocation2 + $0x4e0] sm:$0xff]
    %v331 = vld [vmem:[#allocation2 + $0x4e8] sm:$0xff]
    %v332 = vld [vmem:[#allocation2 + $0x4f0] sm:$0xff]
    %v333 = vld [vmem:[#allocation2 + $0x4f8] sm:$0xff]
    %v334 = vld [vmem:[#allocation2 + $0x500] sm:$0xff]
    %v335 = vld [vmem:[#allocation2 + $0x508] sm:$0xff]
    %v336 = vld [vmem:[#allocation2 + $0x510] sm:$0xff]
    %v337 = vld [vmem:[#allocation2 + $0x518] sm:$0xff]
    %v338 = vld [vmem:[#allocation2 + $0x520] sm:$0xff]
    %v339 = vld [vmem:[#allocation2 + $0x528] sm:$0xff]
    %v340 = vld [vmem:[#allocation2 + $0x530] sm:$0xff]
    %v341 = vld [vmem:[#allocation2 + $0x538] sm:$0xff]
    %v342 = vld [vmem:[#allocation2 + $0x540] sm:$0xff]
    %v343 = vld [vmem:[#allocation2 + $0x548] sm:$0xff]
    %v344 = vld [vmem:[#allocation2 + $0x550] sm:$0xff]
    %v345 = vld [vmem:[#allocation2 + $0x558] sm:$0xff]
    %v346 = vld [vmem:[#allocation2 + $0x560] sm:$0xff]
    %v347 = vld [vmem:[#allocation2 + $0x568] sm:$0xff]
    %v348 = vld [vmem:[#allocation2 + $0x570] sm:$0xff]
    %v349 = vld [vmem:[#allocation2 + $0x578] sm:$0xff]
    %v350 = vld [vmem:[#allocation2 + $0x580] sm:$0xff]
    %v351 = vld [vmem:[#allocation2 + $0x588] sm:$0xff]
    %v352 = vld [vmem:[#allocation2 + $0x590] sm:$0xff]
    %v353 = vld [vmem:[#allocation2 + $0x598] sm:$0xff]
    %v354 = vld [vmem:[#allocation2 + $0x5a0] sm:$0xff]
    %v355 = vld [vmem:[#allocation2 + $0x5a8] sm:$0xff]
    %v356 = vld [vmem:[#allocation2 + $0x5b0] sm:$0xff]
    %v357 = vld [vmem:[#allocation2 + $0x5b8] sm:$0xff]
    %v358 = vld [vmem:[#allocation2 + $0x5c0] sm:$0xff]
    %v359 = vld [vmem:[#allocation2 + $0x5c8] sm:$0xff]
    %v360 = vld [vmem:[#allocation2 + $0x5d0] sm:$0xff]
    %v361 = vld [vmem:[#allocation2 + $0x5d8] sm:$0xff]
    %v362 = vld [vmem:[#allocation2 + $0x5e0] sm:$0xff]
    %v363 = vld [vmem:[#allocation2 + $0x5e8] sm:$0xff]
    %v364 = vld [vmem:[#allocation2 + $0x5f0] sm:$0xff]
    %v365 = vld [vmem:[#allocation2 + $0x5f8] sm:$0xff]
    %v366 = vld [vmem:[#allocation2 + $0x600] sm:$0xff]
    %v367 = vld [vmem:[#allocation2 + $0x608] sm:$0xff]
    %v368 = vld [vmem:[#allocation2 + $0x610] sm:$0xff]
    %v369 = vld [vmem:[#allocation2 + $0x618] sm:$0xff]
    %v370 = vld [vmem:[#allocation2 + $0x620] sm:$0xff]
    %v371 = vld [vmem:[#allocation2 + $0x628] sm:$0xff]
    %v372 = vld [vmem:[#allocation2 + $0x630] sm:$0xff]
    %v373 = vld [vmem:[#allocation2 + $0x638] sm:$0xff]
    %v374 = vld [vmem:[#allocation2 + $0x640] sm:$0xff]
    %v375 = vld [vmem:[#allocation2 + $0x648] sm:$0xff]
    %v376 = vld [vmem:[#allocation2 + $0x650] sm:$0xff]
    %v377 = vld [vmem:[#allocation2 + $0x658] sm:$0xff]
    %v378 = vld [vmem:[#allocation2 + $0x660] sm:$0xff]
    %v379 = vld [vmem:[#allocation2 + $0x668] sm:$0xff]
    %v380 = vld [vmem:[#allocation2 + $0x670] sm:$0xff]
    %v381 = vld [vmem:[#allocation2 + $0x678] sm:$0xff]
    %v382 = vld [vmem:[#allocation2 + $0x680] sm:$0xff]
    %v383 = vld [vmem:[#allocation2 + $0x688] sm:$0xff]
    %v384 = vld [vmem:[#allocation2 + $0x690] sm:$0xff]
    %v385 = vld [vmem:[#allocation2 + $0x698] sm:$0xff]
    %v386 = vld [vmem:[#allocation2 + $0x6a0] sm:$0xff]
    %v387 = vld [vmem:[#allocation2 + $0x6a8] sm:$0xff]
    %v388 = vld [vmem:[#allocation2 + $0x6b0] sm:$0xff]
    %v389 = vld [vmem:[#allocation2 + $0x6b8] sm:$0xff]
    %v390 = vld [vmem:[#allocation2 + $0x6c0] sm:$0xff]
    %v391 = vld [vmem:[#allocation2 + $0x6c8] sm:$0xff]
    %v392 = vld [vmem:[#allocation2 + $0x6d0] sm:$0xff]
    %v393 = vld [vmem:[#allocation2 + $0x6d8] sm:$0xff]
    %v394 = vld [vmem:[#allocation2 + $0x6e0] sm:$0xff]
    %v395 = vld [vmem:[#allocation2 + $0x6e8] sm:$0xff]
    %v396 = vld [vmem:[#allocation2 + $0x6f0] sm:$0xff]
    %v397 = vld [vmem:[#allocation2 + $0x6f8] sm:$0xff]
    %v398 = vld [vmem:[#allocation2 + $0x700] sm:$0xff]
    %v399 = vld [vmem:[#allocation2 + $0x708] sm:$0xff]
    %v400 = vld [vmem:[#allocation2 + $0x710] sm:$0xff]
    %v401 = vld [vmem:[#allocation2 + $0x718] sm:$0xff]
    %v402 = vld [vmem:[#allocation2 + $0x720] sm:$0xff]
    %v403 = vld [vmem:[#allocation2 + $0x728] sm:$0xff]
    %v404 = vld [vmem:[#allocation2 + $0x730] sm:$0xff]
    %v405 = vld [vmem:[#allocation2 + $0x738] sm:$0xff]
    %v406 = vld [vmem:[#allocation2 + $0x740] sm:$0xff]
    %v407 = vld [vmem:[#allocation2 + $0x748] sm:$0xff]
    %v408 = vld [vmem:[#allocation2 + $0x750] sm:$0xff]
    %v409 = vld [vmem:[#allocation2 + $0x758] sm:$0xff]
    %v410 = vld [vmem:[#allocation2 + $0x760] sm:$0xff]
    %v411 = vld [vmem:[#allocation2 + $0x768] sm:$0xff]
    %v412 = vld [vmem:[#allocation2 + $0x770] sm:$0xff]
    %v413 = vld [vmem:[#allocation2 + $0x778] sm:$0xff]
    %v414 = vld [vmem:[#allocation2 + $0x780] sm:$0xff]
    %v415 = vld [vmem:[#allocation2 + $0x788] sm:$0xff]
    %v416 = vld [vmem:[#allocation2 + $0x790] sm:$0xff]
    %v417 = vld [vmem:[#allocation2 + $0x798] sm:$0xff]
    %v418 = vld [vmem:[#allocation2 + $0x7a0] sm:$0xff]
    %v419 = vld [vmem:[#allocation2 + $0x7a8] sm:$0xff]
    %v420 = vld [vmem:[#allocation2 + $0x7b0] sm:$0xff]
    %v421 = vld [vmem:[#allocation2 + $0x7b8] sm:$0xff]
    %v422 = vld [vmem:[#allocation2 + $0x7c0] sm:$0xff]
    %v423 = vld [vmem:[#allocation2 + $0x7c8] sm:$0xff]
    %v424 = vld [vmem:[#allocation2 + $0x7d0] sm:$0xff]
    %v425 = vld [vmem:[#allocation2 + $0x7d8] sm:$0xff]
    %v426 = vld [vmem:[#allocation2 + $0x7e0] sm:$0xff]
    %v427 = vld [vmem:[#allocation2 + $0x7e8] sm:$0xff]
    %v428 = vld [vmem:[#allocation2 + $0x7f0] sm:$0xff]
    %v429 = vld [vmem:[#allocation2 + $0x7f8] sm:$0xff]
    %v430 = vld [vmem:[#allocation2 + $0x800] sm:$0xff]
    %v431 = vld [vmem:[#allocation2 + $0x808] sm:$0xff]
    %v432 = vld [vmem:[#allocation2 + $0x810] sm:$0xff]
    %v433 = vld [vmem:[#allocation2 + $0x818] sm:$0xff]
    %v434 = vld [vmem:[#allocation2 + $0x820] sm:$0xff]
    %v435 = vld [vmem:[#allocation2 + $0x828] sm:$0xff]
    %v436 = vld [vmem:[#allocation2 + $0x830] sm:$0xff]
    %v437 = vld [vmem:[#allocation2 + $0x838] sm:$0xff]
    %v438 = vld [vmem:[#allocation2 + $0x840] sm:$0xff]
    %v439 = vld [vmem:[#allocation2 + $0x848] sm:$0xff]
    %v440 = vld [vmem:[#allocation2 + $0x850] sm:$0xff]
    %v441 = vld [vmem:[#allocation2 + $0x858] sm:$0xff]
    %v442 = vld [vmem:[#allocation2 + $0x860] sm:$0xff]
    %v443 = vld [vmem:[#allocation2 + $0x868] sm:$0xff]
    %v444 = vld [vmem:[#allocation2 + $0x870] sm:$0xff]
    %v445 = vld [vmem:[#allocation2 + $0x878] sm:$0xff]
    %v446 = vld [vmem:[#allocation2 + $0x880] sm:$0xff]
    %v447 = vld [vmem:[#allocation2 + $0x888] sm:$0xff]
    %v448 = vld [vmem:[#allocation2 + $0x890] sm:$0xff]
    %v449 = vld [vmem:[#allocation2 + $0x898] sm:$0xff]
    %v450 = vld [vmem:[#allocation2 + $0x8a0] sm:$0xff]
    %v451 = vld [vmem:[#allocation2 + $0x8a8] sm:$0xff]
    %v452 = vld [vmem:[#allocation2 + $0x8b0] sm:$0xff]
    %v453 = vld [vmem:[#allocation2 + $0x8b8] sm:$0xff]
    %v454 = vld [vmem:[#allocation2 + $0x8c0] sm:$0xff]
    %v455 = vld [vmem:[#allocation2 + $0x8c8] sm:$0xff]
    %v456 = vld [vmem:[#allocation2 + $0x8d0] sm:$0xff]
    %v457 = vld [vmem:[#allocation2 + $0x8d8] sm:$0xff]
    %v458 = vld [vmem:[#allocation2 + $0x8e0] sm:$0xff]
    %v459 = vld [vmem:[#allocation2 + $0x8e8] sm:$0xff]
    %v460 = vld [vmem:[#allocation2 + $0x8f0] sm:$0xff]
    %v461 = vld [vmem:[#allocation2 + $0x8f8] sm:$0xff]
    %v462 = vld [vmem:[#allocation2 + $0x900] sm:$0xff]
    %v463 = vld [vmem:[#allocation2 + $0x908] sm:$0xff]
    %v464 = vld [vmem:[#allocation2 + $0x910] sm:$0xff]
    %v465 = vld [vmem:[#allocation2 + $0x918] sm:$0xff]
    %v466 = vld [vmem:[#allocation2 + $0x920] sm:$0xff]
    %v467 = vld [vmem:[#allocation2 + $0x928] sm:$0xff]
    %v468 = vld [vmem:[#allocation2 + $0x930] sm:$0xff]
    %v469 = vld [vmem:[#allocation2 + $0x938] sm:$0xff]
    %v470 = vld [vmem:[#allocation2 + $0x940] sm:$0xff]
    %v471 = vld [vmem:[#allocation2 + $0x948] sm:$0xff]
    %v472 = vld [vmem:[#allocation2 + $0x950] sm:$0xff]
    %v473 = vld [vmem:[#allocation2 + $0x958] sm:$0xff]
    %v474 = vld [vmem:[#allocation2 + $0x960] sm:$0xff]
    %v475 = vld [vmem:[#allocation2 + $0x968] sm:$0xff]
    %v476 = vld [vmem:[#allocation2 + $0x970] sm:$0xff]
    %v477 = vld [vmem:[#allocation2 + $0x978] sm:$0xff]
    %v478 = vld [vmem:[#allocation2 + $0x980] sm:$0xff]
    %v479 = vld [vmem:[#allocation2 + $0x988] sm:$0xff]
    %v480 = vld [vmem:[#allocation2 + $0x990] sm:$0xff]
    %v481 = vld [vmem:[#allocation2 + $0x998] sm:$0xff]
    %v482 = vld [vmem:[#allocation2 + $0x9a0] sm:$0xff]
    %v483 = vld [vmem:[#allocation2 + $0x9a8] sm:$0xff]
    %v484 = vld [vmem:[#allocation2 + $0x9b0] sm:$0xff]
    %v485 = vld [vmem:[#allocation2 + $0x9b8] sm:$0xff]
    %v486 = vld [vmem:[#allocation2 + $0x9c0] sm:$0xff]
    %v487 = vld [vmem:[#allocation2 + $0x9c8] sm:$0xff]
    %v488 = vld [vmem:[#allocation2 + $0x9d0] sm:$0xff]
    %v489 = vld [vmem:[#allocation2 + $0x9d8] sm:$0xff]
    %v490 = vld [vmem:[#allocation2 + $0x9e0] sm:$0xff]
    %v491 = vld [vmem:[#allocation2 + $0x9e8] sm:$0xff]
    %v492 = vld [vmem:[#allocation2 + $0x9f0] sm:$0xff]
    %v493 = vld [vmem:[#allocation2 + $0x9f8] sm:$0xff]
    %v494 = vld [vmem:[#allocation2 + $0xa00] sm:$0xff]
    %v495 = vld [vmem:[#allocation2 + $0xa08] sm:$0xff]
    %v496 = vld [vmem:[#allocation2 + $0xa10] sm:$0xff]
    %v497 = vld [vmem:[#allocation2 + $0xa18] sm:$0xff]
    %v498 = vld [vmem:[#allocation2 + $0xa20] sm:$0xff]
    %v499 = vld [vmem:[#allocation2 + $0xa28] sm:$0xff]
    %v500 = vld [vmem:[#allocation2 + $0xa30] sm:$0xff]
    %v501 = vld [vmem:[#allocation2 + $0xa38] sm:$0xff]
    %v502 = vld [vmem:[#allocation2 + $0xa40] sm:$0xff]
    %v503 = vld [vmem:[#allocation2 + $0xa48] sm:$0xff]
    %v504 = vld [vmem:[#allocation2 + $0xa50] sm:$0xff]
    %v505 = vld [vmem:[#allocation2 + $0xa58] sm:$0xff]
    %v506 = vld [vmem:[#allocation2 + $0xa60] sm:$0xff]
    %v507 = vld [vmem:[#allocation2 + $0xa68] sm:$0xff]
    %v508 = vld [vmem:[#allocation2 + $0xa70] sm:$0xff]
    %v509 = vld [vmem:[#allocation2 + $0xa78] sm:$0xff]
    %v510 = vld [vmem:[#allocation2 + $0xa80] sm:$0xff]
    %v511 = vld [vmem:[#allocation2 + $0xa88] sm:$0xff]
    %v512 = vld [vmem:[#allocation2 + $0xa90] sm:$0xff]
    %v513 = vld [vmem:[#allocation2 + $0xa98] sm:$0xff]
    %v514 = vld [vmem:[#allocation2 + $0xaa0] sm:$0xff]
    %v515 = vld [vmem:[#allocation2 + $0xaa8] sm:$0xff]
    %v516 = vld [vmem:[#allocation2 + $0xab0] sm:$0xff]
    %v517 = vld [vmem:[#allocation2 + $0xab8] sm:$0xff]
    %v518 = vld [vmem:[#allocation2 + $0xac0] sm:$0xff]
    %v519 = vld [vmem:[#allocation2 + $0xac8] sm:$0xff]
    %v520 = vld [vmem:[#allocation2 + $0xad0] sm:$0xff]
    %v521 = vld [vmem:[#allocation2 + $0xad8] sm:$0xff]
    %v522 = vld [vmem:[#allocation2 + $0xae0] sm:$0xff]
    %v523 = vld [vmem:[#allocation2 + $0xae8] sm:$0xff]
    %v524 = vld [vmem:[#allocation2 + $0xaf0] sm:$0xff]
    %v525 = vld [vmem:[#allocation2 + $0xaf8] sm:$0xff]
    %v526 = vld [vmem:[#allocation2 + $0xb00] sm:$0xff]
    %v527 = vld [vmem:[#allocation2 + $0xb08] sm:$0xff]
    %v528 = vld [vmem:[#allocation2 + $0xb10] sm:$0xff]
    %v529 = vld [vmem:[#allocation2 + $0xb18] sm:$0xff]
    %v530 = vld [vmem:[#allocation2 + $0xb20] sm:$0xff]
    %v531 = vld [vmem:[#allocation2 + $0xb28] sm:$0xff]
    %v532 = vld [vmem:[#allocation2 + $0xb30] sm:$0xff]
    %v533 = vld [vmem:[#allocation2 + $0xb38] sm:$0xff]
    %v534 = vld [vmem:[#allocation2 + $0xb40] sm:$0xff]
    %v535 = vld [vmem:[#allocation2 + $0xb48] sm:$0xff]
    %v536 = vld [vmem:[#allocation2 + $0xb50] sm:$0xff]
    %v537 = vld [vmem:[#allocation2 + $0xb58] sm:$0xff]
    %v538 = vld [vmem:[#allocation2 + $0xb60] sm:$0xff]
    %v539 = vld [vmem:[#allocation2 + $0xb68] sm:$0xff]
    %v540 = vld [vmem:[#allocation2 + $0xb70] sm:$0xff]
    %v541 = vld [vmem:[#allocation2 + $0xb78] sm:$0xff]
    %v542 = vld [vmem:[#allocation2 + $0xb80] sm:$0xff]
    %v543 = vld [vmem:[#allocation2 + $0xb88] sm:$0xff]
    %v544 = vld [vmem:[#allocation2 + $0xb90] sm:$0xff]
    %v545 = vld [vmem:[#allocation2 + $0xb98] sm:$0xff]
    %v546 = vld [vmem:[#allocation2 + $0xba0] sm:$0xff]
    %v547 = vld [vmem:[#allocation2 + $0xba8] sm:$0xff]
    %v548 = vld [vmem:[#allocation2 + $0xbb0] sm:$0xff]
    %v549 = vld [vmem:[#allocation2 + $0xbb8] sm:$0xff]
    %v550 = vld [vmem:[#allocation2 + $0xbc0] sm:$0xff]
    %v551 = vld [vmem:[#allocation2 + $0xbc8] sm:$0xff]
    %v552 = vld [vmem:[#allocation2 + $0xbd0] sm:$0xff]
    %v553 = vld [vmem:[#allocation2 + $0xbd8] sm:$0xff]
    %v554 = vld [vmem:[#allocation2 + $0xbe0] sm:$0xff]
    %v555 = vld [vmem:[#allocation2 + $0xbe8] sm:$0xff]
    %v556 = vld [vmem:[#allocation2 + $0xbf0] sm:$0xff]
    %v557 = vld [vmem:[#allocation2 + $0xbf8] sm:$0xff]
    %558 = vmatprep.subr.mxu0 %v175
    %559 = vmatpush1.msra.mxu0 %v174
    %560 = vmatprep.subr.mxu0 %v181
    %561 = vmatpush1.msra.mxu0 %v180
    %562 = vmatprep.subr.mxu0 %v187
    %563 = vmatpush1.msra.mxu0 %v186
    %564 = vmatprep.subr.mxu0 %v193
    %565 = vmatpush1.msra.mxu0 %v192
    %566 = vmatprep.subr.mxu0 %v199
    %567 = vmatpush1.msra.mxu0 %v198
    %568 = vmatprep.subr.mxu0 %v205
    %569 = vmatpush1.msra.mxu0 %v204
    %570 = vmatprep.subr.mxu0 %v211
    %571 = vmatpush1.msra.mxu0 %v210
    %572 = vmatprep.subr.mxu0 %v217
    %573 = vmatpush1.msra.mxu0 %v216
    %574 = vmatprep.subr.mxu0 %v223
    %575 = vmatpush1.msra.mxu0 %v222
    %576 = vmatprep.subr.mxu0 %v229
    %577 = vmatpush1.msra.mxu0 %v228
    %578 = vmatprep.subr.mxu0 %v235
    %579 = vmatpush1.msra.mxu0 %v234
    %580 = vmatprep.subr.mxu0 %v241
    %581 = vmatpush1.msra.mxu0 %v240
    %582 = vmatprep.subr.mxu0 %v247
    %583 = vmatpush1.msra.mxu0 %v246
    %584 = vmatprep.subr.mxu0 %v253
    %585 = vmatpush1.msra.mxu0 %v252
    %586 = vmatprep.subr.mxu0 %v259
    %587 = vmatpush1.msra.mxu0 %v258
    %588 = vmatprep.subr.mxu0 %v265
    %589 = vmatpush1.msra.mxu0 %v264
    %590 = vmatprep.subr.mxu0 %v271
    %591 = vmatpush1.msra.mxu0 %v270
    %592 = vmatprep.subr.mxu0 %v277
    %593 = vmatpush1.msra.mxu0 %v276
    %594 = vmatprep.subr.mxu0 %v283
    %595 = vmatpush1.msra.mxu0 %v282
    %596 = vmatprep.subr.mxu0 %v289
    %597 = vmatpush1.msra.mxu0 %v288
    %598 = vmatprep.subr.mxu0 %v295
    %599 = vmatpush1.msra.mxu0 %v294
    %600 = vmatprep.subr.mxu0 %v301
    %601 = vmatpush1.msra.mxu0 %v300
    %602 = vmatprep.subr.mxu0 %v307
    %603 = vmatpush1.msra.mxu0 %v306
    %604 = vmatprep.subr.mxu0 %v313
    %605 = vmatpush1.msra.mxu0 %v312
    %606 = vmatprep.subr.mxu0 %v319
    %607 = vmatpush1.msra.mxu0 %v318
    %608 = vmatprep.subr.mxu0 %v325
    %609 = vmatpush1.msra.mxu0 %v324
    %610 = vmatprep.subr.mxu0 %v331
    %611 = vmatpush1.msra.mxu0 %v330
    %612 = vmatprep.subr.mxu0 %v337
    %613 = vmatpush1.msra.mxu0 %v336
    %614 = vmatprep.subr.mxu0 %v343
    %615 = vmatpush1.msra.mxu0 %v342
    %616 = vmatprep.subr.mxu0 %v349
    %617 = vmatpush1.msra.mxu0 %v348
    %618 = vmatprep.subr.mxu0 %v355
    %619 = vmatpush1.msra.mxu0 %v354
    %620 = vmatprep.subr.mxu0 %v361
    %621 = vmatpush1.msra.mxu0 %v360
    %622 = vmatprep.mubr.f32.mxu0 %v47
    %623 = vmatmul.mubr.f32.gmra.mrb[0].mxu0 %v46
    %v624 = vpop.f32.mrb[0].mxu0
    %v625 = vadd.f32 0.0, %v624
    %v626 = vpop.f32.mrb[0].mxu0
    %v627 = vadd.f32 0.0, %v626
    %628 = vmatprep.mubr.f32.mxu0 %v51
    %629 = vmatmul.mubr.f32.gmra.mrb[0].mxu0 %v50
    %v630 = vpop.f32.mrb[0].mxu0
    %v631 = vadd.f32 0.0, %v630
    %v632 = vpop.f32.mrb[0].mxu0
    %v633 = vadd.f32 0.0, %v632
    %634 = vmatprep.mubr.f32.mxu0 %v55
    %635 = vmatmul.mubr.f32.gmra.mrb[0].mxu0 %v54
    %v636 = vpop.f32.mrb[0].mxu0
    %v637 = vadd.f32 0.0, %v636
    %v638 = vpop.f32.mrb[0].mxu0
    %v639 = vadd.f32 0.0, %v638
    %640 = vmatprep.mubr.f32.mxu0 %v59
    %641 = vmatmul.mubr.f32.gmra.mrb[0].mxu0 %v58
    %v642 = vpop.f32.mrb[0].mxu0
    %v643 = vadd.f32 0.0, %v642
    %v644 = vpop.f32.mrb[0].mxu0
    %v645 = vadd.f32 0.0, %v644
    %646 = vmatprep.mubr.f32.mxu0 %v63
    %647 = vmatmul.mubr.f32.gmra.mrb[0].mxu0 %v62
    %v648 = vpop.f32.mrb[0].mxu0
    %v649 = vadd.f32 0.0, %v648
    %v650 = vpop.f32.mrb[0].mxu0
    %v651 = vadd.f32 0.0, %v650
    %652 = vmatprep.mubr.f32.mxu0 %v67
    %653 = vmatmul.mubr.f32.gmra.mrb[0].mxu0 %v66
    %v654 = vpop.f32.mrb[0].mxu0
    %v655 = vadd.f32 0.0, %v654
    %v656 = vpop.f32.mrb[0].mxu0
    %v657 = vadd.f32 0.0, %v656
    %658 = vmatprep.mubr.f32.mxu0 %v71
    %659 = vmatmul.mubr.f32.gmra.mrb[0].mxu0 %v70
    %v660 = vpop.f32.mrb[0].mxu0
    %v661 = vadd.f32 0.0, %v660
    %v662 = vpop.f32.mrb[0].mxu0
    %v663 = vadd.f32 0.0, %v662
    %664 = vmatprep.mubr.f32.mxu0 %v75
    %665 = vmatmul.mubr.f32.gmra.mrb[0].mxu0 %v74
    %v666 = vpop.f32.mrb[0].mxu0
    %v667 = vadd.f32 0.0, %v666
    %v668 = vpop.f32.mrb[0].mxu0
    %v669 = vadd.f32 0.0, %v668
    %670 = vmatprep.mubr.f32.mxu0 %v79
    %671 = vmatmul.mubr.f32.gmra.mrb[0].mxu0 %v78
    %v672 = vpop.f32.mrb[0].mxu0
    %v673 = vadd.f32 0.0, %v672
    %v674 = vpop.f32.mrb[0].mxu0
    %v675 = vadd.f32 0.0, %v674
    %676 = vmatprep.mubr.f32.mxu0 %v83
    %677 = vmatmul.mubr.f32.gmra.mrb[0].mxu0 %v82
    %v678 = vpop.f32.mrb[0].mxu0
    %v679 = vadd.f32 0.0, %v678
    %v680 = vpop.f32.mrb[0].mxu0
    %v681 = vadd.f32 0.0, %v680
    %682 = vmatprep.mubr.f32.mxu0 %v87
    %683 = vmatmul.mubr.f32.gmra.mrb[0].mxu0 %v86
    %v684 = vpop.f32.mrb[0].mxu0
    %v685 = vadd.f32 0.0, %v684
    %v686 = vpop.f32.mrb[0].mxu0
    %v687 = vadd.f32 0.0, %v686
    %688 = vmatprep.mubr.f32.mxu0 %v91
    %689 = vmatmul.mubr.f32.gmra.mrb[0].mxu0 %v90
    %v690 = vpop.f32.mrb[0].mxu0
    %v691 = vadd.f32 0.0, %v690
    %v692 = vpop.f32.mrb[0].mxu0
    %v693 = vadd.f32 0.0, %v692
    %694 = vmatprep.mubr.f32.mxu0 %v95
    %695 = vmatmul.mubr.f32.gmra.mrb[0].mxu0 %v94
    %v696 = vpop.f32.mrb[0].mxu0
    %v697 = vadd.f32 0.0, %v696
    %v698 = vpop.f32.mrb[0].mxu0
    %v699 = vadd.f32 0.0, %v698
    %700 = vmatprep.mubr.f32.mxu0 %v99
    %701 = vmatmul.mubr.f32.gmra.mrb[0].mxu0 %v98
    %v702 = vpop.f32.mrb[0].mxu0
    %v703 = vadd.f32 0.0, %v702
    %v704 = vpop.f32.mrb[0].mxu0
    %v705 = vadd.f32 0.0, %v704
    %706 = vmatprep.mubr.f32.mxu0 %v103
    %707 = vmatmul.mubr.f32.gmra.mrb[0].mxu0 %v102
    %v708 = vpop.f32.mrb[0].mxu0
    %v709 = vadd.f32 0.0, %v708
    %v710 = vpop.f32.mrb[0].mxu0
    %v711 = vadd.f32 0.0, %v710
    %712 = vmatprep.mubr.f32.mxu0 %v107
    %713 = vmatmul.mubr.f32.gmra.mrb[0].mxu0 %v106
    %v714 = vpop.f32.mrb[0].mxu0
    %v715 = vadd.f32 0.0, %v714
    %v716 = vpop.f32.mrb[0].mxu0
    %v717 = vadd.f32 0.0, %v716
    %718 = vmatprep.mubr.f32.mxu0 %v111
    %719 = vmatmul.mubr.f32.gmra.mrb[0].mxu0 %v110
    %v720 = vpop.f32.mrb[0].mxu0
    %v721 = vadd.f32 0.0, %v720
    %v722 = vpop.f32.mrb[0].mxu0
    %v723 = vadd.f32 0.0, %v722
    %724 = vmatprep.mubr.f32.mxu0 %v115
    %725 = vmatmul.mubr.f32.gmra.mrb[0].mxu0 %v114
    %v726 = vpop.f32.mrb[0].mxu0
    %v727 = vadd.f32 0.0, %v726
    %v728 = vpop.f32.mrb[0].mxu0
    %v729 = vadd.f32 0.0, %v728
    %730 = vmatprep.mubr.f32.mxu0 %v119
    %731 = vmatmul.mubr.f32.gmra.mrb[0].mxu0 %v118
    %v732 = vpop.f32.mrb[0].mxu0
    %v733 = vadd.f32 0.0, %v732
    %v734 = vpop.f32.mrb[0].mxu0
    %v735 = vadd.f32 0.0, %v734
    %736 = vmatprep.mubr.f32.mxu0 %v123
    %737 = vmatmul.mubr.f32.gmra.mrb[0].mxu0 %v122
    %v738 = vpop.f32.mrb[0].mxu0
    %v739 = vadd.f32 0.0, %v738
    %v740 = vpop.f32.mrb[0].mxu0
    %v741 = vadd.f32 0.0, %v740
    %742 = vmatprep.mubr.f32.mxu0 %v127
    %743 = vmatmul.mubr.f32.gmra.mrb[0].mxu0 %v126
    %v744 = vpop.f32.mrb[0].mxu0
    %v745 = vadd.f32 0.0, %v744
    %v746 = vpop.f32.mrb[0].mxu0
    %v747 = vadd.f32 0.0, %v746
    %748 = vmatprep.mubr.f32.mxu0 %v131
    %749 = vmatmul.mubr.f32.gmra.mrb[0].mxu0 %v130
    %v750 = vpop.f32.mrb[0].mxu0
    %v751 = vadd.f32 0.0, %v750
    %v752 = vpop.f32.mrb[0].mxu0
    %v753 = vadd.f32 0.0, %v752
    %754 = vmatprep.mubr.f32.mxu0 %v135
    %755 = vmatmul.mubr.f32.gmra.mrb[0].mxu0 %v134
    %v756 = vpop.f32.mrb[0].mxu0
    %v757 = vadd.f32 0.0, %v756
    %v758 = vpop.f32.mrb[0].mxu0
    %v759 = vadd.f32 0.0, %v758
    %760 = vmatprep.mubr.f32.mxu0 %v139
    %761 = vmatmul.mubr.f32.gmra.mrb[0].mxu0 %v138
    %v762 = vpop.f32.mrb[0].mxu0
    %v763 = vadd.f32 0.0, %v762
    %v764 = vpop.f32.mrb[0].mxu0
    %v765 = vadd.f32 0.0, %v764
    %766 = vmatprep.mubr.f32.mxu0 %v143
    %767 = vmatmul.mubr.f32.gmra.mrb[0].mxu0 %v142
    %v768 = vpop.f32.mrb[0].mxu0
    %v769 = vadd.f32 0.0, %v768
    %v770 = vpop.f32.mrb[0].mxu0
    %v771 = vadd.f32 0.0, %v770
    %772 = vmatprep.mubr.f32.mxu0 %v147
    %773 = vmatmul.mubr.f32.gmra.mrb[0].mxu0 %v146
    %v774 = vpop.f32.mrb[0].mxu0
    %v775 = vadd.f32 0.0, %v774
    %v776 = vpop.f32.mrb[0].mxu0
    %v777 = vadd.f32 0.0, %v776
    %778 = vmatprep.mubr.f32.mxu0 %v151
    %779 = vmatmul.mubr.f32.gmra.mrb[0].mxu0 %v150
    %v780 = vpop.f32.mrb[0].mxu0
    %v781 = vadd.f32 0.0, %v780
    %v782 = vpop.f32.mrb[0].mxu0
    %v783 = vadd.f32 0.0, %v782
    %784 = vmatprep.mubr.f32.mxu0 %v155
    %785 = vmatmul.mubr.f32.gmra.mrb[0].mxu0 %v154
    %v786 = vpop.f32.mrb[0].mxu0
    %v787 = vadd.f32 0.0, %v786
    %v788 = vpop.f32.mrb[0].mxu0
    %v789 = vadd.f32 0.0, %v788
    %790 = vmatprep.mubr.f32.mxu0 %v159
    %791 = vmatmul.mubr.f32.gmra.mrb[0].mxu0 %v158
    %v792 = vpop.f32.mrb[0].mxu0
    %v793 = vadd.f32 0.0, %v792
    %v794 = vpop.f32.mrb[0].mxu0
    %v795 = vadd.f32 0.0, %v794
    %796 = vmatprep.mubr.f32.mxu0 %v163
    %797 = vmatmul.mubr.f32.gmra.mrb[0].mxu0 %v162
    %v798 = vpop.f32.mrb[0].mxu0
    %v799 = vadd.f32 0.0, %v798
    %v800 = vpop.f32.mrb[0].mxu0
    %v801 = vadd.f32 0.0, %v800
    %802 = vmatprep.mubr.f32.mxu0 %v167
    %803 = vmatmul.mubr.f32.gmra.mrb[0].mxu0 %v166
    %v804 = vpop.f32.mrb[0].mxu0
    %v805 = vadd.f32 0.0, %v804
    %v806 = vpop.f32.mrb[0].mxu0
    %v807 = vadd.f32 0.0, %v806
    %808 = vmatprep.mubr.f32.mxu0 %v171
    %809 = vmatmul.mubr.f32.gmra.mrb[0].mxu0 %v170
    %v810 = vpop.f32.mrb[0].mxu0
    %v811 = vadd.f32 0.0, %v810
    %v812 = vpop.f32.mrb[0].mxu0
    %v813 = vadd.f32 0.0, %v812
    %814 = vdwg.mxu0
    %815 = vmatprep.subr.mxu0 %v367
    %816 = vmatpush1.msra.mxu0 %v366
    %817 = vmatprep.subr.mxu0 %v373
    %818 = vmatpush1.msra.mxu0 %v372
    %819 = vmatprep.subr.mxu0 %v379
    %820 = vmatpush1.msra.mxu0 %v378
    %821 = vmatprep.subr.mxu0 %v385
    %822 = vmatpush1.msra.mxu0 %v384
    %823 = vmatprep.subr.mxu0 %v391
    %824 = vmatpush1.msra.mxu0 %v390
    %825 = vmatprep.subr.mxu0 %v397
    %826 = vmatpush1.msra.mxu0 %v396
    %827 = vmatprep.subr.mxu0 %v403
    %828 = vmatpush1.msra.mxu0 %v402
    %829 = vmatprep.subr.mxu0 %v409
    %830 = vmatpush1.msra.mxu0 %v408
    %831 = vmatprep.subr.mxu0 %v415
    %832 = vmatpush1.msra.mxu0 %v414
    %833 = vmatprep.subr.mxu0 %v421
    %834 = vmatpush1.msra.mxu0 %v420
    %835 = vmatprep.subr.mxu0 %v427
    %836 = vmatpush1.msra.mxu0 %v426
    %837 = vmatprep.subr.mxu0 %v433
    %838 = vmatpush1.msra.mxu0 %v432
    %839 = vmatprep.subr.mxu0 %v439
    %840 = vmatpush1.msra.mxu0 %v438
    %841 = vmatprep.subr.mxu0 %v445
    %842 = vmatpush1.msra.mxu0 %v444
    %843 = vmatprep.subr.mxu0 %v451
    %844 = vmatpush1.msra.mxu0 %v450
    %845 = vmatprep.subr.mxu0 %v457
    %846 = vmatpush1.msra.mxu0 %v456
    %847 = vmatprep.subr.mxu0 %v463
    %848 = vmatpush1.msra.mxu0 %v462
    %849 = vmatprep.subr.mxu0 %v469
    %850 = vmatpush1.msra.mxu0 %v468
    %851 = vmatprep.subr.mxu0 %v475
    %852 = vmatpush1.msra.mxu0 %v474
    %853 = vmatprep.subr.mxu0 %v481
    %854 = vmatpush1.msra.mxu0 %v480
    %855 = vmatprep.subr.mxu0 %v487
    %856 = vmatpush1.msra.mxu0 %v486
    %857 = vmatprep.subr.mxu0 %v493
    %858 = vmatpush1.msra.mxu0 %v492
    %859 = vmatprep.subr.mxu0 %v499
    %860 = vmatpush1.msra.mxu0 %v498
    %861 = vmatprep.subr.mxu0 %v505
    %862 = vmatpush1.msra.mxu0 %v504
    %863 = vmatprep.subr.mxu0 %v511
    %864 = vmatpush1.msra.mxu0 %v510
    %865 = vmatprep.subr.mxu0 %v517
    %866 = vmatpush1.msra.mxu0 %v516
    %867 = vmatprep.subr.mxu0 %v523
    %868 = vmatpush1.msra.mxu0 %v522
    %869 = vmatprep.subr.mxu0 %v529
    %870 = vmatpush1.msra.mxu0 %v528
    %871 = vmatprep.subr.mxu0 %v535
    %872 = vmatpush1.msra.mxu0 %v534
    %873 = vmatprep.subr.mxu0 %v541
    %874 = vmatpush1.msra.mxu0 %v540
    %875 = vmatprep.subr.mxu0 %v547
    %876 = vmatpush1.msra.mxu0 %v546
    %877 = vmatprep.subr.mxu0 %v553
    %878 = vmatpush1.msra.mxu0 %v552
    %879 = vmatprep.mubr.f32.mxu0 %v49
    %880 = vmatmul.mubr.f32.gmra.mrb[0].mxu0 %v48
    %v881 = vpop.f32.mrb[0].mxu0
    %v882 = vadd.f32 %v625, %v881
    %v883 = vpop.f32.mrb[0].mxu0
    %v884 = vadd.f32 %v627, %v883
    %885 = vmatprep.mubr.f32.mxu0 %v53
    %886 = vmatmul.mubr.f32.gmra.mrb[0].mxu0 %v52
    %v887 = vpop.f32.mrb[0].mxu0
    %v888 = vadd.f32 %v631, %v887
    %v889 = vpop.f32.mrb[0].mxu0
    %v890 = vadd.f32 %v633, %v889
    %891 = vmatprep.mubr.f32.mxu0 %v57
    %892 = vmatmul.mubr.f32.gmra.mrb[0].mxu0 %v56
    %v893 = vpop.f32.mrb[0].mxu0
    %v894 = vadd.f32 %v637, %v893
    %v895 = vpop.f32.mrb[0].mxu0
    %v896 = vadd.f32 %v639, %v895
    %897 = vmatprep.mubr.f32.mxu0 %v61
    %898 = vmatmul.mubr.f32.gmra.mrb[0].mxu0 %v60
    %v899 = vpop.f32.mrb[0].mxu0
    %v900 = vadd.f32 %v643, %v899
    %v901 = vpop.f32.mrb[0].mxu0
    %v902 = vadd.f32 %v645, %v901
    %903 = vmatprep.mubr.f32.mxu0 %v65
    %904 = vmatmul.mubr.f32.gmra.mrb[0].mxu0 %v64
    %v905 = vpop.f32.mrb[0].mxu0
    %v906 = vadd.f32 %v649, %v905
    %v907 = vpop.f32.mrb[0].mxu0
    %v908 = vadd.f32 %v651, %v907
    %909 = vmatprep.mubr.f32.mxu0 %v69
    %910 = vmatmul.mubr.f32.gmra.mrb[0].mxu0 %v68
    %v911 = vpop.f32.mrb[0].mxu0
    %v912 = vadd.f32 %v655, %v911
    %v913 = vpop.f32.mrb[0].mxu0
    %v914 = vadd.f32 %v657, %v913
    %915 = vmatprep.mubr.f32.mxu0 %v73
    %916 = vmatmul.mubr.f32.gmra.mrb[0].mxu0 %v72
    %v917 = vpop.f32.mrb[0].mxu0
    %v918 = vadd.f32 %v661, %v917
    %v919 = vpop.f32.mrb[0].mxu0
    %v920 = vadd.f32 %v663, %v919
    %921 = vmatprep.mubr.f32.mxu0 %v77
    %922 = vmatmul.mubr.f32.gmra.mrb[0].mxu0 %v76
    %v923 = vpop.f32.mrb[0].mxu0
    %v924 = vadd.f32 %v667, %v923
    %v925 = vpop.f32.mrb[0].mxu0
    %v926 = vadd.f32 %v669, %v925
    %927 = vmatprep.mubr.f32.mxu0 %v81
    %928 = vmatmul.mubr.f32.gmra.mrb[0].mxu0 %v80
    %v929 = vpop.f32.mrb[0].mxu0
    %v930 = vadd.f32 %v673, %v929
    %v931 = vpop.f32.mrb[0].mxu0
    %v932 = vadd.f32 %v675, %v931
    %933 = vmatprep.mubr.f32.mxu0 %v85
    %934 = vmatmul.mubr.f32.gmra.mrb[0].mxu0 %v84
    %v935 = vpop.f32.mrb[0].mxu0
    %v936 = vadd.f32 %v679, %v935
    %v937 = vpop.f32.mrb[0].mxu0
    %v938 = vadd.f32 %v681, %v937
    %939 = vmatprep.mubr.f32.mxu0 %v89
    %940 = vmatmul.mubr.f32.gmra.mrb[0].mxu0 %v88
    %v941 = vpop.f32.mrb[0].mxu0
    %v942 = vadd.f32 %v685, %v941
    %v943 = vpop.f32.mrb[0].mxu0
    %v944 = vadd.f32 %v687, %v943
    %945 = vmatprep.mubr.f32.mxu0 %v93
    %946 = vmatmul.mubr.f32.gmra.mrb[0].mxu0 %v92
    %v947 = vpop.f32.mrb[0].mxu0
    %v948 = vadd.f32 %v691, %v947
    %v949 = vpop.f32.mrb[0].mxu0
    %v950 = vadd.f32 %v693, %v949
    %951 = vmatprep.mubr.f32.mxu0 %v97
    %952 = vmatmul.mubr.f32.gmra.mrb[0].mxu0 %v96
    %v953 = vpop.f32.mrb[0].mxu0
    %v954 = vadd.f32 %v697, %v953
    %v955 = vpop.f32.mrb[0].mxu0
    %v956 = vadd.f32 %v699, %v955
    %957 = vmatprep.mubr.f32.mxu0 %v101
    %958 = vmatmul.mubr.f32.gmra.mrb[0].mxu0 %v100
    %v959 = vpop.f32.mrb[0].mxu0
    %v960 = vadd.f32 %v703, %v959
    %v961 = vpop.f32.mrb[0].mxu0
    %v962 = vadd.f32 %v705, %v961
    %963 = vmatprep.mubr.f32.mxu0 %v105
    %964 = vmatmul.mubr.f32.gmra.mrb[0].mxu0 %v104
    %v965 = vpop.f32.mrb[0].mxu0
    %v966 = vadd.f32 %v709, %v965
    %v967 = vpop.f32.mrb[0].mxu0
    %v968 = vadd.f32 %v711, %v967
    %969 = vmatprep.mubr.f32.mxu0 %v109
    %970 = vmatmul.mubr.f32.gmra.mrb[0].mxu0 %v108
    %v971 = vpop.f32.mrb[0].mxu0
    %v972 = vadd.f32 %v715, %v971
    %v973 = vpop.f32.mrb[0].mxu0
    %v974 = vadd.f32 %v717, %v973
    %975 = vmatprep.mubr.f32.mxu0 %v113
    %976 = vmatmul.mubr.f32.gmra.mrb[0].mxu0 %v112
    %v977 = vpop.f32.mrb[0].mxu0
    %v978 = vadd.f32 %v721, %v977
    %v979 = vpop.f32.mrb[0].mxu0
    %v980 = vadd.f32 %v723, %v979
    %981 = vmatprep.mubr.f32.mxu0 %v117
    %982 = vmatmul.mubr.f32.gmra.mrb[0].mxu0 %v116
    %v983 = vpop.f32.mrb[0].mxu0
    %v984 = vadd.f32 %v727, %v983
    %v985 = vpop.f32.mrb[0].mxu0
    %v986 = vadd.f32 %v729, %v985
    %987 = vmatprep.mubr.f32.mxu0 %v121
    %988 = vmatmul.mubr.f32.gmra.mrb[0].mxu0 %v120
    %v989 = vpop.f32.mrb[0].mxu0
    %v990 = vadd.f32 %v733, %v989
    %v991 = vpop.f32.mrb[0].mxu0
    %v992 = vadd.f32 %v735, %v991
    %993 = vmatprep.mubr.f32.mxu0 %v125
    %994 = vmatmul.mubr.f32.gmra.mrb[0].mxu0 %v124
    %v995 = vpop.f32.mrb[0].mxu0
    %v996 = vadd.f32 %v739, %v995
    %v997 = vpop.f32.mrb[0].mxu0
    %v998 = vadd.f32 %v741, %v997
    %999 = vmatprep.mubr.f32.mxu0 %v129
    %1000 = vmatmul.mubr.f32.gmra.mrb[0].mxu0 %v128
    %v1001 = vpop.f32.mrb[0].mxu0
    %v1002 = vadd.f32 %v745, %v1001
    %v1003 = vpop.f32.mrb[0].mxu0
    %v1004 = vadd.f32 %v747, %v1003
    %1005 = vmatprep.mubr.f32.mxu0 %v133
    %1006 = vmatmul.mubr.f32.gmra.mrb[0].mxu0 %v132
    %v1007 = vpop.f32.mrb[0].mxu0
    %v1008 = vadd.f32 %v751, %v1007
    %v1009 = vpop.f32.mrb[0].mxu0
    %v1010 = vadd.f32 %v753, %v1009
    %1011 = vmatprep.mubr.f32.mxu0 %v137
    %1012 = vmatmul.mubr.f32.gmra.mrb[0].mxu0 %v136
    %v1013 = vpop.f32.mrb[0].mxu0
    %v1014 = vadd.f32 %v757, %v1013
    %v1015 = vpop.f32.mrb[0].mxu0
    %v1016 = vadd.f32 %v759, %v1015
    %1017 = vmatprep.mubr.f32.mxu0 %v141
    %1018 = vmatmul.mubr.f32.gmra.mrb[0].mxu0 %v140
    %v1019 = vpop.f32.mrb[0].mxu0
    %v1020 = vadd.f32 %v763, %v1019
    %v1021 = vpop.f32.mrb[0].mxu0
    %v1022 = vadd.f32 %v765, %v1021
    %1023 = vmatprep.mubr.f32.mxu0 %v145
    %1024 = vmatmul.mubr.f32.gmra.mrb[0].mxu0 %v144
    %v1025 = vpop.f32.mrb[0].mxu0
    %v1026 = vadd.f32 %v769, %v1025
    %v1027 = vpop.f32.mrb[0].mxu0
    %v1028 = vadd.f32 %v771, %v1027
    %1029 = vmatprep.mubr.f32.mxu0 %v149
    %1030 = vmatmul.mubr.f32.gmra.mrb[0].mxu0 %v148
    %v1031 = vpop.f32.mrb[0].mxu0
    %v1032 = vadd.f32 %v775, %v1031
    %v1033 = vpop.f32.mrb[0].mxu0
    %v1034 = vadd.f32 %v777, %v1033
    %1035 = vmatprep.mubr.f32.mxu0 %v153
    %1036 = vmatmul.mubr.f32.gmra.mrb[0].mxu0 %v152
    %v1037 = vpop.f32.mrb[0].mxu0
    %v1038 = vadd.f32 %v781, %v1037
    %v1039 = vpop.f32.mrb[0].mxu0
    %v1040 = vadd.f32 %v783, %v1039
    %1041 = vmatprep.mubr.f32.mxu0 %v157
    %1042 = vmatmul.mubr.f32.gmra.mrb[0].mxu0 %v156
    %v1043 = vpop.f32.mrb[0].mxu0
    %v1044 = vadd.f32 %v787, %v1043
    %v1045 = vpop.f32.mrb[0].mxu0
    %v1046 = vadd.f32 %v789, %v1045
    %1047 = vmatprep.mubr.f32.mxu0 %v161
    %1048 = vmatmul.mubr.f32.gmra.mrb[0].mxu0 %v160
    %v1049 = vpop.f32.mrb[0].mxu0
    %v1050 = vadd.f32 %v793, %v1049
    %v1051 = vpop.f32.mrb[0].mxu0
    %v1052 = vadd.f32 %v795, %v1051
    %1053 = vmatprep.mubr.f32.mxu0 %v165
    %1054 = vmatmul.mubr.f32.gmra.mrb[0].mxu0 %v164
    %v1055 = vpop.f32.mrb[0].mxu0
    %v1056 = vadd.f32 %v799, %v1055
    %v1057 = vpop.f32.mrb[0].mxu0
    %v1058 = vadd.f32 %v801, %v1057
    %1059 = vmatprep.mubr.f32.mxu0 %v169
    %1060 = vmatmul.mubr.f32.gmra.mrb[0].mxu0 %v168
    %v1061 = vpop.f32.mrb[0].mxu0
    %v1062 = vadd.f32 %v805, %v1061
    %v1063 = vpop.f32.mrb[0].mxu0
    %v1064 = vadd.f32 %v807, %v1063
    %1065 = vmatprep.mubr.f32.mxu0 %v173
    %1066 = vmatmul.mubr.f32.gmra.mrb[0].mxu0 %v172
    %v1067 = vpop.f32.mrb[0].mxu0
    %v1068 = vadd.f32 %v811, %v1067
    %v1069 = vpop.f32.mrb[0].mxu0
    %v1070 = vadd.f32 %v813, %v1069
    %1071 = vdwg.mxu0
    %1072 = vmatprep.subr.mxu0 %v177
    %1073 = vmatpush1.msra.mxu0 %v176
    %1074 = vmatprep.subr.mxu0 %v183
    %1075 = vmatpush1.msra.mxu0 %v182
    %1076 = vmatprep.subr.mxu0 %v189
    %1077 = vmatpush1.msra.mxu0 %v188
    %1078 = vmatprep.subr.mxu0 %v195
    %1079 = vmatpush1.msra.mxu0 %v194
    %1080 = vmatprep.subr.mxu0 %v201
    %1081 = vmatpush1.msra.mxu0 %v200
    %1082 = vmatprep.subr.mxu0 %v207
    %1083 = vmatpush1.msra.mxu0 %v206
    %1084 = vmatprep.subr.mxu0 %v213
    %1085 = vmatpush1.msra.mxu0 %v212
    %1086 = vmatprep.subr.mxu0 %v219
    %1087 = vmatpush1.msra.mxu0 %v218
    %1088 = vmatprep.subr.mxu0 %v225
    %1089 = vmatpush1.msra.mxu0 %v224
    %1090 = vmatprep.subr.mxu0 %v231
    %1091 = vmatpush1.msra.mxu0 %v230
    %1092 = vmatprep.subr.mxu0 %v237
    %1093 = vmatpush1.msra.mxu0 %v236
    %1094 = vmatprep.subr.mxu0 %v243
    %1095 = vmatpush1.msra.mxu0 %v242
    %1096 = vmatprep.subr.mxu0 %v249
    %1097 = vmatpush1.msra.mxu0 %v248
    %1098 = vmatprep.subr.mxu0 %v255
    %1099 = vmatpush1.msra.mxu0 %v254
    %1100 = vmatprep.subr.mxu0 %v261
    %1101 = vmatpush1.msra.mxu0 %v260
    %1102 = vmatprep.subr.mxu0 %v267
    %1103 = vmatpush1.msra.mxu0 %v266
    %1104 = vmatprep.subr.mxu0 %v273
    %1105 = vmatpush1.msra.mxu0 %v272
    %1106 = vmatprep.subr.mxu0 %v279
    %1107 = vmatpush1.msra.mxu0 %v278
    %1108 = vmatprep.subr.mxu0 %v285
    %1109 = vmatpush1.msra.mxu0 %v284
    %1110 = vmatprep.subr.mxu0 %v291
    %1111 = vmatpush1.msra.mxu0 %v290
    %1112 = vmatprep.subr.mxu0 %v297
    %1113 = vmatpush1.msra.mxu0 %v296
    %1114 = vmatprep.subr.mxu0 %v303
    %1115 = vmatpush1.msra.mxu0 %v302
    %1116 = vmatprep.subr.mxu0 %v309
    %1117 = vmatpush1.msra.mxu0 %v308
    %1118 = vmatprep.subr.mxu0 %v315
    %1119 = vmatpush1.msra.mxu0 %v314
    %1120 = vmatprep.subr.mxu0 %v321
    %1121 = vmatpush1.msra.mxu0 %v320
    %1122 = vmatprep.subr.mxu0 %v327
    %1123 = vmatpush1.msra.mxu0 %v326
    %1124 = vmatprep.subr.mxu0 %v333
    %1125 = vmatpush1.msra.mxu0 %v332
    %1126 = vmatprep.subr.mxu0 %v339
    %1127 = vmatpush1.msra.mxu0 %v338
    %1128 = vmatprep.subr.mxu0 %v345
    %1129 = vmatpush1.msra.mxu0 %v344
    %1130 = vmatprep.subr.mxu0 %v351
    %1131 = vmatpush1.msra.mxu0 %v350
    %1132 = vmatprep.subr.mxu0 %v357
    %1133 = vmatpush1.msra.mxu0 %v356
    %1134 = vmatprep.subr.mxu0 %v363
    %1135 = vmatpush1.msra.mxu0 %v362
    %1136 = vmatprep.mubr.f32.mxu0 %v47
    %1137 = vmatmul.mubr.f32.gmra.mrb[0].mxu0 %v46
    %v1138 = vpop.f32.mrb[0].mxu0
    %v1139 = vadd.f32 0.0, %v1138
    %v1140 = vpop.f32.mrb[0].mxu0
    %v1141 = vadd.f32 0.0, %v1140
    %1142 = vmatprep.mubr.f32.mxu0 %v51
    %1143 = vmatmul.mubr.f32.gmra.mrb[0].mxu0 %v50
    %v1144 = vpop.f32.mrb[0].mxu0
    %v1145 = vadd.f32 0.0, %v1144
    %v1146 = vpop.f32.mrb[0].mxu0
    %v1147 = vadd.f32 0.0, %v1146
    %1148 = vmatprep.mubr.f32.mxu0 %v55
    %1149 = vmatmul.mubr.f32.gmra.mrb[0].mxu0 %v54
    %v1150 = vpop.f32.mrb[0].mxu0
    %v1151 = vadd.f32 0.0, %v1150
    %v1152 = vpop.f32.mrb[0].mxu0
    %v1153 = vadd.f32 0.0, %v1152
    %1154 = vmatprep.mubr.f32.mxu0 %v59
    %1155 = vmatmul.mubr.f32.gmra.mrb[0].mxu0 %v58
    %v1156 = vpop.f32.mrb[0].mxu0
    %v1157 = vadd.f32 0.0, %v1156
    %v1158 = vpop.f32.mrb[0].mxu0
    %v1159 = vadd.f32 0.0, %v1158
    %1160 = vmatprep.mubr.f32.mxu0 %v63
    %1161 = vmatmul.mubr.f32.gmra.mrb[0].mxu0 %v62
    %v1162 = vpop.f32.mrb[0].mxu0
    %v1163 = vadd.f32 0.0, %v1162
    %v1164 = vpop.f32.mrb[0].mxu0
    %v1165 = vadd.f32 0.0, %v1164
    %1166 = vmatprep.mubr.f32.mxu0 %v67
    %1167 = vmatmul.mubr.f32.gmra.mrb[0].mxu0 %v66
    %v1168 = vpop.f32.mrb[0].mxu0
    %v1169 = vadd.f32 0.0, %v1168
    %v1170 = vpop.f32.mrb[0].mxu0
    %v1171 = vadd.f32 0.0, %v1170
    %1172 = vmatprep.mubr.f32.mxu0 %v71
    %1173 = vmatmul.mubr.f32.gmra.mrb[0].mxu0 %v70
    %v1174 = vpop.f32.mrb[0].mxu0
    %v1175 = vadd.f32 0.0, %v1174
    %v1176 = vpop.f32.mrb[0].mxu0
    %v1177 = vadd.f32 0.0, %v1176
    %1178 = vmatprep.mubr.f32.mxu0 %v75
    %1179 = vmatmul.mubr.f32.gmra.mrb[0].mxu0 %v74
    %v1180 = vpop.f32.mrb[0].mxu0
    %v1181 = vadd.f32 0.0, %v1180
    %v1182 = vpop.f32.mrb[0].mxu0
    %v1183 = vadd.f32 0.0, %v1182
    %1184 = vmatprep.mubr.f32.mxu0 %v79
    %1185 = vmatmul.mubr.f32.gmra.mrb[0].mxu0 %v78
    %v1186 = vpop.f32.mrb[0].mxu0
    %v1187 = vadd.f32 0.0, %v1186
    %v1188 = vpop.f32.mrb[0].mxu0
    %v1189 = vadd.f32 0.0, %v1188
    %1190 = vmatprep.mubr.f32.mxu0 %v83
    %1191 = vmatmul.mubr.f32.gmra.mrb[0].mxu0 %v82
    %v1192 = vpop.f32.mrb[0].mxu0
    %v1193 = vadd.f32 0.0, %v1192
    %v1194 = vpop.f32.mrb[0].mxu0
    %v1195 = vadd.f32 0.0, %v1194
    %1196 = vmatprep.mubr.f32.mxu0 %v87
    %1197 = vmatmul.mubr.f32.gmra.mrb[0].mxu0 %v86
    %v1198 = vpop.f32.mrb[0].mxu0
    %v1199 = vadd.f32 0.0, %v1198
    %v1200 = vpop.f32.mrb[0].mxu0
    %v1201 = vadd.f32 0.0, %v1200
    %1202 = vmatprep.mubr.f32.mxu0 %v91
    %1203 = vmatmul.mubr.f32.gmra.mrb[0].mxu0 %v90
    %v1204 = vpop.f32.mrb[0].mxu0
    %v1205 = vadd.f32 0.0, %v1204
    %v1206 = vpop.f32.mrb[0].mxu0
    %v1207 = vadd.f32 0.0, %v1206
    %1208 = vmatprep.mubr.f32.mxu0 %v95
    %1209 = vmatmul.mubr.f32.gmra.mrb[0].mxu0 %v94
    %v1210 = vpop.f32.mrb[0].mxu0
    %v1211 = vadd.f32 0.0, %v1210
    %v1212 = vpop.f32.mrb[0].mxu0
    %v1213 = vadd.f32 0.0, %v1212
    %1214 = vmatprep.mubr.f32.mxu0 %v99
    %1215 = vmatmul.mubr.f32.gmra.mrb[0].mxu0 %v98
    %v1216 = vpop.f32.mrb[0].mxu0
    %v1217 = vadd.f32 0.0, %v1216
    %v1218 = vpop.f32.mrb[0].mxu0
    %v1219 = vadd.f32 0.0, %v1218
    %1220 = vmatprep.mubr.f32.mxu0 %v103
    %1221 = vmatmul.mubr.f32.gmra.mrb[0].mxu0 %v102
    %v1222 = vpop.f32.mrb[0].mxu0
    %v1223 = vadd.f32 0.0, %v1222
    %v1224 = vpop.f32.mrb[0].mxu0
    %v1225 = vadd.f32 0.0, %v1224
    %1226 = vmatprep.mubr.f32.mxu0 %v107
    %1227 = vmatmul.mubr.f32.gmra.mrb[0].mxu0 %v106
    %v1228 = vpop.f32.mrb[0].mxu0
    %v1229 = vadd.f32 0.0, %v1228
    %v1230 = vpop.f32.mrb[0].mxu0
    %v1231 = vadd.f32 0.0, %v1230
    %1232 = vmatprep.mubr.f32.mxu0 %v111
    %1233 = vmatmul.mubr.f32.gmra.mrb[0].mxu0 %v110
    %v1234 = vpop.f32.mrb[0].mxu0
    %v1235 = vadd.f32 0.0, %v1234
    %v1236 = vpop.f32.mrb[0].mxu0
    %v1237 = vadd.f32 0.0, %v1236
    %1238 = vmatprep.mubr.f32.mxu0 %v115
    %1239 = vmatmul.mubr.f32.gmra.mrb[0].mxu0 %v114
    %v1240 = vpop.f32.mrb[0].mxu0
    %v1241 = vadd.f32 0.0, %v1240
    %v1242 = vpop.f32.mrb[0].mxu0
    %v1243 = vadd.f32 0.0, %v1242
    %1244 = vmatprep.mubr.f32.mxu0 %v119
    %1245 = vmatmul.mubr.f32.gmra.mrb[0].mxu0 %v118
    %v1246 = vpop.f32.mrb[0].mxu0
    %v1247 = vadd.f32 0.0, %v1246
    %v1248 = vpop.f32.mrb[0].mxu0
    %v1249 = vadd.f32 0.0, %v1248
    %1250 = vmatprep.mubr.f32.mxu0 %v123
    %1251 = vmatmul.mubr.f32.gmra.mrb[0].mxu0 %v122
    %v1252 = vpop.f32.mrb[0].mxu0
    %v1253 = vadd.f32 0.0, %v1252
    %v1254 = vpop.f32.mrb[0].mxu0
    %v1255 = vadd.f32 0.0, %v1254
    %1256 = vmatprep.mubr.f32.mxu0 %v127
    %1257 = vmatmul.mubr.f32.gmra.mrb[0].mxu0 %v126
    %v1258 = vpop.f32.mrb[0].mxu0
    %v1259 = vadd.f32 0.0, %v1258
    %v1260 = vpop.f32.mrb[0].mxu0
    %v1261 = vadd.f32 0.0, %v1260
    %1262 = vmatprep.mubr.f32.mxu0 %v131
    %1263 = vmatmul.mubr.f32.gmra.mrb[0].mxu0 %v130
    %v1264 = vpop.f32.mrb[0].mxu0
    %v1265 = vadd.f32 0.0, %v1264
    %v1266 = vpop.f32.mrb[0].mxu0
    %v1267 = vadd.f32 0.0, %v1266
    %1268 = vmatprep.mubr.f32.mxu0 %v135
    %1269 = vmatmul.mubr.f32.gmra.mrb[0].mxu0 %v134
    %v1270 = vpop.f32.mrb[0].mxu0
    %v1271 = vadd.f32 0.0, %v1270
    %v1272 = vpop.f32.mrb[0].mxu0
    %v1273 = vadd.f32 0.0, %v1272
    %1274 = vmatprep.mubr.f32.mxu0 %v139
    %1275 = vmatmul.mubr.f32.gmra.mrb[0].mxu0 %v138
    %v1276 = vpop.f32.mrb[0].mxu0
    %v1277 = vadd.f32 0.0, %v1276
    %v1278 = vpop.f32.mrb[0].mxu0
    %v1279 = vadd.f32 0.0, %v1278
    %1280 = vmatprep.mubr.f32.mxu0 %v143
    %1281 = vmatmul.mubr.f32.gmra.mrb[0].mxu0 %v142
    %v1282 = vpop.f32.mrb[0].mxu0
    %v1283 = vadd.f32 0.0, %v1282
    %v1284 = vpop.f32.mrb[0].mxu0
    %v1285 = vadd.f32 0.0, %v1284
    %1286 = vmatprep.mubr.f32.mxu0 %v147
    %1287 = vmatmul.mubr.f32.gmra.mrb[0].mxu0 %v146
    %v1288 = vpop.f32.mrb[0].mxu0
    %v1289 = vadd.f32 0.0, %v1288
    %v1290 = vpop.f32.mrb[0].mxu0
    %v1291 = vadd.f32 0.0, %v1290
    %1292 = vmatprep.mubr.f32.mxu0 %v151
    %1293 = vmatmul.mubr.f32.gmra.mrb[0].mxu0 %v150
    %v1294 = vpop.f32.mrb[0].mxu0
    %v1295 = vadd.f32 0.0, %v1294
    %v1296 = vpop.f32.mrb[0].mxu0
    %v1297 = vadd.f32 0.0, %v1296
    %1298 = vmatprep.mubr.f32.mxu0 %v155
    %1299 = vmatmul.mubr.f32.gmra.mrb[0].mxu0 %v154
    %v1300 = vpop.f32.mrb[0].mxu0
    %v1301 = vadd.f32 0.0, %v1300
    %v1302 = vpop.f32.mrb[0].mxu0
    %v1303 = vadd.f32 0.0, %v1302
    %1304 = vmatprep.mubr.f32.mxu0 %v159
    %1305 = vmatmul.mubr.f32.gmra.mrb[0].mxu0 %v158
    %v1306 = vpop.f32.mrb[0].mxu0
    %v1307 = vadd.f32 0.0, %v1306
    %v1308 = vpop.f32.mrb[0].mxu0
    %v1309 = vadd.f32 0.0, %v1308
    %1310 = vmatprep.mubr.f32.mxu0 %v163
    %1311 = vmatmul.mubr.f32.gmra.mrb[0].mxu0 %v162
    %v1312 = vpop.f32.mrb[0].mxu0
    %v1313 = vadd.f32 0.0, %v1312
    %v1314 = vpop.f32.mrb[0].mxu0
    %v1315 = vadd.f32 0.0, %v1314
    %1316 = vmatprep.mubr.f32.mxu0 %v167
    %1317 = vmatmul.mubr.f32.gmra.mrb[0].mxu0 %v166
    %v1318 = vpop.f32.mrb[0].mxu0
    %v1319 = vadd.f32 0.0, %v1318
    %v1320 = vpop.f32.mrb[0].mxu0
    %v1321 = vadd.f32 0.0, %v1320
    %1322 = vmatprep.mubr.f32.mxu0 %v171
    %1323 = vmatmul.mubr.f32.gmra.mrb[0].mxu0 %v170
    %v1324 = vpop.f32.mrb[0].mxu0
    %v1325 = vadd.f32 0.0, %v1324
    %v1326 = vpop.f32.mrb[0].mxu0
    %v1327 = vadd.f32 0.0, %v1326
    %1328 = vdwg.mxu0
    %1329 = vmatprep.subr.mxu0 %v369
    %1330 = vmatpush1.msra.mxu0 %v368
    %1331 = vmatprep.subr.mxu0 %v375
    %1332 = vmatpush1.msra.mxu0 %v374
    %1333 = vmatprep.subr.mxu0 %v381
    %1334 = vmatpush1.msra.mxu0 %v380
    %1335 = vmatprep.subr.mxu0 %v387
    %1336 = vmatpush1.msra.mxu0 %v386
    %1337 = vmatprep.subr.mxu0 %v393
    %1338 = vmatpush1.msra.mxu0 %v392
    %1339 = vmatprep.subr.mxu0 %v399
    %1340 = vmatpush1.msra.mxu0 %v398
    %1341 = vmatprep.subr.mxu0 %v405
    %1342 = vmatpush1.msra.mxu0 %v404
    %1343 = vmatprep.subr.mxu0 %v411
    %1344 = vmatpush1.msra.mxu0 %v410
    %1345 = vmatprep.subr.mxu0 %v417
    %1346 = vmatpush1.msra.mxu0 %v416
    %1347 = vmatprep.subr.mxu0 %v423
    %1348 = vmatpush1.msra.mxu0 %v422
    %1349 = vmatprep.subr.mxu0 %v429
    %1350 = vmatpush1.msra.mxu0 %v428
    %1351 = vmatprep.subr.mxu0 %v435
    %1352 = vmatpush1.msra.mxu0 %v434
    %1353 = vmatprep.subr.mxu0 %v441
    %1354 = vmatpush1.msra.mxu0 %v440
    %1355 = vmatprep.subr.mxu0 %v447
    %1356 = vmatpush1.msra.mxu0 %v446
    %1357 = vmatprep.subr.mxu0 %v453
    %1358 = vmatpush1.msra.mxu0 %v452
    %1359 = vmatprep.subr.mxu0 %v459
    %1360 = vmatpush1.msra.mxu0 %v458
    %1361 = vmatprep.subr.mxu0 %v465
    %1362 = vmatpush1.msra.mxu0 %v464
    %1363 = vmatprep.subr.mxu0 %v471
    %1364 = vmatpush1.msra.mxu0 %v470
    %1365 = vmatprep.subr.mxu0 %v477
    %1366 = vmatpush1.msra.mxu0 %v476
    %1367 = vmatprep.subr.mxu0 %v483
    %1368 = vmatpush1.msra.mxu0 %v482
    %1369 = vmatprep.subr.mxu0 %v489
    %1370 = vmatpush1.msra.mxu0 %v488
    %1371 = vmatprep.subr.mxu0 %v495
    %1372 = vmatpush1.msra.mxu0 %v494
    %1373 = vmatprep.subr.mxu0 %v501
    %1374 = vmatpush1.msra.mxu0 %v500
    %1375 = vmatprep.subr.mxu0 %v507
    %1376 = vmatpush1.msra.mxu0 %v506
    %1377 = vmatprep.subr.mxu0 %v513
    %1378 = vmatpush1.msra.mxu0 %v512
    %1379 = vmatprep.subr.mxu0 %v519
    %1380 = vmatpush1.msra.mxu0 %v518
    %1381 = vmatprep.subr.mxu0 %v525
    %1382 = vmatpush1.msra.mxu0 %v524
    %1383 = vmatprep.subr.mxu0 %v531
    %1384 = vmatpush1.msra.mxu0 %v530
    %1385 = vmatprep.subr.mxu0 %v537
    %1386 = vmatpush1.msra.mxu0 %v536
    %1387 = vmatprep.subr.mxu0 %v543
    %1388 = vmatpush1.msra.mxu0 %v542
    %1389 = vmatprep.subr.mxu0 %v549
    %1390 = vmatpush1.msra.mxu0 %v548
    %1391 = vmatprep.subr.mxu0 %v555
    %1392 = vmatpush1.msra.mxu0 %v554
    %1393 = vmatprep.mubr.f32.mxu0 %v49
    %1394 = vmatmul.mubr.f32.gmra.mrb[0].mxu0 %v48
    %v1395 = vpop.f32.mrb[0].mxu0
    %v1396 = vadd.f32 %v1139, %v1395
    %v1397 = vpop.f32.mrb[0].mxu0
    %v1398 = vadd.f32 %v1141, %v1397
    %1399 = vmatprep.mubr.f32.mxu0 %v53
    %1400 = vmatmul.mubr.f32.gmra.mrb[0].mxu0 %v52
    %v1401 = vpop.f32.mrb[0].mxu0
    %v1402 = vadd.f32 %v1145, %v1401
    %v1403 = vpop.f32.mrb[0].mxu0
    %v1404 = vadd.f32 %v1147, %v1403
    %1405 = vmatprep.mubr.f32.mxu0 %v57
    %1406 = vmatmul.mubr.f32.gmra.mrb[0].mxu0 %v56
    %v1407 = vpop.f32.mrb[0].mxu0
    %v1408 = vadd.f32 %v1151, %v1407
    %v1409 = vpop.f32.mrb[0].mxu0
    %v1410 = vadd.f32 %v1153, %v1409
    %1411 = vmatprep.mubr.f32.mxu0 %v61
    %1412 = vmatmul.mubr.f32.gmra.mrb[0].mxu0 %v60
    %v1413 = vpop.f32.mrb[0].mxu0
    %v1414 = vadd.f32 %v1157, %v1413
    %v1415 = vpop.f32.mrb[0].mxu0
    %v1416 = vadd.f32 %v1159, %v1415
    %1417 = vmatprep.mubr.f32.mxu0 %v65
    %1418 = vmatmul.mubr.f32.gmra.mrb[0].mxu0 %v64
    %v1419 = vpop.f32.mrb[0].mxu0
    %v1420 = vadd.f32 %v1163, %v1419
    %v1421 = vpop.f32.mrb[0].mxu0
    %v1422 = vadd.f32 %v1165, %v1421
    %1423 = vmatprep.mubr.f32.mxu0 %v69
    %1424 = vmatmul.mubr.f32.gmra.mrb[0].mxu0 %v68
    %v1425 = vpop.f32.mrb[0].mxu0
    %v1426 = vadd.f32 %v1169, %v1425
    %v1427 = vpop.f32.mrb[0].mxu0
    %v1428 = vadd.f32 %v1171, %v1427
    %1429 = vmatprep.mubr.f32.mxu0 %v73
    %1430 = vmatmul.mubr.f32.gmra.mrb[0].mxu0 %v72
    %v1431 = vpop.f32.mrb[0].mxu0
    %v1432 = vadd.f32 %v1175, %v1431
    %v1433 = vpop.f32.mrb[0].mxu0
    %v1434 = vadd.f32 %v1177, %v1433
    %1435 = vmatprep.mubr.f32.mxu0 %v77
    %1436 = vmatmul.mubr.f32.gmra.mrb[0].mxu0 %v76
    %v1437 = vpop.f32.mrb[0].mxu0
    %v1438 = vadd.f32 %v1181, %v1437
    %v1439 = vpop.f32.mrb[0].mxu0
    %v1440 = vadd.f32 %v1183, %v1439
    %1441 = vmatprep.mubr.f32.mxu0 %v81
    %1442 = vmatmul.mubr.f32.gmra.mrb[0].mxu0 %v80
    %v1443 = vpop.f32.mrb[0].mxu0
    %v1444 = vadd.f32 %v1187, %v1443
    %v1445 = vpop.f32.mrb[0].mxu0
    %v1446 = vadd.f32 %v1189, %v1445
    %1447 = vmatprep.mubr.f32.mxu0 %v85
    %1448 = vmatmul.mubr.f32.gmra.mrb[0].mxu0 %v84
    %v1449 = vpop.f32.mrb[0].mxu0
    %v1450 = vadd.f32 %v1193, %v1449
    %v1451 = vpop.f32.mrb[0].mxu0
    %v1452 = vadd.f32 %v1195, %v1451
    %1453 = vmatprep.mubr.f32.mxu0 %v89
    %1454 = vmatmul.mubr.f32.gmra.mrb[0].mxu0 %v88
    %v1455 = vpop.f32.mrb[0].mxu0
    %v1456 = vadd.f32 %v1199, %v1455
    %v1457 = vpop.f32.mrb[0].mxu0
    %v1458 = vadd.f32 %v1201, %v1457
    %1459 = vmatprep.mubr.f32.mxu0 %v93
    %1460 = vmatmul.mubr.f32.gmra.mrb[0].mxu0 %v92
    %v1461 = vpop.f32.mrb[0].mxu0
    %v1462 = vadd.f32 %v1205, %v1461
    %v1463 = vpop.f32.mrb[0].mxu0
    %v1464 = vadd.f32 %v1207, %v1463
    %1465 = vmatprep.mubr.f32.mxu0 %v97
    %1466 = vmatmul.mubr.f32.gmra.mrb[0].mxu0 %v96
    %v1467 = vpop.f32.mrb[0].mxu0
    %v1468 = vadd.f32 %v1211, %v1467
    %v1469 = vpop.f32.mrb[0].mxu0
    %v1470 = vadd.f32 %v1213, %v1469
    %1471 = vmatprep.mubr.f32.mxu0 %v101
    %1472 = vmatmul.mubr.f32.gmra.mrb[0].mxu0 %v100
    %v1473 = vpop.f32.mrb[0].mxu0
    %v1474 = vadd.f32 %v1217, %v1473
    %v1475 = vpop.f32.mrb[0].mxu0
    %v1476 = vadd.f32 %v1219, %v1475
    %1477 = vmatprep.mubr.f32.mxu0 %v105
    %1478 = vmatmul.mubr.f32.gmra.mrb[0].mxu0 %v104
    %v1479 = vpop.f32.mrb[0].mxu0
    %v1480 = vadd.f32 %v1223, %v1479
    %v1481 = vpop.f32.mrb[0].mxu0
    %v1482 = vadd.f32 %v1225, %v1481
    %1483 = vmatprep.mubr.f32.mxu0 %v109
    %1484 = vmatmul.mubr.f32.gmra.mrb[0].mxu0 %v108
    %v1485 = vpop.f32.mrb[0].mxu0
    %v1486 = vadd.f32 %v1229, %v1485
    %v1487 = vpop.f32.mrb[0].mxu0
    %v1488 = vadd.f32 %v1231, %v1487
    %1489 = vmatprep.mubr.f32.mxu0 %v113
    %1490 = vmatmul.mubr.f32.gmra.mrb[0].mxu0 %v112
    %v1491 = vpop.f32.mrb[0].mxu0
    %v1492 = vadd.f32 %v1235, %v1491
    %v1493 = vpop.f32.mrb[0].mxu0
    %v1494 = vadd.f32 %v1237, %v1493
    %1495 = vmatprep.mubr.f32.mxu0 %v117
    %1496 = vmatmul.mubr.f32.gmra.mrb[0].mxu0 %v116
    %v1497 = vpop.f32.mrb[0].mxu0
    %v1498 = vadd.f32 %v1241, %v1497
    %v1499 = vpop.f32.mrb[0].mxu0
    %v1500 = vadd.f32 %v1243, %v1499
    %1501 = vmatprep.mubr.f32.mxu0 %v121
    %1502 = vmatmul.mubr.f32.gmra.mrb[0].mxu0 %v120
    %v1503 = vpop.f32.mrb[0].mxu0
    %v1504 = vadd.f32 %v1247, %v1503
    %v1505 = vpop.f32.mrb[0].mxu0
    %v1506 = vadd.f32 %v1249, %v1505
    %1507 = vmatprep.mubr.f32.mxu0 %v125
    %1508 = vmatmul.mubr.f32.gmra.mrb[0].mxu0 %v124
    %v1509 = vpop.f32.mrb[0].mxu0
    %v1510 = vadd.f32 %v1253, %v1509
    %v1511 = vpop.f32.mrb[0].mxu0
    %v1512 = vadd.f32 %v1255, %v1511
    %1513 = vmatprep.mubr.f32.mxu0 %v129
    %1514 = vmatmul.mubr.f32.gmra.mrb[0].mxu0 %v128
    %v1515 = vpop.f32.mrb[0].mxu0
    %v1516 = vadd.f32 %v1259, %v1515
    %v1517 = vpop.f32.mrb[0].mxu0
    %v1518 = vadd.f32 %v1261, %v1517
    %1519 = vmatprep.mubr.f32.mxu0 %v133
    %1520 = vmatmul.mubr.f32.gmra.mrb[0].mxu0 %v132
    %v1521 = vpop.f32.mrb[0].mxu0
    %v1522 = vadd.f32 %v1265, %v1521
    %v1523 = vpop.f32.mrb[0].mxu0
    %v1524 = vadd.f32 %v1267, %v1523
    %1525 = vmatprep.mubr.f32.mxu0 %v137
    %1526 = vmatmul.mubr.f32.gmra.mrb[0].mxu0 %v136
    %v1527 = vpop.f32.mrb[0].mxu0
    %v1528 = vadd.f32 %v1271, %v1527
    %v1529 = vpop.f32.mrb[0].mxu0
    %v1530 = vadd.f32 %v1273, %v1529
    %1531 = vmatprep.mubr.f32.mxu0 %v141
    %1532 = vmatmul.mubr.f32.gmra.mrb[0].mxu0 %v140
    %v1533 = vpop.f32.mrb[0].mxu0
    %v1534 = vadd.f32 %v1277, %v1533
    %v1535 = vpop.f32.mrb[0].mxu0
    %v1536 = vadd.f32 %v1279, %v1535
    %1537 = vmatprep.mubr.f32.mxu0 %v145
    %1538 = vmatmul.mubr.f32.gmra.mrb[0].mxu0 %v144
    %v1539 = vpop.f32.mrb[0].mxu0
    %v1540 = vadd.f32 %v1283, %v1539
    %v1541 = vpop.f32.mrb[0].mxu0
    %v1542 = vadd.f32 %v1285, %v1541
    %1543 = vmatprep.mubr.f32.mxu0 %v149
    %1544 = vmatmul.mubr.f32.gmra.mrb[0].mxu0 %v148
    %v1545 = vpop.f32.mrb[0].mxu0
    %v1546 = vadd.f32 %v1289, %v1545
    %v1547 = vpop.f32.mrb[0].mxu0
    %v1548 = vadd.f32 %v1291, %v1547
    %1549 = vmatprep.mubr.f32.mxu0 %v153
    %1550 = vmatmul.mubr.f32.gmra.mrb[0].mxu0 %v152
    %v1551 = vpop.f32.mrb[0].mxu0
    %v1552 = vadd.f32 %v1295, %v1551
    %v1553 = vpop.f32.mrb[0].mxu0
    %v1554 = vadd.f32 %v1297, %v1553
    %1555 = vmatprep.mubr.f32.mxu0 %v157
    %1556 = vmatmul.mubr.f32.gmra.mrb[0].mxu0 %v156
    %v1557 = vpop.f32.mrb[0].mxu0
    %v1558 = vadd.f32 %v1301, %v1557
    %v1559 = vpop.f32.mrb[0].mxu0
    %v1560 = vadd.f32 %v1303, %v1559
    %1561 = vmatprep.mubr.f32.mxu0 %v161
    %1562 = vmatmul.mubr.f32.gmra.mrb[0].mxu0 %v160
    %v1563 = vpop.f32.mrb[0].mxu0
    %v1564 = vadd.f32 %v1307, %v1563
    %v1565 = vpop.f32.mrb[0].mxu0
    %v1566 = vadd.f32 %v1309, %v1565
    %1567 = vmatprep.mubr.f32.mxu0 %v165
    %1568 = vmatmul.mubr.f32.gmra.mrb[0].mxu0 %v164
    %v1569 = vpop.f32.mrb[0].mxu0
    %v1570 = vadd.f32 %v1313, %v1569
    %v1571 = vpop.f32.mrb[0].mxu0
    %v1572 = vadd.f32 %v1315, %v1571
    %1573 = vmatprep.mubr.f32.mxu0 %v169
    %1574 = vmatmul.mubr.f32.gmra.mrb[0].mxu0 %v168
    %v1575 = vpop.f32.mrb[0].mxu0
    %v1576 = vadd.f32 %v1319, %v1575
    %v1577 = vpop.f32.mrb[0].mxu0
    %v1578 = vadd.f32 %v1321, %v1577
    %1579 = vmatprep.mubr.f32.mxu0 %v173
    %1580 = vmatmul.mubr.f32.gmra.mrb[0].mxu0 %v172
    %v1581 = vpop.f32.mrb[0].mxu0
    %v1582 = vadd.f32 %v1325, %v1581
    %v1583 = vpop.f32.mrb[0].mxu0
    %v1584 = vadd.f32 %v1327, %v1583
    %1585 = vdwg.mxu0
    %1586 = vmatprep.subr.mxu0 %v179
    %1587 = vmatpush1.msra.mxu0 %v178
    %1588 = vmatprep.subr.mxu0 %v185
    %1589 = vmatpush1.msra.mxu0 %v184
    %1590 = vmatprep.subr.mxu0 %v191
    %1591 = vmatpush1.msra.mxu0 %v190
    %1592 = vmatprep.subr.mxu0 %v197
    %1593 = vmatpush1.msra.mxu0 %v196
    %1594 = vmatprep.subr.mxu0 %v203
    %1595 = vmatpush1.msra.mxu0 %v202
    %1596 = vmatprep.subr.mxu0 %v209
    %1597 = vmatpush1.msra.mxu0 %v208
    %1598 = vmatprep.subr.mxu0 %v215
    %1599 = vmatpush1.msra.mxu0 %v214
    %1600 = vmatprep.subr.mxu0 %v221
    %1601 = vmatpush1.msra.mxu0 %v220
    %1602 = vmatprep.subr.mxu0 %v227
    %1603 = vmatpush1.msra.mxu0 %v226
    %1604 = vmatprep.subr.mxu0 %v233
    %1605 = vmatpush1.msra.mxu0 %v232
    %1606 = vmatprep.subr.mxu0 %v239
    %1607 = vmatpush1.msra.mxu0 %v238
    %1608 = vmatprep.subr.mxu0 %v245
    %1609 = vmatpush1.msra.mxu0 %v244
    %1610 = vmatprep.subr.mxu0 %v251
    %1611 = vmatpush1.msra.mxu0 %v250
    %1612 = vmatprep.subr.mxu0 %v257
    %1613 = vmatpush1.msra.mxu0 %v256
    %1614 = vmatprep.subr.mxu0 %v263
    %1615 = vmatpush1.msra.mxu0 %v262
    %1616 = vmatprep.subr.mxu0 %v269
    %1617 = vmatpush1.msra.mxu0 %v268
    %1618 = vmatprep.subr.mxu0 %v275
    %1619 = vmatpush1.msra.mxu0 %v274
    %1620 = vmatprep.subr.mxu0 %v281
    %1621 = vmatpush1.msra.mxu0 %v280
    %1622 = vmatprep.subr.mxu0 %v287
    %1623 = vmatpush1.msra.mxu0 %v286
    %1624 = vmatprep.subr.mxu0 %v293
    %1625 = vmatpush1.msra.mxu0 %v292
    %1626 = vmatprep.subr.mxu0 %v299
    %1627 = vmatpush1.msra.mxu0 %v298
    %1628 = vmatprep.subr.mxu0 %v305
    %1629 = vmatpush1.msra.mxu0 %v304
    %1630 = vmatprep.subr.mxu0 %v311
    %1631 = vmatpush1.msra.mxu0 %v310
    %1632 = vmatprep.subr.mxu0 %v317
    %1633 = vmatpush1.msra.mxu0 %v316
    %1634 = vmatprep.subr.mxu0 %v323
    %1635 = vmatpush1.msra.mxu0 %v322
    %1636 = vmatprep.subr.mxu0 %v329
    %1637 = vmatpush1.msra.mxu0 %v328
    %1638 = vmatprep.subr.mxu0 %v335
    %1639 = vmatpush1.msra.mxu0 %v334
    %1640 = vmatprep.subr.mxu0 %v341
    %1641 = vmatpush1.msra.mxu0 %v340
    %1642 = vmatprep.subr.mxu0 %v347
    %1643 = vmatpush1.msra.mxu0 %v346
    %1644 = vmatprep.subr.mxu0 %v353
    %1645 = vmatpush1.msra.mxu0 %v352
    %1646 = vmatprep.subr.mxu0 %v359
    %1647 = vmatpush1.msra.mxu0 %v358
    %1648 = vmatprep.subr.mxu0 %v365
    %1649 = vmatpush1.msra.mxu0 %v364
    %1650 = vmatprep.mubr.f32.mxu0 %v47
    %1651 = vmatmul.mubr.f32.gmra.mrb[0].mxu0 %v46
    %v1652 = vpop.f32.mrb[0].mxu0
    %v1653 = vadd.f32 0.0, %v1652
    %v1654 = vpop.f32.mrb[0].mxu0
    %v1655 = vadd.f32 0.0, %v1654
    %1656 = vmatprep.mubr.f32.mxu0 %v51
    %1657 = vmatmul.mubr.f32.gmra.mrb[0].mxu0 %v50
    %v1658 = vpop.f32.mrb[0].mxu0
    %v1659 = vadd.f32 0.0, %v1658
    %v1660 = vpop.f32.mrb[0].mxu0
    %v1661 = vadd.f32 0.0, %v1660
    %1662 = vmatprep.mubr.f32.mxu0 %v55
    %1663 = vmatmul.mubr.f32.gmra.mrb[0].mxu0 %v54
    %v1664 = vpop.f32.mrb[0].mxu0
    %v1665 = vadd.f32 0.0, %v1664
    %v1666 = vpop.f32.mrb[0].mxu0
    %v1667 = vadd.f32 0.0, %v1666
    %1668 = vmatprep.mubr.f32.mxu0 %v59
    %1669 = vmatmul.mubr.f32.gmra.mrb[0].mxu0 %v58
    %v1670 = vpop.f32.mrb[0].mxu0
    %v1671 = vadd.f32 0.0, %v1670
    %v1672 = vpop.f32.mrb[0].mxu0
    %v1673 = vadd.f32 0.0, %v1672
    %1674 = vmatprep.mubr.f32.mxu0 %v63
    %1675 = vmatmul.mubr.f32.gmra.mrb[0].mxu0 %v62
    %v1676 = vpop.f32.mrb[0].mxu0
    %v1677 = vadd.f32 0.0, %v1676
    %v1678 = vpop.f32.mrb[0].mxu0
    %v1679 = vadd.f32 0.0, %v1678
    %1680 = vmatprep.mubr.f32.mxu0 %v67
    %1681 = vmatmul.mubr.f32.gmra.mrb[0].mxu0 %v66
    %v1682 = vpop.f32.mrb[0].mxu0
    %v1683 = vadd.f32 0.0, %v1682
    %v1684 = vpop.f32.mrb[0].mxu0
    %v1685 = vadd.f32 0.0, %v1684
    %1686 = vmatprep.mubr.f32.mxu0 %v71
    %1687 = vmatmul.mubr.f32.gmra.mrb[0].mxu0 %v70
    %v1688 = vpop.f32.mrb[0].mxu0
    %v1689 = vadd.f32 0.0, %v1688
    %v1690 = vpop.f32.mrb[0].mxu0
    %v1691 = vadd.f32 0.0, %v1690
    %1692 = vmatprep.mubr.f32.mxu0 %v75
    %1693 = vmatmul.mubr.f32.gmra.mrb[0].mxu0 %v74
    %v1694 = vpop.f32.mrb[0].mxu0
    %v1695 = vadd.f32 0.0, %v1694
    %v1696 = vpop.f32.mrb[0].mxu0
    %v1697 = vadd.f32 0.0, %v1696
    %1698 = vmatprep.mubr.f32.mxu0 %v79
    %1699 = vmatmul.mubr.f32.gmra.mrb[0].mxu0 %v78
    %v1700 = vpop.f32.mrb[0].mxu0
    %v1701 = vadd.f32 0.0, %v1700
    %v1702 = vpop.f32.mrb[0].mxu0
    %v1703 = vadd.f32 0.0, %v1702
    %1704 = vmatprep.mubr.f32.mxu0 %v83
    %1705 = vmatmul.mubr.f32.gmra.mrb[0].mxu0 %v82
    %v1706 = vpop.f32.mrb[0].mxu0
    %v1707 = vadd.f32 0.0, %v1706
    %v1708 = vpop.f32.mrb[0].mxu0
    %v1709 = vadd.f32 0.0, %v1708
    %1710 = vmatprep.mubr.f32.mxu0 %v87
    %1711 = vmatmul.mubr.f32.gmra.mrb[0].mxu0 %v86
    %v1712 = vpop.f32.mrb[0].mxu0
    %v1713 = vadd.f32 0.0, %v1712
    %v1714 = vpop.f32.mrb[0].mxu0
    %v1715 = vadd.f32 0.0, %v1714
    %1716 = vmatprep.mubr.f32.mxu0 %v91
    %1717 = vmatmul.mubr.f32.gmra.mrb[0].mxu0 %v90
    %v1718 = vpop.f32.mrb[0].mxu0
    %v1719 = vadd.f32 0.0, %v1718
    %v1720 = vpop.f32.mrb[0].mxu0
    %v1721 = vadd.f32 0.0, %v1720
    %1722 = vmatprep.mubr.f32.mxu0 %v95
    %1723 = vmatmul.mubr.f32.gmra.mrb[0].mxu0 %v94
    %v1724 = vpop.f32.mrb[0].mxu0
    %v1725 = vadd.f32 0.0, %v1724
    %v1726 = vpop.f32.mrb[0].mxu0
    %v1727 = vadd.f32 0.0, %v1726
    %1728 = vmatprep.mubr.f32.mxu0 %v99
    %1729 = vmatmul.mubr.f32.gmra.mrb[0].mxu0 %v98
    %v1730 = vpop.f32.mrb[0].mxu0
    %v1731 = vadd.f32 0.0, %v1730
    %v1732 = vpop.f32.mrb[0].mxu0
    %v1733 = vadd.f32 0.0, %v1732
    %1734 = vmatprep.mubr.f32.mxu0 %v103
    %1735 = vmatmul.mubr.f32.gmra.mrb[0].mxu0 %v102
    %v1736 = vpop.f32.mrb[0].mxu0
    %v1737 = vadd.f32 0.0, %v1736
    %v1738 = vpop.f32.mrb[0].mxu0
    %v1739 = vadd.f32 0.0, %v1738
    %1740 = vmatprep.mubr.f32.mxu0 %v107
    %1741 = vmatmul.mubr.f32.gmra.mrb[0].mxu0 %v106
    %v1742 = vpop.f32.mrb[0].mxu0
    %v1743 = vadd.f32 0.0, %v1742
    %v1744 = vpop.f32.mrb[0].mxu0
    %v1745 = vadd.f32 0.0, %v1744
    %1746 = vmatprep.mubr.f32.mxu0 %v111
    %1747 = vmatmul.mubr.f32.gmra.mrb[0].mxu0 %v110
    %v1748 = vpop.f32.mrb[0].mxu0
    %v1749 = vadd.f32 0.0, %v1748
    %v1750 = vpop.f32.mrb[0].mxu0
    %v1751 = vadd.f32 0.0, %v1750
    %1752 = vmatprep.mubr.f32.mxu0 %v115
    %1753 = vmatmul.mubr.f32.gmra.mrb[0].mxu0 %v114
    %v1754 = vpop.f32.mrb[0].mxu0
    %v1755 = vadd.f32 0.0, %v1754
    %v1756 = vpop.f32.mrb[0].mxu0
    %v1757 = vadd.f32 0.0, %v1756
    %1758 = vmatprep.mubr.f32.mxu0 %v119
    %1759 = vmatmul.mubr.f32.gmra.mrb[0].mxu0 %v118
    %v1760 = vpop.f32.mrb[0].mxu0
    %v1761 = vadd.f32 0.0, %v1760
    %v1762 = vpop.f32.mrb[0].mxu0
    %v1763 = vadd.f32 0.0, %v1762
    %1764 = vmatprep.mubr.f32.mxu0 %v123
    %1765 = vmatmul.mubr.f32.gmra.mrb[0].mxu0 %v122
    %v1766 = vpop.f32.mrb[0].mxu0
    %v1767 = vadd.f32 0.0, %v1766
    %v1768 = vpop.f32.mrb[0].mxu0
    %v1769 = vadd.f32 0.0, %v1768
    %1770 = vmatprep.mubr.f32.mxu0 %v127
    %1771 = vmatmul.mubr.f32.gmra.mrb[0].mxu0 %v126
    %v1772 = vpop.f32.mrb[0].mxu0
    %v1773 = vadd.f32 0.0, %v1772
    %v1774 = vpop.f32.mrb[0].mxu0
    %v1775 = vadd.f32 0.0, %v1774
    %1776 = vmatprep.mubr.f32.mxu0 %v131
    %1777 = vmatmul.mubr.f32.gmra.mrb[0].mxu0 %v130
    %v1778 = vpop.f32.mrb[0].mxu0
    %v1779 = vadd.f32 0.0, %v1778
    %v1780 = vpop.f32.mrb[0].mxu0
    %v1781 = vadd.f32 0.0, %v1780
    %1782 = vmatprep.mubr.f32.mxu0 %v135
    %1783 = vmatmul.mubr.f32.gmra.mrb[0].mxu0 %v134
    %v1784 = vpop.f32.mrb[0].mxu0
    %v1785 = vadd.f32 0.0, %v1784
    %v1786 = vpop.f32.mrb[0].mxu0
    %v1787 = vadd.f32 0.0, %v1786
    %1788 = vmatprep.mubr.f32.mxu0 %v139
    %1789 = vmatmul.mubr.f32.gmra.mrb[0].mxu0 %v138
    %v1790 = vpop.f32.mrb[0].mxu0
    %v1791 = vadd.f32 0.0, %v1790
    %v1792 = vpop.f32.mrb[0].mxu0
    %v1793 = vadd.f32 0.0, %v1792
    %1794 = vmatprep.mubr.f32.mxu0 %v143
    %1795 = vmatmul.mubr.f32.gmra.mrb[0].mxu0 %v142
    %v1796 = vpop.f32.mrb[0].mxu0
    %v1797 = vadd.f32 0.0, %v1796
    %v1798 = vpop.f32.mrb[0].mxu0
    %v1799 = vadd.f32 0.0, %v1798
    %1800 = vmatprep.mubr.f32.mxu0 %v147
    %1801 = vmatmul.mubr.f32.gmra.mrb[0].mxu0 %v146
    %v1802 = vpop.f32.mrb[0].mxu0
    %v1803 = vadd.f32 0.0, %v1802
    %v1804 = vpop.f32.mrb[0].mxu0
    %v1805 = vadd.f32 0.0, %v1804
    %1806 = vmatprep.mubr.f32.mxu0 %v151
    %1807 = vmatmul.mubr.f32.gmra.mrb[0].mxu0 %v150
    %v1808 = vpop.f32.mrb[0].mxu0
    %v1809 = vadd.f32 0.0, %v1808
    %v1810 = vpop.f32.mrb[0].mxu0
    %v1811 = vadd.f32 0.0, %v1810
    %1812 = vmatprep.mubr.f32.mxu0 %v155
    %1813 = vmatmul.mubr.f32.gmra.mrb[0].mxu0 %v154
    %v1814 = vpop.f32.mrb[0].mxu0
    %v1815 = vadd.f32 0.0, %v1814
    %v1816 = vpop.f32.mrb[0].mxu0
    %v1817 = vadd.f32 0.0, %v1816
    %1818 = vmatprep.mubr.f32.mxu0 %v159
    %1819 = vmatmul.mubr.f32.gmra.mrb[0].mxu0 %v158
    %v1820 = vpop.f32.mrb[0].mxu0
    %v1821 = vadd.f32 0.0, %v1820
    %v1822 = vpop.f32.mrb[0].mxu0
    %v1823 = vadd.f32 0.0, %v1822
    %1824 = vmatprep.mubr.f32.mxu0 %v163
    %1825 = vmatmul.mubr.f32.gmra.mrb[0].mxu0 %v162
    %v1826 = vpop.f32.mrb[0].mxu0
    %v1827 = vadd.f32 0.0, %v1826
    %v1828 = vpop.f32.mrb[0].mxu0
    %v1829 = vadd.f32 0.0, %v1828
    %1830 = vmatprep.mubr.f32.mxu0 %v167
    %1831 = vmatmul.mubr.f32.gmra.mrb[0].mxu0 %v166
    %v1832 = vpop.f32.mrb[0].mxu0
    %v1833 = vadd.f32 0.0, %v1832
    %v1834 = vpop.f32.mrb[0].mxu0
    %v1835 = vadd.f32 0.0, %v1834
    %1836 = vmatprep.mubr.f32.mxu0 %v171
    %1837 = vmatmul.mubr.f32.gmra.mrb[0].mxu0 %v170
    %v1838 = vpop.f32.mrb[0].mxu0
    %v1839 = vadd.f32 0.0, %v1838
    %v1840 = vpop.f32.mrb[0].mxu0
    %v1841 = vadd.f32 0.0, %v1840
    %1842 = vdwg.mxu0
    %1843 = vmatprep.subr.mxu0 %v371
    %1844 = vmatpush1.msra.mxu0 %v370
    %1845 = vmatprep.subr.mxu0 %v377
    %1846 = vmatpush1.msra.mxu0 %v376
    %1847 = vmatprep.subr.mxu0 %v383
    %1848 = vmatpush1.msra.mxu0 %v382
    %1849 = vmatprep.subr.mxu0 %v389
    %1850 = vmatpush1.msra.mxu0 %v388
    %1851 = vmatprep.subr.mxu0 %v395
    %1852 = vmatpush1.msra.mxu0 %v394
    %1853 = vmatprep.subr.mxu0 %v401
    %1854 = vmatpush1.msra.mxu0 %v400
    %1855 = vmatprep.subr.mxu0 %v407
    %1856 = vmatpush1.msra.mxu0 %v406
    %1857 = vmatprep.subr.mxu0 %v413
    %1858 = vmatpush1.msra.mxu0 %v412
    %1859 = vmatprep.subr.mxu0 %v419
    %1860 = vmatpush1.msra.mxu0 %v418
    %1861 = vmatprep.subr.mxu0 %v425
    %1862 = vmatpush1.msra.mxu0 %v424
    %1863 = vmatprep.subr.mxu0 %v431
    %1864 = vmatpush1.msra.mxu0 %v430
    %1865 = vmatprep.subr.mxu0 %v437
    %1866 = vmatpush1.msra.mxu0 %v436
    %1867 = vmatprep.subr.mxu0 %v443
    %1868 = vmatpush1.msra.mxu0 %v442
    %1869 = vmatprep.subr.mxu0 %v449
    %1870 = vmatpush1.msra.mxu0 %v448
    %1871 = vmatprep.subr.mxu0 %v455
    %1872 = vmatpush1.msra.mxu0 %v454
    %1873 = vmatprep.subr.mxu0 %v461
    %1874 = vmatpush1.msra.mxu0 %v460
    %1875 = vmatprep.subr.mxu0 %v467
    %1876 = vmatpush1.msra.mxu0 %v466
    %1877 = vmatprep.subr.mxu0 %v473
    %1878 = vmatpush1.msra.mxu0 %v472
    %1879 = vmatprep.subr.mxu0 %v479
    %1880 = vmatpush1.msra.mxu0 %v478
    %1881 = vmatprep.subr.mxu0 %v485
    %1882 = vmatpush1.msra.mxu0 %v484
    %1883 = vmatprep.subr.mxu0 %v491
    %1884 = vmatpush1.msra.mxu0 %v490
    %1885 = vmatprep.subr.mxu0 %v497
    %1886 = vmatpush1.msra.mxu0 %v496
    %1887 = vmatprep.subr.mxu0 %v503
    %1888 = vmatpush1.msra.mxu0 %v502
    %1889 = vmatprep.subr.mxu0 %v509
    %1890 = vmatpush1.msra.mxu0 %v508
    %1891 = vmatprep.subr.mxu0 %v515
    %1892 = vmatpush1.msra.mxu0 %v514
    %1893 = vmatprep.subr.mxu0 %v521
    %1894 = vmatpush1.msra.mxu0 %v520
    %1895 = vmatprep.subr.mxu0 %v527
    %1896 = vmatpush1.msra.mxu0 %v526
    %1897 = vmatprep.subr.mxu0 %v533
    %1898 = vmatpush1.msra.mxu0 %v532
    %1899 = vmatprep.subr.mxu0 %v539
    %1900 = vmatpush1.msra.mxu0 %v538
    %1901 = vmatprep.subr.mxu0 %v545
    %1902 = vmatpush1.msra.mxu0 %v544
    %1903 = vmatprep.subr.mxu0 %v551
    %1904 = vmatpush1.msra.mxu0 %v550
    %1905 = vmatprep.subr.mxu0 %v557
    %1906 = vmatpush1.msra.mxu0 %v556
    %1907 = vmatprep.mubr.f32.mxu0 %v49
    %1908 = vmatmul.mubr.f32.gmra.mrb[0].mxu0 %v48
    %v1909 = vpop.f32.mrb[0].mxu0
    %v1910 = vadd.f32 %v1653, %v1909
    %v1911 = vpop.f32.mrb[0].mxu0
    %v1912 = vadd.f32 %v1655, %v1911
    %1913 = vmatprep.mubr.f32.mxu0 %v53
    %1914 = vmatmul.mubr.f32.gmra.mrb[0].mxu0 %v52
    %v1915 = vpop.f32.mrb[0].mxu0
    %v1916 = vadd.f32 %v1659, %v1915
    %v1917 = vpop.f32.mrb[0].mxu0
    %v1918 = vadd.f32 %v1661, %v1917
    %1919 = vmatprep.mubr.f32.mxu0 %v57
    %1920 = vmatmul.mubr.f32.gmra.mrb[0].mxu0 %v56
    %v1921 = vpop.f32.mrb[0].mxu0
    %v1922 = vadd.f32 %v1665, %v1921
    %v1923 = vpop.f32.mrb[0].mxu0
    %v1924 = vadd.f32 %v1667, %v1923
    %1925 = vmatprep.mubr.f32.mxu0 %v61
    %1926 = vmatmul.mubr.f32.gmra.mrb[0].mxu0 %v60
    %v1927 = vpop.f32.mrb[0].mxu0
    %v1928 = vadd.f32 %v1671, %v1927
    %v1929 = vpop.f32.mrb[0].mxu0
    %v1930 = vadd.f32 %v1673, %v1929
    %1931 = vmatprep.mubr.f32.mxu0 %v65
    %1932 = vmatmul.mubr.f32.gmra.mrb[0].mxu0 %v64
    %v1933 = vpop.f32.mrb[0].mxu0
    %v1934 = vadd.f32 %v1677, %v1933
    %v1935 = vpop.f32.mrb[0].mxu0
    %v1936 = vadd.f32 %v1679, %v1935
    %1937 = vmatprep.mubr.f32.mxu0 %v69
    %1938 = vmatmul.mubr.f32.gmra.mrb[0].mxu0 %v68
    %v1939 = vpop.f32.mrb[0].mxu0
    %v1940 = vadd.f32 %v1683, %v1939
    %v1941 = vpop.f32.mrb[0].mxu0
    %v1942 = vadd.f32 %v1685, %v1941
    %1943 = vmatprep.mubr.f32.mxu0 %v73
    %1944 = vmatmul.mubr.f32.gmra.mrb[0].mxu0 %v72
    %v1945 = vpop.f32.mrb[0].mxu0
    %v1946 = vadd.f32 %v1689, %v1945
    %v1947 = vpop.f32.mrb[0].mxu0
    %v1948 = vadd.f32 %v1691, %v1947
    %1949 = vmatprep.mubr.f32.mxu0 %v77
    %1950 = vmatmul.mubr.f32.gmra.mrb[0].mxu0 %v76
    %v1951 = vpop.f32.mrb[0].mxu0
    %v1952 = vadd.f32 %v1695, %v1951
    %v1953 = vpop.f32.mrb[0].mxu0
    %v1954 = vadd.f32 %v1697, %v1953
    %1955 = vmatprep.mubr.f32.mxu0 %v81
    %1956 = vmatmul.mubr.f32.gmra.mrb[0].mxu0 %v80
    %v1957 = vpop.f32.mrb[0].mxu0
    %v1958 = vadd.f32 %v1701, %v1957
    %v1959 = vpop.f32.mrb[0].mxu0
    %v1960 = vadd.f32 %v1703, %v1959
    %1961 = vmatprep.mubr.f32.mxu0 %v85
    %1962 = vmatmul.mubr.f32.gmra.mrb[0].mxu0 %v84
    %v1963 = vpop.f32.mrb[0].mxu0
    %v1964 = vadd.f32 %v1707, %v1963
    %v1965 = vpop.f32.mrb[0].mxu0
    %v1966 = vadd.f32 %v1709, %v1965
    %1967 = vmatprep.mubr.f32.mxu0 %v89
    %1968 = vmatmul.mubr.f32.gmra.mrb[0].mxu0 %v88
    %v1969 = vpop.f32.mrb[0].mxu0
    %v1970 = vadd.f32 %v1713, %v1969
    %v1971 = vpop.f32.mrb[0].mxu0
    %v1972 = vadd.f32 %v1715, %v1971
    %1973 = vmatprep.mubr.f32.mxu0 %v93
    %1974 = vmatmul.mubr.f32.gmra.mrb[0].mxu0 %v92
    %v1975 = vpop.f32.mrb[0].mxu0
    %v1976 = vadd.f32 %v1719, %v1975
    %v1977 = vpop.f32.mrb[0].mxu0
    %v1978 = vadd.f32 %v1721, %v1977
    %1979 = vmatprep.mubr.f32.mxu0 %v97
    %1980 = vmatmul.mubr.f32.gmra.mrb[0].mxu0 %v96
    %v1981 = vpop.f32.mrb[0].mxu0
    %v1982 = vadd.f32 %v1725, %v1981
    %v1983 = vpop.f32.mrb[0].mxu0
    %v1984 = vadd.f32 %v1727, %v1983
    %1985 = vmatprep.mubr.f32.mxu0 %v101
    %1986 = vmatmul.mubr.f32.gmra.mrb[0].mxu0 %v100
    %v1987 = vpop.f32.mrb[0].mxu0
    %v1988 = vadd.f32 %v1731, %v1987
    %v1989 = vpop.f32.mrb[0].mxu0
    %v1990 = vadd.f32 %v1733, %v1989
    %1991 = vmatprep.mubr.f32.mxu0 %v105
    %1992 = vmatmul.mubr.f32.gmra.mrb[0].mxu0 %v104
    %v1993 = vpop.f32.mrb[0].mxu0
    %v1994 = vadd.f32 %v1737, %v1993
    %v1995 = vpop.f32.mrb[0].mxu0
    %v1996 = vadd.f32 %v1739, %v1995
    %1997 = vmatprep.mubr.f32.mxu0 %v109
    %1998 = vmatmul.mubr.f32.gmra.mrb[0].mxu0 %v108
    %v1999 = vpop.f32.mrb[0].mxu0
    %v2000 = vadd.f32 %v1743, %v1999
    %v2001 = vpop.f32.mrb[0].mxu0
    %v2002 = vadd.f32 %v1745, %v2001
    %2003 = vmatprep.mubr.f32.mxu0 %v113
    %2004 = vmatmul.mubr.f32.gmra.mrb[0].mxu0 %v112
    %v2005 = vpop.f32.mrb[0].mxu0
    %v2006 = vadd.f32 %v1749, %v2005
    %v2007 = vpop.f32.mrb[0].mxu0
    %v2008 = vadd.f32 %v1751, %v2007
    %2009 = vmatprep.mubr.f32.mxu0 %v117
    %2010 = vmatmul.mubr.f32.gmra.mrb[0].mxu0 %v116
    %v2011 = vpop.f32.mrb[0].mxu0
    %v2012 = vadd.f32 %v1755, %v2011
    %v2013 = vpop.f32.mrb[0].mxu0
    %v2014 = vadd.f32 %v1757, %v2013
    %2015 = vmatprep.mubr.f32.mxu0 %v121
    %2016 = vmatmul.mubr.f32.gmra.mrb[0].mxu0 %v120
    %v2017 = vpop.f32.mrb[0].mxu0
    %v2018 = vadd.f32 %v1761, %v2017
    %v2019 = vpop.f32.mrb[0].mxu0
    %v2020 = vadd.f32 %v1763, %v2019
    %2021 = vmatprep.mubr.f32.mxu0 %v125
    %2022 = vmatmul.mubr.f32.gmra.mrb[0].mxu0 %v124
    %v2023 = vpop.f32.mrb[0].mxu0
    %v2024 = vadd.f32 %v1767, %v2023
    %v2025 = vpop.f32.mrb[0].mxu0
    %v2026 = vadd.f32 %v1769, %v2025
    %2027 = vmatprep.mubr.f32.mxu0 %v129
    %2028 = vmatmul.mubr.f32.gmra.mrb[0].mxu0 %v128
    %v2029 = vpop.f32.mrb[0].mxu0
    %v2030 = vadd.f32 %v1773, %v2029
    %v2031 = vpop.f32.mrb[0].mxu0
    %v2032 = vadd.f32 %v1775, %v2031
    %2033 = vmatprep.mubr.f32.mxu0 %v133
    %2034 = vmatmul.mubr.f32.gmra.mrb[0].mxu0 %v132
    %v2035 = vpop.f32.mrb[0].mxu0
    %v2036 = vadd.f32 %v1779, %v2035
    %v2037 = vpop.f32.mrb[0].mxu0
    %v2038 = vadd.f32 %v1781, %v2037
    %2039 = vmatprep.mubr.f32.mxu0 %v137
    %2040 = vmatmul.mubr.f32.gmra.mrb[0].mxu0 %v136
    %v2041 = vpop.f32.mrb[0].mxu0
    %v2042 = vadd.f32 %v1785, %v2041
    %v2043 = vpop.f32.mrb[0].mxu0
    %v2044 = vadd.f32 %v1787, %v2043
    %2045 = vmatprep.mubr.f32.mxu0 %v141
    %2046 = vmatmul.mubr.f32.gmra.mrb[0].mxu0 %v140
    %v2047 = vpop.f32.mrb[0].mxu0
    %v2048 = vadd.f32 %v1791, %v2047
    %v2049 = vpop.f32.mrb[0].mxu0
    %v2050 = vadd.f32 %v1793, %v2049
    %2051 = vmatprep.mubr.f32.mxu0 %v145
    %2052 = vmatmul.mubr.f32.gmra.mrb[0].mxu0 %v144
    %v2053 = vpop.f32.mrb[0].mxu0
    %v2054 = vadd.f32 %v1797, %v2053
    %v2055 = vpop.f32.mrb[0].mxu0
    %v2056 = vadd.f32 %v1799, %v2055
    %2057 = vmatprep.mubr.f32.mxu0 %v149
    %2058 = vmatmul.mubr.f32.gmra.mrb[0].mxu0 %v148
    %v2059 = vpop.f32.mrb[0].mxu0
    %v2060 = vadd.f32 %v1803, %v2059
    %v2061 = vpop.f32.mrb[0].mxu0
    %v2062 = vadd.f32 %v1805, %v2061
    %2063 = vmatprep.mubr.f32.mxu0 %v153
    %2064 = vmatmul.mubr.f32.gmra.mrb[0].mxu0 %v152
    %v2065 = vpop.f32.mrb[0].mxu0
    %v2066 = vadd.f32 %v1809, %v2065
    %v2067 = vpop.f32.mrb[0].mxu0
    %v2068 = vadd.f32 %v1811, %v2067
    %2069 = vmatprep.mubr.f32.mxu0 %v157
    %2070 = vmatmul.mubr.f32.gmra.mrb[0].mxu0 %v156
    %v2071 = vpop.f32.mrb[0].mxu0
    %v2072 = vadd.f32 %v1815, %v2071
    %v2073 = vpop.f32.mrb[0].mxu0
    %v2074 = vadd.f32 %v1817, %v2073
    %2075 = vmatprep.mubr.f32.mxu0 %v161
    %2076 = vmatmul.mubr.f32.gmra.mrb[0].mxu0 %v160
    %v2077 = vpop.f32.mrb[0].mxu0
    %v2078 = vadd.f32 %v1821, %v2077
    %v2079 = vpop.f32.mrb[0].mxu0
    %v2080 = vadd.f32 %v1823, %v2079
    %2081 = vmatprep.mubr.f32.mxu0 %v165
    %2082 = vmatmul.mubr.f32.gmra.mrb[0].mxu0 %v164
    %v2083 = vpop.f32.mrb[0].mxu0
    %v2084 = vadd.f32 %v1827, %v2083
    %v2085 = vpop.f32.mrb[0].mxu0
    %v2086 = vadd.f32 %v1829, %v2085
    %2087 = vmatprep.mubr.f32.mxu0 %v169
    %2088 = vmatmul.mubr.f32.gmra.mrb[0].mxu0 %v168
    %v2089 = vpop.f32.mrb[0].mxu0
    %v2090 = vadd.f32 %v1833, %v2089
    %v2091 = vpop.f32.mrb[0].mxu0
    %v2092 = vadd.f32 %v1835, %v2091
    %2093 = vmatprep.mubr.f32.mxu0 %v173
    %2094 = vmatmul.mubr.f32.gmra.mrb[0].mxu0 %v172
    %v2095 = vpop.f32.mrb[0].mxu0
    %v2096 = vadd.f32 %v1839, %v2095
    %v2097 = vpop.f32.mrb[0].mxu0
    %v2098 = vadd.f32 %v1841, %v2097
    %2099 = vdwg.mxu0
    %v2100 = vmax.f32 %v882, %v894
    %v2101 = vmax.f32 %v884, %v896
    %v2102 = vmax.f32 %v1396, %v1408
    %v2103 = vmax.f32 %v1398, %v1410
    %v2104 = vmax.f32 %v1910, %v1922
    %v2105 = vmax.f32 %v1912, %v1924
    %v2106 = vmax.f32 %v888, %v900
    %v2107 = vmax.f32 %v890, %v902
    %v2108 = vmax.f32 %v1402, %v1414
    %v2109 = vmax.f32 %v1404, %v1416
    %v2110 = vmax.f32 %v1916, %v1928
    %v2111 = vmax.f32 %v1918, %v1930
    %v2112 = vmax.f32 %v906, %v918
    %v2113 = vmax.f32 %v908, %v920
    %v2114 = vmax.f32 %v1420, %v1432
    %v2115 = vmax.f32 %v1422, %v1434
    %v2116 = vmax.f32 %v1934, %v1946
    %v2117 = vmax.f32 %v1936, %v1948
    %v2118 = vmax.f32 %v912, %v924
    %v2119 = vmax.f32 %v914, %v926
    %v2120 = vmax.f32 %v1426, %v1438
    %v2121 = vmax.f32 %v1428, %v1440
    %v2122 = vmax.f32 %v1940, %v1952
    %v2123 = vmax.f32 %v1942, %v1954
    %v2124 = vmax.f32 %v930, %v942
    %v2125 = vmax.f32 %v932, %v944
    %v2126 = vmax.f32 %v1444, %v1456
    %v2127 = vmax.f32 %v1446, %v1458
    %v2128 = vmax.f32 %v1958, %v1970
    %v2129 = vmax.f32 %v1960, %v1972
    %v2130 = vmax.f32 %v936, %v948
    %v2131 = vmax.f32 %v938, %v950
    %v2132 = vmax.f32 %v1450, %v1462
    %v2133 = vmax.f32 %v1452, %v1464
    %v2134 = vmax.f32 %v1964, %v1976
    %v2135 = vmax.f32 %v1966, %v1978
    %v2136 = vmax.f32 %v954, %v966
    %v2137 = vmax.f32 %v956, %v968
    %v2138 = vmax.f32 %v1468, %v1480
    %v2139 = vmax.f32 %v1470, %v1482
    %v2140 = vmax.f32 %v1982, %v1994
    %v2141 = vmax.f32 %v1984, %v1996
    %v2142 = vmax.f32 %v960, %v972
    %v2143 = vmax.f32 %v962, %v974
    %v2144 = vmax.f32 %v1474, %v1486
    %v2145 = vmax.f32 %v1476, %v1488
    %v2146 = vmax.f32 %v1988, %v2000
    %v2147 = vmax.f32 %v1990, %v2002
    %v2148 = vmax.f32 %v978, %v990
    %v2149 = vmax.f32 %v980, %v992
    %v2150 = vmax.f32 %v1492, %v1504
    %v2151 = vmax.f32 %v1494, %v1506
    %v2152 = vmax.f32 %v2006, %v2018
    %v2153 = vmax.f32 %v2008, %v2020
    %v2154 = vmax.f32 %v984, %v996
    %v2155 = vmax.f32 %v986, %v998
    %v2156 = vmax.f32 %v1498, %v1510
    %v2157 = vmax.f32 %v1500, %v1512
    %v2158 = vmax.f32 %v2012, %v2024
    %v2159 = vmax.f32 %v2014, %v2026
    %v2160 = vmax.f32 %v1002, %v1014
    %v2161 = vmax.f32 %v1004, %v1016
    %v2162 = vmax.f32 %v1516, %v1528
    %v2163 = vmax.f32 %v1518, %v1530
    %v2164 = vmax.f32 %v2030, %v2042
    %v2165 = vmax.f32 %v2032, %v2044
    %v2166 = vmax.f32 %v1008, %v1020
    %v2167 = vmax.f32 %v1010, %v1022
    %v2168 = vmax.f32 %v1522, %v1534
    %v2169 = vmax.f32 %v1524, %v1536
    %v2170 = vmax.f32 %v2036, %v2048
    %v2171 = vmax.f32 %v2038, %v2050
    %v2172 = vmax.f32 %v1026, %v1038
    %v2173 = vmax.f32 %v1028, %v1040
    %v2174 = vmax.f32 %v1540, %v1552
    %v2175 = vmax.f32 %v1542, %v1554
    %v2176 = vmax.f32 %v2054, %v2066
    %v2177 = vmax.f32 %v2056, %v2068
    %v2178 = vmax.f32 %v1032, %v1044
    %v2179 = vmax.f32 %v1034, %v1046
    %v2180 = vmax.f32 %v1546, %v1558
    %v2181 = vmax.f32 %v1548, %v1560
    %v2182 = vmax.f32 %v2060, %v2072
    %v2183 = vmax.f32 %v2062, %v2074
    %v2184 = vmax.f32 %v1050, %v1062
    %v2185 = vmax.f32 %v1052, %v1064
    %v2186 = vmax.f32 %v1564, %v1576
    %v2187 = vmax.f32 %v1566, %v1578
    %v2188 = vmax.f32 %v2078, %v2090
    %v2189 = vmax.f32 %v2080, %v2092
    %v2190 = vmax.f32 %v1056, %v1068
    %v2191 = vmax.f32 %v1058, %v1070
    %v2192 = vmax.f32 %v1570, %v1582
    %v2193 = vmax.f32 %v1572, %v1584
    %v2194 = vmax.f32 %v2084, %v2096
    %v2195 = vmax.f32 %v2086, %v2098
    %v2196 = vmax.f32 %v2100, %v2103
    %v2197 = vmax.f32 %v2101, %v2104
    %v2198 = vmax.f32 %v2102, %v2105
    %v2199 = vmax.f32 %v2106, %v2109
    %v2200 = vmax.f32 %v2107, %v2110
    %v2201 = vmax.f32 %v2108, %v2111
    %v2202 = vmax.f32 %v2112, %v2115
    %v2203 = vmax.f32 %v2113, %v2116
    %v2204 = vmax.f32 %v2114, %v2117
    %v2205 = vmax.f32 %v2118, %v2121
    %v2206 = vmax.f32 %v2119, %v2122
    %v2207 = vmax.f32 %v2120, %v2123
    %v2208 = vmax.f32 %v2124, %v2127
    %v2209 = vmax.f32 %v2125, %v2128
    %v2210 = vmax.f32 %v2126, %v2129
    %v2211 = vmax.f32 %v2130, %v2133
    %v2212 = vmax.f32 %v2131, %v2134
    %v2213 = vmax.f32 %v2132, %v2135
    %v2214 = vmax.f32 %v2136, %v2139
    %v2215 = vmax.f32 %v2137, %v2140
    %v2216 = vmax.f32 %v2138, %v2141
    %v2217 = vmax.f32 %v2142, %v2145
    %v2218 = vmax.f32 %v2143, %v2146
    %v2219 = vmax.f32 %v2144, %v2147
    %v2220 = vmax.f32 %v2148, %v2151
    %v2221 = vmax.f32 %v2149, %v2152
    %v2222 = vmax.f32 %v2150, %v2153
    %v2223 = vmax.f32 %v2154, %v2157
    %v2224 = vmax.f32 %v2155, %v2158
    %v2225 = vmax.f32 %v2156, %v2159
    %v2226 = vmax.f32 %v2160, %v2163
    %v2227 = vmax.f32 %v2161, %v2164
    %v2228 = vmax.f32 %v2162, %v2165
    %v2229 = vmax.f32 %v2166, %v2169
    %v2230 = vmax.f32 %v2167, %v2170
    %v2231 = vmax.f32 %v2168, %v2171
    %v2232 = vmax.f32 %v2172, %v2175
    %v2233 = vmax.f32 %v2173, %v2176
    %v2234 = vmax.f32 %v2174, %v2177
    %v2235 = vmax.f32 %v2178, %v2181
    %v2236 = vmax.f32 %v2179, %v2182
    %v2237 = vmax.f32 %v2180, %v2183
    %v2238 = vmax.f32 %v2184, %v2187
    %v2239 = vmax.f32 %v2185, %v2188
    %v2240 = vmax.f32 %v2186, %v2189
    %v2241 = vmax.f32 %v2190, %v2193
    %v2242 = vmax.f32 %v2191, %v2194
    %v2243 = vmax.f32 %v2192, %v2195
    %v2244 = vld [vmem:[%s2] sm:$0x7]
    %v2246 = vlaneseq
    %v2247 = vshrl.u32 %v2246, 7
    %v2248 = vsub.s32 0, %v2247
    %v2249 = vrot.slane %v2244, %v2248
    %v2250 = vlaneseq
    %v2251 = vshrl.u32 %v2250, 7
    %v2252 = vsub.s32 1, %v2251
    %v2253 = vrot.slane %v2244, %v2252
    %v2254 = vlaneseq
    %v2255 = vshrl.u32 %v2254, 7
    %v2256 = vsub.s32 2, %v2255
    %v2257 = vrot.slane %v2244, %v2256
    %v2261 = vadd.f32 %v2196, %v2249
    %v2262 = vadd.f32 %v2197, %v2253
    %v2263 = vadd.f32 %v2198, %v2257
    %v2264 = vadd.f32 %v2199, %v2249
    %v2265 = vadd.f32 %v2200, %v2253
    %v2266 = vadd.f32 %v2201, %v2257
    %v2267 = vadd.f32 %v2202, %v2249
    %v2268 = vadd.f32 %v2203, %v2253
    %v2269 = vadd.f32 %v2204, %v2257
    %v2270 = vadd.f32 %v2205, %v2249
    %v2271 = vadd.f32 %v2206, %v2253
    %v2272 = vadd.f32 %v2207, %v2257
    %v2273 = vadd.f32 %v2208, %v2249
    %v2274 = vadd.f32 %v2209, %v2253
    %v2275 = vadd.f32 %v2210, %v2257
    %v2276 = vadd.f32 %v2211, %v2249
    %v2277 = vadd.f32 %v2212, %v2253
    %v2278 = vadd.f32 %v2213, %v2257
    %v2279 = vadd.f32 %v2214, %v2249
    %v2280 = vadd.f32 %v2215, %v2253
    %v2281 = vadd.f32 %v2216, %v2257
    %v2282 = vadd.f32 %v2217, %v2249
    %v2283 = vadd.f32 %v2218, %v2253
    %v2284 = vadd.f32 %v2219, %v2257
    %v2285 = vadd.f32 %v2220, %v2249
    %v2286 = vadd.f32 %v2221, %v2253
    %v2287 = vadd.f32 %v2222, %v2257
    %v2288 = vadd.f32 %v2223, %v2249
    %v2289 = vadd.f32 %v2224, %v2253
    %v2290 = vadd.f32 %v2225, %v2257
    %v2291 = vadd.f32 %v2226, %v2249
    %v2292 = vadd.f32 %v2227, %v2253
    %v2293 = vadd.f32 %v2228, %v2257
    %v2294 = vadd.f32 %v2229, %v2249
    %v2295 = vadd.f32 %v2230, %v2253
    %v2296 = vadd.f32 %v2231, %v2257
    %v2297 = vadd.f32 %v2232, %v2249
    %v2298 = vadd.f32 %v2233, %v2253
    %v2299 = vadd.f32 %v2234, %v2257
    %v2300 = vadd.f32 %v2235, %v2249
    %v2301 = vadd.f32 %v2236, %v2253
    %v2302 = vadd.f32 %v2237, %v2257
    %v2303 = vadd.f32 %v2238, %v2249
    %v2304 = vadd.f32 %v2239, %v2253
    %v2305 = vadd.f32 %v2240, %v2257
    %v2306 = vadd.f32 %v2241, %v2249
    %v2307 = vadd.f32 %v2242, %v2253
    %v2308 = vadd.f32 %v2243, %v2257
    %v2309 = vmax.f32 %v2261, 0.0
    %v2310 = vmax.f32 %v2262, 0.0
    %v2311 = vmax.f32 %v2263, 0.0
    %v2312 = vmax.f32 %v2264, 0.0
    %v2313 = vmax.f32 %v2265, 0.0
    %v2314 = vmax.f32 %v2266, 0.0
    %v2315 = vmax.f32 %v2267, 0.0
    %v2316 = vmax.f32 %v2268, 0.0
    %v2317 = vmax.f32 %v2269, 0.0
    %v2318 = vmax.f32 %v2270, 0.0
    %v2319 = vmax.f32 %v2271, 0.0
    %v2320 = vmax.f32 %v2272, 0.0
    %v2321 = vmax.f32 %v2273, 0.0
    %v2322 = vmax.f32 %v2274, 0.0
    %v2323 = vmax.f32 %v2275, 0.0
    %v2324 = vmax.f32 %v2276, 0.0
    %v2325 = vmax.f32 %v2277, 0.0
    %v2326 = vmax.f32 %v2278, 0.0
    %v2327 = vmax.f32 %v2279, 0.0
    %v2328 = vmax.f32 %v2280, 0.0
    %v2329 = vmax.f32 %v2281, 0.0
    %v2330 = vmax.f32 %v2282, 0.0
    %v2331 = vmax.f32 %v2283, 0.0
    %v2332 = vmax.f32 %v2284, 0.0
    %v2333 = vmax.f32 %v2285, 0.0
    %v2334 = vmax.f32 %v2286, 0.0
    %v2335 = vmax.f32 %v2287, 0.0
    %v2336 = vmax.f32 %v2288, 0.0
    %v2337 = vmax.f32 %v2289, 0.0
    %v2338 = vmax.f32 %v2290, 0.0
    %v2339 = vmax.f32 %v2291, 0.0
    %v2340 = vmax.f32 %v2292, 0.0
    %v2341 = vmax.f32 %v2293, 0.0
    %v2342 = vmax.f32 %v2294, 0.0
    %v2343 = vmax.f32 %v2295, 0.0
    %v2344 = vmax.f32 %v2296, 0.0
    %v2345 = vmax.f32 %v2297, 0.0
    %v2346 = vmax.f32 %v2298, 0.0
    %v2347 = vmax.f32 %v2299, 0.0
    %v2348 = vmax.f32 %v2300, 0.0
    %v2349 = vmax.f32 %v2301, 0.0
    %v2350 = vmax.f32 %v2302, 0.0
    %v2351 = vmax.f32 %v2303, 0.0
    %v2352 = vmax.f32 %v2304, 0.0
    %v2353 = vmax.f32 %v2305, 0.0
    %v2354 = vmax.f32 %v2306, 0.0
    %v2355 = vmax.f32 %v2307, 0.0
    %v2356 = vmax.f32 %v2308, 0.0
    %v2357 = vld [vmem:[%s3] sm:$0xff]
    %v2358 = vld [vmem:[%s3 + $0x8] sm:$0xff]
    %v2359 = vld [vmem:[%s3 + $0x10] sm:$0xff]
    %v2360 = vld [vmem:[%s3 + $0x18] sm:$0xff]
    %v2361 = vld [vmem:[%s3 + $0x20] sm:$0xff]
    %v2362 = vld [vmem:[%s3 + $0x28] sm:$0xff]
    %v2363 = vld [vmem:[%s3 + $0x30] sm:$0xff]
    %v2364 = vld [vmem:[%s3 + $0x38] sm:$0xff]
    %v2365 = vld [vmem:[%s3 + $0x40] sm:$0xff]
    %v2366 = vld [vmem:[%s3 + $0x48] sm:$0xff]
    %v2367 = vld [vmem:[%s3 + $0x50] sm:$0xff]
    %v2368 = vld [vmem:[%s3 + $0x58] sm:$0xff]
    %v2369 = vld [vmem:[%s3 + $0x60] sm:$0xff]
    %v2370 = vld [vmem:[%s3 + $0x68] sm:$0xff]
    %v2371 = vld [vmem:[%s3 + $0x70] sm:$0xff]
    %v2372 = vld [vmem:[%s3 + $0x78] sm:$0xff]
    %v2373 = vld [vmem:[%s3 + $0x80] sm:$0xff]
    %v2374 = vld [vmem:[%s3 + $0x88] sm:$0xff]
    %v2375 = vld [vmem:[%s3 + $0x90] sm:$0xff]
    %v2376 = vld [vmem:[%s3 + $0x98] sm:$0xff]
    %v2377 = vld [vmem:[%s3 + $0xa0] sm:$0xff]
    %v2378 = vld [vmem:[%s3 + $0xa8] sm:$0xff]
    %v2379 = vld [vmem:[%s3 + $0xb0] sm:$0xff]
    %v2380 = vld [vmem:[%s3 + $0xb8] sm:$0xff]
    %v2381 = vld [vmem:[%s3 + $0xc0] sm:$0xff]
    %v2382 = vld [vmem:[%s3 + $0xc8] sm:$0xff]
    %v2383 = vld [vmem:[%s3 + $0xd0] sm:$0xff]
    %v2384 = vld [vmem:[%s3 + $0xd8] sm:$0xff]
    %v2385 = vld [vmem:[%s3 + $0xe0] sm:$0xff]
    %v2386 = vld [vmem:[%s3 + $0xe8] sm:$0xff]
    %v2387 = vld [vmem:[%s3 + $0xf0] sm:$0xff]
    %v2388 = vld [vmem:[%s3 + $0xf8] sm:$0xff]
    %v2389 = vld [vmem:[%s3 + $0x100] sm:$0xff]
    %v2390 = vld [vmem:[%s3 + $0x108] sm:$0xff]
    %v2391 = vld [vmem:[%s3 + $0x110] sm:$0xff]
    %v2392 = vld [vmem:[%s3 + $0x118] sm:$0xff]
    %v2393 = vld [vmem:[%s3 + $0x120] sm:$0xff]
    %v2394 = vld [vmem:[%s3 + $0x128] sm:$0xff]
    %v2395 = vld [vmem:[%s3 + $0x130] sm:$0xff]
    %v2396 = vld [vmem:[%s3 + $0x138] sm:$0xff]
    %v2397 = vld [vmem:[%s3 + $0x140] sm:$0xff]
    %v2398 = vld [vmem:[%s3 + $0x148] sm:$0xff]
    %v2399 = vld [vmem:[%s3 + $0x150] sm:$0xff]
    %v2400 = vld [vmem:[%s3 + $0x158] sm:$0xff]
    %v2401 = vld [vmem:[%s3 + $0x160] sm:$0xff]
    %v2402 = vld [vmem:[%s3 + $0x168] sm:$0xff]
    %v2403 = vld [vmem:[%s3 + $0x170] sm:$0xff]
    %v2404 = vld [vmem:[%s3 + $0x178] sm:$0xff]
    %v2405 = vld [vmem:[%s3 + $0x180] sm:$0xff]
    %v2406 = vld [vmem:[%s3 + $0x188] sm:$0xff]
    %v2407 = vld [vmem:[%s3 + $0x190] sm:$0xff]
    %v2408 = vld [vmem:[%s3 + $0x198] sm:$0xff]
    %v2409 = vld [vmem:[%s3 + $0x1a0] sm:$0xff]
    %v2410 = vld [vmem:[%s3 + $0x1a8] sm:$0xff]
    %v2411 = vld [vmem:[%s3 + $0x1b0] sm:$0xff]
    %v2412 = vld [vmem:[%s3 + $0x1b8] sm:$0xff]
    %v2413 = vld [vmem:[%s3 + $0x1c0] sm:$0xff]
    %v2414 = vld [vmem:[%s3 + $0x1c8] sm:$0xff]
    %v2415 = vld [vmem:[%s3 + $0x1d0] sm:$0xff]
    %v2416 = vld [vmem:[%s3 + $0x1d8] sm:$0xff]
    %v2417 = vld [vmem:[%s3 + $0x1e0] sm:$0xff]
    %v2418 = vld [vmem:[%s3 + $0x1e8] sm:$0xff]
    %v2419 = vld [vmem:[%s3 + $0x1f0] sm:$0xff]
    %v2420 = vld [vmem:[%s3 + $0x1f8] sm:$0xff]
    %v2421 = vld [vmem:[%s3 + $0x200] sm:$0xff]
    %v2422 = vld [vmem:[%s3 + $0x208] sm:$0xff]
    %v2423 = vld [vmem:[%s3 + $0x210] sm:$0xff]
    %v2424 = vld [vmem:[%s3 + $0x218] sm:$0xff]
    %v2425 = vld [vmem:[%s3 + $0x220] sm:$0xff]
    %v2426 = vld [vmem:[%s3 + $0x228] sm:$0xff]
    %v2427 = vld [vmem:[%s3 + $0x230] sm:$0xff]
    %v2428 = vld [vmem:[%s3 + $0x238] sm:$0xff]
    %v2429 = vld [vmem:[%s3 + $0x240] sm:$0xff]
    %v2430 = vld [vmem:[%s3 + $0x248] sm:$0xff]
    %v2431 = vld [vmem:[%s3 + $0x250] sm:$0xff]
    %v2432 = vld [vmem:[%s3 + $0x258] sm:$0xff]
    %v2433 = vld [vmem:[%s3 + $0x260] sm:$0xff]
    %v2434 = vld [vmem:[%s3 + $0x268] sm:$0xff]
    %v2435 = vld [vmem:[%s3 + $0x270] sm:$0xff]
    %v2436 = vld [vmem:[%s3 + $0x278] sm:$0xff]
    %v2437 = vld [vmem:[%s3 + $0x280] sm:$0xff]
    %v2438 = vld [vmem:[%s3 + $0x288] sm:$0xff]
    %v2439 = vld [vmem:[%s3 + $0x290] sm:$0xff]
    %v2440 = vld [vmem:[%s3 + $0x298] sm:$0xff]
    %v2441 = vld [vmem:[%s3 + $0x2a0] sm:$0xff]
    %v2442 = vld [vmem:[%s3 + $0x2a8] sm:$0xff]
    %v2443 = vld [vmem:[%s3 + $0x2b0] sm:$0xff]
    %v2444 = vld [vmem:[%s3 + $0x2b8] sm:$0xff]
    %v2445 = vld [vmem:[%s3 + $0x2c0] sm:$0xff]
    %v2446 = vld [vmem:[%s3 + $0x2c8] sm:$0xff]
    %v2447 = vld [vmem:[%s3 + $0x2d0] sm:$0xff]
    %v2448 = vld [vmem:[%s3 + $0x2d8] sm:$0xff]
    %v2449 = vld [vmem:[%s3 + $0x2e0] sm:$0xff]
    %v2450 = vld [vmem:[%s3 + $0x2e8] sm:$0xff]
    %v2451 = vld [vmem:[%s3 + $0x2f0] sm:$0xff]
    %v2452 = vld [vmem:[%s3 + $0x2f8] sm:$0xff]
    %v2453 = vld [vmem:[%s3 + $0x300] sm:$0xff]
    %v2454 = vld [vmem:[%s3 + $0x308] sm:$0xff]
    %v2455 = vld [vmem:[%s3 + $0x310] sm:$0xff]
    %v2456 = vld [vmem:[%s3 + $0x318] sm:$0xff]
    %v2457 = vld [vmem:[%s3 + $0x320] sm:$0xff]
    %v2458 = vld [vmem:[%s3 + $0x328] sm:$0xff]
    %v2459 = vld [vmem:[%s3 + $0x330] sm:$0xff]
    %v2460 = vld [vmem:[%s3 + $0x338] sm:$0xff]
    %v2461 = vld [vmem:[%s3 + $0x340] sm:$0xff]
    %v2462 = vld [vmem:[%s3 + $0x348] sm:$0xff]
    %v2463 = vld [vmem:[%s3 + $0x350] sm:$0xff]
    %v2464 = vld [vmem:[%s3 + $0x358] sm:$0xff]
    %v2465 = vld [vmem:[%s3 + $0x360] sm:$0xff]
    %v2466 = vld [vmem:[%s3 + $0x368] sm:$0xff]
    %v2467 = vld [vmem:[%s3 + $0x370] sm:$0xff]
    %v2468 = vld [vmem:[%s3 + $0x378] sm:$0xff]
    %v2469 = vld [vmem:[%s3 + $0x380] sm:$0xff]
    %v2470 = vld [vmem:[%s3 + $0x388] sm:$0xff]
    %v2471 = vld [vmem:[%s3 + $0x390] sm:$0xff]
    %v2472 = vld [vmem:[%s3 + $0x398] sm:$0xff]
    %v2473 = vld [vmem:[%s3 + $0x3a0] sm:$0xff]
    %v2474 = vld [vmem:[%s3 + $0x3a8] sm:$0xff]
    %v2475 = vld [vmem:[%s3 + $0x3b0] sm:$0xff]
    %v2476 = vld [vmem:[%s3 + $0x3b8] sm:$0xff]
    %v2477 = vld [vmem:[%s3 + $0x3c0] sm:$0xff]
    %v2478 = vld [vmem:[%s3 + $0x3c8] sm:$0xff]
    %v2479 = vld [vmem:[%s3 + $0x3d0] sm:$0xff]
    %v2480 = vld [vmem:[%s3 + $0x3d8] sm:$0xff]
    %v2481 = vld [vmem:[%s3 + $0x3e0] sm:$0xff]
    %v2482 = vld [vmem:[%s3 + $0x3e8] sm:$0xff]
    %v2483 = vld [vmem:[%s3 + $0x3f0] sm:$0xff]
    %v2484 = vld [vmem:[%s3 + $0x3f8] sm:$0xff]
    %v2485 = vld [vmem:[%s3 + $0x400] sm:$0xff]
    %v2486 = vld [vmem:[%s3 + $0x408] sm:$0xff]
    %v2487 = vld [vmem:[%s3 + $0x410] sm:$0xff]
    %v2488 = vld [vmem:[%s3 + $0x418] sm:$0xff]
    %v2489 = vld [vmem:[%s3 + $0x420] sm:$0xff]
    %v2490 = vld [vmem:[%s3 + $0x428] sm:$0xff]
    %v2491 = vld [vmem:[%s3 + $0x430] sm:$0xff]
    %v2492 = vld [vmem:[%s3 + $0x438] sm:$0xff]
    %v2493 = vld [vmem:[%s3 + $0x440] sm:$0xff]
    %v2494 = vld [vmem:[%s3 + $0x448] sm:$0xff]
    %v2495 = vld [vmem:[%s3 + $0x450] sm:$0xff]
    %v2496 = vld [vmem:[%s3 + $0x458] sm:$0xff]
    %v2497 = vld [vmem:[%s3 + $0x460] sm:$0xff]
    %v2498 = vld [vmem:[%s3 + $0x468] sm:$0xff]
    %v2499 = vld [vmem:[%s3 + $0x470] sm:$0xff]
    %v2500 = vld [vmem:[%s3 + $0x478] sm:$0xff]
    %v2501 = vld [vmem:[%s3 + $0x480] sm:$0xff]
    %v2502 = vld [vmem:[%s3 + $0x488] sm:$0xff]
    %v2503 = vld [vmem:[%s3 + $0x490] sm:$0xff]
    %v2504 = vld [vmem:[%s3 + $0x498] sm:$0xff]
    %v2505 = vld [vmem:[%s3 + $0x4a0] sm:$0xff]
    %v2506 = vld [vmem:[%s3 + $0x4a8] sm:$0xff]
    %v2507 = vld [vmem:[%s3 + $0x4b0] sm:$0xff]
    %v2508 = vld [vmem:[%s3 + $0x4b8] sm:$0xff]
    %v2509 = vld [vmem:[%s3 + $0x4c0] sm:$0xff]
    %v2510 = vld [vmem:[%s3 + $0x4c8] sm:$0xff]
    %v2511 = vld [vmem:[%s3 + $0x4d0] sm:$0xff]
    %v2512 = vld [vmem:[%s3 + $0x4d8] sm:$0xff]
    %v2513 = vld [vmem:[%s3 + $0x4e0] sm:$0xff]
    %v2514 = vld [vmem:[%s3 + $0x4e8] sm:$0xff]
    %v2515 = vld [vmem:[%s3 + $0x4f0] sm:$0xff]
    %v2516 = vld [vmem:[%s3 + $0x4f8] sm:$0xff]
    %v2517 = vld [vmem:[%s3 + $0x500] sm:$0xff]
    %v2518 = vld [vmem:[%s3 + $0x508] sm:$0xff]
    %v2519 = vld [vmem:[%s3 + $0x510] sm:$0xff]
    %v2520 = vld [vmem:[%s3 + $0x518] sm:$0xff]
    %v2521 = vld [vmem:[%s3 + $0x520] sm:$0xff]
    %v2522 = vld [vmem:[%s3 + $0x528] sm:$0xff]
    %v2523 = vld [vmem:[%s3 + $0x530] sm:$0xff]
    %v2524 = vld [vmem:[%s3 + $0x538] sm:$0xff]
    %v2525 = vld [vmem:[%s3 + $0x540] sm:$0xff]
    %v2526 = vld [vmem:[%s3 + $0x548] sm:$0xff]
    %v2527 = vld [vmem:[%s3 + $0x550] sm:$0xff]
    %v2528 = vld [vmem:[%s3 + $0x558] sm:$0xff]
    %v2529 = vld [vmem:[%s3 + $0x560] sm:$0xff]
    %v2530 = vld [vmem:[%s3 + $0x568] sm:$0xff]
    %v2531 = vld [vmem:[%s3 + $0x570] sm:$0xff]
    %v2532 = vld [vmem:[%s3 + $0x578] sm:$0xff]
    %v2533 = vld [vmem:[%s3 + $0x580] sm:$0xff]
    %v2534 = vld [vmem:[%s3 + $0x588] sm:$0xff]
    %v2535 = vld [vmem:[%s3 + $0x590] sm:$0xff]
    %v2536 = vld [vmem:[%s3 + $0x598] sm:$0xff]
    %v2537 = vld [vmem:[%s3 + $0x5a0] sm:$0xff]
    %v2538 = vld [vmem:[%s3 + $0x5a8] sm:$0xff]
    %v2539 = vld [vmem:[%s3 + $0x5b0] sm:$0xff]
    %v2540 = vld [vmem:[%s3 + $0x5b8] sm:$0xff]
    %v2541 = vld [vmem:[%s3 + $0x5c0] sm:$0xff]
    %v2542 = vld [vmem:[%s3 + $0x5c8] sm:$0xff]
    %v2543 = vld [vmem:[%s3 + $0x5d0] sm:$0xff]
    %v2544 = vld [vmem:[%s3 + $0x5d8] sm:$0xff]
    %v2545 = vld [vmem:[%s3 + $0x5e0] sm:$0xff]
    %v2546 = vld [vmem:[%s3 + $0x5e8] sm:$0xff]
    %v2547 = vld [vmem:[%s3 + $0x5f0] sm:$0xff]
    %v2548 = vld [vmem:[%s3 + $0x5f8] sm:$0xff]
    %vm2597 = vcmask 1046528
    %v2598 = vrot.slane %v2309, 1
    %v2599 = vrot.slane %v2312, 1
    %v2600 = vsel %vm2597, %v2598, %v2599
    %v2601 = vrot.slane %v2310, 1
    %v2602 = vrot.slane %v2313, 1
    %v2603 = vsel %vm2597, %v2601, %v2602
    %v2604 = vrot.slane %v2311, 1
    %v2605 = vrot.slane %v2314, 1
    %v2606 = vsel %vm2597, %v2604, %v2605
    %v2607 = vsel %vm2597, %v2599, %v2598
    %v2608 = vsel %vm2597, %v2602, %v2601
    %v2609 = vsel %vm2597, %v2605, %v2604
    %v2610 = vrot.slane %v2315, 1
    %v2611 = vrot.slane %v2318, 1
    %v2612 = vsel %vm2597, %v2610, %v2611
    %v2613 = vrot.slane %v2316, 1
    %v2614 = vrot.slane %v2319, 1
    %v2615 = vsel %vm2597, %v2613, %v2614
    %v2616 = vrot.slane %v2317, 1
    %v2617 = vrot.slane %v2320, 1
    %v2618 = vsel %vm2597, %v2616, %v2617
    %v2619 = vsel %vm2597, %v2611, %v2610
    %v2620 = vsel %vm2597, %v2614, %v2613
    %v2621 = vsel %vm2597, %v2617, %v2616
    %v2622 = vrot.slane %v2321, 1
    %v2623 = vrot.slane %v2324, 1
    %v2624 = vsel %vm2597, %v2622, %v2623
    %v2625 = vrot.slane %v2322, 1
    %v2626 = vrot.slane %v2325, 1
    %v2627 = vsel %vm2597, %v2625, %v2626
    %v2628 = vrot.slane %v2323, 1
    %v2629 = vrot.slane %v2326, 1
    %v2630 = vsel %vm2597, %v2628, %v2629
    %v2631 = vsel %vm2597, %v2623, %v2622
    %v2632 = vsel %vm2597, %v2626, %v2625
    %v2633 = vsel %vm2597, %v2629, %v2628
    %v2634 = vrot.slane %v2327, 1
    %v2635 = vrot.slane %v2330, 1
    %v2636 = vsel %vm2597, %v2634, %v2635
    %v2637 = vrot.slane %v2328, 1
    %v2638 = vrot.slane %v2331, 1
    %v2639 = vsel %vm2597, %v2637, %v2638
    %v2640 = vrot.slane %v2329, 1
    %v2641 = vrot.slane %v2332, 1
    %v2642 = vsel %vm2597, %v2640, %v2641
    %v2643 = vsel %vm2597, %v2635, %v2634
    %v2644 = vsel %vm2597, %v2638, %v2637
    %v2645 = vsel %vm2597, %v2641, %v2640
    %v2646 = vrot.slane %v2333, 1
    %v2647 = vrot.slane %v2336, 1
    %v2648 = vsel %vm2597, %v2646, %v2647
    %v2649 = vrot.slane %v2334, 1
    %v2650 = vrot.slane %v2337, 1
    %v2651 = vsel %vm2597, %v2649, %v2650
    %v2652 = vrot.slane %v2335, 1
    %v2653 = vrot.slane %v2338, 1
    %v2654 = vsel %vm2597, %v2652, %v2653
    %v2655 = vsel %vm2597, %v2647, %v2646
    %v2656 = vsel %vm2597, %v2650, %v2649
    %v2657 = vsel %vm2597, %v2653, %v2652
    %v2658 = vrot.slane %v2339, 1
    %v2659 = vrot.slane %v2342, 1
    %v2660 = vsel %vm2597, %v2658, %v2659
    %v2661 = vrot.slane %v2340, 1
    %v2662 = vrot.slane %v2343, 1
    %v2663 = vsel %vm2597, %v2661, %v2662
    %v2664 = vrot.slane %v2341, 1
    %v2665 = vrot.slane %v2344, 1
    %v2666 = vsel %vm2597, %v2664, %v2665
    %v2667 = vsel %vm2597, %v2659, %v2658
    %v2668 = vsel %vm2597, %v2662, %v2661
    %v2669 = vsel %vm2597, %v2665, %v2664
    %v2670 = vrot.slane %v2345, 1
    %v2671 = vrot.slane %v2348, 1
    %v2672 = vsel %vm2597, %v2670, %v2671
    %v2673 = vrot.slane %v2346, 1
    %v2674 = vrot.slane %v2349, 1
    %v2675 = vsel %vm2597, %v2673, %v2674
    %v2676 = vrot.slane %v2347, 1
    %v2677 = vrot.slane %v2350, 1
    %v2678 = vsel %vm2597, %v2676, %v2677
    %v2679 = vsel %vm2597, %v2671, %v2670
    %v2680 = vsel %vm2597, %v2674, %v2673
    %v2681 = vsel %vm2597, %v2677, %v2676
    %v2682 = vrot.slane %v2351, 1
    %v2683 = vrot.slane %v2354, 1
    %v2684 = vsel %vm2597, %v2682, %v2683
    %v2685 = vrot.slane %v2352, 1
    %v2686 = vrot.slane %v2355, 1
    %v2687 = vsel %vm2597, %v2685, %v2686
    %v2688 = vrot.slane %v2353, 1
    %v2689 = vrot.slane %v2356, 1
    %v2690 = vsel %vm2597, %v2688, %v2689
    %v2691 = vsel %vm2597, %v2683, %v2682
    %v2692 = vsel %vm2597, %v2686, %v2685
    %v2693 = vsel %vm2597, %v2689, %v2688
    %s2742 = scalar_lea.vmem %s3, 1536
    %v2743 = vld [vmem:[%s2742] sm:$0xff]
    %v2744 = vld [vmem:[%s2742 + $0x8] sm:$0xff]
    %v2745 = vld [vmem:[%s2742 + $0x10] sm:$0xff]
    %v2746 = vld [vmem:[%s2742 + $0x18] sm:$0xff]
    %v2747 = vld [vmem:[%s2742 + $0x20] sm:$0xff]
    %v2748 = vld [vmem:[%s2742 + $0x28] sm:$0xff]
    %v2749 = vld [vmem:[%s2742 + $0x30] sm:$0xff]
    %v2750 = vld [vmem:[%s2742 + $0x38] sm:$0xff]
    %v2751 = vld [vmem:[%s2742 + $0x40] sm:$0xff]
    %v2752 = vld [vmem:[%s2742 + $0x48] sm:$0xff]
    %v2753 = vld [vmem:[%s2742 + $0x50] sm:$0xff]
    %v2754 = vld [vmem:[%s2742 + $0x58] sm:$0xff]
    %v2755 = vld [vmem:[%s2742 + $0x60] sm:$0xff]
    %v2756 = vld [vmem:[%s2742 + $0x68] sm:$0xff]
    %v2757 = vld [vmem:[%s2742 + $0x70] sm:$0xff]
    %v2758 = vld [vmem:[%s2742 + $0x78] sm:$0xff]
    %v2759 = vld [vmem:[%s2742 + $0x80] sm:$0xff]
    %v2760 = vld [vmem:[%s2742 + $0x88] sm:$0xff]
    %v2761 = vld [vmem:[%s2742 + $0x90] sm:$0xff]
    %v2762 = vld [vmem:[%s2742 + $0x98] sm:$0xff]
    %v2763 = vld [vmem:[%s2742 + $0xa0] sm:$0xff]
    %v2764 = vld [vmem:[%s2742 + $0xa8] sm:$0xff]
    %v2765 = vld [vmem:[%s2742 + $0xb0] sm:$0xff]
    %v2766 = vld [vmem:[%s2742 + $0xb8] sm:$0xff]
    %v2767 = vld [vmem:[%s2742 + $0xc0] sm:$0xff]
    %v2768 = vld [vmem:[%s2742 + $0xc8] sm:$0xff]
    %v2769 = vld [vmem:[%s2742 + $0xd0] sm:$0xff]
    %v2770 = vld [vmem:[%s2742 + $0xd8] sm:$0xff]
    %v2771 = vld [vmem:[%s2742 + $0xe0] sm:$0xff]
    %v2772 = vld [vmem:[%s2742 + $0xe8] sm:$0xff]
    %v2773 = vld [vmem:[%s2742 + $0xf0] sm:$0xff]
    %v2774 = vld [vmem:[%s2742 + $0xf8] sm:$0xff]
    %v2775 = vld [vmem:[%s2742 + $0x100] sm:$0xff]
    %v2776 = vld [vmem:[%s2742 + $0x108] sm:$0xff]
    %v2777 = vld [vmem:[%s2742 + $0x110] sm:$0xff]
    %v2778 = vld [vmem:[%s2742 + $0x118] sm:$0xff]
    %v2779 = vld [vmem:[%s2742 + $0x120] sm:$0xff]
    %v2780 = vld [vmem:[%s2742 + $0x128] sm:$0xff]
    %v2781 = vld [vmem:[%s2742 + $0x130] sm:$0xff]
    %v2782 = vld [vmem:[%s2742 + $0x138] sm:$0xff]
    %v2783 = vld [vmem:[%s2742 + $0x140] sm:$0xff]
    %v2784 = vld [vmem:[%s2742 + $0x148] sm:$0xff]
    %v2785 = vld [vmem:[%s2742 + $0x150] sm:$0xff]
    %v2786 = vld [vmem:[%s2742 + $0x158] sm:$0xff]
    %v2787 = vld [vmem:[%s2742 + $0x160] sm:$0xff]
    %v2788 = vld [vmem:[%s2742 + $0x168] sm:$0xff]
    %v2789 = vld [vmem:[%s2742 + $0x170] sm:$0xff]
    %v2790 = vld [vmem:[%s2742 + $0x178] sm:$0xff]
    %v2791 = vld [vmem:[%s2742 + $0x180] sm:$0xff]
    %v2792 = vld [vmem:[%s2742 + $0x188] sm:$0xff]
    %v2793 = vld [vmem:[%s2742 + $0x190] sm:$0xff]
    %v2794 = vld [vmem:[%s2742 + $0x198] sm:$0xff]
    %v2795 = vld [vmem:[%s2742 + $0x1a0] sm:$0xff]
    %v2796 = vld [vmem:[%s2742 + $0x1a8] sm:$0xff]
    %v2797 = vld [vmem:[%s2742 + $0x1b0] sm:$0xff]
    %v2798 = vld [vmem:[%s2742 + $0x1b8] sm:$0xff]
    %v2799 = vld [vmem:[%s2742 + $0x1c0] sm:$0xff]
    %v2800 = vld [vmem:[%s2742 + $0x1c8] sm:$0xff]
    %v2801 = vld [vmem:[%s2742 + $0x1d0] sm:$0xff]
    %v2802 = vld [vmem:[%s2742 + $0x1d8] sm:$0xff]
    %v2803 = vld [vmem:[%s2742 + $0x1e0] sm:$0xff]
    %v2804 = vld [vmem:[%s2742 + $0x1e8] sm:$0xff]
    %v2805 = vld [vmem:[%s2742 + $0x1f0] sm:$0xff]
    %v2806 = vld [vmem:[%s2742 + $0x1f8] sm:$0xff]
    %v2807 = vld [vmem:[%s2742 + $0x200] sm:$0xff]
    %v2808 = vld [vmem:[%s2742 + $0x208] sm:$0xff]
    %v2809 = vld [vmem:[%s2742 + $0x210] sm:$0xff]
    %v2810 = vld [vmem:[%s2742 + $0x218] sm:$0xff]
    %v2811 = vld [vmem:[%s2742 + $0x220] sm:$0xff]
    %v2812 = vld [vmem:[%s2742 + $0x228] sm:$0xff]
    %v2813 = vld [vmem:[%s2742 + $0x230] sm:$0xff]
    %v2814 = vld [vmem:[%s2742 + $0x238] sm:$0xff]
    %v2815 = vld [vmem:[%s2742 + $0x240] sm:$0xff]
    %v2816 = vld [vmem:[%s2742 + $0x248] sm:$0xff]
    %v2817 = vld [vmem:[%s2742 + $0x250] sm:$0xff]
    %v2818 = vld [vmem:[%s2742 + $0x258] sm:$0xff]
    %v2819 = vld [vmem:[%s2742 + $0x260] sm:$0xff]
    %v2820 = vld [vmem:[%s2742 + $0x268] sm:$0xff]
    %v2821 = vld [vmem:[%s2742 + $0x270] sm:$0xff]
    %v2822 = vld [vmem:[%s2742 + $0x278] sm:$0xff]
    %v2823 = vld [vmem:[%s2742 + $0x280] sm:$0xff]
    %v2824 = vld [vmem:[%s2742 + $0x288] sm:$0xff]
    %v2825 = vld [vmem:[%s2742 + $0x290] sm:$0xff]
    %v2826 = vld [vmem:[%s2742 + $0x298] sm:$0xff]
    %v2827 = vld [vmem:[%s2742 + $0x2a0] sm:$0xff]
    %v2828 = vld [vmem:[%s2742 + $0x2a8] sm:$0xff]
    %v2829 = vld [vmem:[%s2742 + $0x2b0] sm:$0xff]
    %v2830 = vld [vmem:[%s2742 + $0x2b8] sm:$0xff]
    %v2831 = vld [vmem:[%s2742 + $0x2c0] sm:$0xff]
    %v2832 = vld [vmem:[%s2742 + $0x2c8] sm:$0xff]
    %v2833 = vld [vmem:[%s2742 + $0x2d0] sm:$0xff]
    %v2834 = vld [vmem:[%s2742 + $0x2d8] sm:$0xff]
    %v2835 = vld [vmem:[%s2742 + $0x2e0] sm:$0xff]
    %v2836 = vld [vmem:[%s2742 + $0x2e8] sm:$0xff]
    %v2837 = vld [vmem:[%s2742 + $0x2f0] sm:$0xff]
    %v2838 = vld [vmem:[%s2742 + $0x2f8] sm:$0xff]
    %v2839 = vld [vmem:[%s2742 + $0x300] sm:$0xff]
    %v2840 = vld [vmem:[%s2742 + $0x308] sm:$0xff]
    %v2841 = vld [vmem:[%s2742 + $0x310] sm:$0xff]
    %v2842 = vld [vmem:[%s2742 + $0x318] sm:$0xff]
    %v2843 = vld [vmem:[%s2742 + $0x320] sm:$0xff]
    %v2844 = vld [vmem:[%s2742 + $0x328] sm:$0xff]
    %v2845 = vld [vmem:[%s2742 + $0x330] sm:$0xff]
    %v2846 = vld [vmem:[%s2742 + $0x338] sm:$0xff]
    %v2847 = vld [vmem:[%s2742 + $0x340] sm:$0xff]
    %v2848 = vld [vmem:[%s2742 + $0x348] sm:$0xff]
    %v2849 = vld [vmem:[%s2742 + $0x350] sm:$0xff]
    %v2850 = vld [vmem:[%s2742 + $0x358] sm:$0xff]
    %v2851 = vld [vmem:[%s2742 + $0x360] sm:$0xff]
    %v2852 = vld [vmem:[%s2742 + $0x368] sm:$0xff]
    %v2853 = vld [vmem:[%s2742 + $0x370] sm:$0xff]
    %v2854 = vld [vmem:[%s2742 + $0x378] sm:$0xff]
    %v2855 = vld [vmem:[%s2742 + $0x380] sm:$0xff]
    %v2856 = vld [vmem:[%s2742 + $0x388] sm:$0xff]
    %v2857 = vld [vmem:[%s2742 + $0x390] sm:$0xff]
    %v2858 = vld [vmem:[%s2742 + $0x398] sm:$0xff]
    %v2859 = vld [vmem:[%s2742 + $0x3a0] sm:$0xff]
    %v2860 = vld [vmem:[%s2742 + $0x3a8] sm:$0xff]
    %v2861 = vld [vmem:[%s2742 + $0x3b0] sm:$0xff]
    %v2862 = vld [vmem:[%s2742 + $0x3b8] sm:$0xff]
    %v2863 = vld [vmem:[%s2742 + $0x3c0] sm:$0xff]
    %v2864 = vld [vmem:[%s2742 + $0x3c8] sm:$0xff]
    %v2865 = vld [vmem:[%s2742 + $0x3d0] sm:$0xff]
    %v2866 = vld [vmem:[%s2742 + $0x3d8] sm:$0xff]
    %v2867 = vld [vmem:[%s2742 + $0x3e0] sm:$0xff]
    %v2868 = vld [vmem:[%s2742 + $0x3e8] sm:$0xff]
    %v2869 = vld [vmem:[%s2742 + $0x3f0] sm:$0xff]
    %v2870 = vld [vmem:[%s2742 + $0x3f8] sm:$0xff]
    %v2871 = vld [vmem:[%s2742 + $0x400] sm:$0xff]
    %v2872 = vld [vmem:[%s2742 + $0x408] sm:$0xff]
    %v2873 = vld [vmem:[%s2742 + $0x410] sm:$0xff]
    %v2874 = vld [vmem:[%s2742 + $0x418] sm:$0xff]
    %v2875 = vld [vmem:[%s2742 + $0x420] sm:$0xff]
    %v2876 = vld [vmem:[%s2742 + $0x428] sm:$0xff]
    %v2877 = vld [vmem:[%s2742 + $0x430] sm:$0xff]
    %v2878 = vld [vmem:[%s2742 + $0x438] sm:$0xff]
    %v2879 = vld [vmem:[%s2742 + $0x440] sm:$0xff]
    %v2880 = vld [vmem:[%s2742 + $0x448] sm:$0xff]
    %v2881 = vld [vmem:[%s2742 + $0x450] sm:$0xff]
    %v2882 = vld [vmem:[%s2742 + $0x458] sm:$0xff]
    %v2883 = vld [vmem:[%s2742 + $0x460] sm:$0xff]
    %v2884 = vld [vmem:[%s2742 + $0x468] sm:$0xff]
    %v2885 = vld [vmem:[%s2742 + $0x470] sm:$0xff]
    %v2886 = vld [vmem:[%s2742 + $0x478] sm:$0xff]
    %v2887 = vld [vmem:[%s2742 + $0x480] sm:$0xff]
    %v2888 = vld [vmem:[%s2742 + $0x488] sm:$0xff]
    %v2889 = vld [vmem:[%s2742 + $0x490] sm:$0xff]
    %v2890 = vld [vmem:[%s2742 + $0x498] sm:$0xff]
    %v2891 = vld [vmem:[%s2742 + $0x4a0] sm:$0xff]
    %v2892 = vld [vmem:[%s2742 + $0x4a8] sm:$0xff]
    %v2893 = vld [vmem:[%s2742 + $0x4b0] sm:$0xff]
    %v2894 = vld [vmem:[%s2742 + $0x4b8] sm:$0xff]
    %v2895 = vld [vmem:[%s2742 + $0x4c0] sm:$0xff]
    %v2896 = vld [vmem:[%s2742 + $0x4c8] sm:$0xff]
    %v2897 = vld [vmem:[%s2742 + $0x4d0] sm:$0xff]
    %v2898 = vld [vmem:[%s2742 + $0x4d8] sm:$0xff]
    %v2899 = vld [vmem:[%s2742 + $0x4e0] sm:$0xff]
    %v2900 = vld [vmem:[%s2742 + $0x4e8] sm:$0xff]
    %v2901 = vld [vmem:[%s2742 + $0x4f0] sm:$0xff]
    %v2902 = vld [vmem:[%s2742 + $0x4f8] sm:$0xff]
    %v2903 = vld [vmem:[%s2742 + $0x500] sm:$0xff]
    %v2904 = vld [vmem:[%s2742 + $0x508] sm:$0xff]
    %v2905 = vld [vmem:[%s2742 + $0x510] sm:$0xff]
    %v2906 = vld [vmem:[%s2742 + $0x518] sm:$0xff]
    %v2907 = vld [vmem:[%s2742 + $0x520] sm:$0xff]
    %v2908 = vld [vmem:[%s2742 + $0x528] sm:$0xff]
    %v2909 = vld [vmem:[%s2742 + $0x530] sm:$0xff]
    %v2910 = vld [vmem:[%s2742 + $0x538] sm:$0xff]
    %v2911 = vld [vmem:[%s2742 + $0x540] sm:$0xff]
    %v2912 = vld [vmem:[%s2742 + $0x548] sm:$0xff]
    %v2913 = vld [vmem:[%s2742 + $0x550] sm:$0xff]
    %v2914 = vld [vmem:[%s2742 + $0x558] sm:$0xff]
    %v2915 = vld [vmem:[%s2742 + $0x560] sm:$0xff]
    %v2916 = vld [vmem:[%s2742 + $0x568] sm:$0xff]
    %v2917 = vld [vmem:[%s2742 + $0x570] sm:$0xff]
    %v2918 = vld [vmem:[%s2742 + $0x578] sm:$0xff]
    %v2919 = vld [vmem:[%s2742 + $0x580] sm:$0xff]
    %v2920 = vld [vmem:[%s2742 + $0x588] sm:$0xff]
    %v2921 = vld [vmem:[%s2742 + $0x590] sm:$0xff]
    %v2922 = vld [vmem:[%s2742 + $0x598] sm:$0xff]
    %v2923 = vld [vmem:[%s2742 + $0x5a0] sm:$0xff]
    %v2924 = vld [vmem:[%s2742 + $0x5a8] sm:$0xff]
    %v2925 = vld [vmem:[%s2742 + $0x5b0] sm:$0xff]
    %v2926 = vld [vmem:[%s2742 + $0x5b8] sm:$0xff]
    %v2927 = vld [vmem:[%s2742 + $0x5c0] sm:$0xff]
    %v2928 = vld [vmem:[%s2742 + $0x5c8] sm:$0xff]
    %v2929 = vld [vmem:[%s2742 + $0x5d0] sm:$0xff]
    %v2930 = vld [vmem:[%s2742 + $0x5d8] sm:$0xff]
    %v2931 = vld [vmem:[%s2742 + $0x5e0] sm:$0xff]
    %v2932 = vld [vmem:[%s2742 + $0x5e8] sm:$0xff]
    %v2933 = vld [vmem:[%s2742 + $0x5f0] sm:$0xff]
    %v2934 = vld [vmem:[%s2742 + $0x5f8] sm:$0xff]
    %2935 = vmatprep.subr.mxu0 %v2744
    %2936 = vmatpush1.msra.mxu0 %v2743
    %2937 = vmatprep.subr.mxu0 %v2748
    %2938 = vmatpush1.msra.mxu0 %v2747
    %2939 = vmatprep.subr.mxu0 %v2752
    %2940 = vmatpush1.msra.mxu0 %v2751
    %2941 = vmatprep.subr.mxu0 %v2756
    %2942 = vmatpush1.msra.mxu0 %v2755
    %2943 = vmatprep.subr.mxu0 %v2760
    %2944 = vmatpush1.msra.mxu0 %v2759
    %2945 = vmatprep.subr.mxu0 %v2764
    %2946 = vmatpush1.msra.mxu0 %v2763
    %2947 = vmatprep.subr.mxu0 %v2768
    %2948 = vmatpush1.msra.mxu0 %v2767
    %2949 = vmatprep.subr.mxu0 %v2772
    %2950 = vmatpush1.msra.mxu0 %v2771
    %2951 = vmatprep.subr.mxu0 %v2776
    %2952 = vmatpush1.msra.mxu0 %v2775
    %2953 = vmatprep.subr.mxu0 %v2780
    %2954 = vmatpush1.msra.mxu0 %v2779
    %2955 = vmatprep.subr.mxu0 %v2784
    %2956 = vmatpush1.msra.mxu0 %v2783
    %2957 = vmatprep.subr.mxu0 %v2788
    %2958 = vmatpush1.msra.mxu0 %v2787
    %2959 = vmatprep.subr.mxu0 %v2792
    %2960 = vmatpush1.msra.mxu0 %v2791
    %2961 = vmatprep.subr.mxu0 %v2796
    %2962 = vmatpush1.msra.mxu0 %v2795
    %2963 = vmatprep.subr.mxu0 %v2800
    %2964 = vmatpush1.msra.mxu0 %v2799
    %2965 = vmatprep.subr.mxu0 %v2804
    %2966 = vmatpush1.msra.mxu0 %v2803
    %2967 = vmatprep.subr.mxu0 %v2808
    %2968 = vmatpush1.msra.mxu0 %v2807
    %2969 = vmatprep.subr.mxu0 %v2812
    %2970 = vmatpush1.msra.mxu0 %v2811
    %2971 = vmatprep.subr.mxu0 %v2816
    %2972 = vmatpush1.msra.mxu0 %v2815
    %2973 = vmatprep.subr.mxu0 %v2820
    %2974 = vmatpush1.msra.mxu0 %v2819
    %2975 = vmatprep.subr.mxu0 %v2824
    %2976 = vmatpush1.msra.mxu0 %v2823
    %2977 = vmatprep.subr.mxu0 %v2828
    %2978 = vmatpush1.msra.mxu0 %v2827
    %2979 = vmatprep.subr.mxu0 %v2832
    %2980 = vmatpush1.msra.mxu0 %v2831
    %2981 = vmatprep.subr.mxu0 %v2836
    %2982 = vmatpush1.msra.mxu0 %v2835
    %2983 = vmatprep.subr.mxu0 %v2840
    %2984 = vmatpush1.msra.mxu0 %v2839
    %2985 = vmatprep.subr.mxu0 %v2844
    %2986 = vmatpush1.msra.mxu0 %v2843
    %2987 = vmatprep.subr.mxu0 %v2848
    %2988 = vmatpush1.msra.mxu0 %v2847
    %2989 = vmatprep.subr.mxu0 %v2852
    %2990 = vmatpush1.msra.mxu0 %v2851
    %2991 = vmatprep.subr.mxu0 %v2856
    %2992 = vmatpush1.msra.mxu0 %v2855
    %2993 = vmatprep.subr.mxu0 %v2860
    %2994 = vmatpush1.msra.mxu0 %v2859
    %2995 = vmatprep.subr.mxu0 %v2864
    %2996 = vmatpush1.msra.mxu0 %v2863
    %2997 = vmatprep.subr.mxu0 %v2868
    %2998 = vmatpush1.msra.mxu0 %v2867
    %2999 = vmatprep.mubr.f32.mxu0 %v2603
    %3000 = vmatmul.mubr.f32.gmra.mrb[0].mxu0 %v2600
    %v3001 = vpop.f32.mrb[0].mxu0
    %v3002 = vadd.f32 0.0, %v3001
    %v3003 = vpop.f32.mrb[0].mxu0
    %v3004 = vadd.f32 0.0, %v3003
    %3005 = vmatprep.mubr.f32.mxu0 %v2608
    %3006 = vmatmul.mubr.f32.gmra.mrb[0].mxu0 %v2607
    %v3007 = vpop.f32.mrb[0].mxu0
    %v3008 = vadd.f32 0.0, %v3007
    %v3009 = vpop.f32.mrb[0].mxu0
    %v3010 = vadd.f32 0.0, %v3009
    %3011 = vmatprep.mubr.f32.mxu0 %v2615
    %3012 = vmatmul.mubr.f32.gmra.mrb[0].mxu0 %v2612
    %v3013 = vpop.f32.mrb[0].mxu0
    %v3014 = vadd.f32 0.0, %v3013
    %v3015 = vpop.f32.mrb[0].mxu0
    %v3016 = vadd.f32 0.0, %v3015
    %3017 = vmatprep.mubr.f32.mxu0 %v2620
    %3018 = vmatmul.mubr.f32.gmra.mrb[0].mxu0 %v2619
    %v3019 = vpop.f32.mrb[0].mxu0
    %v3020 = vadd.f32 0.0, %v3019
    %v3021 = vpop.f32.mrb[0].mxu0
    %v3022 = vadd.f32 0.0, %v3021
    %3023 = vmatprep.mubr.f32.mxu0 %v2627
    %3024 = vmatmul.mubr.f32.gmra.mrb[0].mxu0 %v2624
    %v3025 = vpop.f32.mrb[0].mxu0
    %v3026 = vadd.f32 0.0, %v3025
    %v3027 = vpop.f32.mrb[0].mxu0
    %v3028 = vadd.f32 0.0, %v3027
    %3029 = vmatprep.mubr.f32.mxu0 %v2632
    %3030 = vmatmul.mubr.f32.gmra.mrb[0].mxu0 %v2631
    %v3031 = vpop.f32.mrb[0].mxu0
    %v3032 = vadd.f32 0.0, %v3031
    %v3033 = vpop.f32.mrb[0].mxu0
    %v3034 = vadd.f32 0.0, %v3033
    %3035 = vmatprep.mubr.f32.mxu0 %v2639
    %3036 = vmatmul.mubr.f32.gmra.mrb[0].mxu0 %v2636
    %v3037 = vpop.f32.mrb[0].mxu0
    %v3038 = vadd.f32 0.0, %v3037
    %v3039 = vpop.f32.mrb[0].mxu0
    %v3040 = vadd.f32 0.0, %v3039
    %3041 = vmatprep.mubr.f32.mxu0 %v2644
    %3042 = vmatmul.mubr.f32.gmra.mrb[0].mxu0 %v2643
    %v3043 = vpop.f32.mrb[0].mxu0
    %v3044 = vadd.f32 0.0, %v3043
    %v3045 = vpop.f32.mrb[0].mxu0
    %v3046 = vadd.f32 0.0, %v3045
    %3047 = vmatprep.mubr.f32.mxu0 %v2651
    %3048 = vmatmul.mubr.f32.gmra.mrb[0].mxu0 %v2648
    %v3049 = vpop.f32.mrb[0].mxu0
    %v3050 = vadd.f32 0.0, %v3049
    %v3051 = vpop.f32.mrb[0].mxu0
    %v3052 = vadd.f32 0.0, %v3051
    %3053 = vmatprep.mubr.f32.mxu0 %v2656
    %3054 = vmatmul.mubr.f32.gmra.mrb[0].mxu0 %v2655
    %v3055 = vpop.f32.mrb[0].mxu0
    %v3056 = vadd.f32 0.0, %v3055
    %v3057 = vpop.f32.mrb[0].mxu0
    %v3058 = vadd.f32 0.0, %v3057
    %3059 = vmatprep.mubr.f32.mxu0 %v2663
    %3060 = vmatmul.mubr.f32.gmra.mrb[0].mxu0 %v2660
    %v3061 = vpop.f32.mrb[0].mxu0
    %v3062 = vadd.f32 0.0, %v3061
    %v3063 = vpop.f32.mrb[0].mxu0
    %v3064 = vadd.f32 0.0, %v3063
    %3065 = vmatprep.mubr.f32.mxu0 %v2668
    %3066 = vmatmul.mubr.f32.gmra.mrb[0].mxu0 %v2667
    %v3067 = vpop.f32.mrb[0].mxu0
    %v3068 = vadd.f32 0.0, %v3067
    %v3069 = vpop.f32.mrb[0].mxu0
    %v3070 = vadd.f32 0.0, %v3069
    %3071 = vmatprep.mubr.f32.mxu0 %v2675
    %3072 = vmatmul.mubr.f32.gmra.mrb[0].mxu0 %v2672
    %v3073 = vpop.f32.mrb[0].mxu0
    %v3074 = vadd.f32 0.0, %v3073
    %v3075 = vpop.f32.mrb[0].mxu0
    %v3076 = vadd.f32 0.0, %v3075
    %3077 = vmatprep.mubr.f32.mxu0 %v2680
    %3078 = vmatmul.mubr.f32.gmra.mrb[0].mxu0 %v2679
    %v3079 = vpop.f32.mrb[0].mxu0
    %v3080 = vadd.f32 0.0, %v3079
    %v3081 = vpop.f32.mrb[0].mxu0
    %v3082 = vadd.f32 0.0, %v3081
    %3083 = vmatprep.mubr.f32.mxu0 %v2687
    %3084 = vmatmul.mubr.f32.gmra.mrb[0].mxu0 %v2684
    %v3085 = vpop.f32.mrb[0].mxu0
    %v3086 = vadd.f32 0.0, %v3085
    %v3087 = vpop.f32.mrb[0].mxu0
    %v3088 = vadd.f32 0.0, %v3087
    %3089 = vmatprep.mubr.f32.mxu0 %v2692
    %3090 = vmatmul.mubr.f32.gmra.mrb[0].mxu0 %v2691
    %v3091 = vpop.f32.mrb[0].mxu0
    %v3092 = vadd.f32 0.0, %v3091
    %v3093 = vpop.f32.mrb[0].mxu0
    %v3094 = vadd.f32 0.0, %v3093
    %3095 = vdwg.mxu0
    %3096 = vmatprep.subr.mxu0 %v2872
    %3097 = vmatpush1.msra.mxu0 %v2871
    %3098 = vmatprep.subr.mxu0 %v2876
    %3099 = vmatpush1.msra.mxu0 %v2875
    %3100 = vmatprep.subr.mxu0 %v2880
    %3101 = vmatpush1.msra.mxu0 %v2879
    %3102 = vmatprep.subr.mxu0 %v2884
    %3103 = vmatpush1.msra.mxu0 %v2883
    %3104 = vmatprep.subr.mxu0 %v2888
    %3105 = vmatpush1.msra.mxu0 %v2887
    %3106 = vmatprep.subr.mxu0 %v2892
    %3107 = vmatpush1.msra.mxu0 %v2891
    %3108 = vmatprep.subr.mxu0 %v2896
    %3109 = vmatpush1.msra.mxu0 %v2895
    %3110 = vmatprep.subr.mxu0 %v2900
    %3111 = vmatpush1.msra.mxu0 %v2899
    %3112 = vmatprep.subr.mxu0 %v2904
    %3113 = vmatpush1.msra.mxu0 %v2903
    %3114 = vmatprep.subr.mxu0 %v2908
    %3115 = vmatpush1.msra.mxu0 %v2907
    %3116 = vmatprep.subr.mxu0 %v2912
    %3117 = vmatpush1.msra.mxu0 %v2911
    %3118 = vmatprep.subr.mxu0 %v2916
    %3119 = vmatpush1.msra.mxu0 %v2915
    %3120 = vmatprep.subr.mxu0 %v2920
    %3121 = vmatpush1.msra.mxu0 %v2919
    %3122 = vmatprep.subr.mxu0 %v2924
    %3123 = vmatpush1.msra.mxu0 %v2923
    %3124 = vmatprep.subr.mxu0 %v2928
    %3125 = vmatpush1.msra.mxu0 %v2927
    %3126 = vmatprep.subr.mxu0 %v2932
    %3127 = vmatpush1.msra.mxu0 %v2931
    %3128 = vmatprep.subr.mxu0 0.0
    %3129 = vmatpush1.msra.mxu0 0.0
    %3130 = vmatprep.subr.mxu0 0.0
    %3131 = vmatpush1.msra.mxu0 0.0
    %3132 = vmatprep.subr.mxu0 0.0
    %3133 = vmatpush1.msra.mxu0 0.0
    %3134 = vmatprep.subr.mxu0 0.0
    %3135 = vmatpush1.msra.mxu0 0.0
    %3136 = vmatprep.subr.mxu0 0.0
    %3137 = vmatpush1.msra.mxu0 0.0
    %3138 = vmatprep.subr.mxu0 0.0
    %3139 = vmatpush1.msra.mxu0 0.0
    %3140 = vmatprep.subr.mxu0 0.0
    %3141 = vmatpush1.msra.mxu0 0.0
    %3142 = vmatprep.subr.mxu0 0.0
    %3143 = vmatpush1.msra.mxu0 0.0
    %3144 = vmatprep.subr.mxu0 0.0
    %3145 = vmatpush1.msra.mxu0 0.0
    %3146 = vmatprep.subr.mxu0 0.0
    %3147 = vmatpush1.msra.mxu0 0.0
    %3148 = vmatprep.subr.mxu0 0.0
    %3149 = vmatpush1.msra.mxu0 0.0
    %3150 = vmatprep.subr.mxu0 0.0
    %3151 = vmatpush1.msra.mxu0 0.0
    %3152 = vmatprep.subr.mxu0 0.0
    %3153 = vmatpush1.msra.mxu0 0.0
    %3154 = vmatprep.subr.mxu0 0.0
    %3155 = vmatpush1.msra.mxu0 0.0
    %3156 = vmatprep.subr.mxu0 0.0
    %3157 = vmatpush1.msra.mxu0 0.0
    %3158 = vmatprep.subr.mxu0 0.0
    %3159 = vmatpush1.msra.mxu0 0.0
    %3160 = vmatprep.mubr.f32.mxu0 0.0
    %3161 = vmatmul.mubr.f32.gmra.mrb[0].mxu0 %v2606
    %v3162 = vpop.f32.mrb[0].mxu0
    %v3163 = vadd.f32 %v3002, %v3162
    %v3164 = vpop.f32.mrb[0].mxu0
    %v3165 = vadd.f32 %v3004, %v3164
    %3166 = vmatprep.mubr.f32.mxu0 0.0
    %3167 = vmatmul.mubr.f32.gmra.mrb[0].mxu0 %v2609
    %v3168 = vpop.f32.mrb[0].mxu0
    %v3169 = vadd.f32 %v3008, %v3168
    %v3170 = vpop.f32.mrb[0].mxu0
    %v3171 = vadd.f32 %v3010, %v3170
    %3172 = vmatprep.mubr.f32.mxu0 0.0
    %3173 = vmatmul.mubr.f32.gmra.mrb[0].mxu0 %v2618
    %v3174 = vpop.f32.mrb[0].mxu0
    %v3175 = vadd.f32 %v3014, %v3174
    %v3176 = vpop.f32.mrb[0].mxu0
    %v3177 = vadd.f32 %v3016, %v3176
    %3178 = vmatprep.mubr.f32.mxu0 0.0
    %3179 = vmatmul.mubr.f32.gmra.mrb[0].mxu0 %v2621
    %v3180 = vpop.f32.mrb[0].mxu0
    %v3181 = vadd.f32 %v3020, %v3180
    %v3182 = vpop.f32.mrb[0].mxu0
    %v3183 = vadd.f32 %v3022, %v3182
    %3184 = vmatprep.mubr.f32.mxu0 0.0
    %3185 = vmatmul.mubr.f32.gmra.mrb[0].mxu0 %v2630
    %v3186 = vpop.f32.mrb[0].mxu0
    %v3187 = vadd.f32 %v3026, %v3186
    %v3188 = vpop.f32.mrb[0].mxu0
    %v3189 = vadd.f32 %v3028, %v3188
    %3190 = vmatprep.mubr.f32.mxu0 0.0
    %3191 = vmatmul.mubr.f32.gmra.mrb[0].mxu0 %v2633
    %v3192 = vpop.f32.mrb[0].mxu0
    %v3193 = vadd.f32 %v3032, %v3192
    %v3194 = vpop.f32.mrb[0].mxu0
    %v3195 = vadd.f32 %v3034, %v3194
    %3196 = vmatprep.mubr.f32.mxu0 0.0
    %3197 = vmatmul.mubr.f32.gmra.mrb[0].mxu0 %v2642
    %v3198 = vpop.f32.mrb[0].mxu0
    %v3199 = vadd.f32 %v3038, %v3198
    %v3200 = vpop.f32.mrb[0].mxu0
    %v3201 = vadd.f32 %v3040, %v3200
    %3202 = vmatprep.mubr.f32.mxu0 0.0
    %3203 = vmatmul.mubr.f32.gmra.mrb[0].mxu0 %v2645
    %v3204 = vpop.f32.mrb[0].mxu0
    %v3205 = vadd.f32 %v3044, %v3204
    %v3206 = vpop.f32.mrb[0].mxu0
    %v3207 = vadd.f32 %v3046, %v3206
    %3208 = vmatprep.mubr.f32.mxu0 0.0
    %3209 = vmatmul.mubr.f32.gmra.mrb[0].mxu0 %v2654
    %v3210 = vpop.f32.mrb[0].mxu0
    %v3211 = vadd.f32 %v3050, %v3210
    %v3212 = vpop.f32.mrb[0].mxu0
    %v3213 = vadd.f32 %v3052, %v3212
    %3214 = vmatprep.mubr.f32.mxu0 0.0
    %3215 = vmatmul.mubr.f32.gmra.mrb[0].mxu0 %v2657
    %v3216 = vpop.f32.mrb[0].mxu0
    %v3217 = vadd.f32 %v3056, %v3216
    %v3218 = vpop.f32.mrb[0].mxu0
    %v3219 = vadd.f32 %v3058, %v3218
    %3220 = vmatprep.mubr.f32.mxu0 0.0
    %3221 = vmatmul.mubr.f32.gmra.mrb[0].mxu0 %v2666
    %v3222 = vpop.f32.mrb[0].mxu0
    %v3223 = vadd.f32 %v3062, %v3222
    %v3224 = vpop.f32.mrb[0].mxu0
    %v3225 = vadd.f32 %v3064, %v3224
    %3226 = vmatprep.mubr.f32.mxu0 0.0
    %3227 = vmatmul.mubr.f32.gmra.mrb[0].mxu0 %v2669
    %v3228 = vpop.f32.mrb[0].mxu0
    %v3229 = vadd.f32 %v3068, %v3228
    %v3230 = vpop.f32.mrb[0].mxu0
    %v3231 = vadd.f32 %v3070, %v3230
    %3232 = vmatprep.mubr.f32.mxu0 0.0
    %3233 = vmatmul.mubr.f32.gmra.mrb[0].mxu0 %v2678
    %v3234 = vpop.f32.mrb[0].mxu0
    %v3235 = vadd.f32 %v3074, %v3234
    %v3236 = vpop.f32.mrb[0].mxu0
    %v3237 = vadd.f32 %v3076, %v3236
    %3238 = vmatprep.mubr.f32.mxu0 0.0
    %3239 = vmatmul.mubr.f32.gmra.mrb[0].mxu0 %v2681
    %v3240 = vpop.f32.mrb[0].mxu0
    %v3241 = vadd.f32 %v3080, %v3240
    %v3242 = vpop.f32.mrb[0].mxu0
    %v3243 = vadd.f32 %v3082, %v3242
    %3244 = vmatprep.mubr.f32.mxu0 0.0
    %3245 = vmatmul.mubr.f32.gmra.mrb[0].mxu0 %v2690
    %v3246 = vpop.f32.mrb[0].mxu0
    %v3247 = vadd.f32 %v3086, %v3246
    %v3248 = vpop.f32.mrb[0].mxu0
    %v3249 = vadd.f32 %v3088, %v3248
    %3250 = vmatprep.mubr.f32.mxu0 0.0
    %3251 = vmatmul.mubr.f32.gmra.mrb[0].mxu0 %v2693
    %v3252 = vpop.f32.mrb[0].mxu0
    %v3253 = vadd.f32 %v3092, %v3252
    %v3254 = vpop.f32.mrb[0].mxu0
    %v3255 = vadd.f32 %v3094, %v3254
    %3256 = vdwg.mxu0
    %3257 = vmatprep.subr.mxu0 %v2746
    %3258 = vmatpush1.msra.mxu0 %v2745
    %3259 = vmatprep.subr.mxu0 %v2750
    %3260 = vmatpush1.msra.mxu0 %v2749
    %3261 = vmatprep.subr.mxu0 %v2754
    %3262 = vmatpush1.msra.mxu0 %v2753
    %3263 = vmatprep.subr.mxu0 %v2758
    %3264 = vmatpush1.msra.mxu0 %v2757
    %3265 = vmatprep.subr.mxu0 %v2762
    %3266 = vmatpush1.msra.mxu0 %v2761
    %3267 = vmatprep.subr.mxu0 %v2766
    %3268 = vmatpush1.msra.mxu0 %v2765
    %3269 = vmatprep.subr.mxu0 %v2770
    %3270 = vmatpush1.msra.mxu0 %v2769
    %3271 = vmatprep.subr.mxu0 %v2774
    %3272 = vmatpush1.msra.mxu0 %v2773
    %3273 = vmatprep.subr.mxu0 %v2778
    %3274 = vmatpush1.msra.mxu0 %v2777
    %3275 = vmatprep.subr.mxu0 %v2782
    %3276 = vmatpush1.msra.mxu0 %v2781
    %3277 = vmatprep.subr.mxu0 %v2786
    %3278 = vmatpush1.msra.mxu0 %v2785
    %3279 = vmatprep.subr.mxu0 %v2790
    %3280 = vmatpush1.msra.mxu0 %v2789
    %3281 = vmatprep.subr.mxu0 %v2794
    %3282 = vmatpush1.msra.mxu0 %v2793
    %3283 = vmatprep.subr.mxu0 %v2798
    %3284 = vmatpush1.msra.mxu0 %v2797
    %3285 = vmatprep.subr.mxu0 %v2802
    %3286 = vmatpush1.msra.mxu0 %v2801
    %3287 = vmatprep.subr.mxu0 %v2806
    %3288 = vmatpush1.msra.mxu0 %v2805
    %3289 = vmatprep.subr.mxu0 %v2810
    %3290 = vmatpush1.msra.mxu0 %v2809
    %3291 = vmatprep.subr.mxu0 %v2814
    %3292 = vmatpush1.msra.mxu0 %v2813
    %3293 = vmatprep.subr.mxu0 %v2818
    %3294 = vmatpush1.msra.mxu0 %v2817
    %3295 = vmatprep.subr.mxu0 %v2822
    %3296 = vmatpush1.msra.mxu0 %v2821
    %3297 = vmatprep.subr.mxu0 %v2826
    %3298 = vmatpush1.msra.mxu0 %v2825
    %3299 = vmatprep.subr.mxu0 %v2830
    %3300 = vmatpush1.msra.mxu0 %v2829
    %3301 = vmatprep.subr.mxu0 %v2834
    %3302 = vmatpush1.msra.mxu0 %v2833
    %3303 = vmatprep.subr.mxu0 %v2838
    %3304 = vmatpush1.msra.mxu0 %v2837
    %3305 = vmatprep.subr.mxu0 %v2842
    %3306 = vmatpush1.msra.mxu0 %v2841
    %3307 = vmatprep.subr.mxu0 %v2846
    %3308 = vmatpush1.msra.mxu0 %v2845
    %3309 = vmatprep.subr.mxu0 %v2850
    %3310 = vmatpush1.msra.mxu0 %v2849
    %3311 = vmatprep.subr.mxu0 %v2854
    %3312 = vmatpush1.msra.mxu0 %v2853
    %3313 = vmatprep.subr.mxu0 %v2858
    %3314 = vmatpush1.msra.mxu0 %v2857
    %3315 = vmatprep.subr.mxu0 %v2862
    %3316 = vmatpush1.msra.mxu0 %v2861
    %3317 = vmatprep.subr.mxu0 %v2866
    %3318 = vmatpush1.msra.mxu0 %v2865
    %3319 = vmatprep.subr.mxu0 %v2870
    %3320 = vmatpush1.msra.mxu0 %v2869
    %3321 = vmatprep.mubr.f32.mxu0 %v2603
    %3322 = vmatmul.mubr.f32.gmra.mrb[0].mxu0 %v2600
    %v3323 = vpop.f32.mrb[0].mxu0
    %v3324 = vadd.f32 0.0, %v3323
    %v3325 = vpop.f32.mrb[0].mxu0
    %v3326 = vadd.f32 0.0, %v3325
    %3327 = vmatprep.mubr.f32.mxu0 %v2608
    %3328 = vmatmul.mubr.f32.gmra.mrb[0].mxu0 %v2607
    %v3329 = vpop.f32.mrb[0].mxu0
    %v3330 = vadd.f32 0.0, %v3329
    %v3331 = vpop.f32.mrb[0].mxu0
    %v3332 = vadd.f32 0.0, %v3331
    %3333 = vmatprep.mubr.f32.mxu0 %v2615
    %3334 = vmatmul.mubr.f32.gmra.mrb[0].mxu0 %v2612
    %v3335 = vpop.f32.mrb[0].mxu0
    %v3336 = vadd.f32 0.0, %v3335
    %v3337 = vpop.f32.mrb[0].mxu0
    %v3338 = vadd.f32 0.0, %v3337
    %3339 = vmatprep.mubr.f32.mxu0 %v2620
    %3340 = vmatmul.mubr.f32.gmra.mrb[0].mxu0 %v2619
    %v3341 = vpop.f32.mrb[0].mxu0
    %v3342 = vadd.f32 0.0, %v3341
    %v3343 = vpop.f32.mrb[0].mxu0
    %v3344 = vadd.f32 0.0, %v3343
    %3345 = vmatprep.mubr.f32.mxu0 %v2627
    %3346 = vmatmul.mubr.f32.gmra.mrb[0].mxu0 %v2624
    %v3347 = vpop.f32.mrb[0].mxu0
    %v3348 = vadd.f32 0.0, %v3347
    %v3349 = vpop.f32.mrb[0].mxu0
    %v3350 = vadd.f32 0.0, %v3349
    %3351 = vmatprep.mubr.f32.mxu0 %v2632
    %3352 = vmatmul.mubr.f32.gmra.mrb[0].mxu0 %v2631
    %v3353 = vpop.f32.mrb[0].mxu0
    %v3354 = vadd.f32 0.0, %v3353
    %v3355 = vpop.f32.mrb[0].mxu0
    %v3356 = vadd.f32 0.0, %v3355
    %3357 = vmatprep.mubr.f32.mxu0 %v2639
    %3358 = vmatmul.mubr.f32.gmra.mrb[0].mxu0 %v2636
    %v3359 = vpop.f32.mrb[0].mxu0
    %v3360 = vadd.f32 0.0, %v3359
    %v3361 = vpop.f32.mrb[0].mxu0
    %v3362 = vadd.f32 0.0, %v3361
    %3363 = vmatprep.mubr.f32.mxu0 %v2644
    %3364 = vmatmul.mubr.f32.gmra.mrb[0].mxu0 %v2643
    %v3365 = vpop.f32.mrb[0].mxu0
    %v3366 = vadd.f32 0.0, %v3365
    %v3367 = vpop.f32.mrb[0].mxu0
    %v3368 = vadd.f32 0.0, %v3367
    %3369 = vmatprep.mubr.f32.mxu0 %v2651
    %3370 = vmatmul.mubr.f32.gmra.mrb[0].mxu0 %v2648
    %v3371 = vpop.f32.mrb[0].mxu0
    %v3372 = vadd.f32 0.0, %v3371
    %v3373 = vpop.f32.mrb[0].mxu0
    %v3374 = vadd.f32 0.0, %v3373
    %3375 = vmatprep.mubr.f32.mxu0 %v2656
    %3376 = vmatmul.mubr.f32.gmra.mrb[0].mxu0 %v2655
    %v3377 = vpop.f32.mrb[0].mxu0
    %v3378 = vadd.f32 0.0, %v3377
    %v3379 = vpop.f32.mrb[0].mxu0
    %v3380 = vadd.f32 0.0, %v3379
    %3381 = vmatprep.mubr.f32.mxu0 %v2663
    %3382 = vmatmul.mubr.f32.gmra.mrb[0].mxu0 %v2660
    %v3383 = vpop.f32.mrb[0].mxu0
    %v3384 = vadd.f32 0.0, %v3383
    %v3385 = vpop.f32.mrb[0].mxu0
    %v3386 = vadd.f32 0.0, %v3385
    %3387 = vmatprep.mubr.f32.mxu0 %v2668
    %3388 = vmatmul.mubr.f32.gmra.mrb[0].mxu0 %v2667
    %v3389 = vpop.f32.mrb[0].mxu0
    %v3390 = vadd.f32 0.0, %v3389
    %v3391 = vpop.f32.mrb[0].mxu0
    %v3392 = vadd.f32 0.0, %v3391
    %3393 = vmatprep.mubr.f32.mxu0 %v2675
    %3394 = vmatmul.mubr.f32.gmra.mrb[0].mxu0 %v2672
    %v3395 = vpop.f32.mrb[0].mxu0
    %v3396 = vadd.f32 0.0, %v3395
    %v3397 = vpop.f32.mrb[0].mxu0
    %v3398 = vadd.f32 0.0, %v3397
    %3399 = vmatprep.mubr.f32.mxu0 %v2680
    %3400 = vmatmul.mubr.f32.gmra.mrb[0].mxu0 %v2679
    %v3401 = vpop.f32.mrb[0].mxu0
    %v3402 = vadd.f32 0.0, %v3401
    %v3403 = vpop.f32.mrb[0].mxu0
    %v3404 = vadd.f32 0.0, %v3403
    %3405 = vmatprep.mubr.f32.mxu0 %v2687
    %3406 = vmatmul.mubr.f32.gmra.mrb[0].mxu0 %v2684
    %v3407 = vpop.f32.mrb[0].mxu0
    %v3408 = vadd.f32 0.0, %v3407
    %v3409 = vpop.f32.mrb[0].mxu0
    %v3410 = vadd.f32 0.0, %v3409
    %3411 = vmatprep.mubr.f32.mxu0 %v2692
    %3412 = vmatmul.mubr.f32.gmra.mrb[0].mxu0 %v2691
    %v3413 = vpop.f32.mrb[0].mxu0
    %v3414 = vadd.f32 0.0, %v3413
    %v3415 = vpop.f32.mrb[0].mxu0
    %v3416 = vadd.f32 0.0, %v3415
    %3417 = vdwg.mxu0
    %3418 = vmatprep.subr.mxu0 %v2874
    %3419 = vmatpush1.msra.mxu0 %v2873
    %3420 = vmatprep.subr.mxu0 %v2878
    %3421 = vmatpush1.msra.mxu0 %v2877
    %3422 = vmatprep.subr.mxu0 %v2882
    %3423 = vmatpush1.msra.mxu0 %v2881
    %3424 = vmatprep.subr.mxu0 %v2886
    %3425 = vmatpush1.msra.mxu0 %v2885
    %3426 = vmatprep.subr.mxu0 %v2890
    %3427 = vmatpush1.msra.mxu0 %v2889
    %3428 = vmatprep.subr.mxu0 %v2894
    %3429 = vmatpush1.msra.mxu0 %v2893
    %3430 = vmatprep.subr.mxu0 %v2898
    %3431 = vmatpush1.msra.mxu0 %v2897
    %3432 = vmatprep.subr.mxu0 %v2902
    %3433 = vmatpush1.msra.mxu0 %v2901
    %3434 = vmatprep.subr.mxu0 %v2906
    %3435 = vmatpush1.msra.mxu0 %v2905
    %3436 = vmatprep.subr.mxu0 %v2910
    %3437 = vmatpush1.msra.mxu0 %v2909
    %3438 = vmatprep.subr.mxu0 %v2914
    %3439 = vmatpush1.msra.mxu0 %v2913
    %3440 = vmatprep.subr.mxu0 %v2918
    %3441 = vmatpush1.msra.mxu0 %v2917
    %3442 = vmatprep.subr.mxu0 %v2922
    %3443 = vmatpush1.msra.mxu0 %v2921
    %3444 = vmatprep.subr.mxu0 %v2926
    %3445 = vmatpush1.msra.mxu0 %v2925
    %3446 = vmatprep.subr.mxu0 %v2930
    %3447 = vmatpush1.msra.mxu0 %v2929
    %3448 = vmatprep.subr.mxu0 %v2934
    %3449 = vmatpush1.msra.mxu0 %v2933
    %3450 = vmatprep.subr.mxu0 0.0
    %3451 = vmatpush1.msra.mxu0 0.0
    %3452 = vmatprep.subr.mxu0 0.0
    %3453 = vmatpush1.msra.mxu0 0.0
    %3454 = vmatprep.subr.mxu0 0.0
    %3455 = vmatpush1.msra.mxu0 0.0
    %3456 = vmatprep.subr.mxu0 0.0
    %3457 = vmatpush1.msra.mxu0 0.0
    %3458 = vmatprep.subr.mxu0 0.0
    %3459 = vmatpush1.msra.mxu0 0.0
    %3460 = vmatprep.subr.mxu0 0.0
    %3461 = vmatpush1.msra.mxu0 0.0
    %3462 = vmatprep.subr.mxu0 0.0
    %3463 = vmatpush1.msra.mxu0 0.0
    %3464 = vmatprep.subr.mxu0 0.0
    %3465 = vmatpush1.msra.mxu0 0.0
    %3466 = vmatprep.subr.mxu0 0.0
    %3467 = vmatpush1.msra.mxu0 0.0
    %3468 = vmatprep.subr.mxu0 0.0
    %3469 = vmatpush1.msra.mxu0 0.0
    %3470 = vmatprep.subr.mxu0 0.0
    %3471 = vmatpush1.msra.mxu0 0.0
    %3472 = vmatprep.subr.mxu0 0.0
    %3473 = vmatpush1.msra.mxu0 0.0
    %3474 = vmatprep.subr.mxu0 0.0
    %3475 = vmatpush1.msra.mxu0 0.0
    %3476 = vmatprep.subr.mxu0 0.0
    %3477 = vmatpush1.msra.mxu0 0.0
    %3478 = vmatprep.subr.mxu0 0.0
    %3479 = vmatpush1.msra.mxu0 0.0
    %3480 = vmatprep.subr.mxu0 0.0
    %3481 = vmatpush1.msra.mxu0 0.0
    %3482 = vmatprep.mubr.f32.mxu0 0.0
    %3483 = vmatmul.mubr.f32.gmra.mrb[0].mxu0 %v2606
    %v3484 = vpop.f32.mrb[0].mxu0
    %v3485 = vadd.f32 %v3324, %v3484
    %v3486 = vpop.f32.mrb[0].mxu0
    %v3487 = vadd.f32 %v3326, %v3486
    %3488 = vmatprep.mubr.f32.mxu0 0.0
    %3489 = vmatmul.mubr.f32.gmra.mrb[0].mxu0 %v2609
    %v3490 = vpop.f32.mrb[0].mxu0
    %v3491 = vadd.f32 %v3330, %v3490
    %v3492 = vpop.f32.mrb[0].mxu0
    %v3493 = vadd.f32 %v3332, %v3492
    %3494 = vmatprep.mubr.f32.mxu0 0.0
    %3495 = vmatmul.mubr.f32.gmra.mrb[0].mxu0 %v2618
    %v3496 = vpop.f32.mrb[0].mxu0
    %v3497 = vadd.f32 %v3336, %v3496
    %v3498 = vpop.f32.mrb[0].mxu0
    %v3499 = vadd.f32 %v3338, %v3498
    %3500 = vmatprep.mubr.f32.mxu0 0.0
    %3501 = vmatmul.mubr.f32.gmra.mrb[0].mxu0 %v2621
    %v3502 = vpop.f32.mrb[0].mxu0
    %v3503 = vadd.f32 %v3342, %v3502
    %v3504 = vpop.f32.mrb[0].mxu0
    %v3505 = vadd.f32 %v3344, %v3504
    %3506 = vmatprep.mubr.f32.mxu0 0.0
    %3507 = vmatmul.mubr.f32.gmra.mrb[0].mxu0 %v2630
    %v3508 = vpop.f32.mrb[0].mxu0
    %v3509 = vadd.f32 %v3348, %v3508
    %v3510 = vpop.f32.mrb[0].mxu0
    %v3511 = vadd.f32 %v3350, %v3510
    %3512 = vmatprep.mubr.f32.mxu0 0.0
    %3513 = vmatmul.mubr.f32.gmra.mrb[0].mxu0 %v2633
    %v3514 = vpop.f32.mrb[0].mxu0
    %v3515 = vadd.f32 %v3354, %v3514
    %v3516 = vpop.f32.mrb[0].mxu0
    %v3517 = vadd.f32 %v3356, %v3516
    %3518 = vmatprep.mubr.f32.mxu0 0.0
    %3519 = vmatmul.mubr.f32.gmra.mrb[0].mxu0 %v2642
    %v3520 = vpop.f32.mrb[0].mxu0
    %v3521 = vadd.f32 %v3360, %v3520
    %v3522 = vpop.f32.mrb[0].mxu0
    %v3523 = vadd.f32 %v3362, %v3522
    %3524 = vmatprep.mubr.f32.mxu0 0.0
    %3525 = vmatmul.mubr.f32.gmra.mrb[0].mxu0 %v2645
    %v3526 = vpop.f32.mrb[0].mxu0
    %v3527 = vadd.f32 %v3366, %v3526
    %v3528 = vpop.f32.mrb[0].mxu0
    %v3529 = vadd.f32 %v3368, %v3528
    %3530 = vmatprep.mubr.f32.mxu0 0.0
    %3531 = vmatmul.mubr.f32.gmra.mrb[0].mxu0 %v2654
    %v3532 = vpop.f32.mrb[0].mxu0
    %v3533 = vadd.f32 %v3372, %v3532
    %v3534 = vpop.f32.mrb[0].mxu0
    %v3535 = vadd.f32 %v3374, %v3534
    %3536 = vmatprep.mubr.f32.mxu0 0.0
    %3537 = vmatmul.mubr.f32.gmra.mrb[0].mxu0 %v2657
    %v3538 = vpop.f32.mrb[0].mxu0
    %v3539 = vadd.f32 %v3378, %v3538
    %v3540 = vpop.f32.mrb[0].mxu0
    %v3541 = vadd.f32 %v3380, %v3540
    %3542 = vmatprep.mubr.f32.mxu0 0.0
    %3543 = vmatmul.mubr.f32.gmra.mrb[0].mxu0 %v2666
    %v3544 = vpop.f32.mrb[0].mxu0
    %v3545 = vadd.f32 %v3384, %v3544
    %v3546 = vpop.f32.mrb[0].mxu0
    %v3547 = vadd.f32 %v3386, %v3546
    %3548 = vmatprep.mubr.f32.mxu0 0.0
    %3549 = vmatmul.mubr.f32.gmra.mrb[0].mxu0 %v2669
    %v3550 = vpop.f32.mrb[0].mxu0
    %v3551 = vadd.f32 %v3390, %v3550
    %v3552 = vpop.f32.mrb[0].mxu0
    %v3553 = vadd.f32 %v3392, %v3552
    %3554 = vmatprep.mubr.f32.mxu0 0.0
    %3555 = vmatmul.mubr.f32.gmra.mrb[0].mxu0 %v2678
    %v3556 = vpop.f32.mrb[0].mxu0
    %v3557 = vadd.f32 %v3396, %v3556
    %v3558 = vpop.f32.mrb[0].mxu0
    %v3559 = vadd.f32 %v3398, %v3558
    %3560 = vmatprep.mubr.f32.mxu0 0.0
    %3561 = vmatmul.mubr.f32.gmra.mrb[0].mxu0 %v2681
    %v3562 = vpop.f32.mrb[0].mxu0
    %v3563 = vadd.f32 %v3402, %v3562
    %v3564 = vpop.f32.mrb[0].mxu0
    %v3565 = vadd.f32 %v3404, %v3564
    %3566 = vmatprep.mubr.f32.mxu0 0.0
    %3567 = vmatmul.mubr.f32.gmra.mrb[0].mxu0 %v2690
    %v3568 = vpop.f32.mrb[0].mxu0
    %v3569 = vadd.f32 %v3408, %v3568
    %v3570 = vpop.f32.mrb[0].mxu0
    %v3571 = vadd.f32 %v3410, %v3570
    %3572 = vmatprep.mubr.f32.mxu0 0.0
    %3573 = vmatmul.mubr.f32.gmra.mrb[0].mxu0 %v2693
    %v3574 = vpop.f32.mrb[0].mxu0
    %v3575 = vadd.f32 %v3414, %v3574
    %v3576 = vpop.f32.mrb[0].mxu0
    %v3577 = vadd.f32 %v3416, %v3576
    %3578 = vdwg.mxu0
    %3579 = vmatprep.subr.mxu0 %v2358
    %3580 = vmatpush1.msra.mxu0 %v2357
    %3581 = vmatprep.subr.mxu0 %v2362
    %3582 = vmatpush1.msra.mxu0 %v2361
    %3583 = vmatprep.subr.mxu0 %v2366
    %3584 = vmatpush1.msra.mxu0 %v2365
    %3585 = vmatprep.subr.mxu0 %v2370
    %3586 = vmatpush1.msra.mxu0 %v2369
    %3587 = vmatprep.subr.mxu0 %v2374
    %3588 = vmatpush1.msra.mxu0 %v2373
    %3589 = vmatprep.subr.mxu0 %v2378
    %3590 = vmatpush1.msra.mxu0 %v2377
    %3591 = vmatprep.subr.mxu0 %v2382
    %3592 = vmatpush1.msra.mxu0 %v2381
    %3593 = vmatprep.subr.mxu0 %v2386
    %3594 = vmatpush1.msra.mxu0 %v2385
    %3595 = vmatprep.subr.mxu0 %v2390
    %3596 = vmatpush1.msra.mxu0 %v2389
    %3597 = vmatprep.subr.mxu0 %v2394
    %3598 = vmatpush1.msra.mxu0 %v2393
    %3599 = vmatprep.subr.mxu0 %v2398
    %3600 = vmatpush1.msra.mxu0 %v2397
    %3601 = vmatprep.subr.mxu0 %v2402
    %3602 = vmatpush1.msra.mxu0 %v2401
    %3603 = vmatprep.subr.mxu0 %v2406
    %3604 = vmatpush1.msra.mxu0 %v2405
    %3605 = vmatprep.subr.mxu0 %v2410
    %3606 = vmatpush1.msra.mxu0 %v2409
    %3607 = vmatprep.subr.mxu0 %v2414
    %3608 = vmatpush1.msra.mxu0 %v2413
    %3609 = vmatprep.subr.mxu0 %v2418
    %3610 = vmatpush1.msra.mxu0 %v2417
    %3611 = vmatprep.subr.mxu0 %v2422
    %3612 = vmatpush1.msra.mxu0 %v2421
    %3613 = vmatprep.subr.mxu0 %v2426
    %3614 = vmatpush1.msra.mxu0 %v2425
    %3615 = vmatprep.subr.mxu0 %v2430
    %3616 = vmatpush1.msra.mxu0 %v2429
    %3617 = vmatprep.subr.mxu0 %v2434
    %3618 = vmatpush1.msra.mxu0 %v2433
    %3619 = vmatprep.subr.mxu0 %v2438
    %3620 = vmatpush1.msra.mxu0 %v2437
    %3621 = vmatprep.subr.mxu0 %v2442
    %3622 = vmatpush1.msra.mxu0 %v2441
    %3623 = vmatprep.subr.mxu0 %v2446
    %3624 = vmatpush1.msra.mxu0 %v2445
    %3625 = vmatprep.subr.mxu0 %v2450
    %3626 = vmatpush1.msra.mxu0 %v2449
    %3627 = vmatprep.subr.mxu0 %v2454
    %3628 = vmatpush1.msra.mxu0 %v2453
    %3629 = vmatprep.subr.mxu0 %v2458
    %3630 = vmatpush1.msra.mxu0 %v2457
    %3631 = vmatprep.subr.mxu0 %v2462
    %3632 = vmatpush1.msra.mxu0 %v2461
    %3633 = vmatprep.subr.mxu0 %v2466
    %3634 = vmatpush1.msra.mxu0 %v2465
    %3635 = vmatprep.subr.mxu0 %v2470
    %3636 = vmatpush1.msra.mxu0 %v2469
    %3637 = vmatprep.subr.mxu0 %v2474
    %3638 = vmatpush1.msra.mxu0 %v2473
    %3639 = vmatprep.subr.mxu0 %v2478
    %3640 = vmatpush1.msra.mxu0 %v2477
    %3641 = vmatprep.subr.mxu0 %v2482
    %3642 = vmatpush1.msra.mxu0 %v2481
    %3643 = vmatprep.mubr.f32.mxu0 %v2310
    %3644 = vmatmul.mubr.f32.gmra.mrb[0].mxu0 %v2309
    %v3645 = vpop.f32.mrb[0].mxu0
    %v3646 = vadd.f32 %v3163, %v3645
    %v3647 = vpop.f32.mrb[0].mxu0
    %v3648 = vadd.f32 %v3165, %v3647
    %3649 = vmatprep.mubr.f32.mxu0 %v2313
    %3650 = vmatmul.mubr.f32.gmra.mrb[0].mxu0 %v2312
    %v3651 = vpop.f32.mrb[0].mxu0
    %v3652 = vadd.f32 %v3169, %v3651
    %v3653 = vpop.f32.mrb[0].mxu0
    %v3654 = vadd.f32 %v3171, %v3653
    %3655 = vmatprep.mubr.f32.mxu0 %v2316
    %3656 = vmatmul.mubr.f32.gmra.mrb[0].mxu0 %v2315
    %v3657 = vpop.f32.mrb[0].mxu0
    %v3658 = vadd.f32 %v3175, %v3657
    %v3659 = vpop.f32.mrb[0].mxu0
    %v3660 = vadd.f32 %v3177, %v3659
    %3661 = vmatprep.mubr.f32.mxu0 %v2319
    %3662 = vmatmul.mubr.f32.gmra.mrb[0].mxu0 %v2318
    %v3663 = vpop.f32.mrb[0].mxu0
    %v3664 = vadd.f32 %v3181, %v3663
    %v3665 = vpop.f32.mrb[0].mxu0
    %v3666 = vadd.f32 %v3183, %v3665
    %3667 = vmatprep.mubr.f32.mxu0 %v2322
    %3668 = vmatmul.mubr.f32.gmra.mrb[0].mxu0 %v2321
    %v3669 = vpop.f32.mrb[0].mxu0
    %v3670 = vadd.f32 %v3187, %v3669
    %v3671 = vpop.f32.mrb[0].mxu0
    %v3672 = vadd.f32 %v3189, %v3671
    %3673 = vmatprep.mubr.f32.mxu0 %v2325
    %3674 = vmatmul.mubr.f32.gmra.mrb[0].mxu0 %v2324
    %v3675 = vpop.f32.mrb[0].mxu0
    %v3676 = vadd.f32 %v3193, %v3675
    %v3677 = vpop.f32.mrb[0].mxu0
    %v3678 = vadd.f32 %v3195, %v3677
    %3679 = vmatprep.mubr.f32.mxu0 %v2328
    %3680 = vmatmul.mubr.f32.gmra.mrb[0].mxu0 %v2327
    %v3681 = vpop.f32.mrb[0].mxu0
    %v3682 = vadd.f32 %v3199, %v3681
    %v3683 = vpop.f32.mrb[0].mxu0
    %v3684 = vadd.f32 %v3201, %v3683
    %3685 = vmatprep.mubr.f32.mxu0 %v2331
    %3686 = vmatmul.mubr.f32.gmra.mrb[0].mxu0 %v2330
    %v3687 = vpop.f32.mrb[0].mxu0
    %v3688 = vadd.f32 %v3205, %v3687
    %v3689 = vpop.f32.mrb[0].mxu0
    %v3690 = vadd.f32 %v3207, %v3689
    %3691 = vmatprep.mubr.f32.mxu0 %v2334
    %3692 = vmatmul.mubr.f32.gmra.mrb[0].mxu0 %v2333
    %v3693 = vpop.f32.mrb[0].mxu0
    %v3694 = vadd.f32 %v3211, %v3693
    %v3695 = vpop.f32.mrb[0].mxu0
    %v3696 = vadd.f32 %v3213, %v3695
    %3697 = vmatprep.mubr.f32.mxu0 %v2337
    %3698 = vmatmul.mubr.f32.gmra.mrb[0].mxu0 %v2336
    %v3699 = vpop.f32.mrb[0].mxu0
    %v3700 = vadd.f32 %v3217, %v3699
    %v3701 = vpop.f32.mrb[0].mxu0
    %v3702 = vadd.f32 %v3219, %v3701
    %3703 = vmatprep.mubr.f32.mxu0 %v2340
    %3704 = vmatmul.mubr.f32.gmra.mrb[0].mxu0 %v2339
    %v3705 = vpop.f32.mrb[0].mxu0
    %v3706 = vadd.f32 %v3223, %v3705
    %v3707 = vpop.f32.mrb[0].mxu0
    %v3708 = vadd.f32 %v3225, %v3707
    %3709 = vmatprep.mubr.f32.mxu0 %v2343
    %3710 = vmatmul.mubr.f32.gmra.mrb[0].mxu0 %v2342
    %v3711 = vpop.f32.mrb[0].mxu0
    %v3712 = vadd.f32 %v3229, %v3711
    %v3713 = vpop.f32.mrb[0].mxu0
    %v3714 = vadd.f32 %v3231, %v3713
    %3715 = vmatprep.mubr.f32.mxu0 %v2346
    %3716 = vmatmul.mubr.f32.gmra.mrb[0].mxu0 %v2345
    %v3717 = vpop.f32.mrb[0].mxu0
    %v3718 = vadd.f32 %v3235, %v3717
    %v3719 = vpop.f32.mrb[0].mxu0
    %v3720 = vadd.f32 %v3237, %v3719
    %3721 = vmatprep.mubr.f32.mxu0 %v2349
    %3722 = vmatmul.mubr.f32.gmra.mrb[0].mxu0 %v2348
    %v3723 = vpop.f32.mrb[0].mxu0
    %v3724 = vadd.f32 %v3241, %v3723
    %v3725 = vpop.f32.mrb[0].mxu0
    %v3726 = vadd.f32 %v3243, %v3725
    %3727 = vmatprep.mubr.f32.mxu0 %v2352
    %3728 = vmatmul.mubr.f32.gmra.mrb[0].mxu0 %v2351
    %v3729 = vpop.f32.mrb[0].mxu0
    %v3730 = vadd.f32 %v3247, %v3729
    %v3731 = vpop.f32.mrb[0].mxu0
    %v3732 = vadd.f32 %v3249, %v3731
    %3733 = vmatprep.mubr.f32.mxu0 %v2355
    %3734 = vmatmul.mubr.f32.gmra.mrb[0].mxu0 %v2354
    %v3735 = vpop.f32.mrb[0].mxu0
    %v3736 = vadd.f32 %v3253, %v3735
    %v3737 = vpop.f32.mrb[0].mxu0
    %v3738 = vadd.f32 %v3255, %v3737
    %3739 = vdwg.mxu0
    %3740 = vmatprep.subr.mxu0 %v2486
    %3741 = vmatpush1.msra.mxu0 %v2485
    %3742 = vmatprep.subr.mxu0 %v2490
    %3743 = vmatpush1.msra.mxu0 %v2489
    %3744 = vmatprep.subr.mxu0 %v2494
    %3745 = vmatpush1.msra.mxu0 %v2493
    %3746 = vmatprep.subr.mxu0 %v2498
    %3747 = vmatpush1.msra.mxu0 %v2497
    %3748 = vmatprep.subr.mxu0 %v2502
    %3749 = vmatpush1.msra.mxu0 %v2501
    %3750 = vmatprep.subr.mxu0 %v2506
    %3751 = vmatpush1.msra.mxu0 %v2505
    %3752 = vmatprep.subr.mxu0 %v2510
    %3753 = vmatpush1.msra.mxu0 %v2509
    %3754 = vmatprep.subr.mxu0 %v2514
    %3755 = vmatpush1.msra.mxu0 %v2513
    %3756 = vmatprep.subr.mxu0 %v2518
    %3757 = vmatpush1.msra.mxu0 %v2517
    %3758 = vmatprep.subr.mxu0 %v2522
    %3759 = vmatpush1.msra.mxu0 %v2521
    %3760 = vmatprep.subr.mxu0 %v2526
    %3761 = vmatpush1.msra.mxu0 %v2525
    %3762 = vmatprep.subr.mxu0 %v2530
    %3763 = vmatpush1.msra.mxu0 %v2529
    %3764 = vmatprep.subr.mxu0 %v2534
    %3765 = vmatpush1.msra.mxu0 %v2533
    %3766 = vmatprep.subr.mxu0 %v2538
    %3767 = vmatpush1.msra.mxu0 %v2537
    %3768 = vmatprep.subr.mxu0 %v2542
    %3769 = vmatpush1.msra.mxu0 %v2541
    %3770 = vmatprep.subr.mxu0 %v2546
    %3771 = vmatpush1.msra.mxu0 %v2545
    %3772 = vmatprep.subr.mxu0 0.0
    %3773 = vmatpush1.msra.mxu0 0.0
    %3774 = vmatprep.subr.mxu0 0.0
    %3775 = vmatpush1.msra.mxu0 0.0
    %3776 = vmatprep.subr.mxu0 0.0
    %3777 = vmatpush1.msra.mxu0 0.0
    %3778 = vmatprep.subr.mxu0 0.0
    %3779 = vmatpush1.msra.mxu0 0.0
    %3780 = vmatprep.subr.mxu0 0.0
    %3781 = vmatpush1.msra.mxu0 0.0
    %3782 = vmatprep.subr.mxu0 0.0
    %3783 = vmatpush1.msra.mxu0 0.0
    %3784 = vmatprep.subr.mxu0 0.0
    %3785 = vmatpush1.msra.mxu0 0.0
    %3786 = vmatprep.subr.mxu0 0.0
    %3787 = vmatpush1.msra.mxu0 0.0
    %3788 = vmatprep.subr.mxu0 0.0
    %3789 = vmatpush1.msra.mxu0 0.0
    %3790 = vmatprep.subr.mxu0 0.0
    %3791 = vmatpush1.msra.mxu0 0.0
    %3792 = vmatprep.subr.mxu0 0.0
    %3793 = vmatpush1.msra.mxu0 0.0
    %3794 = vmatprep.subr.mxu0 0.0
    %3795 = vmatpush1.msra.mxu0 0.0
    %3796 = vmatprep.subr.mxu0 0.0
    %3797 = vmatpush1.msra.mxu0 0.0
    %3798 = vmatprep.subr.mxu0 0.0
    %3799 = vmatpush1.msra.mxu0 0.0
    %3800 = vmatprep.subr.mxu0 0.0
    %3801 = vmatpush1.msra.mxu0 0.0
    %3802 = vmatprep.subr.mxu0 0.0
    %3803 = vmatpush1.msra.mxu0 0.0
    %3804 = vmatprep.mubr.f32.mxu0 0.0
    %3805 = vmatmul.mubr.f32.gmra.mrb[0].mxu0 %v2311
    %v3806 = vpop.f32.mrb[0].mxu0
    %v3807 = vadd.f32 %v3646, %v3806
    %v3808 = vpop.f32.mrb[0].mxu0
    %v3809 = vadd.f32 %v3648, %v3808
    %3810 = vmatprep.mubr.f32.mxu0 0.0
    %3811 = vmatmul.mubr.f32.gmra.mrb[0].mxu0 %v2314
    %v3812 = vpop.f32.mrb[0].mxu0
    %v3813 = vadd.f32 %v3652, %v3812
    %v3814 = vpop.f32.mrb[0].mxu0
    %v3815 = vadd.f32 %v3654, %v3814
    %3816 = vmatprep.mubr.f32.mxu0 0.0
    %3817 = vmatmul.mubr.f32.gmra.mrb[0].mxu0 %v2317
    %v3818 = vpop.f32.mrb[0].mxu0
    %v3819 = vadd.f32 %v3658, %v3818
    %v3820 = vpop.f32.mrb[0].mxu0
    %v3821 = vadd.f32 %v3660, %v3820
    %3822 = vmatprep.mubr.f32.mxu0 0.0
    %3823 = vmatmul.mubr.f32.gmra.mrb[0].mxu0 %v2320
    %v3824 = vpop.f32.mrb[0].mxu0
    %v3825 = vadd.f32 %v3664, %v3824
    %v3826 = vpop.f32.mrb[0].mxu0
    %v3827 = vadd.f32 %v3666, %v3826
    %3828 = vmatprep.mubr.f32.mxu0 0.0
    %3829 = vmatmul.mubr.f32.gmra.mrb[0].mxu0 %v2323
    %v3830 = vpop.f32.mrb[0].mxu0
    %v3831 = vadd.f32 %v3670, %v3830
    %v3832 = vpop.f32.mrb[0].mxu0
    %v3833 = vadd.f32 %v3672, %v3832
    %3834 = vmatprep.mubr.f32.mxu0 0.0
    %3835 = vmatmul.mubr.f32.gmra.mrb[0].mxu0 %v2326
    %v3836 = vpop.f32.mrb[0].mxu0
    %v3837 = vadd.f32 %v3676, %v3836
    %v3838 = vpop.f32.mrb[0].mxu0
    %v3839 = vadd.f32 %v3678, %v3838
    %3840 = vmatprep.mubr.f32.mxu0 0.0
    %3841 = vmatmul.mubr.f32.gmra.mrb[0].mxu0 %v2329
    %v3842 = vpop.f32.mrb[0].mxu0
    %v3843 = vadd.f32 %v3682, %v3842
    %v3844 = vpop.f32.mrb[0].mxu0
    %v3845 = vadd.f32 %v3684, %v3844
    %3846 = vmatprep.mubr.f32.mxu0 0.0
    %3847 = vmatmul.mubr.f32.gmra.mrb[0].mxu0 %v2332
    %v3848 = vpop.f32.mrb[0].mxu0
    %v3849 = vadd.f32 %v3688, %v3848
    %v3850 = vpop.f32.mrb[0].mxu0
    %v3851 = vadd.f32 %v3690, %v3850
    %3852 = vmatprep.mubr.f32.mxu0 0.0
    %3853 = vmatmul.mubr.f32.gmra.mrb[0].mxu0 %v2335
    %v3854 = vpop.f32.mrb[0].mxu0
    %v3855 = vadd.f32 %v3694, %v3854
    %v3856 = vpop.f32.mrb[0].mxu0
    %v3857 = vadd.f32 %v3696, %v3856
    %3858 = vmatprep.mubr.f32.mxu0 0.0
    %3859 = vmatmul.mubr.f32.gmra.mrb[0].mxu0 %v2338
    %v3860 = vpop.f32.mrb[0].mxu0
    %v3861 = vadd.f32 %v3700, %v3860
    %v3862 = vpop.f32.mrb[0].mxu0
    %v3863 = vadd.f32 %v3702, %v3862
    %3864 = vmatprep.mubr.f32.mxu0 0.0
    %3865 = vmatmul.mubr.f32.gmra.mrb[0].mxu0 %v2341
    %v3866 = vpop.f32.mrb[0].mxu0
    %v3867 = vadd.f32 %v3706, %v3866
    %v3868 = vpop.f32.mrb[0].mxu0
    %v3869 = vadd.f32 %v3708, %v3868
    %3870 = vmatprep.mubr.f32.mxu0 0.0
    %3871 = vmatmul.mubr.f32.gmra.mrb[0].mxu0 %v2344
    %v3872 = vpop.f32.mrb[0].mxu0
    %v3873 = vadd.f32 %v3712, %v3872
    %v3874 = vpop.f32.mrb[0].mxu0
    %v3875 = vadd.f32 %v3714, %v3874
    %3876 = vmatprep.mubr.f32.mxu0 0.0
    %3877 = vmatmul.mubr.f32.gmra.mrb[0].mxu0 %v2347
    %v3878 = vpop.f32.mrb[0].mxu0
    %v3879 = vadd.f32 %v3718, %v3878
    %v3880 = vpop.f32.mrb[0].mxu0
    %v3881 = vadd.f32 %v3720, %v3880
    %3882 = vmatprep.mubr.f32.mxu0 0.0
    %3883 = vmatmul.mubr.f32.gmra.mrb[0].mxu0 %v2350
    %v3884 = vpop.f32.mrb[0].mxu0
    %v3885 = vadd.f32 %v3724, %v3884
    %v3886 = vpop.f32.mrb[0].mxu0
    %v3887 = vadd.f32 %v3726, %v3886
    %3888 = vmatprep.mubr.f32.mxu0 0.0
    %3889 = vmatmul.mubr.f32.gmra.mrb[0].mxu0 %v2353
    %v3890 = vpop.f32.mrb[0].mxu0
    %v3891 = vadd.f32 %v3730, %v3890
    %v3892 = vpop.f32.mrb[0].mxu0
    %v3893 = vadd.f32 %v3732, %v3892
    %3894 = vmatprep.mubr.f32.mxu0 0.0
    %3895 = vmatmul.mubr.f32.gmra.mrb[0].mxu0 %v2356
    %v3896 = vpop.f32.mrb[0].mxu0
    %v3897 = vadd.f32 %v3736, %v3896
    %v3898 = vpop.f32.mrb[0].mxu0
    %v3899 = vadd.f32 %v3738, %v3898
    %3900 = vdwg.mxu0
    %3901 = vmatprep.subr.mxu0 %v2360
    %3902 = vmatpush1.msra.mxu0 %v2359
    %3903 = vmatprep.subr.mxu0 %v2364
    %3904 = vmatpush1.msra.mxu0 %v2363
    %3905 = vmatprep.subr.mxu0 %v2368
    %3906 = vmatpush1.msra.mxu0 %v2367
    %3907 = vmatprep.subr.mxu0 %v2372
    %3908 = vmatpush1.msra.mxu0 %v2371
    %3909 = vmatprep.subr.mxu0 %v2376
    %3910 = vmatpush1.msra.mxu0 %v2375
    %3911 = vmatprep.subr.mxu0 %v2380
    %3912 = vmatpush1.msra.mxu0 %v2379
    %3913 = vmatprep.subr.mxu0 %v2384
    %3914 = vmatpush1.msra.mxu0 %v2383
    %3915 = vmatprep.subr.mxu0 %v2388
    %3916 = vmatpush1.msra.mxu0 %v2387
    %3917 = vmatprep.subr.mxu0 %v2392
    %3918 = vmatpush1.msra.mxu0 %v2391
    %3919 = vmatprep.subr.mxu0 %v2396
    %3920 = vmatpush1.msra.mxu0 %v2395
    %3921 = vmatprep.subr.mxu0 %v2400
    %3922 = vmatpush1.msra.mxu0 %v2399
    %3923 = vmatprep.subr.mxu0 %v2404
    %3924 = vmatpush1.msra.mxu0 %v2403
    %3925 = vmatprep.subr.mxu0 %v2408
    %3926 = vmatpush1.msra.mxu0 %v2407
    %3927 = vmatprep.subr.mxu0 %v2412
    %3928 = vmatpush1.msra.mxu0 %v2411
    %3929 = vmatprep.subr.mxu0 %v2416
    %3930 = vmatpush1.msra.mxu0 %v2415
    %3931 = vmatprep.subr.mxu0 %v2420
    %3932 = vmatpush1.msra.mxu0 %v2419
    %3933 = vmatprep.subr.mxu0 %v2424
    %3934 = vmatpush1.msra.mxu0 %v2423
    %3935 = vmatprep.subr.mxu0 %v2428
    %3936 = vmatpush1.msra.mxu0 %v2427
    %3937 = vmatprep.subr.mxu0 %v2432
    %3938 = vmatpush1.msra.mxu0 %v2431
    %3939 = vmatprep.subr.mxu0 %v2436
    %3940 = vmatpush1.msra.mxu0 %v2435
    %3941 = vmatprep.subr.mxu0 %v2440
    %3942 = vmatpush1.msra.mxu0 %v2439
    %3943 = vmatprep.subr.mxu0 %v2444
    %3944 = vmatpush1.msra.mxu0 %v2443
    %3945 = vmatprep.subr.mxu0 %v2448
    %3946 = vmatpush1.msra.mxu0 %v2447
    %3947 = vmatprep.subr.mxu0 %v2452
    %3948 = vmatpush1.msra.mxu0 %v2451
    %3949 = vmatprep.subr.mxu0 %v2456
    %3950 = vmatpush1.msra.mxu0 %v2455
    %3951 = vmatprep.subr.mxu0 %v2460
    %3952 = vmatpush1.msra.mxu0 %v2459
    %3953 = vmatprep.subr.mxu0 %v2464
    %3954 = vmatpush1.msra.mxu0 %v2463
    %3955 = vmatprep.subr.mxu0 %v2468
    %3956 = vmatpush1.msra.mxu0 %v2467
    %3957 = vmatprep.subr.mxu0 %v2472
    %3958 = vmatpush1.msra.mxu0 %v2471
    %3959 = vmatprep.subr.mxu0 %v2476
    %3960 = vmatpush1.msra.mxu0 %v2475
    %3961 = vmatprep.subr.mxu0 %v2480
    %3962 = vmatpush1.msra.mxu0 %v2479
    %3963 = vmatprep.subr.mxu0 %v2484
    %3964 = vmatpush1.msra.mxu0 %v2483
    %3965 = vmatprep.mubr.f32.mxu0 %v2310
    %3966 = vmatmul.mubr.f32.gmra.mrb[0].mxu0 %v2309
    %v3967 = vpop.f32.mrb[0].mxu0
    %v3968 = vadd.f32 %v3485, %v3967
    %v3969 = vpop.f32.mrb[0].mxu0
    %v3970 = vadd.f32 %v3487, %v3969
    %3971 = vmatprep.mubr.f32.mxu0 %v2313
    %3972 = vmatmul.mubr.f32.gmra.mrb[0].mxu0 %v2312
    %v3973 = vpop.f32.mrb[0].mxu0
    %v3974 = vadd.f32 %v3491, %v3973
    %v3975 = vpop.f32.mrb[0].mxu0
    %v3976 = vadd.f32 %v3493, %v3975
    %3977 = vmatprep.mubr.f32.mxu0 %v2316
    %3978 = vmatmul.mubr.f32.gmra.mrb[0].mxu0 %v2315
    %v3979 = vpop.f32.mrb[0].mxu0
    %v3980 = vadd.f32 %v3497, %v3979
    %v3981 = vpop.f32.mrb[0].mxu0
    %v3982 = vadd.f32 %v3499, %v3981
    %3983 = vmatprep.mubr.f32.mxu0 %v2319
    %3984 = vmatmul.mubr.f32.gmra.mrb[0].mxu0 %v2318
    %v3985 = vpop.f32.mrb[0].mxu0
    %v3986 = vadd.f32 %v3503, %v3985
    %v3987 = vpop.f32.mrb[0].mxu0
    %v3988 = vadd.f32 %v3505, %v3987
    %3989 = vmatprep.mubr.f32.mxu0 %v2322
    %3990 = vmatmul.mubr.f32.gmra.mrb[0].mxu0 %v2321
    %v3991 = vpop.f32.mrb[0].mxu0
    %v3992 = vadd.f32 %v3509, %v3991
    %v3993 = vpop.f32.mrb[0].mxu0
    %v3994 = vadd.f32 %v3511, %v3993
    %3995 = vmatprep.mubr.f32.mxu0 %v2325
    %3996 = vmatmul.mubr.f32.gmra.mrb[0].mxu0 %v2324
    %v3997 = vpop.f32.mrb[0].mxu0
    %v3998 = vadd.f32 %v3515, %v3997
    %v3999 = vpop.f32.mrb[0].mxu0
    %v4000 = vadd.f32 %v3517, %v3999
    %4001 = vmatprep.mubr.f32.mxu0 %v2328
    %4002 = vmatmul.mubr.f32.gmra.mrb[0].mxu0 %v2327
    %v4003 = vpop.f32.mrb[0].mxu0
    %v4004 = vadd.f32 %v3521, %v4003
    %v4005 = vpop.f32.mrb[0].mxu0
    %v4006 = vadd.f32 %v3523, %v4005
    %4007 = vmatprep.mubr.f32.mxu0 %v2331
    %4008 = vmatmul.mubr.f32.gmra.mrb[0].mxu0 %v2330
    %v4009 = vpop.f32.mrb[0].mxu0
    %v4010 = vadd.f32 %v3527, %v4009
    %v4011 = vpop.f32.mrb[0].mxu0
    %v4012 = vadd.f32 %v3529, %v4011
    %4013 = vmatprep.mubr.f32.mxu0 %v2334
    %4014 = vmatmul.mubr.f32.gmra.mrb[0].mxu0 %v2333
    %v4015 = vpop.f32.mrb[0].mxu0
    %v4016 = vadd.f32 %v3533, %v4015
    %v4017 = vpop.f32.mrb[0].mxu0
    %v4018 = vadd.f32 %v3535, %v4017
    %4019 = vmatprep.mubr.f32.mxu0 %v2337
    %4020 = vmatmul.mubr.f32.gmra.mrb[0].mxu0 %v2336
    %v4021 = vpop.f32.mrb[0].mxu0
    %v4022 = vadd.f32 %v3539, %v4021
    %v4023 = vpop.f32.mrb[0].mxu0
    %v4024 = vadd.f32 %v3541, %v4023
    %4025 = vmatprep.mubr.f32.mxu0 %v2340
    %4026 = vmatmul.mubr.f32.gmra.mrb[0].mxu0 %v2339
    %v4027 = vpop.f32.mrb[0].mxu0
    %v4028 = vadd.f32 %v3545, %v4027
    %v4029 = vpop.f32.mrb[0].mxu0
    %v4030 = vadd.f32 %v3547, %v4029
    %4031 = vmatprep.mubr.f32.mxu0 %v2343
    %4032 = vmatmul.mubr.f32.gmra.mrb[0].mxu0 %v2342
    %v4033 = vpop.f32.mrb[0].mxu0
    %v4034 = vadd.f32 %v3551, %v4033
    %v4035 = vpop.f32.mrb[0].mxu0
    %v4036 = vadd.f32 %v3553, %v4035
    %4037 = vmatprep.mubr.f32.mxu0 %v2346
    %4038 = vmatmul.mubr.f32.gmra.mrb[0].mxu0 %v2345
    %v4039 = vpop.f32.mrb[0].mxu0
    %v4040 = vadd.f32 %v3557, %v4039
    %v4041 = vpop.f32.mrb[0].mxu0
    %v4042 = vadd.f32 %v3559, %v4041
    %4043 = vmatprep.mubr.f32.mxu0 %v2349
    %4044 = vmatmul.mubr.f32.gmra.mrb[0].mxu0 %v2348
    %v4045 = vpop.f32.mrb[0].mxu0
    %v4046 = vadd.f32 %v3563, %v4045
    %v4047 = vpop.f32.mrb[0].mxu0
    %v4048 = vadd.f32 %v3565, %v4047
    %4049 = vmatprep.mubr.f32.mxu0 %v2352
    %4050 = vmatmul.mubr.f32.gmra.mrb[0].mxu0 %v2351
    %v4051 = vpop.f32.mrb[0].mxu0
    %v4052 = vadd.f32 %v3569, %v4051
    %v4053 = vpop.f32.mrb[0].mxu0
    %v4054 = vadd.f32 %v3571, %v4053
    %4055 = vmatprep.mubr.f32.mxu0 %v2355
    %4056 = vmatmul.mubr.f32.gmra.mrb[0].mxu0 %v2354
    %v4057 = vpop.f32.mrb[0].mxu0
    %v4058 = vadd.f32 %v3575, %v4057
    %v4059 = vpop.f32.mrb[0].mxu0
    %v4060 = vadd.f32 %v3577, %v4059
    %4061 = vdwg.mxu0
    %4062 = vmatprep.subr.mxu0 %v2488
    %4063 = vmatpush1.msra.mxu0 %v2487
    %4064 = vmatprep.subr.mxu0 %v2492
    %4065 = vmatpush1.msra.mxu0 %v2491
    %4066 = vmatprep.subr.mxu0 %v2496
    %4067 = vmatpush1.msra.mxu0 %v2495
    %4068 = vmatprep.subr.mxu0 %v2500
    %4069 = vmatpush1.msra.mxu0 %v2499
    %4070 = vmatprep.subr.mxu0 %v2504
    %4071 = vmatpush1.msra.mxu0 %v2503
    %4072 = vmatprep.subr.mxu0 %v2508
    %4073 = vmatpush1.msra.mxu0 %v2507
    %4074 = vmatprep.subr.mxu0 %v2512
    %4075 = vmatpush1.msra.mxu0 %v2511
    %4076 = vmatprep.subr.mxu0 %v2516
    %4077 = vmatpush1.msra.mxu0 %v2515
    %4078 = vmatprep.subr.mxu0 %v2520
    %4079 = vmatpush1.msra.mxu0 %v2519
    %4080 = vmatprep.subr.mxu0 %v2524
    %4081 = vmatpush1.msra.mxu0 %v2523
    %4082 = vmatprep.subr.mxu0 %v2528
    %4083 = vmatpush1.msra.mxu0 %v2527
    %4084 = vmatprep.subr.mxu0 %v2532
    %4085 = vmatpush1.msra.mxu0 %v2531
    %4086 = vmatprep.subr.mxu0 %v2536
    %4087 = vmatpush1.msra.mxu0 %v2535
    %4088 = vmatprep.subr.mxu0 %v2540
    %4089 = vmatpush1.msra.mxu0 %v2539
    %4090 = vmatprep.subr.mxu0 %v2544
    %4091 = vmatpush1.msra.mxu0 %v2543
    %4092 = vmatprep.subr.mxu0 %v2548
    %4093 = vmatpush1.msra.mxu0 %v2547
    %4094 = vmatprep.subr.mxu0 0.0
    %4095 = vmatpush1.msra.mxu0 0.0
    %4096 = vmatprep.subr.mxu0 0.0
    %4097 = vmatpush1.msra.mxu0 0.0
    %4098 = vmatprep.subr.mxu0 0.0
    %4099 = vmatpush1.msra.mxu0 0.0
    %4100 = vmatprep.subr.mxu0 0.0
    %4101 = vmatpush1.msra.mxu0 0.0
    %4102 = vmatprep.subr.mxu0 0.0
    %4103 = vmatpush1.msra.mxu0 0.0
    %4104 = vmatprep.subr.mxu0 0.0
    %4105 = vmatpush1.msra.mxu0 0.0
    %4106 = vmatprep.subr.mxu0 0.0
    %4107 = vmatpush1.msra.mxu0 0.0
    %4108 = vmatprep.subr.mxu0 0.0
    %4109 = vmatpush1.msra.mxu0 0.0
    %4110 = vmatprep.subr.mxu0 0.0
    %4111 = vmatpush1.msra.mxu0 0.0
    %4112 = vmatprep.subr.mxu0 0.0
    %4113 = vmatpush1.msra.mxu0 0.0
    %4114 = vmatprep.subr.mxu0 0.0
    %4115 = vmatpush1.msra.mxu0 0.0
    %4116 = vmatprep.subr.mxu0 0.0
    %4117 = vmatpush1.msra.mxu0 0.0
    %4118 = vmatprep.subr.mxu0 0.0
    %4119 = vmatpush1.msra.mxu0 0.0
    %4120 = vmatprep.subr.mxu0 0.0
    %4121 = vmatpush1.msra.mxu0 0.0
    %4122 = vmatprep.subr.mxu0 0.0
    %4123 = vmatpush1.msra.mxu0 0.0
    %4124 = vmatprep.subr.mxu0 0.0
    %4125 = vmatpush1.msra.mxu0 0.0
    %4126 = vmatprep.mubr.f32.mxu0 0.0
    %4127 = vmatmul.mubr.f32.gmra.mrb[0].mxu0 %v2311
    %v4128 = vpop.f32.mrb[0].mxu0
    %v4129 = vadd.f32 %v3968, %v4128
    %v4130 = vpop.f32.mrb[0].mxu0
    %v4131 = vadd.f32 %v3970, %v4130
    %4132 = vmatprep.mubr.f32.mxu0 0.0
    %4133 = vmatmul.mubr.f32.gmra.mrb[0].mxu0 %v2314
    %v4134 = vpop.f32.mrb[0].mxu0
    %v4135 = vadd.f32 %v3974, %v4134
    %v4136 = vpop.f32.mrb[0].mxu0
    %v4137 = vadd.f32 %v3976, %v4136
    %4138 = vmatprep.mubr.f32.mxu0 0.0
    %4139 = vmatmul.mubr.f32.gmra.mrb[0].mxu0 %v2317
    %v4140 = vpop.f32.mrb[0].mxu0
    %v4141 = vadd.f32 %v3980, %v4140
    %v4142 = vpop.f32.mrb[0].mxu0
    %v4143 = vadd.f32 %v3982, %v4142
    %4144 = vmatprep.mubr.f32.mxu0 0.0
    %4145 = vmatmul.mubr.f32.gmra.mrb[0].mxu0 %v2320
    %v4146 = vpop.f32.mrb[0].mxu0
    %v4147 = vadd.f32 %v3986, %v4146
    %v4148 = vpop.f32.mrb[0].mxu0
    %v4149 = vadd.f32 %v3988, %v4148
    %4150 = vmatprep.mubr.f32.mxu0 0.0
    %4151 = vmatmul.mubr.f32.gmra.mrb[0].mxu0 %v2323
    %v4152 = vpop.f32.mrb[0].mxu0
    %v4153 = vadd.f32 %v3992, %v4152
    %v4154 = vpop.f32.mrb[0].mxu0
    %v4155 = vadd.f32 %v3994, %v4154
    %4156 = vmatprep.mubr.f32.mxu0 0.0
    %4157 = vmatmul.mubr.f32.gmra.mrb[0].mxu0 %v2326
    %v4158 = vpop.f32.mrb[0].mxu0
    %v4159 = vadd.f32 %v3998, %v4158
    %v4160 = vpop.f32.mrb[0].mxu0
    %v4161 = vadd.f32 %v4000, %v4160
    %4162 = vmatprep.mubr.f32.mxu0 0.0
    %4163 = vmatmul.mubr.f32.gmra.mrb[0].mxu0 %v2329
    %v4164 = vpop.f32.mrb[0].mxu0
    %v4165 = vadd.f32 %v4004, %v4164
    %v4166 = vpop.f32.mrb[0].mxu0
    %v4167 = vadd.f32 %v4006, %v4166
    %4168 = vmatprep.mubr.f32.mxu0 0.0
    %4169 = vmatmul.mubr.f32.gmra.mrb[0].mxu0 %v2332
    %v4170 = vpop.f32.mrb[0].mxu0
    %v4171 = vadd.f32 %v4010, %v4170
    %v4172 = vpop.f32.mrb[0].mxu0
    %v4173 = vadd.f32 %v4012, %v4172
    %4174 = vmatprep.mubr.f32.mxu0 0.0
    %4175 = vmatmul.mubr.f32.gmra.mrb[0].mxu0 %v2335
    %v4176 = vpop.f32.mrb[0].mxu0
    %v4177 = vadd.f32 %v4016, %v4176
    %v4178 = vpop.f32.mrb[0].mxu0
    %v4179 = vadd.f32 %v4018, %v4178
    %4180 = vmatprep.mubr.f32.mxu0 0.0
    %4181 = vmatmul.mubr.f32.gmra.mrb[0].mxu0 %v2338
    %v4182 = vpop.f32.mrb[0].mxu0
    %v4183 = vadd.f32 %v4022, %v4182
    %v4184 = vpop.f32.mrb[0].mxu0
    %v4185 = vadd.f32 %v4024, %v4184
    %4186 = vmatprep.mubr.f32.mxu0 0.0
    %4187 = vmatmul.mubr.f32.gmra.mrb[0].mxu0 %v2341
    %v4188 = vpop.f32.mrb[0].mxu0
    %v4189 = vadd.f32 %v4028, %v4188
    %v4190 = vpop.f32.mrb[0].mxu0
    %v4191 = vadd.f32 %v4030, %v4190
    %4192 = vmatprep.mubr.f32.mxu0 0.0
    %4193 = vmatmul.mubr.f32.gmra.mrb[0].mxu0 %v2344
    %v4194 = vpop.f32.mrb[0].mxu0
    %v4195 = vadd.f32 %v4034, %v4194
    %v4196 = vpop.f32.mrb[0].mxu0
    %v4197 = vadd.f32 %v4036, %v4196
    %4198 = vmatprep.mubr.f32.mxu0 0.0
    %4199 = vmatmul.mubr.f32.gmra.mrb[0].mxu0 %v2347
    %v4200 = vpop.f32.mrb[0].mxu0
    %v4201 = vadd.f32 %v4040, %v4200
    %v4202 = vpop.f32.mrb[0].mxu0
    %v4203 = vadd.f32 %v4042, %v4202
    %4204 = vmatprep.mubr.f32.mxu0 0.0
    %4205 = vmatmul.mubr.f32.gmra.mrb[0].mxu0 %v2350
    %v4206 = vpop.f32.mrb[0].mxu0
    %v4207 = vadd.f32 %v4046, %v4206
    %v4208 = vpop.f32.mrb[0].mxu0
    %v4209 = vadd.f32 %v4048, %v4208
    %4210 = vmatprep.mubr.f32.mxu0 0.0
    %4211 = vmatmul.mubr.f32.gmra.mrb[0].mxu0 %v2353
    %v4212 = vpop.f32.mrb[0].mxu0
    %v4213 = vadd.f32 %v4052, %v4212
    %v4214 = vpop.f32.mrb[0].mxu0
    %v4215 = vadd.f32 %v4054, %v4214
    %4216 = vmatprep.mubr.f32.mxu0 0.0
    %4217 = vmatmul.mubr.f32.gmra.mrb[0].mxu0 %v2356
    %v4218 = vpop.f32.mrb[0].mxu0
    %v4219 = vadd.f32 %v4058, %v4218
    %v4220 = vpop.f32.mrb[0].mxu0
    %v4221 = vadd.f32 %v4060, %v4220
    %4222 = vdwg.mxu0
    %vm4223 = vcmask 1045504
    %v4224 = vrot.slane %v2309, 2
    %v4225 = vrot.slane %v2312, 2
    %v4226 = vsel %vm4223, %v4224, %v4225
    %v4227 = vrot.slane %v2310, 2
    %v4228 = vrot.slane %v2313, 2
    %v4229 = vsel %vm4223, %v4227, %v4228
    %v4230 = vrot.slane %v2311, 2
    %v4231 = vrot.slane %v2314, 2
    %v4232 = vsel %vm4223, %v4230, %v4231
    %v4233 = vsel %vm4223, %v4225, %v4224
    %v4234 = vsel %vm4223, %v4228, %v4227
    %v4235 = vsel %vm4223, %v4231, %v4230
    %v4236 = vrot.slane %v2315, 2
    %v4237 = vrot.slane %v2318, 2
    %v4238 = vsel %vm4223, %v4236, %v4237
    %v4239 = vrot.slane %v2316, 2
    %v4240 = vrot.slane %v2319, 2
    %v4241 = vsel %vm4223, %v4239, %v4240
    %v4242 = vrot.slane %v2317, 2
    %v4243 = vrot.slane %v2320, 2
    %v4244 = vsel %vm4223, %v4242, %v4243
    %v4245 = vsel %vm4223, %v4237, %v4236
    %v4246 = vsel %vm4223, %v4240, %v4239
    %v4247 = vsel %vm4223, %v4243, %v4242
    %v4248 = vrot.slane %v2321, 2
    %v4249 = vrot.slane %v2324, 2
    %v4250 = vsel %vm4223, %v4248, %v4249
    %v4251 = vrot.slane %v2322, 2
    %v4252 = vrot.slane %v2325, 2
    %v4253 = vsel %vm4223, %v4251, %v4252
    %v4254 = vrot.slane %v2323, 2
    %v4255 = vrot.slane %v2326, 2
    %v4256 = vsel %vm4223, %v4254, %v4255
    %v4257 = vsel %vm4223, %v4249, %v4248
    %v4258 = vsel %vm4223, %v4252, %v4251
    %v4259 = vsel %vm4223, %v4255, %v4254
    %v4260 = vrot.slane %v2327, 2
    %v4261 = vrot.slane %v2330, 2
    %v4262 = vsel %vm4223, %v4260, %v4261
    %v4263 = vrot.slane %v2328, 2
    %v4264 = vrot.slane %v2331, 2
    %v4265 = vsel %vm4223, %v4263, %v4264
    %v4266 = vrot.slane %v2329, 2
    %v4267 = vrot.slane %v2332, 2
    %v4268 = vsel %vm4223, %v4266, %v4267
    %v4269 = vsel %vm4223, %v4261, %v4260
    %v4270 = vsel %vm4223, %v4264, %v4263
    %v4271 = vsel %vm4223, %v4267, %v4266
    %v4272 = vrot.slane %v2333, 2
    %v4273 = vrot.slane %v2336, 2
    %v4274 = vsel %vm4223, %v4272, %v4273
    %v4275 = vrot.slane %v2334, 2
    %v4276 = vrot.slane %v2337, 2
    %v4277 = vsel %vm4223, %v4275, %v4276
    %v4278 = vrot.slane %v2335, 2
    %v4279 = vrot.slane %v2338, 2
    %v4280 = vsel %vm4223, %v4278, %v4279
    %v4281 = vsel %vm4223, %v4273, %v4272
    %v4282 = vsel %vm4223, %v4276, %v4275
    %v4283 = vsel %vm4223, %v4279, %v4278
    %v4284 = vrot.slane %v2339, 2
    %v4285 = vrot.slane %v2342, 2
    %v4286 = vsel %vm4223, %v4284, %v4285
    %v4287 = vrot.slane %v2340, 2
    %v4288 = vrot.slane %v2343, 2
    %v4289 = vsel %vm4223, %v4287, %v4288
    %v4290 = vrot.slane %v2341, 2
    %v4291 = vrot.slane %v2344, 2
    %v4292 = vsel %vm4223, %v4290, %v4291
    %v4293 = vsel %vm4223, %v4285, %v4284
    %v4294 = vsel %vm4223, %v4288, %v4287
    %v4295 = vsel %vm4223, %v4291, %v4290
    %v4296 = vrot.slane %v2345, 2
    %v4297 = vrot.slane %v2348, 2
    %v4298 = vsel %vm4223, %v4296, %v4297
    %v4299 = vrot.slane %v2346, 2
    %v4300 = vrot.slane %v2349, 2
    %v4301 = vsel %vm4223, %v4299, %v4300
    %v4302 = vrot.slane %v2347, 2
    %v4303 = vrot.slane %v2350, 2
    %v4304 = vsel %vm4223, %v4302, %v4303
    %v4305 = vsel %vm4223, %v4297, %v4296
    %v4306 = vsel %vm4223, %v4300, %v4299
    %v4307 = vsel %vm4223, %v4303, %v4302
    %v4308 = vrot.slane %v2351, 2
    %v4309 = vrot.slane %v2354, 2
    %v4310 = vsel %vm4223, %v4308, %v4309
    %v4311 = vrot.slane %v2352, 2
    %v4312 = vrot.slane %v2355, 2
    %v4313 = vsel %vm4223, %v4311, %v4312
    %v4314 = vrot.slane %v2353, 2
    %v4315 = vrot.slane %v2356, 2
    %v4316 = vsel %vm4223, %v4314, %v4315
    %v4317 = vsel %vm4223, %v4309, %v4308
    %v4318 = vsel %vm4223, %v4312, %v4311
    %v4319 = vsel %vm4223, %v4315, %v4314
    %s4368 = scalar_lea.vmem %s3, 3072
    %v4369 = vld [vmem:[%s4368] sm:$0xff]
    %v4370 = vld [vmem:[%s4368 + $0x8] sm:$0xff]
    %v4371 = vld [vmem:[%s4368 + $0x10] sm:$0xff]
    %v4372 = vld [vmem:[%s4368 + $0x18] sm:$0xff]
    %v4373 = vld [vmem:[%s4368 + $0x20] sm:$0xff]
    %v4374 = vld [vmem:[%s4368 + $0x28] sm:$0xff]
    %v4375 = vld [vmem:[%s4368 + $0x30] sm:$0xff]
    %v4376 = vld [vmem:[%s4368 + $0x38] sm:$0xff]
    %v4377 = vld [vmem:[%s4368 + $0x40] sm:$0xff]
    %v4378 = vld [vmem:[%s4368 + $0x48] sm:$0xff]
    %v4379 = vld [vmem:[%s4368 + $0x50] sm:$0xff]
    %v4380 = vld [vmem:[%s4368 + $0x58] sm:$0xff]
    %v4381 = vld [vmem:[%s4368 + $0x60] sm:$0xff]
    %v4382 = vld [vmem:[%s4368 + $0x68] sm:$0xff]
    %v4383 = vld [vmem:[%s4368 + $0x70] sm:$0xff]
    %v4384 = vld [vmem:[%s4368 + $0x78] sm:$0xff]
    %v4385 = vld [vmem:[%s4368 + $0x80] sm:$0xff]
    %v4386 = vld [vmem:[%s4368 + $0x88] sm:$0xff]
    %v4387 = vld [vmem:[%s4368 + $0x90] sm:$0xff]
    %v4388 = vld [vmem:[%s4368 + $0x98] sm:$0xff]
    %v4389 = vld [vmem:[%s4368 + $0xa0] sm:$0xff]
    %v4390 = vld [vmem:[%s4368 + $0xa8] sm:$0xff]
    %v4391 = vld [vmem:[%s4368 + $0xb0] sm:$0xff]
    %v4392 = vld [vmem:[%s4368 + $0xb8] sm:$0xff]
    %v4393 = vld [vmem:[%s4368 + $0xc0] sm:$0xff]
    %v4394 = vld [vmem:[%s4368 + $0xc8] sm:$0xff]
    %v4395 = vld [vmem:[%s4368 + $0xd0] sm:$0xff]
    %v4396 = vld [vmem:[%s4368 + $0xd8] sm:$0xff]
    %v4397 = vld [vmem:[%s4368 + $0xe0] sm:$0xff]
    %v4398 = vld [vmem:[%s4368 + $0xe8] sm:$0xff]
    %v4399 = vld [vmem:[%s4368 + $0xf0] sm:$0xff]
    %v4400 = vld [vmem:[%s4368 + $0xf8] sm:$0xff]
    %v4401 = vld [vmem:[%s4368 + $0x100] sm:$0xff]
    %v4402 = vld [vmem:[%s4368 + $0x108] sm:$0xff]
    %v4403 = vld [vmem:[%s4368 + $0x110] sm:$0xff]
    %v4404 = vld [vmem:[%s4368 + $0x118] sm:$0xff]
    %v4405 = vld [vmem:[%s4368 + $0x120] sm:$0xff]
    %v4406 = vld [vmem:[%s4368 + $0x128] sm:$0xff]
    %v4407 = vld [vmem:[%s4368 + $0x130] sm:$0xff]
    %v4408 = vld [vmem:[%s4368 + $0x138] sm:$0xff]
    %v4409 = vld [vmem:[%s4368 + $0x140] sm:$0xff]
    %v4410 = vld [vmem:[%s4368 + $0x148] sm:$0xff]
    %v4411 = vld [vmem:[%s4368 + $0x150] sm:$0xff]
    %v4412 = vld [vmem:[%s4368 + $0x158] sm:$0xff]
    %v4413 = vld [vmem:[%s4368 + $0x160] sm:$0xff]
    %v4414 = vld [vmem:[%s4368 + $0x168] sm:$0xff]
    %v4415 = vld [vmem:[%s4368 + $0x170] sm:$0xff]
    %v4416 = vld [vmem:[%s4368 + $0x178] sm:$0xff]
    %v4417 = vld [vmem:[%s4368 + $0x180] sm:$0xff]
    %v4418 = vld [vmem:[%s4368 + $0x188] sm:$0xff]
    %v4419 = vld [vmem:[%s4368 + $0x190] sm:$0xff]
    %v4420 = vld [vmem:[%s4368 + $0x198] sm:$0xff]
    %v4421 = vld [vmem:[%s4368 + $0x1a0] sm:$0xff]
    %v4422 = vld [vmem:[%s4368 + $0x1a8] sm:$0xff]
    %v4423 = vld [vmem:[%s4368 + $0x1b0] sm:$0xff]
    %v4424 = vld [vmem:[%s4368 + $0x1b8] sm:$0xff]
    %v4425 = vld [vmem:[%s4368 + $0x1c0] sm:$0xff]
    %v4426 = vld [vmem:[%s4368 + $0x1c8] sm:$0xff]
    %v4427 = vld [vmem:[%s4368 + $0x1d0] sm:$0xff]
    %v4428 = vld [vmem:[%s4368 + $0x1d8] sm:$0xff]
    %v4429 = vld [vmem:[%s4368 + $0x1e0] sm:$0xff]
    %v4430 = vld [vmem:[%s4368 + $0x1e8] sm:$0xff]
    %v4431 = vld [vmem:[%s4368 + $0x1f0] sm:$0xff]
    %v4432 = vld [vmem:[%s4368 + $0x1f8] sm:$0xff]
    %v4433 = vld [vmem:[%s4368 + $0x200] sm:$0xff]
    %v4434 = vld [vmem:[%s4368 + $0x208] sm:$0xff]
    %v4435 = vld [vmem:[%s4368 + $0x210] sm:$0xff]
    %v4436 = vld [vmem:[%s4368 + $0x218] sm:$0xff]
    %v4437 = vld [vmem:[%s4368 + $0x220] sm:$0xff]
    %v4438 = vld [vmem:[%s4368 + $0x228] sm:$0xff]
    %v4439 = vld [vmem:[%s4368 + $0x230] sm:$0xff]
    %v4440 = vld [vmem:[%s4368 + $0x238] sm:$0xff]
    %v4441 = vld [vmem:[%s4368 + $0x240] sm:$0xff]
    %v4442 = vld [vmem:[%s4368 + $0x248] sm:$0xff]
    %v4443 = vld [vmem:[%s4368 + $0x250] sm:$0xff]
    %v4444 = vld [vmem:[%s4368 + $0x258] sm:$0xff]
    %v4445 = vld [vmem:[%s4368 + $0x260] sm:$0xff]
    %v4446 = vld [vmem:[%s4368 + $0x268] sm:$0xff]
    %v4447 = vld [vmem:[%s4368 + $0x270] sm:$0xff]
    %v4448 = vld [vmem:[%s4368 + $0x278] sm:$0xff]
    %v4449 = vld [vmem:[%s4368 + $0x280] sm:$0xff]
    %v4450 = vld [vmem:[%s4368 + $0x288] sm:$0xff]
    %v4451 = vld [vmem:[%s4368 + $0x290] sm:$0xff]
    %v4452 = vld [vmem:[%s4368 + $0x298] sm:$0xff]
    %v4453 = vld [vmem:[%s4368 + $0x2a0] sm:$0xff]
    %v4454 = vld [vmem:[%s4368 + $0x2a8] sm:$0xff]
    %v4455 = vld [vmem:[%s4368 + $0x2b0] sm:$0xff]
    %v4456 = vld [vmem:[%s4368 + $0x2b8] sm:$0xff]
    %v4457 = vld [vmem:[%s4368 + $0x2c0] sm:$0xff]
    %v4458 = vld [vmem:[%s4368 + $0x2c8] sm:$0xff]
    %v4459 = vld [vmem:[%s4368 + $0x2d0] sm:$0xff]
    %v4460 = vld [vmem:[%s4368 + $0x2d8] sm:$0xff]
    %v4461 = vld [vmem:[%s4368 + $0x2e0] sm:$0xff]
    %v4462 = vld [vmem:[%s4368 + $0x2e8] sm:$0xff]
    %v4463 = vld [vmem:[%s4368 + $0x2f0] sm:$0xff]
    %v4464 = vld [vmem:[%s4368 + $0x2f8] sm:$0xff]
    %v4465 = vld [vmem:[%s4368 + $0x300] sm:$0xff]
    %v4466 = vld [vmem:[%s4368 + $0x308] sm:$0xff]
    %v4467 = vld [vmem:[%s4368 + $0x310] sm:$0xff]
    %v4468 = vld [vmem:[%s4368 + $0x318] sm:$0xff]
    %v4469 = vld [vmem:[%s4368 + $0x320] sm:$0xff]
    %v4470 = vld [vmem:[%s4368 + $0x328] sm:$0xff]
    %v4471 = vld [vmem:[%s4368 + $0x330] sm:$0xff]
    %v4472 = vld [vmem:[%s4368 + $0x338] sm:$0xff]
    %v4473 = vld [vmem:[%s4368 + $0x340] sm:$0xff]
    %v4474 = vld [vmem:[%s4368 + $0x348] sm:$0xff]
    %v4475 = vld [vmem:[%s4368 + $0x350] sm:$0xff]
    %v4476 = vld [vmem:[%s4368 + $0x358] sm:$0xff]
    %v4477 = vld [vmem:[%s4368 + $0x360] sm:$0xff]
    %v4478 = vld [vmem:[%s4368 + $0x368] sm:$0xff]
    %v4479 = vld [vmem:[%s4368 + $0x370] sm:$0xff]
    %v4480 = vld [vmem:[%s4368 + $0x378] sm:$0xff]
    %v4481 = vld [vmem:[%s4368 + $0x380] sm:$0xff]
    %v4482 = vld [vmem:[%s4368 + $0x388] sm:$0xff]
    %v4483 = vld [vmem:[%s4368 + $0x390] sm:$0xff]
    %v4484 = vld [vmem:[%s4368 + $0x398] sm:$0xff]
    %v4485 = vld [vmem:[%s4368 + $0x3a0] sm:$0xff]
    %v4486 = vld [vmem:[%s4368 + $0x3a8] sm:$0xff]
    %v4487 = vld [vmem:[%s4368 + $0x3b0] sm:$0xff]
    %v4488 = vld [vmem:[%s4368 + $0x3b8] sm:$0xff]
    %v4489 = vld [vmem:[%s4368 + $0x3c0] sm:$0xff]
    %v4490 = vld [vmem:[%s4368 + $0x3c8] sm:$0xff]
    %v4491 = vld [vmem:[%s4368 + $0x3d0] sm:$0xff]
    %v4492 = vld [vmem:[%s4368 + $0x3d8] sm:$0xff]
    %v4493 = vld [vmem:[%s4368 + $0x3e0] sm:$0xff]
    %v4494 = vld [vmem:[%s4368 + $0x3e8] sm:$0xff]
    %v4495 = vld [vmem:[%s4368 + $0x3f0] sm:$0xff]
    %v4496 = vld [vmem:[%s4368 + $0x3f8] sm:$0xff]
    %v4497 = vld [vmem:[%s4368 + $0x400] sm:$0xff]
    %v4498 = vld [vmem:[%s4368 + $0x408] sm:$0xff]
    %v4499 = vld [vmem:[%s4368 + $0x410] sm:$0xff]
    %v4500 = vld [vmem:[%s4368 + $0x418] sm:$0xff]
    %v4501 = vld [vmem:[%s4368 + $0x420] sm:$0xff]
    %v4502 = vld [vmem:[%s4368 + $0x428] sm:$0xff]
    %v4503 = vld [vmem:[%s4368 + $0x430] sm:$0xff]
    %v4504 = vld [vmem:[%s4368 + $0x438] sm:$0xff]
    %v4505 = vld [vmem:[%s4368 + $0x440] sm:$0xff]
    %v4506 = vld [vmem:[%s4368 + $0x448] sm:$0xff]
    %v4507 = vld [vmem:[%s4368 + $0x450] sm:$0xff]
    %v4508 = vld [vmem:[%s4368 + $0x458] sm:$0xff]
    %v4509 = vld [vmem:[%s4368 + $0x460] sm:$0xff]
    %v4510 = vld [vmem:[%s4368 + $0x468] sm:$0xff]
    %v4511 = vld [vmem:[%s4368 + $0x470] sm:$0xff]
    %v4512 = vld [vmem:[%s4368 + $0x478] sm:$0xff]
    %v4513 = vld [vmem:[%s4368 + $0x480] sm:$0xff]
    %v4514 = vld [vmem:[%s4368 + $0x488] sm:$0xff]
    %v4515 = vld [vmem:[%s4368 + $0x490] sm:$0xff]
    %v4516 = vld [vmem:[%s4368 + $0x498] sm:$0xff]
    %v4517 = vld [vmem:[%s4368 + $0x4a0] sm:$0xff]
    %v4518 = vld [vmem:[%s4368 + $0x4a8] sm:$0xff]
    %v4519 = vld [vmem:[%s4368 + $0x4b0] sm:$0xff]
    %v4520 = vld [vmem:[%s4368 + $0x4b8] sm:$0xff]
    %v4521 = vld [vmem:[%s4368 + $0x4c0] sm:$0xff]
    %v4522 = vld [vmem:[%s4368 + $0x4c8] sm:$0xff]
    %v4523 = vld [vmem:[%s4368 + $0x4d0] sm:$0xff]
    %v4524 = vld [vmem:[%s4368 + $0x4d8] sm:$0xff]
    %v4525 = vld [vmem:[%s4368 + $0x4e0] sm:$0xff]
    %v4526 = vld [vmem:[%s4368 + $0x4e8] sm:$0xff]
    %v4527 = vld [vmem:[%s4368 + $0x4f0] sm:$0xff]
    %v4528 = vld [vmem:[%s4368 + $0x4f8] sm:$0xff]
    %v4529 = vld [vmem:[%s4368 + $0x500] sm:$0xff]
    %v4530 = vld [vmem:[%s4368 + $0x508] sm:$0xff]
    %v4531 = vld [vmem:[%s4368 + $0x510] sm:$0xff]
    %v4532 = vld [vmem:[%s4368 + $0x518] sm:$0xff]
    %v4533 = vld [vmem:[%s4368 + $0x520] sm:$0xff]
    %v4534 = vld [vmem:[%s4368 + $0x528] sm:$0xff]
    %v4535 = vld [vmem:[%s4368 + $0x530] sm:$0xff]
    %v4536 = vld [vmem:[%s4368 + $0x538] sm:$0xff]
    %v4537 = vld [vmem:[%s4368 + $0x540] sm:$0xff]
    %v4538 = vld [vmem:[%s4368 + $0x548] sm:$0xff]
    %v4539 = vld [vmem:[%s4368 + $0x550] sm:$0xff]
    %v4540 = vld [vmem:[%s4368 + $0x558] sm:$0xff]
    %v4541 = vld [vmem:[%s4368 + $0x560] sm:$0xff]
    %v4542 = vld [vmem:[%s4368 + $0x568] sm:$0xff]
    %v4543 = vld [vmem:[%s4368 + $0x570] sm:$0xff]
    %v4544 = vld [vmem:[%s4368 + $0x578] sm:$0xff]
    %v4545 = vld [vmem:[%s4368 + $0x580] sm:$0xff]
    %v4546 = vld [vmem:[%s4368 + $0x588] sm:$0xff]
    %v4547 = vld [vmem:[%s4368 + $0x590] sm:$0xff]
    %v4548 = vld [vmem:[%s4368 + $0x598] sm:$0xff]
    %v4549 = vld [vmem:[%s4368 + $0x5a0] sm:$0xff]
    %v4550 = vld [vmem:[%s4368 + $0x5a8] sm:$0xff]
    %v4551 = vld [vmem:[%s4368 + $0x5b0] sm:$0xff]
    %v4552 = vld [vmem:[%s4368 + $0x5b8] sm:$0xff]
    %v4553 = vld [vmem:[%s4368 + $0x5c0] sm:$0xff]
    %v4554 = vld [vmem:[%s4368 + $0x5c8] sm:$0xff]
    %v4555 = vld [vmem:[%s4368 + $0x5d0] sm:$0xff]
    %v4556 = vld [vmem:[%s4368 + $0x5d8] sm:$0xff]
    %v4557 = vld [vmem:[%s4368 + $0x5e0] sm:$0xff]
    %v4558 = vld [vmem:[%s4368 + $0x5e8] sm:$0xff]
    %v4559 = vld [vmem:[%s4368 + $0x5f0] sm:$0xff]
    %v4560 = vld [vmem:[%s4368 + $0x5f8] sm:$0xff]
    %4561 = vmatprep.subr.mxu0 %v4370
    %4562 = vmatpush1.msra.mxu0 %v4369
    %4563 = vmatprep.subr.mxu0 %v4374
    %4564 = vmatpush1.msra.mxu0 %v4373
    %4565 = vmatprep.subr.mxu0 %v4378
    %4566 = vmatpush1.msra.mxu0 %v4377
    %4567 = vmatprep.subr.mxu0 %v4382
    %4568 = vmatpush1.msra.mxu0 %v4381
    %4569 = vmatprep.subr.mxu0 %v4386
    %4570 = vmatpush1.msra.mxu0 %v4385
    %4571 = vmatprep.subr.mxu0 %v4390
    %4572 = vmatpush1.msra.mxu0 %v4389
    %4573 = vmatprep.subr.mxu0 %v4394
    %4574 = vmatpush1.msra.mxu0 %v4393
    %4575 = vmatprep.subr.mxu0 %v4398
    %4576 = vmatpush1.msra.mxu0 %v4397
    %4577 = vmatprep.subr.mxu0 %v4402
    %4578 = vmatpush1.msra.mxu0 %v4401
    %4579 = vmatprep.subr.mxu0 %v4406
    %4580 = vmatpush1.msra.mxu0 %v4405
    %4581 = vmatprep.subr.mxu0 %v4410
    %4582 = vmatpush1.msra.mxu0 %v4409
    %4583 = vmatprep.subr.mxu0 %v4414
    %4584 = vmatpush1.msra.mxu0 %v4413
    %4585 = vmatprep.subr.mxu0 %v4418
    %4586 = vmatpush1.msra.mxu0 %v4417
    %4587 = vmatprep.subr.mxu0 %v4422
    %4588 = vmatpush1.msra.mxu0 %v4421
    %4589 = vmatprep.subr.mxu0 %v4426
    %4590 = vmatpush1.msra.mxu0 %v4425
    %4591 = vmatprep.subr.mxu0 %v4430
    %4592 = vmatpush1.msra.mxu0 %v4429
    %4593 = vmatprep.subr.mxu0 %v4434
    %4594 = vmatpush1.msra.mxu0 %v4433
    %4595 = vmatprep.subr.mxu0 %v4438
    %4596 = vmatpush1.msra.mxu0 %v4437
    %4597 = vmatprep.subr.mxu0 %v4442
    %4598 = vmatpush1.msra.mxu0 %v4441
    %4599 = vmatprep.subr.mxu0 %v4446
    %4600 = vmatpush1.msra.mxu0 %v4445
    %4601 = vmatprep.subr.mxu0 %v4450
    %4602 = vmatpush1.msra.mxu0 %v4449
    %4603 = vmatprep.subr.mxu0 %v4454
    %4604 = vmatpush1.msra.mxu0 %v4453
    %4605 = vmatprep.subr.mxu0 %v4458
    %4606 = vmatpush1.msra.mxu0 %v4457
    %4607 = vmatprep.subr.mxu0 %v4462
    %4608 = vmatpush1.msra.mxu0 %v4461
    %4609 = vmatprep.subr.mxu0 %v4466
    %4610 = vmatpush1.msra.mxu0 %v4465
    %4611 = vmatprep.subr.mxu0 %v4470
    %4612 = vmatpush1.msra.mxu0 %v4469
    %4613 = vmatprep.subr.mxu0 %v4474
    %4614 = vmatpush1.msra.mxu0 %v4473
    %4615 = vmatprep.subr.mxu0 %v4478
    %4616 = vmatpush1.msra.mxu0 %v4477
    %4617 = vmatprep.subr.mxu0 %v4482
    %4618 = vmatpush1.msra.mxu0 %v4481
    %4619 = vmatprep.subr.mxu0 %v4486
    %4620 = vmatpush1.msra.mxu0 %v4485
    %4621 = vmatprep.subr.mxu0 %v4490
    %4622 = vmatpush1.msra.mxu0 %v4489
    %4623 = vmatprep.subr.mxu0 %v4494
    %4624 = vmatpush1.msra.mxu0 %v4493
    %4625 = vmatprep.mubr.f32.mxu0 %v4229
    %4626 = vmatmul.mubr.f32.gmra.mrb[0].mxu0 %v4226
    %v4627 = vpop.f32.mrb[0].mxu0
    %v4628 = vadd.f32 0.0, %v4627
    %v4629 = vpop.f32.mrb[0].mxu0
    %v4630 = vadd.f32 0.0, %v4629
    %4631 = vmatprep.mubr.f32.mxu0 %v4234
    %4632 = vmatmul.mubr.f32.gmra.mrb[0].mxu0 %v4233
    %v4633 = vpop.f32.mrb[0].mxu0
    %v4634 = vadd.f32 0.0, %v4633
    %v4635 = vpop.f32.mrb[0].mxu0
    %v4636 = vadd.f32 0.0, %v4635
    %4637 = vmatprep.mubr.f32.mxu0 %v4241
    %4638 = vmatmul.mubr.f32.gmra.mrb[0].mxu0 %v4238
    %v4639 = vpop.f32.mrb[0].mxu0
    %v4640 = vadd.f32 0.0, %v4639
    %v4641 = vpop.f32.mrb[0].mxu0
    %v4642 = vadd.f32 0.0, %v4641
    %4643 = vmatprep.mubr.f32.mxu0 %v4246
    %4644 = vmatmul.mubr.f32.gmra.mrb[0].mxu0 %v4245
    %v4645 = vpop.f32.mrb[0].mxu0
    %v4646 = vadd.f32 0.0, %v4645
    %v4647 = vpop.f32.mrb[0].mxu0
    %v4648 = vadd.f32 0.0, %v4647
    %4649 = vmatprep.mubr.f32.mxu0 %v4253
    %4650 = vmatmul.mubr.f32.gmra.mrb[0].mxu0 %v4250
    %v4651 = vpop.f32.mrb[0].mxu0
    %v4652 = vadd.f32 0.0, %v4651
    %v4653 = vpop.f32.mrb[0].mxu0
    %v4654 = vadd.f32 0.0, %v4653
    %4655 = vmatprep.mubr.f32.mxu0 %v4258
    %4656 = vmatmul.mubr.f32.gmra.mrb[0].mxu0 %v4257
    %v4657 = vpop.f32.mrb[0].mxu0
    %v4658 = vadd.f32 0.0, %v4657
    %v4659 = vpop.f32.mrb[0].mxu0
    %v4660 = vadd.f32 0.0, %v4659
    %4661 = vmatprep.mubr.f32.mxu0 %v4265
    %4662 = vmatmul.mubr.f32.gmra.mrb[0].mxu0 %v4262
    %v4663 = vpop.f32.mrb[0].mxu0
    %v4664 = vadd.f32 0.0, %v4663
    %v4665 = vpop.f32.mrb[0].mxu0
    %v4666 = vadd.f32 0.0, %v4665
    %4667 = vmatprep.mubr.f32.mxu0 %v4270
    %4668 = vmatmul.mubr.f32.gmra.mrb[0].mxu0 %v4269
    %v4669 = vpop.f32.mrb[0].mxu0
    %v4670 = vadd.f32 0.0, %v4669
    %v4671 = vpop.f32.mrb[0].mxu0
    %v4672 = vadd.f32 0.0, %v4671
    %4673 = vmatprep.mubr.f32.mxu0 %v4277
    %4674 = vmatmul.mubr.f32.gmra.mrb[0].mxu0 %v4274
    %v4675 = vpop.f32.mrb[0].mxu0
    %v4676 = vadd.f32 0.0, %v4675
    %v4677 = vpop.f32.mrb[0].mxu0
    %v4678 = vadd.f32 0.0, %v4677
    %4679 = vmatprep.mubr.f32.mxu0 %v4282
    %4680 = vmatmul.mubr.f32.gmra.mrb[0].mxu0 %v4281
    %v4681 = vpop.f32.mrb[0].mxu0
    %v4682 = vadd.f32 0.0, %v4681
    %v4683 = vpop.f32.mrb[0].mxu0
    %v4684 = vadd.f32 0.0, %v4683
    %4685 = vmatprep.mubr.f32.mxu0 %v4289
    %4686 = vmatmul.mubr.f32.gmra.mrb[0].mxu0 %v4286
    %v4687 = vpop.f32.mrb[0].mxu0
    %v4688 = vadd.f32 0.0, %v4687
    %v4689 = vpop.f32.mrb[0].mxu0
    %v4690 = vadd.f32 0.0, %v4689
    %4691 = vmatprep.mubr.f32.mxu0 %v4294
    %4692 = vmatmul.mubr.f32.gmra.mrb[0].mxu0 %v4293
    %v4693 = vpop.f32.mrb[0].mxu0
    %v4694 = vadd.f32 0.0, %v4693
    %v4695 = vpop.f32.mrb[0].mxu0
    %v4696 = vadd.f32 0.0, %v4695
    %4697 = vmatprep.mubr.f32.mxu0 %v4301
    %4698 = vmatmul.mubr.f32.gmra.mrb[0].mxu0 %v4298
    %v4699 = vpop.f32.mrb[0].mxu0
    %v4700 = vadd.f32 0.0, %v4699
    %v4701 = vpop.f32.mrb[0].mxu0
    %v4702 = vadd.f32 0.0, %v4701
    %4703 = vmatprep.mubr.f32.mxu0 %v4306
    %4704 = vmatmul.mubr.f32.gmra.mrb[0].mxu0 %v4305
    %v4705 = vpop.f32.mrb[0].mxu0
    %v4706 = vadd.f32 0.0, %v4705
    %v4707 = vpop.f32.mrb[0].mxu0
    %v4708 = vadd.f32 0.0, %v4707
    %4709 = vmatprep.mubr.f32.mxu0 %v4313
    %4710 = vmatmul.mubr.f32.gmra.mrb[0].mxu0 %v4310
    %v4711 = vpop.f32.mrb[0].mxu0
    %v4712 = vadd.f32 0.0, %v4711
    %v4713 = vpop.f32.mrb[0].mxu0
    %v4714 = vadd.f32 0.0, %v4713
    %4715 = vmatprep.mubr.f32.mxu0 %v4318
    %4716 = vmatmul.mubr.f32.gmra.mrb[0].mxu0 %v4317
    %v4717 = vpop.f32.mrb[0].mxu0
    %v4718 = vadd.f32 0.0, %v4717
    %v4719 = vpop.f32.mrb[0].mxu0
    %v4720 = vadd.f32 0.0, %v4719
    %4721 = vdwg.mxu0
    %4722 = vmatprep.subr.mxu0 %v4498
    %4723 = vmatpush1.msra.mxu0 %v4497
    %4724 = vmatprep.subr.mxu0 %v4502
    %4725 = vmatpush1.msra.mxu0 %v4501
    %4726 = vmatprep.subr.mxu0 %v4506
    %4727 = vmatpush1.msra.mxu0 %v4505
    %4728 = vmatprep.subr.mxu0 %v4510
    %4729 = vmatpush1.msra.mxu0 %v4509
    %4730 = vmatprep.subr.mxu0 %v4514
    %4731 = vmatpush1.msra.mxu0 %v4513
    %4732 = vmatprep.subr.mxu0 %v4518
    %4733 = vmatpush1.msra.mxu0 %v4517
    %4734 = vmatprep.subr.mxu0 %v4522
    %4735 = vmatpush1.msra.mxu0 %v4521
    %4736 = vmatprep.subr.mxu0 %v4526
    %4737 = vmatpush1.msra.mxu0 %v4525
    %4738 = vmatprep.subr.mxu0 %v4530
    %4739 = vmatpush1.msra.mxu0 %v4529
    %4740 = vmatprep.subr.mxu0 %v4534
    %4741 = vmatpush1.msra.mxu0 %v4533
    %4742 = vmatprep.subr.mxu0 %v4538
    %4743 = vmatpush1.msra.mxu0 %v4537
    %4744 = vmatprep.subr.mxu0 %v4542
    %4745 = vmatpush1.msra.mxu0 %v4541
    %4746 = vmatprep.subr.mxu0 %v4546
    %4747 = vmatpush1.msra.mxu0 %v4545
    %4748 = vmatprep.subr.mxu0 %v4550
    %4749 = vmatpush1.msra.mxu0 %v4549
    %4750 = vmatprep.subr.mxu0 %v4554
    %4751 = vmatpush1.msra.mxu0 %v4553
    %4752 = vmatprep.subr.mxu0 %v4558
    %4753 = vmatpush1.msra.mxu0 %v4557
    %4754 = vmatprep.subr.mxu0 0.0
    %4755 = vmatpush1.msra.mxu0 0.0
    %4756 = vmatprep.subr.mxu0 0.0
    %4757 = vmatpush1.msra.mxu0 0.0
    %4758 = vmatprep.subr.mxu0 0.0
    %4759 = vmatpush1.msra.mxu0 0.0
    %4760 = vmatprep.subr.mxu0 0.0
    %4761 = vmatpush1.msra.mxu0 0.0
    %4762 = vmatprep.subr.mxu0 0.0
    %4763 = vmatpush1.msra.mxu0 0.0
    %4764 = vmatprep.subr.mxu0 0.0
    %4765 = vmatpush1.msra.mxu0 0.0
    %4766 = vmatprep.subr.mxu0 0.0
    %4767 = vmatpush1.msra.mxu0 0.0
    %4768 = vmatprep.subr.mxu0 0.0
    %4769 = vmatpush1.msra.mxu0 0.0
    %4770 = vmatprep.subr.mxu0 0.0
    %4771 = vmatpush1.msra.mxu0 0.0
    %4772 = vmatprep.subr.mxu0 0.0
    %4773 = vmatpush1.msra.mxu0 0.0
    %4774 = vmatprep.subr.mxu0 0.0
    %4775 = vmatpush1.msra.mxu0 0.0
    %4776 = vmatprep.subr.mxu0 0.0
    %4777 = vmatpush1.msra.mxu0 0.0
    %4778 = vmatprep.subr.mxu0 0.0
    %4779 = vmatpush1.msra.mxu0 0.0
    %4780 = vmatprep.subr.mxu0 0.0
    %4781 = vmatpush1.msra.mxu0 0.0
    %4782 = vmatprep.subr.mxu0 0.0
    %4783 = vmatpush1.msra.mxu0 0.0
    %4784 = vmatprep.subr.mxu0 0.0
    %4785 = vmatpush1.msra.mxu0 0.0
    %4786 = vmatprep.mubr.f32.mxu0 0.0
    %4787 = vmatmul.mubr.f32.gmra.mrb[0].mxu0 %v4232
    %v4788 = vpop.f32.mrb[0].mxu0
    %v4789 = vadd.f32 %v4628, %v4788
    %v4790 = vpop.f32.mrb[0].mxu0
    %v4791 = vadd.f32 %v4630, %v4790
    %4792 = vmatprep.mubr.f32.mxu0 0.0
    %4793 = vmatmul.mubr.f32.gmra.mrb[0].mxu0 %v4235
    %v4794 = vpop.f32.mrb[0].mxu0
    %v4795 = vadd.f32 %v4634, %v4794
    %v4796 = vpop.f32.mrb[0].mxu0
    %v4797 = vadd.f32 %v4636, %v4796
    %4798 = vmatprep.mubr.f32.mxu0 0.0
    %4799 = vmatmul.mubr.f32.gmra.mrb[0].mxu0 %v4244
    %v4800 = vpop.f32.mrb[0].mxu0
    %v4801 = vadd.f32 %v4640, %v4800
    %v4802 = vpop.f32.mrb[0].mxu0
    %v4803 = vadd.f32 %v4642, %v4802
    %4804 = vmatprep.mubr.f32.mxu0 0.0
    %4805 = vmatmul.mubr.f32.gmra.mrb[0].mxu0 %v4247
    %v4806 = vpop.f32.mrb[0].mxu0
    %v4807 = vadd.f32 %v4646, %v4806
    %v4808 = vpop.f32.mrb[0].mxu0
    %v4809 = vadd.f32 %v4648, %v4808
    %4810 = vmatprep.mubr.f32.mxu0 0.0
    %4811 = vmatmul.mubr.f32.gmra.mrb[0].mxu0 %v4256
    %v4812 = vpop.f32.mrb[0].mxu0
    %v4813 = vadd.f32 %v4652, %v4812
    %v4814 = vpop.f32.mrb[0].mxu0
    %v4815 = vadd.f32 %v4654, %v4814
    %4816 = vmatprep.mubr.f32.mxu0 0.0
    %4817 = vmatmul.mubr.f32.gmra.mrb[0].mxu0 %v4259
    %v4818 = vpop.f32.mrb[0].mxu0
    %v4819 = vadd.f32 %v4658, %v4818
    %v4820 = vpop.f32.mrb[0].mxu0
    %v4821 = vadd.f32 %v4660, %v4820
    %4822 = vmatprep.mubr.f32.mxu0 0.0
    %4823 = vmatmul.mubr.f32.gmra.mrb[0].mxu0 %v4268
    %v4824 = vpop.f32.mrb[0].mxu0
    %v4825 = vadd.f32 %v4664, %v4824
    %v4826 = vpop.f32.mrb[0].mxu0
    %v4827 = vadd.f32 %v4666, %v4826
    %4828 = vmatprep.mubr.f32.mxu0 0.0
    %4829 = vmatmul.mubr.f32.gmra.mrb[0].mxu0 %v4271
    %v4830 = vpop.f32.mrb[0].mxu0
    %v4831 = vadd.f32 %v4670, %v4830
    %v4832 = vpop.f32.mrb[0].mxu0
    %v4833 = vadd.f32 %v4672, %v4832
    %4834 = vmatprep.mubr.f32.mxu0 0.0
    %4835 = vmatmul.mubr.f32.gmra.mrb[0].mxu0 %v4280
    %v4836 = vpop.f32.mrb[0].mxu0
    %v4837 = vadd.f32 %v4676, %v4836
    %v4838 = vpop.f32.mrb[0].mxu0
    %v4839 = vadd.f32 %v4678, %v4838
    %4840 = vmatprep.mubr.f32.mxu0 0.0
    %4841 = vmatmul.mubr.f32.gmra.mrb[0].mxu0 %v4283
    %v4842 = vpop.f32.mrb[0].mxu0
    %v4843 = vadd.f32 %v4682, %v4842
    %v4844 = vpop.f32.mrb[0].mxu0
    %v4845 = vadd.f32 %v4684, %v4844
    %4846 = vmatprep.mubr.f32.mxu0 0.0
    %4847 = vmatmul.mubr.f32.gmra.mrb[0].mxu0 %v4292
    %v4848 = vpop.f32.mrb[0].mxu0
    %v4849 = vadd.f32 %v4688, %v4848
    %v4850 = vpop.f32.mrb[0].mxu0
    %v4851 = vadd.f32 %v4690, %v4850
    %4852 = vmatprep.mubr.f32.mxu0 0.0
    %4853 = vmatmul.mubr.f32.gmra.mrb[0].mxu0 %v4295
    %v4854 = vpop.f32.mrb[0].mxu0
    %v4855 = vadd.f32 %v4694, %v4854
    %v4856 = vpop.f32.mrb[0].mxu0
    %v4857 = vadd.f32 %v4696, %v4856
    %4858 = vmatprep.mubr.f32.mxu0 0.0
    %4859 = vmatmul.mubr.f32.gmra.mrb[0].mxu0 %v4304
    %v4860 = vpop.f32.mrb[0].mxu0
    %v4861 = vadd.f32 %v4700, %v4860
    %v4862 = vpop.f32.mrb[0].mxu0
    %v4863 = vadd.f32 %v4702, %v4862
    %4864 = vmatprep.mubr.f32.mxu0 0.0
    %4865 = vmatmul.mubr.f32.gmra.mrb[0].mxu0 %v4307
    %v4866 = vpop.f32.mrb[0].mxu0
    %v4867 = vadd.f32 %v4706, %v4866
    %v4868 = vpop.f32.mrb[0].mxu0
    %v4869 = vadd.f32 %v4708, %v4868
    %4870 = vmatprep.mubr.f32.mxu0 0.0
    %4871 = vmatmul.mubr.f32.gmra.mrb[0].mxu0 %v4316
    %v4872 = vpop.f32.mrb[0].mxu0
    %v4873 = vadd.f32 %v4712, %v4872
    %v4874 = vpop.f32.mrb[0].mxu0
    %v4875 = vadd.f32 %v4714, %v4874
    %4876 = vmatprep.mubr.f32.mxu0 0.0
    %4877 = vmatmul.mubr.f32.gmra.mrb[0].mxu0 %v4319
    %v4878 = vpop.f32.mrb[0].mxu0
    %v4879 = vadd.f32 %v4718, %v4878
    %v4880 = vpop.f32.mrb[0].mxu0
    %v4881 = vadd.f32 %v4720, %v4880
    %4882 = vdwg.mxu0
    %4883 = vmatprep.subr.mxu0 %v4372
    %4884 = vmatpush1.msra.mxu0 %v4371
    %4885 = vmatprep.subr.mxu0 %v4376
    %4886 = vmatpush1.msra.mxu0 %v4375
    %4887 = vmatprep.subr.mxu0 %v4380
    %4888 = vmatpush1.msra.mxu0 %v4379
    %4889 = vmatprep.subr.mxu0 %v4384
    %4890 = vmatpush1.msra.mxu0 %v4383
    %4891 = vmatprep.subr.mxu0 %v4388
    %4892 = vmatpush1.msra.mxu0 %v4387
    %4893 = vmatprep.subr.mxu0 %v4392
    %4894 = vmatpush1.msra.mxu0 %v4391
    %4895 = vmatprep.subr.mxu0 %v4396
    %4896 = vmatpush1.msra.mxu0 %v4395
    %4897 = vmatprep.subr.mxu0 %v4400
    %4898 = vmatpush1.msra.mxu0 %v4399
    %4899 = vmatprep.subr.mxu0 %v4404
    %4900 = vmatpush1.msra.mxu0 %v4403
    %4901 = vmatprep.subr.mxu0 %v4408
    %4902 = vmatpush1.msra.mxu0 %v4407
    %4903 = vmatprep.subr.mxu0 %v4412
    %4904 = vmatpush1.msra.mxu0 %v4411
    %4905 = vmatprep.subr.mxu0 %v4416
    %4906 = vmatpush1.msra.mxu0 %v4415
    %4907 = vmatprep.subr.mxu0 %v4420
    %4908 = vmatpush1.msra.mxu0 %v4419
    %4909 = vmatprep.subr.mxu0 %v4424
    %4910 = vmatpush1.msra.mxu0 %v4423
    %4911 = vmatprep.subr.mxu0 %v4428
    %4912 = vmatpush1.msra.mxu0 %v4427
    %4913 = vmatprep.subr.mxu0 %v4432
    %4914 = vmatpush1.msra.mxu0 %v4431
    %4915 = vmatprep.subr.mxu0 %v4436
    %4916 = vmatpush1.msra.mxu0 %v4435
    %4917 = vmatprep.subr.mxu0 %v4440
    %4918 = vmatpush1.msra.mxu0 %v4439
    %4919 = vmatprep.subr.mxu0 %v4444
    %4920 = vmatpush1.msra.mxu0 %v4443
    %4921 = vmatprep.subr.mxu0 %v4448
    %4922 = vmatpush1.msra.mxu0 %v4447
    %4923 = vmatprep.subr.mxu0 %v4452
    %4924 = vmatpush1.msra.mxu0 %v4451
    %4925 = vmatprep.subr.mxu0 %v4456
    %4926 = vmatpush1.msra.mxu0 %v4455
    %4927 = vmatprep.subr.mxu0 %v4460
    %4928 = vmatpush1.msra.mxu0 %v4459
    %4929 = vmatprep.subr.mxu0 %v4464
    %4930 = vmatpush1.msra.mxu0 %v4463
    %4931 = vmatprep.subr.mxu0 %v4468
    %4932 = vmatpush1.msra.mxu0 %v4467
    %4933 = vmatprep.subr.mxu0 %v4472
    %4934 = vmatpush1.msra.mxu0 %v4471
    %4935 = vmatprep.subr.mxu0 %v4476
    %4936 = vmatpush1.msra.mxu0 %v4475
    %4937 = vmatprep.subr.mxu0 %v4480
    %4938 = vmatpush1.msra.mxu0 %v4479
    %4939 = vmatprep.subr.mxu0 %v4484
    %4940 = vmatpush1.msra.mxu0 %v4483
    %4941 = vmatprep.subr.mxu0 %v4488
    %4942 = vmatpush1.msra.mxu0 %v4487
    %4943 = vmatprep.subr.mxu0 %v4492
    %4944 = vmatpush1.msra.mxu0 %v4491
    %4945 = vmatprep.subr.mxu0 %v4496
    %4946 = vmatpush1.msra.mxu0 %v4495
    %4947 = vmatprep.mubr.f32.mxu0 %v4229
    %4948 = vmatmul.mubr.f32.gmra.mrb[0].mxu0 %v4226
    %v4949 = vpop.f32.mrb[0].mxu0
    %v4950 = vadd.f32 0.0, %v4949
    %v4951 = vpop.f32.mrb[0].mxu0
    %v4952 = vadd.f32 0.0, %v4951
    %4953 = vmatprep.mubr.f32.mxu0 %v4234
    %4954 = vmatmul.mubr.f32.gmra.mrb[0].mxu0 %v4233
    %v4955 = vpop.f32.mrb[0].mxu0
    %v4956 = vadd.f32 0.0, %v4955
    %v4957 = vpop.f32.mrb[0].mxu0
    %v4958 = vadd.f32 0.0, %v4957
    %4959 = vmatprep.mubr.f32.mxu0 %v4241
    %4960 = vmatmul.mubr.f32.gmra.mrb[0].mxu0 %v4238
    %v4961 = vpop.f32.mrb[0].mxu0
    %v4962 = vadd.f32 0.0, %v4961
    %v4963 = vpop.f32.mrb[0].mxu0
    %v4964 = vadd.f32 0.0, %v4963
    %4965 = vmatprep.mubr.f32.mxu0 %v4246
    %4966 = vmatmul.mubr.f32.gmra.mrb[0].mxu0 %v4245
    %v4967 = vpop.f32.mrb[0].mxu0
    %v4968 = vadd.f32 0.0, %v4967
    %v4969 = vpop.f32.mrb[0].mxu0
    %v4970 = vadd.f32 0.0, %v4969
    %4971 = vmatprep.mubr.f32.mxu0 %v4253
    %4972 = vmatmul.mubr.f32.gmra.mrb[0].mxu0 %v4250
    %v4973 = vpop.f32.mrb[0].mxu0
    %v4974 = vadd.f32 0.0, %v4973
    %v4975 = vpop.f32.mrb[0].mxu0
    %v4976 = vadd.f32 0.0, %v4975
    %4977 = vmatprep.mubr.f32.mxu0 %v4258
    %4978 = vmatmul.mubr.f32.gmra.mrb[0].mxu0 %v4257
    %v4979 = vpop.f32.mrb[0].mxu0
    %v4980 = vadd.f32 0.0, %v4979
    %v4981 = vpop.f32.mrb[0].mxu0
    %v4982 = vadd.f32 0.0, %v4981
    %4983 = vmatprep.mubr.f32.mxu0 %v4265
    %4984 = vmatmul.mubr.f32.gmra.mrb[0].mxu0 %v4262
    %v4985 = vpop.f32.mrb[0].mxu0
    %v4986 = vadd.f32 0.0, %v4985
    %v4987 = vpop.f32.mrb[0].mxu0
    %v4988 = vadd.f32 0.0, %v4987
    %4989 = vmatprep.mubr.f32.mxu0 %v4270
    %4990 = vmatmul.mubr.f32.gmra.mrb[0].mxu0 %v4269
    %v4991 = vpop.f32.mrb[0].mxu0
    %v4992 = vadd.f32 0.0, %v4991
    %v4993 = vpop.f32.mrb[0].mxu0
    %v4994 = vadd.f32 0.0, %v4993
    %4995 = vmatprep.mubr.f32.mxu0 %v4277
    %4996 = vmatmul.mubr.f32.gmra.mrb[0].mxu0 %v4274
    %v4997 = vpop.f32.mrb[0].mxu0
    %v4998 = vadd.f32 0.0, %v4997
    %v4999 = vpop.f32.mrb[0].mxu0
    %v5000 = vadd.f32 0.0, %v4999
    %5001 = vmatprep.mubr.f32.mxu0 %v4282
    %5002 = vmatmul.mubr.f32.gmra.mrb[0].mxu0 %v4281
    %v5003 = vpop.f32.mrb[0].mxu0
    %v5004 = vadd.f32 0.0, %v5003
    %v5005 = vpop.f32.mrb[0].mxu0
    %v5006 = vadd.f32 0.0, %v5005
    %5007 = vmatprep.mubr.f32.mxu0 %v4289
    %5008 = vmatmul.mubr.f32.gmra.mrb[0].mxu0 %v4286
    %v5009 = vpop.f32.mrb[0].mxu0
    %v5010 = vadd.f32 0.0, %v5009
    %v5011 = vpop.f32.mrb[0].mxu0
    %v5012 = vadd.f32 0.0, %v5011
    %5013 = vmatprep.mubr.f32.mxu0 %v4294
    %5014 = vmatmul.mubr.f32.gmra.mrb[0].mxu0 %v4293
    %v5015 = vpop.f32.mrb[0].mxu0
    %v5016 = vadd.f32 0.0, %v5015
    %v5017 = vpop.f32.mrb[0].mxu0
    %v5018 = vadd.f32 0.0, %v5017
    %5019 = vmatprep.mubr.f32.mxu0 %v4301
    %5020 = vmatmul.mubr.f32.gmra.mrb[0].mxu0 %v4298
    %v5021 = vpop.f32.mrb[0].mxu0
    %v5022 = vadd.f32 0.0, %v5021
    %v5023 = vpop.f32.mrb[0].mxu0
    %v5024 = vadd.f32 0.0, %v5023
    %5025 = vmatprep.mubr.f32.mxu0 %v4306
    %5026 = vmatmul.mubr.f32.gmra.mrb[0].mxu0 %v4305
    %v5027 = vpop.f32.mrb[0].mxu0
    %v5028 = vadd.f32 0.0, %v5027
    %v5029 = vpop.f32.mrb[0].mxu0
    %v5030 = vadd.f32 0.0, %v5029
    %5031 = vmatprep.mubr.f32.mxu0 %v4313
    %5032 = vmatmul.mubr.f32.gmra.mrb[0].mxu0 %v4310
    %v5033 = vpop.f32.mrb[0].mxu0
    %v5034 = vadd.f32 0.0, %v5033
    %v5035 = vpop.f32.mrb[0].mxu0
    %v5036 = vadd.f32 0.0, %v5035
    %5037 = vmatprep.mubr.f32.mxu0 %v4318
    %5038 = vmatmul.mubr.f32.gmra.mrb[0].mxu0 %v4317
    %v5039 = vpop.f32.mrb[0].mxu0
    %v5040 = vadd.f32 0.0, %v5039
    %v5041 = vpop.f32.mrb[0].mxu0
    %v5042 = vadd.f32 0.0, %v5041
    %5043 = vdwg.mxu0
    %5044 = vmatprep.subr.mxu0 %v4500
    %5045 = vmatpush1.msra.mxu0 %v4499
    %5046 = vmatprep.subr.mxu0 %v4504
    %5047 = vmatpush1.msra.mxu0 %v4503
    %5048 = vmatprep.subr.mxu0 %v4508
    %5049 = vmatpush1.msra.mxu0 %v4507
    %5050 = vmatprep.subr.mxu0 %v4512
    %5051 = vmatpush1.msra.mxu0 %v4511
    %5052 = vmatprep.subr.mxu0 %v4516
    %5053 = vmatpush1.msra.mxu0 %v4515
    %5054 = vmatprep.subr.mxu0 %v4520
    %5055 = vmatpush1.msra.mxu0 %v4519
    %5056 = vmatprep.subr.mxu0 %v4524
    %5057 = vmatpush1.msra.mxu0 %v4523
    %5058 = vmatprep.subr.mxu0 %v4528
    %5059 = vmatpush1.msra.mxu0 %v4527
    %5060 = vmatprep.subr.mxu0 %v4532
    %5061 = vmatpush1.msra.mxu0 %v4531
    %5062 = vmatprep.subr.mxu0 %v4536
    %5063 = vmatpush1.msra.mxu0 %v4535
    %5064 = vmatprep.subr.mxu0 %v4540
    %5065 = vmatpush1.msra.mxu0 %v4539
    %5066 = vmatprep.subr.mxu0 %v4544
    %5067 = vmatpush1.msra.mxu0 %v4543
    %5068 = vmatprep.subr.mxu0 %v4548
    %5069 = vmatpush1.msra.mxu0 %v4547
    %5070 = vmatprep.subr.mxu0 %v4552
    %5071 = vmatpush1.msra.mxu0 %v4551
    %5072 = vmatprep.subr.mxu0 %v4556
    %5073 = vmatpush1.msra.mxu0 %v4555
    %5074 = vmatprep.subr.mxu0 %v4560
    %5075 = vmatpush1.msra.mxu0 %v4559
    %5076 = vmatprep.subr.mxu0 0.0
    %5077 = vmatpush1.msra.mxu0 0.0
    %5078 = vmatprep.subr.mxu0 0.0
    %5079 = vmatpush1.msra.mxu0 0.0
    %5080 = vmatprep.subr.mxu0 0.0
    %5081 = vmatpush1.msra.mxu0 0.0
    %5082 = vmatprep.subr.mxu0 0.0
    %5083 = vmatpush1.msra.mxu0 0.0
    %5084 = vmatprep.subr.mxu0 0.0
    %5085 = vmatpush1.msra.mxu0 0.0
    %5086 = vmatprep.subr.mxu0 0.0
    %5087 = vmatpush1.msra.mxu0 0.0
    %5088 = vmatprep.subr.mxu0 0.0
    %5089 = vmatpush1.msra.mxu0 0.0
    %5090 = vmatprep.subr.mxu0 0.0
    %5091 = vmatpush1.msra.mxu0 0.0
    %5092 = vmatprep.subr.mxu0 0.0
    %5093 = vmatpush1.msra.mxu0 0.0
    %5094 = vmatprep.subr.mxu0 0.0
    %5095 = vmatpush1.msra.mxu0 0.0
    %5096 = vmatprep.subr.mxu0 0.0
    %5097 = vmatpush1.msra.mxu0 0.0
    %5098 = vmatprep.subr.mxu0 0.0
    %5099 = vmatpush1.msra.mxu0 0.0
    %5100 = vmatprep.subr.mxu0 0.0
    %5101 = vmatpush1.msra.mxu0 0.0
    %5102 = vmatprep.subr.mxu0 0.0
    %5103 = vmatpush1.msra.mxu0 0.0
    %5104 = vmatprep.subr.mxu0 0.0
    %5105 = vmatpush1.msra.mxu0 0.0
    %5106 = vmatprep.subr.mxu0 0.0
    %5107 = vmatpush1.msra.mxu0 0.0
    %5108 = vmatprep.mubr.f32.mxu0 0.0
    %5109 = vmatmul.mubr.f32.gmra.mrb[0].mxu0 %v4232
    %v5110 = vpop.f32.mrb[0].mxu0
    %v5111 = vadd.f32 %v4950, %v5110
    %v5112 = vpop.f32.mrb[0].mxu0
    %v5113 = vadd.f32 %v4952, %v5112
    %5114 = vmatprep.mubr.f32.mxu0 0.0
    %5115 = vmatmul.mubr.f32.gmra.mrb[0].mxu0 %v4235
    %v5116 = vpop.f32.mrb[0].mxu0
    %v5117 = vadd.f32 %v4956, %v5116
    %v5118 = vpop.f32.mrb[0].mxu0
    %v5119 = vadd.f32 %v4958, %v5118
    %5120 = vmatprep.mubr.f32.mxu0 0.0
    %5121 = vmatmul.mubr.f32.gmra.mrb[0].mxu0 %v4244
    %v5122 = vpop.f32.mrb[0].mxu0
    %v5123 = vadd.f32 %v4962, %v5122
    %v5124 = vpop.f32.mrb[0].mxu0
    %v5125 = vadd.f32 %v4964, %v5124
    %5126 = vmatprep.mubr.f32.mxu0 0.0
    %5127 = vmatmul.mubr.f32.gmra.mrb[0].mxu0 %v4247
    %v5128 = vpop.f32.mrb[0].mxu0
    %v5129 = vadd.f32 %v4968, %v5128
    %v5130 = vpop.f32.mrb[0].mxu0
    %v5131 = vadd.f32 %v4970, %v5130
    %5132 = vmatprep.mubr.f32.mxu0 0.0
    %5133 = vmatmul.mubr.f32.gmra.mrb[0].mxu0 %v4256
    %v5134 = vpop.f32.mrb[0].mxu0
    %v5135 = vadd.f32 %v4974, %v5134
    %v5136 = vpop.f32.mrb[0].mxu0
    %v5137 = vadd.f32 %v4976, %v5136
    %5138 = vmatprep.mubr.f32.mxu0 0.0
    %5139 = vmatmul.mubr.f32.gmra.mrb[0].mxu0 %v4259
    %v5140 = vpop.f32.mrb[0].mxu0
    %v5141 = vadd.f32 %v4980, %v5140
    %v5142 = vpop.f32.mrb[0].mxu0
    %v5143 = vadd.f32 %v4982, %v5142
    %5144 = vmatprep.mubr.f32.mxu0 0.0
    %5145 = vmatmul.mubr.f32.gmra.mrb[0].mxu0 %v4268
    %v5146 = vpop.f32.mrb[0].mxu0
    %v5147 = vadd.f32 %v4986, %v5146
    %v5148 = vpop.f32.mrb[0].mxu0
    %v5149 = vadd.f32 %v4988, %v5148
    %5150 = vmatprep.mubr.f32.mxu0 0.0
    %5151 = vmatmul.mubr.f32.gmra.mrb[0].mxu0 %v4271
    %v5152 = vpop.f32.mrb[0].mxu0
    %v5153 = vadd.f32 %v4992, %v5152
    %v5154 = vpop.f32.mrb[0].mxu0
    %v5155 = vadd.f32 %v4994, %v5154
    %5156 = vmatprep.mubr.f32.mxu0 0.0
    %5157 = vmatmul.mubr.f32.gmra.mrb[0].mxu0 %v4280
    %v5158 = vpop.f32.mrb[0].mxu0
    %v5159 = vadd.f32 %v4998, %v5158
    %v5160 = vpop.f32.mrb[0].mxu0
    %v5161 = vadd.f32 %v5000, %v5160
    %5162 = vmatprep.mubr.f32.mxu0 0.0
    %5163 = vmatmul.mubr.f32.gmra.mrb[0].mxu0 %v4283
    %v5164 = vpop.f32.mrb[0].mxu0
    %v5165 = vadd.f32 %v5004, %v5164
    %v5166 = vpop.f32.mrb[0].mxu0
    %v5167 = vadd.f32 %v5006, %v5166
    %5168 = vmatprep.mubr.f32.mxu0 0.0
    %5169 = vmatmul.mubr.f32.gmra.mrb[0].mxu0 %v4292
    %v5170 = vpop.f32.mrb[0].mxu0
    %v5171 = vadd.f32 %v5010, %v5170
    %v5172 = vpop.f32.mrb[0].mxu0
    %v5173 = vadd.f32 %v5012, %v5172
    %5174 = vmatprep.mubr.f32.mxu0 0.0
    %5175 = vmatmul.mubr.f32.gmra.mrb[0].mxu0 %v4295
    %v5176 = vpop.f32.mrb[0].mxu0
    %v5177 = vadd.f32 %v5016, %v5176
    %v5178 = vpop.f32.mrb[0].mxu0
    %v5179 = vadd.f32 %v5018, %v5178
    %5180 = vmatprep.mubr.f32.mxu0 0.0
    %5181 = vmatmul.mubr.f32.gmra.mrb[0].mxu0 %v4304
    %v5182 = vpop.f32.mrb[0].mxu0
    %v5183 = vadd.f32 %v5022, %v5182
    %v5184 = vpop.f32.mrb[0].mxu0
    %v5185 = vadd.f32 %v5024, %v5184
    %5186 = vmatprep.mubr.f32.mxu0 0.0
    %5187 = vmatmul.mubr.f32.gmra.mrb[0].mxu0 %v4307
    %v5188 = vpop.f32.mrb[0].mxu0
    %v5189 = vadd.f32 %v5028, %v5188
    %v5190 = vpop.f32.mrb[0].mxu0
    %v5191 = vadd.f32 %v5030, %v5190
    %5192 = vmatprep.mubr.f32.mxu0 0.0
    %5193 = vmatmul.mubr.f32.gmra.mrb[0].mxu0 %v4316
    %v5194 = vpop.f32.mrb[0].mxu0
    %v5195 = vadd.f32 %v5034, %v5194
    %v5196 = vpop.f32.mrb[0].mxu0
    %v5197 = vadd.f32 %v5036, %v5196
    %5198 = vmatprep.mubr.f32.mxu0 0.0
    %5199 = vmatmul.mubr.f32.gmra.mrb[0].mxu0 %v4319
    %v5200 = vpop.f32.mrb[0].mxu0
    %v5201 = vadd.f32 %v5040, %v5200
    %v5202 = vpop.f32.mrb[0].mxu0
    %v5203 = vadd.f32 %v5042, %v5202
    %5204 = vdwg.mxu0
    %v5205 = vadd.f32 %v3807, %v4789
    %v5206 = vadd.f32 %v3809, %v4791
    %v5207 = vadd.f32 %v4129, %v5111
    %v5208 = vadd.f32 %v4131, %v5113
    %v5209 = vadd.f32 %v3813, %v4795
    %v5210 = vadd.f32 %v3815, %v4797
    %v5211 = vadd.f32 %v4135, %v5117
    %v5212 = vadd.f32 %v4137, %v5119
    %v5213 = vadd.f32 %v3819, %v4801
    %v5214 = vadd.f32 %v3821, %v4803
    %v5215 = vadd.f32 %v4141, %v5123
    %v5216 = vadd.f32 %v4143, %v5125
    %v5217 = vadd.f32 %v3825, %v4807
    %v5218 = vadd.f32 %v3827, %v4809
    %v5219 = vadd.f32 %v4147, %v5129
    %v5220 = vadd.f32 %v4149, %v5131
    %v5221 = vadd.f32 %v3831, %v4813
    %v5222 = vadd.f32 %v3833, %v4815
    %v5223 = vadd.f32 %v4153, %v5135
    %v5224 = vadd.f32 %v4155, %v5137
    %v5225 = vadd.f32 %v3837, %v4819
    %v5226 = vadd.f32 %v3839, %v4821
    %v5227 = vadd.f32 %v4159, %v5141
    %v5228 = vadd.f32 %v4161, %v5143
    %v5229 = vadd.f32 %v3843, %v4825
    %v5230 = vadd.f32 %v3845, %v4827
    %v5231 = vadd.f32 %v4165, %v5147
    %v5232 = vadd.f32 %v4167, %v5149
    %v5233 = vadd.f32 %v3849, %v4831
    %v5234 = vadd.f32 %v3851, %v4833
    %v5235 = vadd.f32 %v4171, %v5153
    %v5236 = vadd.f32 %v4173, %v5155
    %v5237 = vadd.f32 %v3855, %v4837
    %v5238 = vadd.f32 %v3857, %v4839
    %v5239 = vadd.f32 %v4177, %v5159
    %v5240 = vadd.f32 %v4179, %v5161
    %v5241 = vadd.f32 %v3861, %v4843
    %v5242 = vadd.f32 %v3863, %v4845
    %v5243 = vadd.f32 %v4183, %v5165
    %v5244 = vadd.f32 %v4185, %v5167
    %v5245 = vadd.f32 %v3867, %v4849
    %v5246 = vadd.f32 %v3869, %v4851
    %v5247 = vadd.f32 %v4189, %v5171
    %v5248 = vadd.f32 %v4191, %v5173
    %v5249 = vadd.f32 %v3873, %v4855
    %v5250 = vadd.f32 %v3875, %v4857
    %v5251 = vadd.f32 %v4195, %v5177
    %v5252 = vadd.f32 %v4197, %v5179
    %v5253 = vadd.f32 %v3879, %v4861
    %v5254 = vadd.f32 %v3881, %v4863
    %v5255 = vadd.f32 %v4201, %v5183
    %v5256 = vadd.f32 %v4203, %v5185
    %v5257 = vadd.f32 %v3885, %v4867
    %v5258 = vadd.f32 %v3887, %v4869
    %v5259 = vadd.f32 %v4207, %v5189
    %v5260 = vadd.f32 %v4209, %v5191
    %v5261 = vadd.f32 %v3891, %v4873
    %v5262 = vadd.f32 %v3893, %v4875
    %v5263 = vadd.f32 %v4213, %v5195
    %v5264 = vadd.f32 %v4215, %v5197
    %v5265 = vadd.f32 %v3897, %v4879
    %v5266 = vadd.f32 %v3899, %v4881
    %v5267 = vadd.f32 %v4219, %v5201
    %v5268 = vadd.f32 %v4221, %v5203
    %vm5269 = vcmask 1044480
    %v5270 = vrot.slane %v2309, 3
    %v5271 = vrot.slane %v2312, 3
    %v5272 = vsel %vm5269, %v5270, %v5271
    %v5273 = vrot.slane %v2310, 3
    %v5274 = vrot.slane %v2313, 3
    %v5275 = vsel %vm5269, %v5273, %v5274
    %v5276 = vrot.slane %v2311, 3
    %v5277 = vrot.slane %v2314, 3
    %v5278 = vsel %vm5269, %v5276, %v5277
    %v5279 = vsel %vm5269, %v5271, %v5270
    %v5280 = vsel %vm5269, %v5274, %v5273
    %v5281 = vsel %vm5269, %v5277, %v5276
    %v5282 = vrot.slane %v2315, 3
    %v5283 = vrot.slane %v2318, 3
    %v5284 = vsel %vm5269, %v5282, %v5283
    %v5285 = vrot.slane %v2316, 3
    %v5286 = vrot.slane %v2319, 3
    %v5287 = vsel %vm5269, %v5285, %v5286
    %v5288 = vrot.slane %v2317, 3
    %v5289 = vrot.slane %v2320, 3
    %v5290 = vsel %vm5269, %v5288, %v5289
    %v5291 = vsel %vm5269, %v5283, %v5282
    %v5292 = vsel %vm5269, %v5286, %v5285
    %v5293 = vsel %vm5269, %v5289, %v5288
    %v5294 = vrot.slane %v2321, 3
    %v5295 = vrot.slane %v2324, 3
    %v5296 = vsel %vm5269, %v5294, %v5295
    %v5297 = vrot.slane %v2322, 3
    %v5298 = vrot.slane %v2325, 3
    %v5299 = vsel %vm5269, %v5297, %v5298
    %v5300 = vrot.slane %v2323, 3
    %v5301 = vrot.slane %v2326, 3
    %v5302 = vsel %vm5269, %v5300, %v5301
    %v5303 = vsel %vm5269, %v5295, %v5294
    %v5304 = vsel %vm5269, %v5298, %v5297
    %v5305 = vsel %vm5269, %v5301, %v5300
    %v5306 = vrot.slane %v2327, 3
    %v5307 = vrot.slane %v2330, 3
    %v5308 = vsel %vm5269, %v5306, %v5307
    %v5309 = vrot.slane %v2328, 3
    %v5310 = vrot.slane %v2331, 3
    %v5311 = vsel %vm5269, %v5309, %v5310
    %v5312 = vrot.slane %v2329, 3
    %v5313 = vrot.slane %v2332, 3
    %v5314 = vsel %vm5269, %v5312, %v5313
    %v5315 = vsel %vm5269, %v5307, %v5306
    %v5316 = vsel %vm5269, %v5310, %v5309
    %v5317 = vsel %vm5269, %v5313, %v5312
    %v5318 = vrot.slane %v2333, 3
    %v5319 = vrot.slane %v2336, 3
    %v5320 = vsel %vm5269, %v5318, %v5319
    %v5321 = vrot.slane %v2334, 3
    %v5322 = vrot.slane %v2337, 3
    %v5323 = vsel %vm5269, %v5321, %v5322
    %v5324 = vrot.slane %v2335, 3
    %v5325 = vrot.slane %v2338, 3
    %v5326 = vsel %vm5269, %v5324, %v5325
    %v5327 = vsel %vm5269, %v5319, %v5318
    %v5328 = vsel %vm5269, %v5322, %v5321
    %v5329 = vsel %vm5269, %v5325, %v5324
    %v5330 = vrot.slane %v2339, 3
    %v5331 = vrot.slane %v2342, 3
    %v5332 = vsel %vm5269, %v5330, %v5331
    %v5333 = vrot.slane %v2340, 3
    %v5334 = vrot.slane %v2343, 3
    %v5335 = vsel %vm5269, %v5333, %v5334
    %v5336 = vrot.slane %v2341, 3
    %v5337 = vrot.slane %v2344, 3
    %v5338 = vsel %vm5269, %v5336, %v5337
    %v5339 = vsel %vm5269, %v5331, %v5330
    %v5340 = vsel %vm5269, %v5334, %v5333
    %v5341 = vsel %vm5269, %v5337, %v5336
    %v5342 = vrot.slane %v2345, 3
    %v5343 = vrot.slane %v2348, 3
    %v5344 = vsel %vm5269, %v5342, %v5343
    %v5345 = vrot.slane %v2346, 3
    %v5346 = vrot.slane %v2349, 3
    %v5347 = vsel %vm5269, %v5345, %v5346
    %v5348 = vrot.slane %v2347, 3
    %v5349 = vrot.slane %v2350, 3
    %v5350 = vsel %vm5269, %v5348, %v5349
    %v5351 = vsel %vm5269, %v5343, %v5342
    %v5352 = vsel %vm5269, %v5346, %v5345
    %v5353 = vsel %vm5269, %v5349, %v5348
    %v5354 = vrot.slane %v2351, 3
    %v5355 = vrot.slane %v2354, 3
    %v5356 = vsel %vm5269, %v5354, %v5355
    %v5357 = vrot.slane %v2352, 3
    %v5358 = vrot.slane %v2355, 3
    %v5359 = vsel %vm5269, %v5357, %v5358
    %v5360 = vrot.slane %v2353, 3
    %v5361 = vrot.slane %v2356, 3
    %v5362 = vsel %vm5269, %v5360, %v5361
    %v5363 = vsel %vm5269, %v5355, %v5354
    %v5364 = vsel %vm5269, %v5358, %v5357
    %v5365 = vsel %vm5269, %v5361, %v5360
    %s5414 = scalar_lea.vmem %s3, 4608
    %v5415 = vld [vmem:[%s5414] sm:$0xff]
    %v5416 = vld [vmem:[%s5414 + $0x8] sm:$0xff]
    %v5417 = vld [vmem:[%s5414 + $0x10] sm:$0xff]
    %v5418 = vld [vmem:[%s5414 + $0x18] sm:$0xff]
    %v5419 = vld [vmem:[%s5414 + $0x20] sm:$0xff]
    %v5420 = vld [vmem:[%s5414 + $0x28] sm:$0xff]
    %v5421 = vld [vmem:[%s5414 + $0x30] sm:$0xff]
    %v5422 = vld [vmem:[%s5414 + $0x38] sm:$0xff]
    %v5423 = vld [vmem:[%s5414 + $0x40] sm:$0xff]
    %v5424 = vld [vmem:[%s5414 + $0x48] sm:$0xff]
    %v5425 = vld [vmem:[%s5414 + $0x50] sm:$0xff]
    %v5426 = vld [vmem:[%s5414 + $0x58] sm:$0xff]
    %v5427 = vld [vmem:[%s5414 + $0x60] sm:$0xff]
    %v5428 = vld [vmem:[%s5414 + $0x68] sm:$0xff]
    %v5429 = vld [vmem:[%s5414 + $0x70] sm:$0xff]
    %v5430 = vld [vmem:[%s5414 + $0x78] sm:$0xff]
    %v5431 = vld [vmem:[%s5414 + $0x80] sm:$0xff]
    %v5432 = vld [vmem:[%s5414 + $0x88] sm:$0xff]
    %v5433 = vld [vmem:[%s5414 + $0x90] sm:$0xff]
    %v5434 = vld [vmem:[%s5414 + $0x98] sm:$0xff]
    %v5435 = vld [vmem:[%s5414 + $0xa0] sm:$0xff]
    %v5436 = vld [vmem:[%s5414 + $0xa8] sm:$0xff]
    %v5437 = vld [vmem:[%s5414 + $0xb0] sm:$0xff]
    %v5438 = vld [vmem:[%s5414 + $0xb8] sm:$0xff]
    %v5439 = vld [vmem:[%s5414 + $0xc0] sm:$0xff]
    %v5440 = vld [vmem:[%s5414 + $0xc8] sm:$0xff]
    %v5441 = vld [vmem:[%s5414 + $0xd0] sm:$0xff]
    %v5442 = vld [vmem:[%s5414 + $0xd8] sm:$0xff]
    %v5443 = vld [vmem:[%s5414 + $0xe0] sm:$0xff]
    %v5444 = vld [vmem:[%s5414 + $0xe8] sm:$0xff]
    %v5445 = vld [vmem:[%s5414 + $0xf0] sm:$0xff]
    %v5446 = vld [vmem:[%s5414 + $0xf8] sm:$0xff]
    %v5447 = vld [vmem:[%s5414 + $0x100] sm:$0xff]
    %v5448 = vld [vmem:[%s5414 + $0x108] sm:$0xff]
    %v5449 = vld [vmem:[%s5414 + $0x110] sm:$0xff]
    %v5450 = vld [vmem:[%s5414 + $0x118] sm:$0xff]
    %v5451 = vld [vmem:[%s5414 + $0x120] sm:$0xff]
    %v5452 = vld [vmem:[%s5414 + $0x128] sm:$0xff]
    %v5453 = vld [vmem:[%s5414 + $0x130] sm:$0xff]
    %v5454 = vld [vmem:[%s5414 + $0x138] sm:$0xff]
    %v5455 = vld [vmem:[%s5414 + $0x140] sm:$0xff]
    %v5456 = vld [vmem:[%s5414 + $0x148] sm:$0xff]
    %v5457 = vld [vmem:[%s5414 + $0x150] sm:$0xff]
    %v5458 = vld [vmem:[%s5414 + $0x158] sm:$0xff]
    %v5459 = vld [vmem:[%s5414 + $0x160] sm:$0xff]
    %v5460 = vld [vmem:[%s5414 + $0x168] sm:$0xff]
    %v5461 = vld [vmem:[%s5414 + $0x170] sm:$0xff]
    %v5462 = vld [vmem:[%s5414 + $0x178] sm:$0xff]
    %v5463 = vld [vmem:[%s5414 + $0x180] sm:$0xff]
    %v5464 = vld [vmem:[%s5414 + $0x188] sm:$0xff]
    %v5465 = vld [vmem:[%s5414 + $0x190] sm:$0xff]
    %v5466 = vld [vmem:[%s5414 + $0x198] sm:$0xff]
    %v5467 = vld [vmem:[%s5414 + $0x1a0] sm:$0xff]
    %v5468 = vld [vmem:[%s5414 + $0x1a8] sm:$0xff]
    %v5469 = vld [vmem:[%s5414 + $0x1b0] sm:$0xff]
    %v5470 = vld [vmem:[%s5414 + $0x1b8] sm:$0xff]
    %v5471 = vld [vmem:[%s5414 + $0x1c0] sm:$0xff]
    %v5472 = vld [vmem:[%s5414 + $0x1c8] sm:$0xff]
    %v5473 = vld [vmem:[%s5414 + $0x1d0] sm:$0xff]
    %v5474 = vld [vmem:[%s5414 + $0x1d8] sm:$0xff]
    %v5475 = vld [vmem:[%s5414 + $0x1e0] sm:$0xff]
    %v5476 = vld [vmem:[%s5414 + $0x1e8] sm:$0xff]
    %v5477 = vld [vmem:[%s5414 + $0x1f0] sm:$0xff]
    %v5478 = vld [vmem:[%s5414 + $0x1f8] sm:$0xff]
    %v5479 = vld [vmem:[%s5414 + $0x200] sm:$0xff]
    %v5480 = vld [vmem:[%s5414 + $0x208] sm:$0xff]
    %v5481 = vld [vmem:[%s5414 + $0x210] sm:$0xff]
    %v5482 = vld [vmem:[%s5414 + $0x218] sm:$0xff]
    %v5483 = vld [vmem:[%s5414 + $0x220] sm:$0xff]
    %v5484 = vld [vmem:[%s5414 + $0x228] sm:$0xff]
    %v5485 = vld [vmem:[%s5414 + $0x230] sm:$0xff]
    %v5486 = vld [vmem:[%s5414 + $0x238] sm:$0xff]
    %v5487 = vld [vmem:[%s5414 + $0x240] sm:$0xff]
    %v5488 = vld [vmem:[%s5414 + $0x248] sm:$0xff]
    %v5489 = vld [vmem:[%s5414 + $0x250] sm:$0xff]
    %v5490 = vld [vmem:[%s5414 + $0x258] sm:$0xff]
    %v5491 = vld [vmem:[%s5414 + $0x260] sm:$0xff]
    %v5492 = vld [vmem:[%s5414 + $0x268] sm:$0xff]
    %v5493 = vld [vmem:[%s5414 + $0x270] sm:$0xff]
    %v5494 = vld [vmem:[%s5414 + $0x278] sm:$0xff]
    %v5495 = vld [vmem:[%s5414 + $0x280] sm:$0xff]
    %v5496 = vld [vmem:[%s5414 + $0x288] sm:$0xff]
    %v5497 = vld [vmem:[%s5414 + $0x290] sm:$0xff]
    %v5498 = vld [vmem:[%s5414 + $0x298] sm:$0xff]
    %v5499 = vld [vmem:[%s5414 + $0x2a0] sm:$0xff]
    %v5500 = vld [vmem:[%s5414 + $0x2a8] sm:$0xff]
    %v5501 = vld [vmem:[%s5414 + $0x2b0] sm:$0xff]
    %v5502 = vld [vmem:[%s5414 + $0x2b8] sm:$0xff]
    %v5503 = vld [vmem:[%s5414 + $0x2c0] sm:$0xff]
    %v5504 = vld [vmem:[%s5414 + $0x2c8] sm:$0xff]
    %v5505 = vld [vmem:[%s5414 + $0x2d0] sm:$0xff]
    %v5506 = vld [vmem:[%s5414 + $0x2d8] sm:$0xff]
    %v5507 = vld [vmem:[%s5414 + $0x2e0] sm:$0xff]
    %v5508 = vld [vmem:[%s5414 + $0x2e8] sm:$0xff]
    %v5509 = vld [vmem:[%s5414 + $0x2f0] sm:$0xff]
    %v5510 = vld [vmem:[%s5414 + $0x2f8] sm:$0xff]
    %v5511 = vld [vmem:[%s5414 + $0x300] sm:$0xff]
    %v5512 = vld [vmem:[%s5414 + $0x308] sm:$0xff]
    %v5513 = vld [vmem:[%s5414 + $0x310] sm:$0xff]
    %v5514 = vld [vmem:[%s5414 + $0x318] sm:$0xff]
    %v5515 = vld [vmem:[%s5414 + $0x320] sm:$0xff]
    %v5516 = vld [vmem:[%s5414 + $0x328] sm:$0xff]
    %v5517 = vld [vmem:[%s5414 + $0x330] sm:$0xff]
    %v5518 = vld [vmem:[%s5414 + $0x338] sm:$0xff]
    %v5519 = vld [vmem:[%s5414 + $0x340] sm:$0xff]
    %v5520 = vld [vmem:[%s5414 + $0x348] sm:$0xff]
    %v5521 = vld [vmem:[%s5414 + $0x350] sm:$0xff]
    %v5522 = vld [vmem:[%s5414 + $0x358] sm:$0xff]
    %v5523 = vld [vmem:[%s5414 + $0x360] sm:$0xff]
    %v5524 = vld [vmem:[%s5414 + $0x368] sm:$0xff]
    %v5525 = vld [vmem:[%s5414 + $0x370] sm:$0xff]
    %v5526 = vld [vmem:[%s5414 + $0x378] sm:$0xff]
    %v5527 = vld [vmem:[%s5414 + $0x380] sm:$0xff]
    %v5528 = vld [vmem:[%s5414 + $0x388] sm:$0xff]
    %v5529 = vld [vmem:[%s5414 + $0x390] sm:$0xff]
    %v5530 = vld [vmem:[%s5414 + $0x398] sm:$0xff]
    %v5531 = vld [vmem:[%s5414 + $0x3a0] sm:$0xff]
    %v5532 = vld [vmem:[%s5414 + $0x3a8] sm:$0xff]
    %v5533 = vld [vmem:[%s5414 + $0x3b0] sm:$0xff]
    %v5534 = vld [vmem:[%s5414 + $0x3b8] sm:$0xff]
    %v5535 = vld [vmem:[%s5414 + $0x3c0] sm:$0xff]
    %v5536 = vld [vmem:[%s5414 + $0x3c8] sm:$0xff]
    %v5537 = vld [vmem:[%s5414 + $0x3d0] sm:$0xff]
    %v5538 = vld [vmem:[%s5414 + $0x3d8] sm:$0xff]
    %v5539 = vld [vmem:[%s5414 + $0x3e0] sm:$0xff]
    %v5540 = vld [vmem:[%s5414 + $0x3e8] sm:$0xff]
    %v5541 = vld [vmem:[%s5414 + $0x3f0] sm:$0xff]
    %v5542 = vld [vmem:[%s5414 + $0x3f8] sm:$0xff]
    %v5543 = vld [vmem:[%s5414 + $0x400] sm:$0xff]
    %v5544 = vld [vmem:[%s5414 + $0x408] sm:$0xff]
    %v5545 = vld [vmem:[%s5414 + $0x410] sm:$0xff]
    %v5546 = vld [vmem:[%s5414 + $0x418] sm:$0xff]
    %v5547 = vld [vmem:[%s5414 + $0x420] sm:$0xff]
    %v5548 = vld [vmem:[%s5414 + $0x428] sm:$0xff]
    %v5549 = vld [vmem:[%s5414 + $0x430] sm:$0xff]
    %v5550 = vld [vmem:[%s5414 + $0x438] sm:$0xff]
    %v5551 = vld [vmem:[%s5414 + $0x440] sm:$0xff]
    %v5552 = vld [vmem:[%s5414 + $0x448] sm:$0xff]
    %v5553 = vld [vmem:[%s5414 + $0x450] sm:$0xff]
    %v5554 = vld [vmem:[%s5414 + $0x458] sm:$0xff]
    %v5555 = vld [vmem:[%s5414 + $0x460] sm:$0xff]
    %v5556 = vld [vmem:[%s5414 + $0x468] sm:$0xff]
    %v5557 = vld [vmem:[%s5414 + $0x470] sm:$0xff]
    %v5558 = vld [vmem:[%s5414 + $0x478] sm:$0xff]
    %v5559 = vld [vmem:[%s5414 + $0x480] sm:$0xff]
    %v5560 = vld [vmem:[%s5414 + $0x488] sm:$0xff]
    %v5561 = vld [vmem:[%s5414 + $0x490] sm:$0xff]
    %v5562 = vld [vmem:[%s5414 + $0x498] sm:$0xff]
    %v5563 = vld [vmem:[%s5414 + $0x4a0] sm:$0xff]
    %v5564 = vld [vmem:[%s5414 + $0x4a8] sm:$0xff]
    %v5565 = vld [vmem:[%s5414 + $0x4b0] sm:$0xff]
    %v5566 = vld [vmem:[%s5414 + $0x4b8] sm:$0xff]
    %v5567 = vld [vmem:[%s5414 + $0x4c0] sm:$0xff]
    %v5568 = vld [vmem:[%s5414 + $0x4c8] sm:$0xff]
    %v5569 = vld [vmem:[%s5414 + $0x4d0] sm:$0xff]
    %v5570 = vld [vmem:[%s5414 + $0x4d8] sm:$0xff]
    %v5571 = vld [vmem:[%s5414 + $0x4e0] sm:$0xff]
    %v5572 = vld [vmem:[%s5414 + $0x4e8] sm:$0xff]
    %v5573 = vld [vmem:[%s5414 + $0x4f0] sm:$0xff]
    %v5574 = vld [vmem:[%s5414 + $0x4f8] sm:$0xff]
    %v5575 = vld [vmem:[%s5414 + $0x500] sm:$0xff]
    %v5576 = vld [vmem:[%s5414 + $0x508] sm:$0xff]
    %v5577 = vld [vmem:[%s5414 + $0x510] sm:$0xff]
    %v5578 = vld [vmem:[%s5414 + $0x518] sm:$0xff]
    %v5579 = vld [vmem:[%s5414 + $0x520] sm:$0xff]
    %v5580 = vld [vmem:[%s5414 + $0x528] sm:$0xff]
    %v5581 = vld [vmem:[%s5414 + $0x530] sm:$0xff]
    %v5582 = vld [vmem:[%s5414 + $0x538] sm:$0xff]
    %v5583 = vld [vmem:[%s5414 + $0x540] sm:$0xff]
    %v5584 = vld [vmem:[%s5414 + $0x548] sm:$0xff]
    %v5585 = vld [vmem:[%s5414 + $0x550] sm:$0xff]
    %v5586 = vld [vmem:[%s5414 + $0x558] sm:$0xff]
    %v5587 = vld [vmem:[%s5414 + $0x560] sm:$0xff]
    %v5588 = vld [vmem:[%s5414 + $0x568] sm:$0xff]
    %v5589 = vld [vmem:[%s5414 + $0x570] sm:$0xff]
    %v5590 = vld [vmem:[%s5414 + $0x578] sm:$0xff]
    %v5591 = vld [vmem:[%s5414 + $0x580] sm:$0xff]
    %v5592 = vld [vmem:[%s5414 + $0x588] sm:$0xff]
    %v5593 = vld [vmem:[%s5414 + $0x590] sm:$0xff]
    %v5594 = vld [vmem:[%s5414 + $0x598] sm:$0xff]
    %v5595 = vld [vmem:[%s5414 + $0x5a0] sm:$0xff]
    %v5596 = vld [vmem:[%s5414 + $0x5a8] sm:$0xff]
    %v5597 = vld [vmem:[%s5414 + $0x5b0] sm:$0xff]
    %v5598 = vld [vmem:[%s5414 + $0x5b8] sm:$0xff]
    %v5599 = vld [vmem:[%s5414 + $0x5c0] sm:$0xff]
    %v5600 = vld [vmem:[%s5414 + $0x5c8] sm:$0xff]
    %v5601 = vld [vmem:[%s5414 + $0x5d0] sm:$0xff]
    %v5602 = vld [vmem:[%s5414 + $0x5d8] sm:$0xff]
    %v5603 = vld [vmem:[%s5414 + $0x5e0] sm:$0xff]
    %v5604 = vld [vmem:[%s5414 + $0x5e8] sm:$0xff]
    %v5605 = vld [vmem:[%s5414 + $0x5f0] sm:$0xff]
    %v5606 = vld [vmem:[%s5414 + $0x5f8] sm:$0xff]
    %5607 = vmatprep.subr.mxu0 %v5416
    %5608 = vmatpush1.msra.mxu0 %v5415
    %5609 = vmatprep.subr.mxu0 %v5420
    %5610 = vmatpush1.msra.mxu0 %v5419
    %5611 = vmatprep.subr.mxu0 %v5424
    %5612 = vmatpush1.msra.mxu0 %v5423
    %5613 = vmatprep.subr.mxu0 %v5428
    %5614 = vmatpush1.msra.mxu0 %v5427
    %5615 = vmatprep.subr.mxu0 %v5432
    %5616 = vmatpush1.msra.mxu0 %v5431
    %5617 = vmatprep.subr.mxu0 %v5436
    %5618 = vmatpush1.msra.mxu0 %v5435
    %5619 = vmatprep.subr.mxu0 %v5440
    %5620 = vmatpush1.msra.mxu0 %v5439
    %5621 = vmatprep.subr.mxu0 %v5444
    %5622 = vmatpush1.msra.mxu0 %v5443
    %5623 = vmatprep.subr.mxu0 %v5448
    %5624 = vmatpush1.msra.mxu0 %v5447
    %5625 = vmatprep.subr.mxu0 %v5452
    %5626 = vmatpush1.msra.mxu0 %v5451
    %5627 = vmatprep.subr.mxu0 %v5456
    %5628 = vmatpush1.msra.mxu0 %v5455
    %5629 = vmatprep.subr.mxu0 %v5460
    %5630 = vmatpush1.msra.mxu0 %v5459
    %5631 = vmatprep.subr.mxu0 %v5464
    %5632 = vmatpush1.msra.mxu0 %v5463
    %5633 = vmatprep.subr.mxu0 %v5468
    %5634 = vmatpush1.msra.mxu0 %v5467
    %5635 = vmatprep.subr.mxu0 %v5472
    %5636 = vmatpush1.msra.mxu0 %v5471
    %5637 = vmatprep.subr.mxu0 %v5476
    %5638 = vmatpush1.msra.mxu0 %v5475
    %5639 = vmatprep.subr.mxu0 %v5480
    %5640 = vmatpush1.msra.mxu0 %v5479
    %5641 = vmatprep.subr.mxu0 %v5484
    %5642 = vmatpush1.msra.mxu0 %v5483
    %5643 = vmatprep.subr.mxu0 %v5488
    %5644 = vmatpush1.msra.mxu0 %v5487
    %5645 = vmatprep.subr.mxu0 %v5492
    %5646 = vmatpush1.msra.mxu0 %v5491
    %5647 = vmatprep.subr.mxu0 %v5496
    %5648 = vmatpush1.msra.mxu0 %v5495
    %5649 = vmatprep.subr.mxu0 %v5500
    %5650 = vmatpush1.msra.mxu0 %v5499
    %5651 = vmatprep.subr.mxu0 %v5504
    %5652 = vmatpush1.msra.mxu0 %v5503
    %5653 = vmatprep.subr.mxu0 %v5508
    %5654 = vmatpush1.msra.mxu0 %v5507
    %5655 = vmatprep.subr.mxu0 %v5512
    %5656 = vmatpush1.msra.mxu0 %v5511
    %5657 = vmatprep.subr.mxu0 %v5516
    %5658 = vmatpush1.msra.mxu0 %v5515
    %5659 = vmatprep.subr.mxu0 %v5520
    %5660 = vmatpush1.msra.mxu0 %v5519
    %5661 = vmatprep.subr.mxu0 %v5524
    %5662 = vmatpush1.msra.mxu0 %v5523
    %5663 = vmatprep.subr.mxu0 %v5528
    %5664 = vmatpush1.msra.mxu0 %v5527
    %5665 = vmatprep.subr.mxu0 %v5532
    %5666 = vmatpush1.msra.mxu0 %v5531
    %5667 = vmatprep.subr.mxu0 %v5536
    %5668 = vmatpush1.msra.mxu0 %v5535
    %5669 = vmatprep.subr.mxu0 %v5540
    %5670 = vmatpush1.msra.mxu0 %v5539
    %5671 = vmatprep.mubr.f32.mxu0 %v5275
    %5672 = vmatmul.mubr.f32.gmra.mrb[0].mxu0 %v5272
    %v5673 = vpop.f32.mrb[0].mxu0
    %v5674 = vadd.f32 0.0, %v5673
    %v5675 = vpop.f32.mrb[0].mxu0
    %v5676 = vadd.f32 0.0, %v5675
    %5677 = vmatprep.mubr.f32.mxu0 %v5280
    %5678 = vmatmul.mubr.f32.gmra.mrb[0].mxu0 %v5279
    %v5679 = vpop.f32.mrb[0].mxu0
    %v5680 = vadd.f32 0.0, %v5679
    %v5681 = vpop.f32.mrb[0].mxu0
    %v5682 = vadd.f32 0.0, %v5681
    %5683 = vmatprep.mubr.f32.mxu0 %v5287
    %5684 = vmatmul.mubr.f32.gmra.mrb[0].mxu0 %v5284
    %v5685 = vpop.f32.mrb[0].mxu0
    %v5686 = vadd.f32 0.0, %v5685
    %v5687 = vpop.f32.mrb[0].mxu0
    %v5688 = vadd.f32 0.0, %v5687
    %5689 = vmatprep.mubr.f32.mxu0 %v5292
    %5690 = vmatmul.mubr.f32.gmra.mrb[0].mxu0 %v5291
    %v5691 = vpop.f32.mrb[0].mxu0
    %v5692 = vadd.f32 0.0, %v5691
    %v5693 = vpop.f32.mrb[0].mxu0
    %v5694 = vadd.f32 0.0, %v5693
    %5695 = vmatprep.mubr.f32.mxu0 %v5299
    %5696 = vmatmul.mubr.f32.gmra.mrb[0].mxu0 %v5296
    %v5697 = vpop.f32.mrb[0].mxu0
    %v5698 = vadd.f32 0.0, %v5697
    %v5699 = vpop.f32.mrb[0].mxu0
    %v5700 = vadd.f32 0.0, %v5699
    %5701 = vmatprep.mubr.f32.mxu0 %v5304
    %5702 = vmatmul.mubr.f32.gmra.mrb[0].mxu0 %v5303
    %v5703 = vpop.f32.mrb[0].mxu0
    %v5704 = vadd.f32 0.0, %v5703
    %v5705 = vpop.f32.mrb[0].mxu0
    %v5706 = vadd.f32 0.0, %v5705
    %5707 = vmatprep.mubr.f32.mxu0 %v5311
    %5708 = vmatmul.mubr.f32.gmra.mrb[0].mxu0 %v5308
    %v5709 = vpop.f32.mrb[0].mxu0
    %v5710 = vadd.f32 0.0, %v5709
    %v5711 = vpop.f32.mrb[0].mxu0
    %v5712 = vadd.f32 0.0, %v5711
    %5713 = vmatprep.mubr.f32.mxu0 %v5316
    %5714 = vmatmul.mubr.f32.gmra.mrb[0].mxu0 %v5315
    %v5715 = vpop.f32.mrb[0].mxu0
    %v5716 = vadd.f32 0.0, %v5715
    %v5717 = vpop.f32.mrb[0].mxu0
    %v5718 = vadd.f32 0.0, %v5717
    %5719 = vmatprep.mubr.f32.mxu0 %v5323
    %5720 = vmatmul.mubr.f32.gmra.mrb[0].mxu0 %v5320
    %v5721 = vpop.f32.mrb[0].mxu0
    %v5722 = vadd.f32 0.0, %v5721
    %v5723 = vpop.f32.mrb[0].mxu0
    %v5724 = vadd.f32 0.0, %v5723
    %5725 = vmatprep.mubr.f32.mxu0 %v5328
    %5726 = vmatmul.mubr.f32.gmra.mrb[0].mxu0 %v5327
    %v5727 = vpop.f32.mrb[0].mxu0
    %v5728 = vadd.f32 0.0, %v5727
    %v5729 = vpop.f32.mrb[0].mxu0
    %v5730 = vadd.f32 0.0, %v5729
    %5731 = vmatprep.mubr.f32.mxu0 %v5335
    %5732 = vmatmul.mubr.f32.gmra.mrb[0].mxu0 %v5332
    %v5733 = vpop.f32.mrb[0].mxu0
    %v5734 = vadd.f32 0.0, %v5733
    %v5735 = vpop.f32.mrb[0].mxu0
    %v5736 = vadd.f32 0.0, %v5735
    %5737 = vmatprep.mubr.f32.mxu0 %v5340
    %5738 = vmatmul.mubr.f32.gmra.mrb[0].mxu0 %v5339
    %v5739 = vpop.f32.mrb[0].mxu0
    %v5740 = vadd.f32 0.0, %v5739
    %v5741 = vpop.f32.mrb[0].mxu0
    %v5742 = vadd.f32 0.0, %v5741
    %5743 = vmatprep.mubr.f32.mxu0 %v5347
    %5744 = vmatmul.mubr.f32.gmra.mrb[0].mxu0 %v5344
    %v5745 = vpop.f32.mrb[0].mxu0
    %v5746 = vadd.f32 0.0, %v5745
    %v5747 = vpop.f32.mrb[0].mxu0
    %v5748 = vadd.f32 0.0, %v5747
    %5749 = vmatprep.mubr.f32.mxu0 %v5352
    %5750 = vmatmul.mubr.f32.gmra.mrb[0].mxu0 %v5351
    %v5751 = vpop.f32.mrb[0].mxu0
    %v5752 = vadd.f32 0.0, %v5751
    %v5753 = vpop.f32.mrb[0].mxu0
    %v5754 = vadd.f32 0.0, %v5753
    %5755 = vmatprep.mubr.f32.mxu0 %v5359
    %5756 = vmatmul.mubr.f32.gmra.mrb[0].mxu0 %v5356
    %v5757 = vpop.f32.mrb[0].mxu0
    %v5758 = vadd.f32 0.0, %v5757
    %v5759 = vpop.f32.mrb[0].mxu0
    %v5760 = vadd.f32 0.0, %v5759
    %5761 = vmatprep.mubr.f32.mxu0 %v5364
    %5762 = vmatmul.mubr.f32.gmra.mrb[0].mxu0 %v5363
    %v5763 = vpop.f32.mrb[0].mxu0
    %v5764 = vadd.f32 0.0, %v5763
    %v5765 = vpop.f32.mrb[0].mxu0
    %v5766 = vadd.f32 0.0, %v5765
    %5767 = vdwg.mxu0
    %5768 = vmatprep.subr.mxu0 %v5544
    %5769 = vmatpush1.msra.mxu0 %v5543
    %5770 = vmatprep.subr.mxu0 %v5548
    %5771 = vmatpush1.msra.mxu0 %v5547
    %5772 = vmatprep.subr.mxu0 %v5552
    %5773 = vmatpush1.msra.mxu0 %v5551
    %5774 = vmatprep.subr.mxu0 %v5556
    %5775 = vmatpush1.msra.mxu0 %v5555
    %5776 = vmatprep.subr.mxu0 %v5560
    %5777 = vmatpush1.msra.mxu0 %v5559
    %5778 = vmatprep.subr.mxu0 %v5564
    %5779 = vmatpush1.msra.mxu0 %v5563
    %5780 = vmatprep.subr.mxu0 %v5568
    %5781 = vmatpush1.msra.mxu0 %v5567
    %5782 = vmatprep.subr.mxu0 %v5572
    %5783 = vmatpush1.msra.mxu0 %v5571
    %5784 = vmatprep.subr.mxu0 %v5576
    %5785 = vmatpush1.msra.mxu0 %v5575
    %5786 = vmatprep.subr.mxu0 %v5580
    %5787 = vmatpush1.msra.mxu0 %v5579
    %5788 = vmatprep.subr.mxu0 %v5584
    %5789 = vmatpush1.msra.mxu0 %v5583
    %5790 = vmatprep.subr.mxu0 %v5588
    %5791 = vmatpush1.msra.mxu0 %v5587
    %5792 = vmatprep.subr.mxu0 %v5592
    %5793 = vmatpush1.msra.mxu0 %v5591
    %5794 = vmatprep.subr.mxu0 %v5596
    %5795 = vmatpush1.msra.mxu0 %v5595
    %5796 = vmatprep.subr.mxu0 %v5600
    %5797 = vmatpush1.msra.mxu0 %v5599
    %5798 = vmatprep.subr.mxu0 %v5604
    %5799 = vmatpush1.msra.mxu0 %v5603
    %5800 = vmatprep.subr.mxu0 0.0
    %5801 = vmatpush1.msra.mxu0 0.0
    %5802 = vmatprep.subr.mxu0 0.0
    %5803 = vmatpush1.msra.mxu0 0.0
    %5804 = vmatprep.subr.mxu0 0.0
    %5805 = vmatpush1.msra.mxu0 0.0
    %5806 = vmatprep.subr.mxu0 0.0
    %5807 = vmatpush1.msra.mxu0 0.0
    %5808 = vmatprep.subr.mxu0 0.0
    %5809 = vmatpush1.msra.mxu0 0.0
    %5810 = vmatprep.subr.mxu0 0.0
    %5811 = vmatpush1.msra.mxu0 0.0
    %5812 = vmatprep.subr.mxu0 0.0
    %5813 = vmatpush1.msra.mxu0 0.0
    %5814 = vmatprep.subr.mxu0 0.0
    %5815 = vmatpush1.msra.mxu0 0.0
    %5816 = vmatprep.subr.mxu0 0.0
    %5817 = vmatpush1.msra.mxu0 0.0
    %5818 = vmatprep.subr.mxu0 0.0
    %5819 = vmatpush1.msra.mxu0 0.0
    %5820 = vmatprep.subr.mxu0 0.0
    %5821 = vmatpush1.msra.mxu0 0.0
    %5822 = vmatprep.subr.mxu0 0.0
    %5823 = vmatpush1.msra.mxu0 0.0
    %5824 = vmatprep.subr.mxu0 0.0
    %5825 = vmatpush1.msra.mxu0 0.0
    %5826 = vmatprep.subr.mxu0 0.0
    %5827 = vmatpush1.msra.mxu0 0.0
    %5828 = vmatprep.subr.mxu0 0.0
    %5829 = vmatpush1.msra.mxu0 0.0
    %5830 = vmatprep.subr.mxu0 0.0
    %5831 = vmatpush1.msra.mxu0 0.0
    %5832 = vmatprep.mubr.f32.mxu0 0.0
    %5833 = vmatmul.mubr.f32.gmra.mrb[0].mxu0 %v5278
    %v5834 = vpop.f32.mrb[0].mxu0
    %v5835 = vadd.f32 %v5674, %v5834
    %v5836 = vpop.f32.mrb[0].mxu0
    %v5837 = vadd.f32 %v5676, %v5836
    %5838 = vmatprep.mubr.f32.mxu0 0.0
    %5839 = vmatmul.mubr.f32.gmra.mrb[0].mxu0 %v5281
    %v5840 = vpop.f32.mrb[0].mxu0
    %v5841 = vadd.f32 %v5680, %v5840
    %v5842 = vpop.f32.mrb[0].mxu0
    %v5843 = vadd.f32 %v5682, %v5842
    %5844 = vmatprep.mubr.f32.mxu0 0.0
    %5845 = vmatmul.mubr.f32.gmra.mrb[0].mxu0 %v5290
    %v5846 = vpop.f32.mrb[0].mxu0
    %v5847 = vadd.f32 %v5686, %v5846
    %v5848 = vpop.f32.mrb[0].mxu0
    %v5849 = vadd.f32 %v5688, %v5848
    %5850 = vmatprep.mubr.f32.mxu0 0.0
    %5851 = vmatmul.mubr.f32.gmra.mrb[0].mxu0 %v5293
    %v5852 = vpop.f32.mrb[0].mxu0
    %v5853 = vadd.f32 %v5692, %v5852
    %v5854 = vpop.f32.mrb[0].mxu0
    %v5855 = vadd.f32 %v5694, %v5854
    %5856 = vmatprep.mubr.f32.mxu0 0.0
    %5857 = vmatmul.mubr.f32.gmra.mrb[0].mxu0 %v5302
    %v5858 = vpop.f32.mrb[0].mxu0
    %v5859 = vadd.f32 %v5698, %v5858
    %v5860 = vpop.f32.mrb[0].mxu0
    %v5861 = vadd.f32 %v5700, %v5860
    %5862 = vmatprep.mubr.f32.mxu0 0.0
    %5863 = vmatmul.mubr.f32.gmra.mrb[0].mxu0 %v5305
    %v5864 = vpop.f32.mrb[0].mxu0
    %v5865 = vadd.f32 %v5704, %v5864
    %v5866 = vpop.f32.mrb[0].mxu0
    %v5867 = vadd.f32 %v5706, %v5866
    %5868 = vmatprep.mubr.f32.mxu0 0.0
    %5869 = vmatmul.mubr.f32.gmra.mrb[0].mxu0 %v5314
    %v5870 = vpop.f32.mrb[0].mxu0
    %v5871 = vadd.f32 %v5710, %v5870
    %v5872 = vpop.f32.mrb[0].mxu0
    %v5873 = vadd.f32 %v5712, %v5872
    %5874 = vmatprep.mubr.f32.mxu0 0.0
    %5875 = vmatmul.mubr.f32.gmra.mrb[0].mxu0 %v5317
    %v5876 = vpop.f32.mrb[0].mxu0
    %v5877 = vadd.f32 %v5716, %v5876
    %v5878 = vpop.f32.mrb[0].mxu0
    %v5879 = vadd.f32 %v5718, %v5878
    %5880 = vmatprep.mubr.f32.mxu0 0.0
    %5881 = vmatmul.mubr.f32.gmra.mrb[0].mxu0 %v5326
    %v5882 = vpop.f32.mrb[0].mxu0
    %v5883 = vadd.f32 %v5722, %v5882
    %v5884 = vpop.f32.mrb[0].mxu0
    %v5885 = vadd.f32 %v5724, %v5884
    %5886 = vmatprep.mubr.f32.mxu0 0.0
    %5887 = vmatmul.mubr.f32.gmra.mrb[0].mxu0 %v5329
    %v5888 = vpop.f32.mrb[0].mxu0
    %v5889 = vadd.f32 %v5728, %v5888
    %v5890 = vpop.f32.mrb[0].mxu0
    %v5891 = vadd.f32 %v5730, %v5890
    %5892 = vmatprep.mubr.f32.mxu0 0.0
    %5893 = vmatmul.mubr.f32.gmra.mrb[0].mxu0 %v5338
    %v5894 = vpop.f32.mrb[0].mxu0
    %v5895 = vadd.f32 %v5734, %v5894
    %v5896 = vpop.f32.mrb[0].mxu0
    %v5897 = vadd.f32 %v5736, %v5896
    %5898 = vmatprep.mubr.f32.mxu0 0.0
    %5899 = vmatmul.mubr.f32.gmra.mrb[0].mxu0 %v5341
    %v5900 = vpop.f32.mrb[0].mxu0
    %v5901 = vadd.f32 %v5740, %v5900
    %v5902 = vpop.f32.mrb[0].mxu0
    %v5903 = vadd.f32 %v5742, %v5902
    %5904 = vmatprep.mubr.f32.mxu0 0.0
    %5905 = vmatmul.mubr.f32.gmra.mrb[0].mxu0 %v5350
    %v5906 = vpop.f32.mrb[0].mxu0
    %v5907 = vadd.f32 %v5746, %v5906
    %v5908 = vpop.f32.mrb[0].mxu0
    %v5909 = vadd.f32 %v5748, %v5908
    %5910 = vmatprep.mubr.f32.mxu0 0.0
    %5911 = vmatmul.mubr.f32.gmra.mrb[0].mxu0 %v5353
    %v5912 = vpop.f32.mrb[0].mxu0
    %v5913 = vadd.f32 %v5752, %v5912
    %v5914 = vpop.f32.mrb[0].mxu0
    %v5915 = vadd.f32 %v5754, %v5914
    %5916 = vmatprep.mubr.f32.mxu0 0.0
    %5917 = vmatmul.mubr.f32.gmra.mrb[0].mxu0 %v5362
    %v5918 = vpop.f32.mrb[0].mxu0
    %v5919 = vadd.f32 %v5758, %v5918
    %v5920 = vpop.f32.mrb[0].mxu0
    %v5921 = vadd.f32 %v5760, %v5920
    %5922 = vmatprep.mubr.f32.mxu0 0.0
    %5923 = vmatmul.mubr.f32.gmra.mrb[0].mxu0 %v5365
    %v5924 = vpop.f32.mrb[0].mxu0
    %v5925 = vadd.f32 %v5764, %v5924
    %v5926 = vpop.f32.mrb[0].mxu0
    %v5927 = vadd.f32 %v5766, %v5926
    %5928 = vdwg.mxu0
    %5929 = vmatprep.subr.mxu0 %v5418
    %5930 = vmatpush1.msra.mxu0 %v5417
    %5931 = vmatprep.subr.mxu0 %v5422
    %5932 = vmatpush1.msra.mxu0 %v5421
    %5933 = vmatprep.subr.mxu0 %v5426
    %5934 = vmatpush1.msra.mxu0 %v5425
    %5935 = vmatprep.subr.mxu0 %v5430
    %5936 = vmatpush1.msra.mxu0 %v5429
    %5937 = vmatprep.subr.mxu0 %v5434
    %5938 = vmatpush1.msra.mxu0 %v5433
    %5939 = vmatprep.subr.mxu0 %v5438
    %5940 = vmatpush1.msra.mxu0 %v5437
    %5941 = vmatprep.subr.mxu0 %v5442
    %5942 = vmatpush1.msra.mxu0 %v5441
    %5943 = vmatprep.subr.mxu0 %v5446
    %5944 = vmatpush1.msra.mxu0 %v5445
    %5945 = vmatprep.subr.mxu0 %v5450
    %5946 = vmatpush1.msra.mxu0 %v5449
    %5947 = vmatprep.subr.mxu0 %v5454
    %5948 = vmatpush1.msra.mxu0 %v5453
    %5949 = vmatprep.subr.mxu0 %v5458
    %5950 = vmatpush1.msra.mxu0 %v5457
    %5951 = vmatprep.subr.mxu0 %v5462
    %5952 = vmatpush1.msra.mxu0 %v5461
    %5953 = vmatprep.subr.mxu0 %v5466
    %5954 = vmatpush1.msra.mxu0 %v5465
    %5955 = vmatprep.subr.mxu0 %v5470
    %5956 = vmatpush1.msra.mxu0 %v5469
    %5957 = vmatprep.subr.mxu0 %v5474
    %5958 = vmatpush1.msra.mxu0 %v5473
    %5959 = vmatprep.subr.mxu0 %v5478
    %5960 = vmatpush1.msra.mxu0 %v5477
    %5961 = vmatprep.subr.mxu0 %v5482
    %5962 = vmatpush1.msra.mxu0 %v5481
    %5963 = vmatprep.subr.mxu0 %v5486
    %5964 = vmatpush1.msra.mxu0 %v5485
    %5965 = vmatprep.subr.mxu0 %v5490
    %5966 = vmatpush1.msra.mxu0 %v5489
    %5967 = vmatprep.subr.mxu0 %v5494
    %5968 = vmatpush1.msra.mxu0 %v5493
    %5969 = vmatprep.subr.mxu0 %v5498
    %5970 = vmatpush1.msra.mxu0 %v5497
    %5971 = vmatprep.subr.mxu0 %v5502
    %5972 = vmatpush1.msra.mxu0 %v5501
    %5973 = vmatprep.subr.mxu0 %v5506
    %5974 = vmatpush1.msra.mxu0 %v5505
    %5975 = vmatprep.subr.mxu0 %v5510
    %5976 = vmatpush1.msra.mxu0 %v5509
    %5977 = vmatprep.subr.mxu0 %v5514
    %5978 = vmatpush1.msra.mxu0 %v5513
    %5979 = vmatprep.subr.mxu0 %v5518
    %5980 = vmatpush1.msra.mxu0 %v5517
    %5981 = vmatprep.subr.mxu0 %v5522
    %5982 = vmatpush1.msra.mxu0 %v5521
    %5983 = vmatprep.subr.mxu0 %v5526
    %5984 = vmatpush1.msra.mxu0 %v5525
    %5985 = vmatprep.subr.mxu0 %v5530
    %5986 = vmatpush1.msra.mxu0 %v5529
    %5987 = vmatprep.subr.mxu0 %v5534
    %5988 = vmatpush1.msra.mxu0 %v5533
    %5989 = vmatprep.subr.mxu0 %v5538
    %5990 = vmatpush1.msra.mxu0 %v5537
    %5991 = vmatprep.subr.mxu0 %v5542
    %5992 = vmatpush1.msra.mxu0 %v5541
    %5993 = vmatprep.mubr.f32.mxu0 %v5275
    %5994 = vmatmul.mubr.f32.gmra.mrb[0].mxu0 %v5272
    %v5995 = vpop.f32.mrb[0].mxu0
    %v5996 = vadd.f32 0.0, %v5995
    %v5997 = vpop.f32.mrb[0].mxu0
    %v5998 = vadd.f32 0.0, %v5997
    %5999 = vmatprep.mubr.f32.mxu0 %v5280
    %6000 = vmatmul.mubr.f32.gmra.mrb[0].mxu0 %v5279
    %v6001 = vpop.f32.mrb[0].mxu0
    %v6002 = vadd.f32 0.0, %v6001
    %v6003 = vpop.f32.mrb[0].mxu0
    %v6004 = vadd.f32 0.0, %v6003
    %6005 = vmatprep.mubr.f32.mxu0 %v5287
    %6006 = vmatmul.mubr.f32.gmra.mrb[0].mxu0 %v5284
    %v6007 = vpop.f32.mrb[0].mxu0
    %v6008 = vadd.f32 0.0, %v6007
    %v6009 = vpop.f32.mrb[0].mxu0
    %v6010 = vadd.f32 0.0, %v6009
    %6011 = vmatprep.mubr.f32.mxu0 %v5292
    %6012 = vmatmul.mubr.f32.gmra.mrb[0].mxu0 %v5291
    %v6013 = vpop.f32.mrb[0].mxu0
    %v6014 = vadd.f32 0.0, %v6013
    %v6015 = vpop.f32.mrb[0].mxu0
    %v6016 = vadd.f32 0.0, %v6015
    %6017 = vmatprep.mubr.f32.mxu0 %v5299
    %6018 = vmatmul.mubr.f32.gmra.mrb[0].mxu0 %v5296
    %v6019 = vpop.f32.mrb[0].mxu0
    %v6020 = vadd.f32 0.0, %v6019
    %v6021 = vpop.f32.mrb[0].mxu0
    %v6022 = vadd.f32 0.0, %v6021
    %6023 = vmatprep.mubr.f32.mxu0 %v5304
    %6024 = vmatmul.mubr.f32.gmra.mrb[0].mxu0 %v5303
    %v6025 = vpop.f32.mrb[0].mxu0
    %v6026 = vadd.f32 0.0, %v6025
    %v6027 = vpop.f32.mrb[0].mxu0
    %v6028 = vadd.f32 0.0, %v6027
    %6029 = vmatprep.mubr.f32.mxu0 %v5311
    %6030 = vmatmul.mubr.f32.gmra.mrb[0].mxu0 %v5308
    %v6031 = vpop.f32.mrb[0].mxu0
    %v6032 = vadd.f32 0.0, %v6031
    %v6033 = vpop.f32.mrb[0].mxu0
    %v6034 = vadd.f32 0.0, %v6033
    %6035 = vmatprep.mubr.f32.mxu0 %v5316
    %6036 = vmatmul.mubr.f32.gmra.mrb[0].mxu0 %v5315
    %v6037 = vpop.f32.mrb[0].mxu0
    %v6038 = vadd.f32 0.0, %v6037
    %v6039 = vpop.f32.mrb[0].mxu0
    %v6040 = vadd.f32 0.0, %v6039
    %6041 = vmatprep.mubr.f32.mxu0 %v5323
    %6042 = vmatmul.mubr.f32.gmra.mrb[0].mxu0 %v5320
    %v6043 = vpop.f32.mrb[0].mxu0
    %v6044 = vadd.f32 0.0, %v6043
    %v6045 = vpop.f32.mrb[0].mxu0
    %v6046 = vadd.f32 0.0, %v6045
    %6047 = vmatprep.mubr.f32.mxu0 %v5328
    %6048 = vmatmul.mubr.f32.gmra.mrb[0].mxu0 %v5327
    %v6049 = vpop.f32.mrb[0].mxu0
    %v6050 = vadd.f32 0.0, %v6049
    %v6051 = vpop.f32.mrb[0].mxu0
    %v6052 = vadd.f32 0.0, %v6051
    %6053 = vmatprep.mubr.f32.mxu0 %v5335
    %6054 = vmatmul.mubr.f32.gmra.mrb[0].mxu0 %v5332
    %v6055 = vpop.f32.mrb[0].mxu0
    %v6056 = vadd.f32 0.0, %v6055
    %v6057 = vpop.f32.mrb[0].mxu0
    %v6058 = vadd.f32 0.0, %v6057
    %6059 = vmatprep.mubr.f32.mxu0 %v5340
    %6060 = vmatmul.mubr.f32.gmra.mrb[0].mxu0 %v5339
    %v6061 = vpop.f32.mrb[0].mxu0
    %v6062 = vadd.f32 0.0, %v6061
    %v6063 = vpop.f32.mrb[0].mxu0
    %v6064 = vadd.f32 0.0, %v6063
    %6065 = vmatprep.mubr.f32.mxu0 %v5347
    %6066 = vmatmul.mubr.f32.gmra.mrb[0].mxu0 %v5344
    %v6067 = vpop.f32.mrb[0].mxu0
    %v6068 = vadd.f32 0.0, %v6067
    %v6069 = vpop.f32.mrb[0].mxu0
    %v6070 = vadd.f32 0.0, %v6069
    %6071 = vmatprep.mubr.f32.mxu0 %v5352
    %6072 = vmatmul.mubr.f32.gmra.mrb[0].mxu0 %v5351
    %v6073 = vpop.f32.mrb[0].mxu0
    %v6074 = vadd.f32 0.0, %v6073
    %v6075 = vpop.f32.mrb[0].mxu0
    %v6076 = vadd.f32 0.0, %v6075
    %6077 = vmatprep.mubr.f32.mxu0 %v5359
    %6078 = vmatmul.mubr.f32.gmra.mrb[0].mxu0 %v5356
    %v6079 = vpop.f32.mrb[0].mxu0
    %v6080 = vadd.f32 0.0, %v6079
    %v6081 = vpop.f32.mrb[0].mxu0
    %v6082 = vadd.f32 0.0, %v6081
    %6083 = vmatprep.mubr.f32.mxu0 %v5364
    %6084 = vmatmul.mubr.f32.gmra.mrb[0].mxu0 %v5363
    %v6085 = vpop.f32.mrb[0].mxu0
    %v6086 = vadd.f32 0.0, %v6085
    %v6087 = vpop.f32.mrb[0].mxu0
    %v6088 = vadd.f32 0.0, %v6087
    %6089 = vdwg.mxu0
    %6090 = vmatprep.subr.mxu0 %v5546
    %6091 = vmatpush1.msra.mxu0 %v5545
    %6092 = vmatprep.subr.mxu0 %v5550
    %6093 = vmatpush1.msra.mxu0 %v5549
    %6094 = vmatprep.subr.mxu0 %v5554
    %6095 = vmatpush1.msra.mxu0 %v5553
    %6096 = vmatprep.subr.mxu0 %v5558
    %6097 = vmatpush1.msra.mxu0 %v5557
    %6098 = vmatprep.subr.mxu0 %v5562
    %6099 = vmatpush1.msra.mxu0 %v5561
    %6100 = vmatprep.subr.mxu0 %v5566
    %6101 = vmatpush1.msra.mxu0 %v5565
    %6102 = vmatprep.subr.mxu0 %v5570
    %6103 = vmatpush1.msra.mxu0 %v5569
    %6104 = vmatprep.subr.mxu0 %v5574
    %6105 = vmatpush1.msra.mxu0 %v5573
    %6106 = vmatprep.subr.mxu0 %v5578
    %6107 = vmatpush1.msra.mxu0 %v5577
    %6108 = vmatprep.subr.mxu0 %v5582
    %6109 = vmatpush1.msra.mxu0 %v5581
    %6110 = vmatprep.subr.mxu0 %v5586
    %6111 = vmatpush1.msra.mxu0 %v5585
    %6112 = vmatprep.subr.mxu0 %v5590
    %6113 = vmatpush1.msra.mxu0 %v5589
    %6114 = vmatprep.subr.mxu0 %v5594
    %6115 = vmatpush1.msra.mxu0 %v5593
    %6116 = vmatprep.subr.mxu0 %v5598
    %6117 = vmatpush1.msra.mxu0 %v5597
    %6118 = vmatprep.subr.mxu0 %v5602
    %6119 = vmatpush1.msra.mxu0 %v5601
    %6120 = vmatprep.subr.mxu0 %v5606
    %6121 = vmatpush1.msra.mxu0 %v5605
    %6122 = vmatprep.subr.mxu0 0.0
    %6123 = vmatpush1.msra.mxu0 0.0
    %6124 = vmatprep.subr.mxu0 0.0
    %6125 = vmatpush1.msra.mxu0 0.0
    %6126 = vmatprep.subr.mxu0 0.0
    %6127 = vmatpush1.msra.mxu0 0.0
    %6128 = vmatprep.subr.mxu0 0.0
    %6129 = vmatpush1.msra.mxu0 0.0
    %6130 = vmatprep.subr.mxu0 0.0
    %6131 = vmatpush1.msra.mxu0 0.0
    %6132 = vmatprep.subr.mxu0 0.0
    %6133 = vmatpush1.msra.mxu0 0.0
    %6134 = vmatprep.subr.mxu0 0.0
    %6135 = vmatpush1.msra.mxu0 0.0
    %6136 = vmatprep.subr.mxu0 0.0
    %6137 = vmatpush1.msra.mxu0 0.0
    %6138 = vmatprep.subr.mxu0 0.0
    %6139 = vmatpush1.msra.mxu0 0.0
    %6140 = vmatprep.subr.mxu0 0.0
    %6141 = vmatpush1.msra.mxu0 0.0
    %6142 = vmatprep.subr.mxu0 0.0
    %6143 = vmatpush1.msra.mxu0 0.0
    %6144 = vmatprep.subr.mxu0 0.0
    %6145 = vmatpush1.msra.mxu0 0.0
    %6146 = vmatprep.subr.mxu0 0.0
    %6147 = vmatpush1.msra.mxu0 0.0
    %6148 = vmatprep.subr.mxu0 0.0
    %6149 = vmatpush1.msra.mxu0 0.0
    %6150 = vmatprep.subr.mxu0 0.0
    %6151 = vmatpush1.msra.mxu0 0.0
    %6152 = vmatprep.subr.mxu0 0.0
    %6153 = vmatpush1.msra.mxu0 0.0
    %6154 = vmatprep.mubr.f32.mxu0 0.0
    %6155 = vmatmul.mubr.f32.gmra.mrb[0].mxu0 %v5278
    %v6156 = vpop.f32.mrb[0].mxu0
    %v6157 = vadd.f32 %v5996, %v6156
    %v6158 = vpop.f32.mrb[0].mxu0
    %v6159 = vadd.f32 %v5998, %v6158
    %6160 = vmatprep.mubr.f32.mxu0 0.0
    %6161 = vmatmul.mubr.f32.gmra.mrb[0].mxu0 %v5281
    %v6162 = vpop.f32.mrb[0].mxu0
    %v6163 = vadd.f32 %v6002, %v6162
    %v6164 = vpop.f32.mrb[0].mxu0
    %v6165 = vadd.f32 %v6004, %v6164
    %6166 = vmatprep.mubr.f32.mxu0 0.0
    %6167 = vmatmul.mubr.f32.gmra.mrb[0].mxu0 %v5290
    %v6168 = vpop.f32.mrb[0].mxu0
    %v6169 = vadd.f32 %v6008, %v6168
    %v6170 = vpop.f32.mrb[0].mxu0
    %v6171 = vadd.f32 %v6010, %v6170
    %6172 = vmatprep.mubr.f32.mxu0 0.0
    %6173 = vmatmul.mubr.f32.gmra.mrb[0].mxu0 %v5293
    %v6174 = vpop.f32.mrb[0].mxu0
    %v6175 = vadd.f32 %v6014, %v6174
    %v6176 = vpop.f32.mrb[0].mxu0
    %v6177 = vadd.f32 %v6016, %v6176
    %6178 = vmatprep.mubr.f32.mxu0 0.0
    %6179 = vmatmul.mubr.f32.gmra.mrb[0].mxu0 %v5302
    %v6180 = vpop.f32.mrb[0].mxu0
    %v6181 = vadd.f32 %v6020, %v6180
    %v6182 = vpop.f32.mrb[0].mxu0
    %v6183 = vadd.f32 %v6022, %v6182
    %6184 = vmatprep.mubr.f32.mxu0 0.0
    %6185 = vmatmul.mubr.f32.gmra.mrb[0].mxu0 %v5305
    %v6186 = vpop.f32.mrb[0].mxu0
    %v6187 = vadd.f32 %v6026, %v6186
    %v6188 = vpop.f32.mrb[0].mxu0
    %v6189 = vadd.f32 %v6028, %v6188
    %6190 = vmatprep.mubr.f32.mxu0 0.0
    %6191 = vmatmul.mubr.f32.gmra.mrb[0].mxu0 %v5314
    %v6192 = vpop.f32.mrb[0].mxu0
    %v6193 = vadd.f32 %v6032, %v6192
    %v6194 = vpop.f32.mrb[0].mxu0
    %v6195 = vadd.f32 %v6034, %v6194
    %6196 = vmatprep.mubr.f32.mxu0 0.0
    %6197 = vmatmul.mubr.f32.gmra.mrb[0].mxu0 %v5317
    %v6198 = vpop.f32.mrb[0].mxu0
    %v6199 = vadd.f32 %v6038, %v6198
    %v6200 = vpop.f32.mrb[0].mxu0
    %v6201 = vadd.f32 %v6040, %v6200
    %6202 = vmatprep.mubr.f32.mxu0 0.0
    %6203 = vmatmul.mubr.f32.gmra.mrb[0].mxu0 %v5326
    %v6204 = vpop.f32.mrb[0].mxu0
    %v6205 = vadd.f32 %v6044, %v6204
    %v6206 = vpop.f32.mrb[0].mxu0
    %v6207 = vadd.f32 %v6046, %v6206
    %6208 = vmatprep.mubr.f32.mxu0 0.0
    %6209 = vmatmul.mubr.f32.gmra.mrb[0].mxu0 %v5329
    %v6210 = vpop.f32.mrb[0].mxu0
    %v6211 = vadd.f32 %v6050, %v6210
    %v6212 = vpop.f32.mrb[0].mxu0
    %v6213 = vadd.f32 %v6052, %v6212
    %6214 = vmatprep.mubr.f32.mxu0 0.0
    %6215 = vmatmul.mubr.f32.gmra.mrb[0].mxu0 %v5338
    %v6216 = vpop.f32.mrb[0].mxu0
    %v6217 = vadd.f32 %v6056, %v6216
    %v6218 = vpop.f32.mrb[0].mxu0
    %v6219 = vadd.f32 %v6058, %v6218
    %6220 = vmatprep.mubr.f32.mxu0 0.0
    %6221 = vmatmul.mubr.f32.gmra.mrb[0].mxu0 %v5341
    %v6222 = vpop.f32.mrb[0].mxu0
    %v6223 = vadd.f32 %v6062, %v6222
    %v6224 = vpop.f32.mrb[0].mxu0
    %v6225 = vadd.f32 %v6064, %v6224
    %6226 = vmatprep.mubr.f32.mxu0 0.0
    %6227 = vmatmul.mubr.f32.gmra.mrb[0].mxu0 %v5350
    %v6228 = vpop.f32.mrb[0].mxu0
    %v6229 = vadd.f32 %v6068, %v6228
    %v6230 = vpop.f32.mrb[0].mxu0
    %v6231 = vadd.f32 %v6070, %v6230
    %6232 = vmatprep.mubr.f32.mxu0 0.0
    %6233 = vmatmul.mubr.f32.gmra.mrb[0].mxu0 %v5353
    %v6234 = vpop.f32.mrb[0].mxu0
    %v6235 = vadd.f32 %v6074, %v6234
    %v6236 = vpop.f32.mrb[0].mxu0
    %v6237 = vadd.f32 %v6076, %v6236
    %6238 = vmatprep.mubr.f32.mxu0 0.0
    %6239 = vmatmul.mubr.f32.gmra.mrb[0].mxu0 %v5362
    %v6240 = vpop.f32.mrb[0].mxu0
    %v6241 = vadd.f32 %v6080, %v6240
    %v6242 = vpop.f32.mrb[0].mxu0
    %v6243 = vadd.f32 %v6082, %v6242
    %6244 = vmatprep.mubr.f32.mxu0 0.0
    %6245 = vmatmul.mubr.f32.gmra.mrb[0].mxu0 %v5365
    %v6246 = vpop.f32.mrb[0].mxu0
    %v6247 = vadd.f32 %v6086, %v6246
    %v6248 = vpop.f32.mrb[0].mxu0
    %v6249 = vadd.f32 %v6088, %v6248
    %6250 = vdwg.mxu0
    %v6251 = vadd.f32 %v5205, %v5835
    %v6252 = vadd.f32 %v5206, %v5837
    %v6253 = vadd.f32 %v5207, %v6157
    %v6254 = vadd.f32 %v5208, %v6159
    %v6255 = vadd.f32 %v5209, %v5841
    %v6256 = vadd.f32 %v5210, %v5843
    %v6257 = vadd.f32 %v5211, %v6163
    %v6258 = vadd.f32 %v5212, %v6165
    %v6259 = vadd.f32 %v5213, %v5847
    %v6260 = vadd.f32 %v5214, %v5849
    %v6261 = vadd.f32 %v5215, %v6169
    %v6262 = vadd.f32 %v5216, %v6171
    %v6263 = vadd.f32 %v5217, %v5853
    %v6264 = vadd.f32 %v5218, %v5855
    %v6265 = vadd.f32 %v5219, %v6175
    %v6266 = vadd.f32 %v5220, %v6177
    %v6267 = vadd.f32 %v5221, %v5859
    %v6268 = vadd.f32 %v5222, %v5861
    %v6269 = vadd.f32 %v5223, %v6181
    %v6270 = vadd.f32 %v5224, %v6183
    %v6271 = vadd.f32 %v5225, %v5865
    %v6272 = vadd.f32 %v5226, %v5867
    %v6273 = vadd.f32 %v5227, %v6187
    %v6274 = vadd.f32 %v5228, %v6189
    %v6275 = vadd.f32 %v5229, %v5871
    %v6276 = vadd.f32 %v5230, %v5873
    %v6277 = vadd.f32 %v5231, %v6193
    %v6278 = vadd.f32 %v5232, %v6195
    %v6279 = vadd.f32 %v5233, %v5877
    %v6280 = vadd.f32 %v5234, %v5879
    %v6281 = vadd.f32 %v5235, %v6199
    %v6282 = vadd.f32 %v5236, %v6201
    %v6283 = vadd.f32 %v5237, %v5883
    %v6284 = vadd.f32 %v5238, %v5885
    %v6285 = vadd.f32 %v5239, %v6205
    %v6286 = vadd.f32 %v5240, %v6207
    %v6287 = vadd.f32 %v5241, %v5889
    %v6288 = vadd.f32 %v5242, %v5891
    %v6289 = vadd.f32 %v5243, %v6211
    %v6290 = vadd.f32 %v5244, %v6213
    %v6291 = vadd.f32 %v5245, %v5895
    %v6292 = vadd.f32 %v5246, %v5897
    %v6293 = vadd.f32 %v5247, %v6217
    %v6294 = vadd.f32 %v5248, %v6219
    %v6295 = vadd.f32 %v5249, %v5901
    %v6296 = vadd.f32 %v5250, %v5903
    %v6297 = vadd.f32 %v5251, %v6223
    %v6298 = vadd.f32 %v5252, %v6225
    %v6299 = vadd.f32 %v5253, %v5907
    %v6300 = vadd.f32 %v5254, %v5909
    %v6301 = vadd.f32 %v5255, %v6229
    %v6302 = vadd.f32 %v5256, %v6231
    %v6303 = vadd.f32 %v5257, %v5913
    %v6304 = vadd.f32 %v5258, %v5915
    %v6305 = vadd.f32 %v5259, %v6235
    %v6306 = vadd.f32 %v5260, %v6237
    %v6307 = vadd.f32 %v5261, %v5919
    %v6308 = vadd.f32 %v5262, %v5921
    %v6309 = vadd.f32 %v5263, %v6241
    %v6310 = vadd.f32 %v5264, %v6243
    %v6311 = vadd.f32 %v5265, %v5925
    %v6312 = vadd.f32 %v5266, %v5927
    %v6313 = vadd.f32 %v5267, %v6247
    %v6314 = vadd.f32 %v5268, %v6249
    %vm6315 = vcmask 1043456
    %v6316 = vrot.slane %v2309, 4
    %v6317 = vrot.slane %v2312, 4
    %v6318 = vsel %vm6315, %v6316, %v6317
    %v6319 = vrot.slane %v2310, 4
    %v6320 = vrot.slane %v2313, 4
    %v6321 = vsel %vm6315, %v6319, %v6320
    %v6322 = vrot.slane %v2311, 4
    %v6323 = vrot.slane %v2314, 4
    %v6324 = vsel %vm6315, %v6322, %v6323
    %v6325 = vsel %vm6315, %v6317, %v6316
    %v6326 = vsel %vm6315, %v6320, %v6319
    %v6327 = vsel %vm6315, %v6323, %v6322
    %v6328 = vrot.slane %v2315, 4
    %v6329 = vrot.slane %v2318, 4
    %v6330 = vsel %vm6315, %v6328, %v6329
    %v6331 = vrot.slane %v2316, 4
    %v6332 = vrot.slane %v2319, 4
    %v6333 = vsel %vm6315, %v6331, %v6332
    %v6334 = vrot.slane %v2317, 4
    %v6335 = vrot.slane %v2320, 4
    %v6336 = vsel %vm6315, %v6334, %v6335
    %v6337 = vsel %vm6315, %v6329, %v6328
    %v6338 = vsel %vm6315, %v6332, %v6331
    %v6339 = vsel %vm6315, %v6335, %v6334
    %v6340 = vrot.slane %v2321, 4
    %v6341 = vrot.slane %v2324, 4
    %v6342 = vsel %vm6315, %v6340, %v6341
    %v6343 = vrot.slane %v2322, 4
    %v6344 = vrot.slane %v2325, 4
    %v6345 = vsel %vm6315, %v6343, %v6344
    %v6346 = vrot.slane %v2323, 4
    %v6347 = vrot.slane %v2326, 4
    %v6348 = vsel %vm6315, %v6346, %v6347
    %v6349 = vsel %vm6315, %v6341, %v6340
    %v6350 = vsel %vm6315, %v6344, %v6343
    %v6351 = vsel %vm6315, %v6347, %v6346
    %v6352 = vrot.slane %v2327, 4
    %v6353 = vrot.slane %v2330, 4
    %v6354 = vsel %vm6315, %v6352, %v6353
    %v6355 = vrot.slane %v2328, 4
    %v6356 = vrot.slane %v2331, 4
    %v6357 = vsel %vm6315, %v6355, %v6356
    %v6358 = vrot.slane %v2329, 4
    %v6359 = vrot.slane %v2332, 4
    %v6360 = vsel %vm6315, %v6358, %v6359
    %v6361 = vsel %vm6315, %v6353, %v6352
    %v6362 = vsel %vm6315, %v6356, %v6355
    %v6363 = vsel %vm6315, %v6359, %v6358
    %v6364 = vrot.slane %v2333, 4
    %v6365 = vrot.slane %v2336, 4
    %v6366 = vsel %vm6315, %v6364, %v6365
    %v6367 = vrot.slane %v2334, 4
    %v6368 = vrot.slane %v2337, 4
    %v6369 = vsel %vm6315, %v6367, %v6368
    %v6370 = vrot.slane %v2335, 4
    %v6371 = vrot.slane %v2338, 4
    %v6372 = vsel %vm6315, %v6370, %v6371
    %v6373 = vsel %vm6315, %v6365, %v6364
    %v6374 = vsel %vm6315, %v6368, %v6367
    %v6375 = vsel %vm6315, %v6371, %v6370
    %v6376 = vrot.slane %v2339, 4
    %v6377 = vrot.slane %v2342, 4
    %v6378 = vsel %vm6315, %v6376, %v6377
    %v6379 = vrot.slane %v2340, 4
    %v6380 = vrot.slane %v2343, 4
    %v6381 = vsel %vm6315, %v6379, %v6380
    %v6382 = vrot.slane %v2341, 4
    %v6383 = vrot.slane %v2344, 4
    %v6384 = vsel %vm6315, %v6382, %v6383
    %v6385 = vsel %vm6315, %v6377, %v6376
    %v6386 = vsel %vm6315, %v6380, %v6379
    %v6387 = vsel %vm6315, %v6383, %v6382
    %v6388 = vrot.slane %v2345, 4
    %v6389 = vrot.slane %v2348, 4
    %v6390 = vsel %vm6315, %v6388, %v6389
    %v6391 = vrot.slane %v2346, 4
    %v6392 = vrot.slane %v2349, 4
    %v6393 = vsel %vm6315, %v6391, %v6392
    %v6394 = vrot.slane %v2347, 4
    %v6395 = vrot.slane %v2350, 4
    %v6396 = vsel %vm6315, %v6394, %v6395
    %v6397 = vsel %vm6315, %v6389, %v6388
    %v6398 = vsel %vm6315, %v6392, %v6391
    %v6399 = vsel %vm6315, %v6395, %v6394
    %v6400 = vrot.slane %v2351, 4
    %v6401 = vrot.slane %v2354, 4
    %v6402 = vsel %vm6315, %v6400, %v6401
    %v6403 = vrot.slane %v2352, 4
    %v6404 = vrot.slane %v2355, 4
    %v6405 = vsel %vm6315, %v6403, %v6404
    %v6406 = vrot.slane %v2353, 4
    %v6407 = vrot.slane %v2356, 4
    %v6408 = vsel %vm6315, %v6406, %v6407
    %v6409 = vsel %vm6315, %v6401, %v6400
    %v6410 = vsel %vm6315, %v6404, %v6403
    %v6411 = vsel %vm6315, %v6407, %v6406
    %s6460 = scalar_lea.vmem %s3, 6144
    %v6461 = vld [vmem:[%s6460] sm:$0xff]
    %v6462 = vld [vmem:[%s6460 + $0x8] sm:$0xff]
    %v6463 = vld [vmem:[%s6460 + $0x10] sm:$0xff]
    %v6464 = vld [vmem:[%s6460 + $0x18] sm:$0xff]
    %v6465 = vld [vmem:[%s6460 + $0x20] sm:$0xff]
    %v6466 = vld [vmem:[%s6460 + $0x28] sm:$0xff]
    %v6467 = vld [vmem:[%s6460 + $0x30] sm:$0xff]
    %v6468 = vld [vmem:[%s6460 + $0x38] sm:$0xff]
    %v6469 = vld [vmem:[%s6460 + $0x40] sm:$0xff]
    %v6470 = vld [vmem:[%s6460 + $0x48] sm:$0xff]
    %v6471 = vld [vmem:[%s6460 + $0x50] sm:$0xff]
    %v6472 = vld [vmem:[%s6460 + $0x58] sm:$0xff]
    %v6473 = vld [vmem:[%s6460 + $0x60] sm:$0xff]
    %v6474 = vld [vmem:[%s6460 + $0x68] sm:$0xff]
    %v6475 = vld [vmem:[%s6460 + $0x70] sm:$0xff]
    %v6476 = vld [vmem:[%s6460 + $0x78] sm:$0xff]
    %v6477 = vld [vmem:[%s6460 + $0x80] sm:$0xff]
    %v6478 = vld [vmem:[%s6460 + $0x88] sm:$0xff]
    %v6479 = vld [vmem:[%s6460 + $0x90] sm:$0xff]
    %v6480 = vld [vmem:[%s6460 + $0x98] sm:$0xff]
    %v6481 = vld [vmem:[%s6460 + $0xa0] sm:$0xff]
    %v6482 = vld [vmem:[%s6460 + $0xa8] sm:$0xff]
    %v6483 = vld [vmem:[%s6460 + $0xb0] sm:$0xff]
    %v6484 = vld [vmem:[%s6460 + $0xb8] sm:$0xff]
    %v6485 = vld [vmem:[%s6460 + $0xc0] sm:$0xff]
    %v6486 = vld [vmem:[%s6460 + $0xc8] sm:$0xff]
    %v6487 = vld [vmem:[%s6460 + $0xd0] sm:$0xff]
    %v6488 = vld [vmem:[%s6460 + $0xd8] sm:$0xff]
    %v6489 = vld [vmem:[%s6460 + $0xe0] sm:$0xff]
    %v6490 = vld [vmem:[%s6460 + $0xe8] sm:$0xff]
    %v6491 = vld [vmem:[%s6460 + $0xf0] sm:$0xff]
    %v6492 = vld [vmem:[%s6460 + $0xf8] sm:$0xff]
    %v6493 = vld [vmem:[%s6460 + $0x100] sm:$0xff]
    %v6494 = vld [vmem:[%s6460 + $0x108] sm:$0xff]
    %v6495 = vld [vmem:[%s6460 + $0x110] sm:$0xff]
    %v6496 = vld [vmem:[%s6460 + $0x118] sm:$0xff]
    %v6497 = vld [vmem:[%s6460 + $0x120] sm:$0xff]
    %v6498 = vld [vmem:[%s6460 + $0x128] sm:$0xff]
    %v6499 = vld [vmem:[%s6460 + $0x130] sm:$0xff]
    %v6500 = vld [vmem:[%s6460 + $0x138] sm:$0xff]
    %v6501 = vld [vmem:[%s6460 + $0x140] sm:$0xff]
    %v6502 = vld [vmem:[%s6460 + $0x148] sm:$0xff]
    %v6503 = vld [vmem:[%s6460 + $0x150] sm:$0xff]
    %v6504 = vld [vmem:[%s6460 + $0x158] sm:$0xff]
    %v6505 = vld [vmem:[%s6460 + $0x160] sm:$0xff]
    %v6506 = vld [vmem:[%s6460 + $0x168] sm:$0xff]
    %v6507 = vld [vmem:[%s6460 + $0x170] sm:$0xff]
    %v6508 = vld [vmem:[%s6460 + $0x178] sm:$0xff]
    %v6509 = vld [vmem:[%s6460 + $0x180] sm:$0xff]
    %v6510 = vld [vmem:[%s6460 + $0x188] sm:$0xff]
    %v6511 = vld [vmem:[%s6460 + $0x190] sm:$0xff]
    %v6512 = vld [vmem:[%s6460 + $0x198] sm:$0xff]
    %v6513 = vld [vmem:[%s6460 + $0x1a0] sm:$0xff]
    %v6514 = vld [vmem:[%s6460 + $0x1a8] sm:$0xff]
    %v6515 = vld [vmem:[%s6460 + $0x1b0] sm:$0xff]
    %v6516 = vld [vmem:[%s6460 + $0x1b8] sm:$0xff]
    %v6517 = vld [vmem:[%s6460 + $0x1c0] sm:$0xff]
    %v6518 = vld [vmem:[%s6460 + $0x1c8] sm:$0xff]
    %v6519 = vld [vmem:[%s6460 + $0x1d0] sm:$0xff]
    %v6520 = vld [vmem:[%s6460 + $0x1d8] sm:$0xff]
    %v6521 = vld [vmem:[%s6460 + $0x1e0] sm:$0xff]
    %v6522 = vld [vmem:[%s6460 + $0x1e8] sm:$0xff]
    %v6523 = vld [vmem:[%s6460 + $0x1f0] sm:$0xff]
    %v6524 = vld [vmem:[%s6460 + $0x1f8] sm:$0xff]
    %v6525 = vld [vmem:[%s6460 + $0x200] sm:$0xff]
    %v6526 = vld [vmem:[%s6460 + $0x208] sm:$0xff]
    %v6527 = vld [vmem:[%s6460 + $0x210] sm:$0xff]
    %v6528 = vld [vmem:[%s6460 + $0x218] sm:$0xff]
    %v6529 = vld [vmem:[%s6460 + $0x220] sm:$0xff]
    %v6530 = vld [vmem:[%s6460 + $0x228] sm:$0xff]
    %v6531 = vld [vmem:[%s6460 + $0x230] sm:$0xff]
    %v6532 = vld [vmem:[%s6460 + $0x238] sm:$0xff]
    %v6533 = vld [vmem:[%s6460 + $0x240] sm:$0xff]
    %v6534 = vld [vmem:[%s6460 + $0x248] sm:$0xff]
    %v6535 = vld [vmem:[%s6460 + $0x250] sm:$0xff]
    %v6536 = vld [vmem:[%s6460 + $0x258] sm:$0xff]
    %v6537 = vld [vmem:[%s6460 + $0x260] sm:$0xff]
    %v6538 = vld [vmem:[%s6460 + $0x268] sm:$0xff]
    %v6539 = vld [vmem:[%s6460 + $0x270] sm:$0xff]
    %v6540 = vld [vmem:[%s6460 + $0x278] sm:$0xff]
    %v6541 = vld [vmem:[%s6460 + $0x280] sm:$0xff]
    %v6542 = vld [vmem:[%s6460 + $0x288] sm:$0xff]
    %v6543 = vld [vmem:[%s6460 + $0x290] sm:$0xff]
    %v6544 = vld [vmem:[%s6460 + $0x298] sm:$0xff]
    %v6545 = vld [vmem:[%s6460 + $0x2a0] sm:$0xff]
    %v6546 = vld [vmem:[%s6460 + $0x2a8] sm:$0xff]
    %v6547 = vld [vmem:[%s6460 + $0x2b0] sm:$0xff]
    %v6548 = vld [vmem:[%s6460 + $0x2b8] sm:$0xff]
    %v6549 = vld [vmem:[%s6460 + $0x2c0] sm:$0xff]
    %v6550 = vld [vmem:[%s6460 + $0x2c8] sm:$0xff]
    %v6551 = vld [vmem:[%s6460 + $0x2d0] sm:$0xff]
    %v6552 = vld [vmem:[%s6460 + $0x2d8] sm:$0xff]
    %v6553 = vld [vmem:[%s6460 + $0x2e0] sm:$0xff]
    %v6554 = vld [vmem:[%s6460 + $0x2e8] sm:$0xff]
    %v6555 = vld [vmem:[%s6460 + $0x2f0] sm:$0xff]
    %v6556 = vld [vmem:[%s6460 + $0x2f8] sm:$0xff]
    %v6557 = vld [vmem:[%s6460 + $0x300] sm:$0xff]
    %v6558 = vld [vmem:[%s6460 + $0x308] sm:$0xff]
    %v6559 = vld [vmem:[%s6460 + $0x310] sm:$0xff]
    %v6560 = vld [vmem:[%s6460 + $0x318] sm:$0xff]
    %v6561 = vld [vmem:[%s6460 + $0x320] sm:$0xff]
    %v6562 = vld [vmem:[%s6460 + $0x328] sm:$0xff]
    %v6563 = vld [vmem:[%s6460 + $0x330] sm:$0xff]
    %v6564 = vld [vmem:[%s6460 + $0x338] sm:$0xff]
    %v6565 = vld [vmem:[%s6460 + $0x340] sm:$0xff]
    %v6566 = vld [vmem:[%s6460 + $0x348] sm:$0xff]
    %v6567 = vld [vmem:[%s6460 + $0x350] sm:$0xff]
    %v6568 = vld [vmem:[%s6460 + $0x358] sm:$0xff]
    %v6569 = vld [vmem:[%s6460 + $0x360] sm:$0xff]
    %v6570 = vld [vmem:[%s6460 + $0x368] sm:$0xff]
    %v6571 = vld [vmem:[%s6460 + $0x370] sm:$0xff]
    %v6572 = vld [vmem:[%s6460 + $0x378] sm:$0xff]
    %v6573 = vld [vmem:[%s6460 + $0x380] sm:$0xff]
    %v6574 = vld [vmem:[%s6460 + $0x388] sm:$0xff]
    %v6575 = vld [vmem:[%s6460 + $0x390] sm:$0xff]
    %v6576 = vld [vmem:[%s6460 + $0x398] sm:$0xff]
    %v6577 = vld [vmem:[%s6460 + $0x3a0] sm:$0xff]
    %v6578 = vld [vmem:[%s6460 + $0x3a8] sm:$0xff]
    %v6579 = vld [vmem:[%s6460 + $0x3b0] sm:$0xff]
    %v6580 = vld [vmem:[%s6460 + $0x3b8] sm:$0xff]
    %v6581 = vld [vmem:[%s6460 + $0x3c0] sm:$0xff]
    %v6582 = vld [vmem:[%s6460 + $0x3c8] sm:$0xff]
    %v6583 = vld [vmem:[%s6460 + $0x3d0] sm:$0xff]
    %v6584 = vld [vmem:[%s6460 + $0x3d8] sm:$0xff]
    %v6585 = vld [vmem:[%s6460 + $0x3e0] sm:$0xff]
    %v6586 = vld [vmem:[%s6460 + $0x3e8] sm:$0xff]
    %v6587 = vld [vmem:[%s6460 + $0x3f0] sm:$0xff]
    %v6588 = vld [vmem:[%s6460 + $0x3f8] sm:$0xff]
    %v6589 = vld [vmem:[%s6460 + $0x400] sm:$0xff]
    %v6590 = vld [vmem:[%s6460 + $0x408] sm:$0xff]
    %v6591 = vld [vmem:[%s6460 + $0x410] sm:$0xff]
    %v6592 = vld [vmem:[%s6460 + $0x418] sm:$0xff]
    %v6593 = vld [vmem:[%s6460 + $0x420] sm:$0xff]
    %v6594 = vld [vmem:[%s6460 + $0x428] sm:$0xff]
    %v6595 = vld [vmem:[%s6460 + $0x430] sm:$0xff]
    %v6596 = vld [vmem:[%s6460 + $0x438] sm:$0xff]
    %v6597 = vld [vmem:[%s6460 + $0x440] sm:$0xff]
    %v6598 = vld [vmem:[%s6460 + $0x448] sm:$0xff]
    %v6599 = vld [vmem:[%s6460 + $0x450] sm:$0xff]
    %v6600 = vld [vmem:[%s6460 + $0x458] sm:$0xff]
    %v6601 = vld [vmem:[%s6460 + $0x460] sm:$0xff]
    %v6602 = vld [vmem:[%s6460 + $0x468] sm:$0xff]
    %v6603 = vld [vmem:[%s6460 + $0x470] sm:$0xff]
    %v6604 = vld [vmem:[%s6460 + $0x478] sm:$0xff]
    %v6605 = vld [vmem:[%s6460 + $0x480] sm:$0xff]
    %v6606 = vld [vmem:[%s6460 + $0x488] sm:$0xff]
    %v6607 = vld [vmem:[%s6460 + $0x490] sm:$0xff]
    %v6608 = vld [vmem:[%s6460 + $0x498] sm:$0xff]
    %v6609 = vld [vmem:[%s6460 + $0x4a0] sm:$0xff]
    %v6610 = vld [vmem:[%s6460 + $0x4a8] sm:$0xff]
    %v6611 = vld [vmem:[%s6460 + $0x4b0] sm:$0xff]
    %v6612 = vld [vmem:[%s6460 + $0x4b8] sm:$0xff]
    %v6613 = vld [vmem:[%s6460 + $0x4c0] sm:$0xff]
    %v6614 = vld [vmem:[%s6460 + $0x4c8] sm:$0xff]
    %v6615 = vld [vmem:[%s6460 + $0x4d0] sm:$0xff]
    %v6616 = vld [vmem:[%s6460 + $0x4d8] sm:$0xff]
    %v6617 = vld [vmem:[%s6460 + $0x4e0] sm:$0xff]
    %v6618 = vld [vmem:[%s6460 + $0x4e8] sm:$0xff]
    %v6619 = vld [vmem:[%s6460 + $0x4f0] sm:$0xff]
    %v6620 = vld [vmem:[%s6460 + $0x4f8] sm:$0xff]
    %v6621 = vld [vmem:[%s6460 + $0x500] sm:$0xff]
    %v6622 = vld [vmem:[%s6460 + $0x508] sm:$0xff]
    %v6623 = vld [vmem:[%s6460 + $0x510] sm:$0xff]
    %v6624 = vld [vmem:[%s6460 + $0x518] sm:$0xff]
    %v6625 = vld [vmem:[%s6460 + $0x520] sm:$0xff]
    %v6626 = vld [vmem:[%s6460 + $0x528] sm:$0xff]
    %v6627 = vld [vmem:[%s6460 + $0x530] sm:$0xff]
    %v6628 = vld [vmem:[%s6460 + $0x538] sm:$0xff]
    %v6629 = vld [vmem:[%s6460 + $0x540] sm:$0xff]
    %v6630 = vld [vmem:[%s6460 + $0x548] sm:$0xff]
    %v6631 = vld [vmem:[%s6460 + $0x550] sm:$0xff]
    %v6632 = vld [vmem:[%s6460 + $0x558] sm:$0xff]
    %v6633 = vld [vmem:[%s6460 + $0x560] sm:$0xff]
    %v6634 = vld [vmem:[%s6460 + $0x568] sm:$0xff]
    %v6635 = vld [vmem:[%s6460 + $0x570] sm:$0xff]
    %v6636 = vld [vmem:[%s6460 + $0x578] sm:$0xff]
    %v6637 = vld [vmem:[%s6460 + $0x580] sm:$0xff]
    %v6638 = vld [vmem:[%s6460 + $0x588] sm:$0xff]
    %v6639 = vld [vmem:[%s6460 + $0x590] sm:$0xff]
    %v6640 = vld [vmem:[%s6460 + $0x598] sm:$0xff]
    %v6641 = vld [vmem:[%s6460 + $0x5a0] sm:$0xff]
    %v6642 = vld [vmem:[%s6460 + $0x5a8] sm:$0xff]
    %v6643 = vld [vmem:[%s6460 + $0x5b0] sm:$0xff]
    %v6644 = vld [vmem:[%s6460 + $0x5b8] sm:$0xff]
    %v6645 = vld [vmem:[%s6460 + $0x5c0] sm:$0xff]
    %v6646 = vld [vmem:[%s6460 + $0x5c8] sm:$0xff]
    %v6647 = vld [vmem:[%s6460 + $0x5d0] sm:$0xff]
    %v6648 = vld [vmem:[%s6460 + $0x5d8] sm:$0xff]
    %v6649 = vld [vmem:[%s6460 + $0x5e0] sm:$0xff]
    %v6650 = vld [vmem:[%s6460 + $0x5e8] sm:$0xff]
    %v6651 = vld [vmem:[%s6460 + $0x5f0] sm:$0xff]
    %v6652 = vld [vmem:[%s6460 + $0x5f8] sm:$0xff]
    %6653 = vmatprep.subr.mxu0 %v6462
    %6654 = vmatpush1.msra.mxu0 %v6461
    %6655 = vmatprep.subr.mxu0 %v6466
    %6656 = vmatpush1.msra.mxu0 %v6465
    %6657 = vmatprep.subr.mxu0 %v6470
    %6658 = vmatpush1.msra.mxu0 %v6469
    %6659 = vmatprep.subr.mxu0 %v6474
    %6660 = vmatpush1.msra.mxu0 %v6473
    %6661 = vmatprep.subr.mxu0 %v6478
    %6662 = vmatpush1.msra.mxu0 %v6477
    %6663 = vmatprep.subr.mxu0 %v6482
    %6664 = vmatpush1.msra.mxu0 %v6481
    %6665 = vmatprep.subr.mxu0 %v6486
    %6666 = vmatpush1.msra.mxu0 %v6485
    %6667 = vmatprep.subr.mxu0 %v6490
    %6668 = vmatpush1.msra.mxu0 %v6489
    %6669 = vmatprep.subr.mxu0 %v6494
    %6670 = vmatpush1.msra.mxu0 %v6493
    %6671 = vmatprep.subr.mxu0 %v6498
    %6672 = vmatpush1.msra.mxu0 %v6497
    %6673 = vmatprep.subr.mxu0 %v6502
    %6674 = vmatpush1.msra.mxu0 %v6501
    %6675 = vmatprep.subr.mxu0 %v6506
    %6676 = vmatpush1.msra.mxu0 %v6505
    %6677 = vmatprep.subr.mxu0 %v6510
    %6678 = vmatpush1.msra.mxu0 %v6509
    %6679 = vmatprep.subr.mxu0 %v6514
    %6680 = vmatpush1.msra.mxu0 %v6513
    %6681 = vmatprep.subr.mxu0 %v6518
    %6682 = vmatpush1.msra.mxu0 %v6517
    %6683 = vmatprep.subr.mxu0 %v6522
    %6684 = vmatpush1.msra.mxu0 %v6521
    %6685 = vmatprep.subr.mxu0 %v6526
    %6686 = vmatpush1.msra.mxu0 %v6525
    %6687 = vmatprep.subr.mxu0 %v6530
    %6688 = vmatpush1.msra.mxu0 %v6529
    %6689 = vmatprep.subr.mxu0 %v6534
    %6690 = vmatpush1.msra.mxu0 %v6533
    %6691 = vmatprep.subr.mxu0 %v6538
    %6692 = vmatpush1.msra.mxu0 %v6537
    %6693 = vmatprep.subr.mxu0 %v6542
    %6694 = vmatpush1.msra.mxu0 %v6541
    %6695 = vmatprep.subr.mxu0 %v6546
    %6696 = vmatpush1.msra.mxu0 %v6545
    %6697 = vmatprep.subr.mxu0 %v6550
    %6698 = vmatpush1.msra.mxu0 %v6549
    %6699 = vmatprep.subr.mxu0 %v6554
    %6700 = vmatpush1.msra.mxu0 %v6553
    %6701 = vmatprep.subr.mxu0 %v6558
    %6702 = vmatpush1.msra.mxu0 %v6557
    %6703 = vmatprep.subr.mxu0 %v6562
    %6704 = vmatpush1.msra.mxu0 %v6561
    %6705 = vmatprep.subr.mxu0 %v6566
    %6706 = vmatpush1.msra.mxu0 %v6565
    %6707 = vmatprep.subr.mxu0 %v6570
    %6708 = vmatpush1.msra.mxu0 %v6569
    %6709 = vmatprep.subr.mxu0 %v6574
    %6710 = vmatpush1.msra.mxu0 %v6573
    %6711 = vmatprep.subr.mxu0 %v6578
    %6712 = vmatpush1.msra.mxu0 %v6577
    %6713 = vmatprep.subr.mxu0 %v6582
    %6714 = vmatpush1.msra.mxu0 %v6581
    %6715 = vmatprep.subr.mxu0 %v6586
    %6716 = vmatpush1.msra.mxu0 %v6585
    %6717 = vmatprep.mubr.f32.mxu0 %v6321
    %6718 = vmatmul.mubr.f32.gmra.mrb[0].mxu0 %v6318
    %v6719 = vpop.f32.mrb[0].mxu0
    %v6720 = vadd.f32 0.0, %v6719
    %v6721 = vpop.f32.mrb[0].mxu0
    %v6722 = vadd.f32 0.0, %v6721
    %6723 = vmatprep.mubr.f32.mxu0 %v6326
    %6724 = vmatmul.mubr.f32.gmra.mrb[0].mxu0 %v6325
    %v6725 = vpop.f32.mrb[0].mxu0
    %v6726 = vadd.f32 0.0, %v6725
    %v6727 = vpop.f32.mrb[0].mxu0
    %v6728 = vadd.f32 0.0, %v6727
    %6729 = vmatprep.mubr.f32.mxu0 %v6333
    %6730 = vmatmul.mubr.f32.gmra.mrb[0].mxu0 %v6330
    %v6731 = vpop.f32.mrb[0].mxu0
    %v6732 = vadd.f32 0.0, %v6731
    %v6733 = vpop.f32.mrb[0].mxu0
    %v6734 = vadd.f32 0.0, %v6733
    %6735 = vmatprep.mubr.f32.mxu0 %v6338
    %6736 = vmatmul.mubr.f32.gmra.mrb[0].mxu0 %v6337
    %v6737 = vpop.f32.mrb[0].mxu0
    %v6738 = vadd.f32 0.0, %v6737
    %v6739 = vpop.f32.mrb[0].mxu0
    %v6740 = vadd.f32 0.0, %v6739
    %6741 = vmatprep.mubr.f32.mxu0 %v6345
    %6742 = vmatmul.mubr.f32.gmra.mrb[0].mxu0 %v6342
    %v6743 = vpop.f32.mrb[0].mxu0
    %v6744 = vadd.f32 0.0, %v6743
    %v6745 = vpop.f32.mrb[0].mxu0
    %v6746 = vadd.f32 0.0, %v6745
    %6747 = vmatprep.mubr.f32.mxu0 %v6350
    %6748 = vmatmul.mubr.f32.gmra.mrb[0].mxu0 %v6349
    %v6749 = vpop.f32.mrb[0].mxu0
    %v6750 = vadd.f32 0.0, %v6749
    %v6751 = vpop.f32.mrb[0].mxu0
    %v6752 = vadd.f32 0.0, %v6751
    %6753 = vmatprep.mubr.f32.mxu0 %v6357
    %6754 = vmatmul.mubr.f32.gmra.mrb[0].mxu0 %v6354
    %v6755 = vpop.f32.mrb[0].mxu0
    %v6756 = vadd.f32 0.0, %v6755
    %v6757 = vpop.f32.mrb[0].mxu0
    %v6758 = vadd.f32 0.0, %v6757
    %6759 = vmatprep.mubr.f32.mxu0 %v6362
    %6760 = vmatmul.mubr.f32.gmra.mrb[0].mxu0 %v6361
    %v6761 = vpop.f32.mrb[0].mxu0
    %v6762 = vadd.f32 0.0, %v6761
    %v6763 = vpop.f32.mrb[0].mxu0
    %v6764 = vadd.f32 0.0, %v6763
    %6765 = vmatprep.mubr.f32.mxu0 %v6369
    %6766 = vmatmul.mubr.f32.gmra.mrb[0].mxu0 %v6366
    %v6767 = vpop.f32.mrb[0].mxu0
    %v6768 = vadd.f32 0.0, %v6767
    %v6769 = vpop.f32.mrb[0].mxu0
    %v6770 = vadd.f32 0.0, %v6769
    %6771 = vmatprep.mubr.f32.mxu0 %v6374
    %6772 = vmatmul.mubr.f32.gmra.mrb[0].mxu0 %v6373
    %v6773 = vpop.f32.mrb[0].mxu0
    %v6774 = vadd.f32 0.0, %v6773
    %v6775 = vpop.f32.mrb[0].mxu0
    %v6776 = vadd.f32 0.0, %v6775
    %6777 = vmatprep.mubr.f32.mxu0 %v6381
    %6778 = vmatmul.mubr.f32.gmra.mrb[0].mxu0 %v6378
    %v6779 = vpop.f32.mrb[0].mxu0
    %v6780 = vadd.f32 0.0, %v6779
    %v6781 = vpop.f32.mrb[0].mxu0
    %v6782 = vadd.f32 0.0, %v6781
    %6783 = vmatprep.mubr.f32.mxu0 %v6386
    %6784 = vmatmul.mubr.f32.gmra.mrb[0].mxu0 %v6385
    %v6785 = vpop.f32.mrb[0].mxu0
    %v6786 = vadd.f32 0.0, %v6785
    %v6787 = vpop.f32.mrb[0].mxu0
    %v6788 = vadd.f32 0.0, %v6787
    %6789 = vmatprep.mubr.f32.mxu0 %v6393
    %6790 = vmatmul.mubr.f32.gmra.mrb[0].mxu0 %v6390
    %v6791 = vpop.f32.mrb[0].mxu0
    %v6792 = vadd.f32 0.0, %v6791
    %v6793 = vpop.f32.mrb[0].mxu0
    %v6794 = vadd.f32 0.0, %v6793
    %6795 = vmatprep.mubr.f32.mxu0 %v6398
    %6796 = vmatmul.mubr.f32.gmra.mrb[0].mxu0 %v6397
    %v6797 = vpop.f32.mrb[0].mxu0
    %v6798 = vadd.f32 0.0, %v6797
    %v6799 = vpop.f32.mrb[0].mxu0
    %v6800 = vadd.f32 0.0, %v6799
    %6801 = vmatprep.mubr.f32.mxu0 %v6405
    %6802 = vmatmul.mubr.f32.gmra.mrb[0].mxu0 %v6402
    %v6803 = vpop.f32.mrb[0].mxu0
    %v6804 = vadd.f32 0.0, %v6803
    %v6805 = vpop.f32.mrb[0].mxu0
    %v6806 = vadd.f32 0.0, %v6805
    %6807 = vmatprep.mubr.f32.mxu0 %v6410
    %6808 = vmatmul.mubr.f32.gmra.mrb[0].mxu0 %v6409
    %v6809 = vpop.f32.mrb[0].mxu0
    %v6810 = vadd.f32 0.0, %v6809
    %v6811 = vpop.f32.mrb[0].mxu0
    %v6812 = vadd.f32 0.0, %v6811
    %6813 = vdwg.mxu0
    %6814 = vmatprep.subr.mxu0 %v6590
    %6815 = vmatpush1.msra.mxu0 %v6589
    %6816 = vmatprep.subr.mxu0 %v6594
    %6817 = vmatpush1.msra.mxu0 %v6593
    %6818 = vmatprep.subr.mxu0 %v6598
    %6819 = vmatpush1.msra.mxu0 %v6597
    %6820 = vmatprep.subr.mxu0 %v6602
    %6821 = vmatpush1.msra.mxu0 %v6601
    %6822 = vmatprep.subr.mxu0 %v6606
    %6823 = vmatpush1.msra.mxu0 %v6605
    %6824 = vmatprep.subr.mxu0 %v6610
    %6825 = vmatpush1.msra.mxu0 %v6609
    %6826 = vmatprep.subr.mxu0 %v6614
    %6827 = vmatpush1.msra.mxu0 %v6613
    %6828 = vmatprep.subr.mxu0 %v6618
    %6829 = vmatpush1.msra.mxu0 %v6617
    %6830 = vmatprep.subr.mxu0 %v6622
    %6831 = vmatpush1.msra.mxu0 %v6621
    %6832 = vmatprep.subr.mxu0 %v6626
    %6833 = vmatpush1.msra.mxu0 %v6625
    %6834 = vmatprep.subr.mxu0 %v6630
    %6835 = vmatpush1.msra.mxu0 %v6629
    %6836 = vmatprep.subr.mxu0 %v6634
    %6837 = vmatpush1.msra.mxu0 %v6633
    %6838 = vmatprep.subr.mxu0 %v6638
    %6839 = vmatpush1.msra.mxu0 %v6637
    %6840 = vmatprep.subr.mxu0 %v6642
    %6841 = vmatpush1.msra.mxu0 %v6641
    %6842 = vmatprep.subr.mxu0 %v6646
    %6843 = vmatpush1.msra.mxu0 %v6645
    %6844 = vmatprep.subr.mxu0 %v6650
    %6845 = vmatpush1.msra.mxu0 %v6649
    %6846 = vmatprep.subr.mxu0 0.0
    %6847 = vmatpush1.msra.mxu0 0.0
    %6848 = vmatprep.subr.mxu0 0.0
    %6849 = vmatpush1.msra.mxu0 0.0
    %6850 = vmatprep.subr.mxu0 0.0
    %6851 = vmatpush1.msra.mxu0 0.0
    %6852 = vmatprep.subr.mxu0 0.0
    %6853 = vmatpush1.msra.mxu0 0.0
    %6854 = vmatprep.subr.mxu0 0.0
    %6855 = vmatpush1.msra.mxu0 0.0
    %6856 = vmatprep.subr.mxu0 0.0
    %6857 = vmatpush1.msra.mxu0 0.0
    %6858 = vmatprep.subr.mxu0 0.0
    %6859 = vmatpush1.msra.mxu0 0.0
    %6860 = vmatprep.subr.mxu0 0.0
    %6861 = vmatpush1.msra.mxu0 0.0
    %6862 = vmatprep.subr.mxu0 0.0
    %6863 = vmatpush1.msra.mxu0 0.0
    %6864 = vmatprep.subr.mxu0 0.0
    %6865 = vmatpush1.msra.mxu0 0.0
    %6866 = vmatprep.subr.mxu0 0.0
    %6867 = vmatpush1.msra.mxu0 0.0
    %6868 = vmatprep.subr.mxu0 0.0
    %6869 = vmatpush1.msra.mxu0 0.0
    %6870 = vmatprep.subr.mxu0 0.0
    %6871 = vmatpush1.msra.mxu0 0.0
    %6872 = vmatprep.subr.mxu0 0.0
    %6873 = vmatpush1.msra.mxu0 0.0
    %6874 = vmatprep.subr.mxu0 0.0
    %6875 = vmatpush1.msra.mxu0 0.0
    %6876 = vmatprep.subr.mxu0 0.0
    %6877 = vmatpush1.msra.mxu0 0.0
    %6878 = vmatprep.mubr.f32.mxu0 0.0
    %6879 = vmatmul.mubr.f32.gmra.mrb[0].mxu0 %v6324
    %v6880 = vpop.f32.mrb[0].mxu0
    %v6881 = vadd.f32 %v6720, %v6880
    %v6882 = vpop.f32.mrb[0].mxu0
    %v6883 = vadd.f32 %v6722, %v6882
    %6884 = vmatprep.mubr.f32.mxu0 0.0
    %6885 = vmatmul.mubr.f32.gmra.mrb[0].mxu0 %v6327
    %v6886 = vpop.f32.mrb[0].mxu0
    %v6887 = vadd.f32 %v6726, %v6886
    %v6888 = vpop.f32.mrb[0].mxu0
    %v6889 = vadd.f32 %v6728, %v6888
    %6890 = vmatprep.mubr.f32.mxu0 0.0
    %6891 = vmatmul.mubr.f32.gmra.mrb[0].mxu0 %v6336
    %v6892 = vpop.f32.mrb[0].mxu0
    %v6893 = vadd.f32 %v6732, %v6892
    %v6894 = vpop.f32.mrb[0].mxu0
    %v6895 = vadd.f32 %v6734, %v6894
    %6896 = vmatprep.mubr.f32.mxu0 0.0
    %6897 = vmatmul.mubr.f32.gmra.mrb[0].mxu0 %v6339
    %v6898 = vpop.f32.mrb[0].mxu0
    %v6899 = vadd.f32 %v6738, %v6898
    %v6900 = vpop.f32.mrb[0].mxu0
    %v6901 = vadd.f32 %v6740, %v6900
    %6902 = vmatprep.mubr.f32.mxu0 0.0
    %6903 = vmatmul.mubr.f32.gmra.mrb[0].mxu0 %v6348
    %v6904 = vpop.f32.mrb[0].mxu0
    %v6905 = vadd.f32 %v6744, %v6904
    %v6906 = vpop.f32.mrb[0].mxu0
    %v6907 = vadd.f32 %v6746, %v6906
    %6908 = vmatprep.mubr.f32.mxu0 0.0
    %6909 = vmatmul.mubr.f32.gmra.mrb[0].mxu0 %v6351
    %v6910 = vpop.f32.mrb[0].mxu0
    %v6911 = vadd.f32 %v6750, %v6910
    %v6912 = vpop.f32.mrb[0].mxu0
    %v6913 = vadd.f32 %v6752, %v6912
    %6914 = vmatprep.mubr.f32.mxu0 0.0
    %6915 = vmatmul.mubr.f32.gmra.mrb[0].mxu0 %v6360
    %v6916 = vpop.f32.mrb[0].mxu0
    %v6917 = vadd.f32 %v6756, %v6916
    %v6918 = vpop.f32.mrb[0].mxu0
    %v6919 = vadd.f32 %v6758, %v6918
    %6920 = vmatprep.mubr.f32.mxu0 0.0
    %6921 = vmatmul.mubr.f32.gmra.mrb[0].mxu0 %v6363
    %v6922 = vpop.f32.mrb[0].mxu0
    %v6923 = vadd.f32 %v6762, %v6922
    %v6924 = vpop.f32.mrb[0].mxu0
    %v6925 = vadd.f32 %v6764, %v6924
    %6926 = vmatprep.mubr.f32.mxu0 0.0
    %6927 = vmatmul.mubr.f32.gmra.mrb[0].mxu0 %v6372
    %v6928 = vpop.f32.mrb[0].mxu0
    %v6929 = vadd.f32 %v6768, %v6928
    %v6930 = vpop.f32.mrb[0].mxu0
    %v6931 = vadd.f32 %v6770, %v6930
    %6932 = vmatprep.mubr.f32.mxu0 0.0
    %6933 = vmatmul.mubr.f32.gmra.mrb[0].mxu0 %v6375
    %v6934 = vpop.f32.mrb[0].mxu0
    %v6935 = vadd.f32 %v6774, %v6934
    %v6936 = vpop.f32.mrb[0].mxu0
    %v6937 = vadd.f32 %v6776, %v6936
    %6938 = vmatprep.mubr.f32.mxu0 0.0
    %6939 = vmatmul.mubr.f32.gmra.mrb[0].mxu0 %v6384
    %v6940 = vpop.f32.mrb[0].mxu0
    %v6941 = vadd.f32 %v6780, %v6940
    %v6942 = vpop.f32.mrb[0].mxu0
    %v6943 = vadd.f32 %v6782, %v6942
    %6944 = vmatprep.mubr.f32.mxu0 0.0
    %6945 = vmatmul.mubr.f32.gmra.mrb[0].mxu0 %v6387
    %v6946 = vpop.f32.mrb[0].mxu0
    %v6947 = vadd.f32 %v6786, %v6946
    %v6948 = vpop.f32.mrb[0].mxu0
    %v6949 = vadd.f32 %v6788, %v6948
    %6950 = vmatprep.mubr.f32.mxu0 0.0
    %6951 = vmatmul.mubr.f32.gmra.mrb[0].mxu0 %v6396
    %v6952 = vpop.f32.mrb[0].mxu0
    %v6953 = vadd.f32 %v6792, %v6952
    %v6954 = vpop.f32.mrb[0].mxu0
    %v6955 = vadd.f32 %v6794, %v6954
    %6956 = vmatprep.mubr.f32.mxu0 0.0
    %6957 = vmatmul.mubr.f32.gmra.mrb[0].mxu0 %v6399
    %v6958 = vpop.f32.mrb[0].mxu0
    %v6959 = vadd.f32 %v6798, %v6958
    %v6960 = vpop.f32.mrb[0].mxu0
    %v6961 = vadd.f32 %v6800, %v6960
    %6962 = vmatprep.mubr.f32.mxu0 0.0
    %6963 = vmatmul.mubr.f32.gmra.mrb[0].mxu0 %v6408
    %v6964 = vpop.f32.mrb[0].mxu0
    %v6965 = vadd.f32 %v6804, %v6964
    %v6966 = vpop.f32.mrb[0].mxu0
    %v6967 = vadd.f32 %v6806, %v6966
    %6968 = vmatprep.mubr.f32.mxu0 0.0
    %6969 = vmatmul.mubr.f32.gmra.mrb[0].mxu0 %v6411
    %v6970 = vpop.f32.mrb[0].mxu0
    %v6971 = vadd.f32 %v6810, %v6970
    %v6972 = vpop.f32.mrb[0].mxu0
    %v6973 = vadd.f32 %v6812, %v6972
    %6974 = vdwg.mxu0
    %6975 = vmatprep.subr.mxu0 %v6464
    %6976 = vmatpush1.msra.mxu0 %v6463
    %6977 = vmatprep.subr.mxu0 %v6468
    %6978 = vmatpush1.msra.mxu0 %v6467
    %6979 = vmatprep.subr.mxu0 %v6472
    %6980 = vmatpush1.msra.mxu0 %v6471
    %6981 = vmatprep.subr.mxu0 %v6476
    %6982 = vmatpush1.msra.mxu0 %v6475
    %6983 = vmatprep.subr.mxu0 %v6480
    %6984 = vmatpush1.msra.mxu0 %v6479
    %6985 = vmatprep.subr.mxu0 %v6484
    %6986 = vmatpush1.msra.mxu0 %v6483
    %6987 = vmatprep.subr.mxu0 %v6488
    %6988 = vmatpush1.msra.mxu0 %v6487
    %6989 = vmatprep.subr.mxu0 %v6492
    %6990 = vmatpush1.msra.mxu0 %v6491
    %6991 = vmatprep.subr.mxu0 %v6496
    %6992 = vmatpush1.msra.mxu0 %v6495
    %6993 = vmatprep.subr.mxu0 %v6500
    %6994 = vmatpush1.msra.mxu0 %v6499
    %6995 = vmatprep.subr.mxu0 %v6504
    %6996 = vmatpush1.msra.mxu0 %v6503
    %6997 = vmatprep.subr.mxu0 %v6508
    %6998 = vmatpush1.msra.mxu0 %v6507
    %6999 = vmatprep.subr.mxu0 %v6512
    %7000 = vmatpush1.msra.mxu0 %v6511
    %7001 = vmatprep.subr.mxu0 %v6516
    %7002 = vmatpush1.msra.mxu0 %v6515
    %7003 = vmatprep.subr.mxu0 %v6520
    %7004 = vmatpush1.msra.mxu0 %v6519
    %7005 = vmatprep.subr.mxu0 %v6524
    %7006 = vmatpush1.msra.mxu0 %v6523
    %7007 = vmatprep.subr.mxu0 %v6528
    %7008 = vmatpush1.msra.mxu0 %v6527
    %7009 = vmatprep.subr.mxu0 %v6532
    %7010 = vmatpush1.msra.mxu0 %v6531
    %7011 = vmatprep.subr.mxu0 %v6536
    %7012 = vmatpush1.msra.mxu0 %v6535
    %7013 = vmatprep.subr.mxu0 %v6540
    %7014 = vmatpush1.msra.mxu0 %v6539
    %7015 = vmatprep.subr.mxu0 %v6544
    %7016 = vmatpush1.msra.mxu0 %v6543
    %7017 = vmatprep.subr.mxu0 %v6548
    %7018 = vmatpush1.msra.mxu0 %v6547
    %7019 = vmatprep.subr.mxu0 %v6552
    %7020 = vmatpush1.msra.mxu0 %v6551
    %7021 = vmatprep.subr.mxu0 %v6556
    %7022 = vmatpush1.msra.mxu0 %v6555
    %7023 = vmatprep.subr.mxu0 %v6560
    %7024 = vmatpush1.msra.mxu0 %v6559
    %7025 = vmatprep.subr.mxu0 %v6564
    %7026 = vmatpush1.msra.mxu0 %v6563
    %7027 = vmatprep.subr.mxu0 %v6568
    %7028 = vmatpush1.msra.mxu0 %v6567
    %7029 = vmatprep.subr.mxu0 %v6572
    %7030 = vmatpush1.msra.mxu0 %v6571
    %7031 = vmatprep.subr.mxu0 %v6576
    %7032 = vmatpush1.msra.mxu0 %v6575
    %7033 = vmatprep.subr.mxu0 %v6580
    %7034 = vmatpush1.msra.mxu0 %v6579
    %7035 = vmatprep.subr.mxu0 %v6584
    %7036 = vmatpush1.msra.mxu0 %v6583
    %7037 = vmatprep.subr.mxu0 %v6588
    %7038 = vmatpush1.msra.mxu0 %v6587
    %7039 = vmatprep.mubr.f32.mxu0 %v6321
    %7040 = vmatmul.mubr.f32.gmra.mrb[0].mxu0 %v6318
    %v7041 = vpop.f32.mrb[0].mxu0
    %v7042 = vadd.f32 0.0, %v7041
    %v7043 = vpop.f32.mrb[0].mxu0
    %v7044 = vadd.f32 0.0, %v7043
    %7045 = vmatprep.mubr.f32.mxu0 %v6326
    %7046 = vmatmul.mubr.f32.gmra.mrb[0].mxu0 %v6325
    %v7047 = vpop.f32.mrb[0].mxu0
    %v7048 = vadd.f32 0.0, %v7047
    %v7049 = vpop.f32.mrb[0].mxu0
    %v7050 = vadd.f32 0.0, %v7049
    %7051 = vmatprep.mubr.f32.mxu0 %v6333
    %7052 = vmatmul.mubr.f32.gmra.mrb[0].mxu0 %v6330
    %v7053 = vpop.f32.mrb[0].mxu0
    %v7054 = vadd.f32 0.0, %v7053
    %v7055 = vpop.f32.mrb[0].mxu0
    %v7056 = vadd.f32 0.0, %v7055
    %7057 = vmatprep.mubr.f32.mxu0 %v6338
    %7058 = vmatmul.mubr.f32.gmra.mrb[0].mxu0 %v6337
    %v7059 = vpop.f32.mrb[0].mxu0
    %v7060 = vadd.f32 0.0, %v7059
    %v7061 = vpop.f32.mrb[0].mxu0
    %v7062 = vadd.f32 0.0, %v7061
    %7063 = vmatprep.mubr.f32.mxu0 %v6345
    %7064 = vmatmul.mubr.f32.gmra.mrb[0].mxu0 %v6342
    %v7065 = vpop.f32.mrb[0].mxu0
    %v7066 = vadd.f32 0.0, %v7065
    %v7067 = vpop.f32.mrb[0].mxu0
    %v7068 = vadd.f32 0.0, %v7067
    %7069 = vmatprep.mubr.f32.mxu0 %v6350
    %7070 = vmatmul.mubr.f32.gmra.mrb[0].mxu0 %v6349
    %v7071 = vpop.f32.mrb[0].mxu0
    %v7072 = vadd.f32 0.0, %v7071
    %v7073 = vpop.f32.mrb[0].mxu0
    %v7074 = vadd.f32 0.0, %v7073
    %7075 = vmatprep.mubr.f32.mxu0 %v6357
    %7076 = vmatmul.mubr.f32.gmra.mrb[0].mxu0 %v6354
    %v7077 = vpop.f32.mrb[0].mxu0
    %v7078 = vadd.f32 0.0, %v7077
    %v7079 = vpop.f32.mrb[0].mxu0
    %v7080 = vadd.f32 0.0, %v7079
    %7081 = vmatprep.mubr.f32.mxu0 %v6362
    %7082 = vmatmul.mubr.f32.gmra.mrb[0].mxu0 %v6361
    %v7083 = vpop.f32.mrb[0].mxu0
    %v7084 = vadd.f32 0.0, %v7083
    %v7085 = vpop.f32.mrb[0].mxu0
    %v7086 = vadd.f32 0.0, %v7085
    %7087 = vmatprep.mubr.f32.mxu0 %v6369
    %7088 = vmatmul.mubr.f32.gmra.mrb[0].mxu0 %v6366
    %v7089 = vpop.f32.mrb[0].mxu0
    %v7090 = vadd.f32 0.0, %v7089
    %v7091 = vpop.f32.mrb[0].mxu0
    %v7092 = vadd.f32 0.0, %v7091
    %7093 = vmatprep.mubr.f32.mxu0 %v6374
    %7094 = vmatmul.mubr.f32.gmra.mrb[0].mxu0 %v6373
    %v7095 = vpop.f32.mrb[0].mxu0
    %v7096 = vadd.f32 0.0, %v7095
    %v7097 = vpop.f32.mrb[0].mxu0
    %v7098 = vadd.f32 0.0, %v7097
    %7099 = vmatprep.mubr.f32.mxu0 %v6381
    %7100 = vmatmul.mubr.f32.gmra.mrb[0].mxu0 %v6378
    %v7101 = vpop.f32.mrb[0].mxu0
    %v7102 = vadd.f32 0.0, %v7101
    %v7103 = vpop.f32.mrb[0].mxu0
    %v7104 = vadd.f32 0.0, %v7103
    %7105 = vmatprep.mubr.f32.mxu0 %v6386
    %7106 = vmatmul.mubr.f32.gmra.mrb[0].mxu0 %v6385
    %v7107 = vpop.f32.mrb[0].mxu0
    %v7108 = vadd.f32 0.0, %v7107
    %v7109 = vpop.f32.mrb[0].mxu0
    %v7110 = vadd.f32 0.0, %v7109
    %7111 = vmatprep.mubr.f32.mxu0 %v6393
    %7112 = vmatmul.mubr.f32.gmra.mrb[0].mxu0 %v6390
    %v7113 = vpop.f32.mrb[0].mxu0
    %v7114 = vadd.f32 0.0, %v7113
    %v7115 = vpop.f32.mrb[0].mxu0
    %v7116 = vadd.f32 0.0, %v7115
    %7117 = vmatprep.mubr.f32.mxu0 %v6398
    %7118 = vmatmul.mubr.f32.gmra.mrb[0].mxu0 %v6397
    %v7119 = vpop.f32.mrb[0].mxu0
    %v7120 = vadd.f32 0.0, %v7119
    %v7121 = vpop.f32.mrb[0].mxu0
    %v7122 = vadd.f32 0.0, %v7121
    %7123 = vmatprep.mubr.f32.mxu0 %v6405
    %7124 = vmatmul.mubr.f32.gmra.mrb[0].mxu0 %v6402
    %v7125 = vpop.f32.mrb[0].mxu0
    %v7126 = vadd.f32 0.0, %v7125
    %v7127 = vpop.f32.mrb[0].mxu0
    %v7128 = vadd.f32 0.0, %v7127
    %7129 = vmatprep.mubr.f32.mxu0 %v6410
    %7130 = vmatmul.mubr.f32.gmra.mrb[0].mxu0 %v6409
    %v7131 = vpop.f32.mrb[0].mxu0
    %v7132 = vadd.f32 0.0, %v7131
    %v7133 = vpop.f32.mrb[0].mxu0
    %v7134 = vadd.f32 0.0, %v7133
    %7135 = vdwg.mxu0
    %7136 = vmatprep.subr.mxu0 %v6592
    %7137 = vmatpush1.msra.mxu0 %v6591
    %7138 = vmatprep.subr.mxu0 %v6596
    %7139 = vmatpush1.msra.mxu0 %v6595
    %7140 = vmatprep.subr.mxu0 %v6600
    %7141 = vmatpush1.msra.mxu0 %v6599
    %7142 = vmatprep.subr.mxu0 %v6604
    %7143 = vmatpush1.msra.mxu0 %v6603
    %7144 = vmatprep.subr.mxu0 %v6608
    %7145 = vmatpush1.msra.mxu0 %v6607
    %7146 = vmatprep.subr.mxu0 %v6612
    %7147 = vmatpush1.msra.mxu0 %v6611
    %7148 = vmatprep.subr.mxu0 %v6616
    %7149 = vmatpush1.msra.mxu0 %v6615
    %7150 = vmatprep.subr.mxu0 %v6620
    %7151 = vmatpush1.msra.mxu0 %v6619
    %7152 = vmatprep.subr.mxu0 %v6624
    %7153 = vmatpush1.msra.mxu0 %v6623
    %7154 = vmatprep.subr.mxu0 %v6628
    %7155 = vmatpush1.msra.mxu0 %v6627
    %7156 = vmatprep.subr.mxu0 %v6632
    %7157 = vmatpush1.msra.mxu0 %v6631
    %7158 = vmatprep.subr.mxu0 %v6636
    %7159 = vmatpush1.msra.mxu0 %v6635
    %7160 = vmatprep.subr.mxu0 %v6640
    %7161 = vmatpush1.msra.mxu0 %v6639
    %7162 = vmatprep.subr.mxu0 %v6644
    %7163 = vmatpush1.msra.mxu0 %v6643
    %7164 = vmatprep.subr.mxu0 %v6648
    %7165 = vmatpush1.msra.mxu0 %v6647
    %7166 = vmatprep.subr.mxu0 %v6652
    %7167 = vmatpush1.msra.mxu0 %v6651
    %7168 = vmatprep.subr.mxu0 0.0
    %7169 = vmatpush1.msra.mxu0 0.0
    %7170 = vmatprep.subr.mxu0 0.0
    %7171 = vmatpush1.msra.mxu0 0.0
    %7172 = vmatprep.subr.mxu0 0.0
    %7173 = vmatpush1.msra.mxu0 0.0
    %7174 = vmatprep.subr.mxu0 0.0
    %7175 = vmatpush1.msra.mxu0 0.0
    %7176 = vmatprep.subr.mxu0 0.0
    %7177 = vmatpush1.msra.mxu0 0.0
    %7178 = vmatprep.subr.mxu0 0.0
    %7179 = vmatpush1.msra.mxu0 0.0
    %7180 = vmatprep.subr.mxu0 0.0
    %7181 = vmatpush1.msra.mxu0 0.0
    %7182 = vmatprep.subr.mxu0 0.0
    %7183 = vmatpush1.msra.mxu0 0.0
    %7184 = vmatprep.subr.mxu0 0.0
    %7185 = vmatpush1.msra.mxu0 0.0
    %7186 = vmatprep.subr.mxu0 0.0
    %7187 = vmatpush1.msra.mxu0 0.0
    %7188 = vmatprep.subr.mxu0 0.0
    %7189 = vmatpush1.msra.mxu0 0.0
    %7190 = vmatprep.subr.mxu0 0.0
    %7191 = vmatpush1.msra.mxu0 0.0
    %7192 = vmatprep.subr.mxu0 0.0
    %7193 = vmatpush1.msra.mxu0 0.0
    %7194 = vmatprep.subr.mxu0 0.0
    %7195 = vmatpush1.msra.mxu0 0.0
    %7196 = vmatprep.subr.mxu0 0.0
    %7197 = vmatpush1.msra.mxu0 0.0
    %7198 = vmatprep.subr.mxu0 0.0
    %7199 = vmatpush1.msra.mxu0 0.0
    %7200 = vmatprep.mubr.f32.mxu0 0.0
    %7201 = vmatmul.mubr.f32.gmra.mrb[0].mxu0 %v6324
    %v7202 = vpop.f32.mrb[0].mxu0
    %v7203 = vadd.f32 %v7042, %v7202
    %v7204 = vpop.f32.mrb[0].mxu0
    %v7205 = vadd.f32 %v7044, %v7204
    %7206 = vmatprep.mubr.f32.mxu0 0.0
    %7207 = vmatmul.mubr.f32.gmra.mrb[0].mxu0 %v6327
    %v7208 = vpop.f32.mrb[0].mxu0
    %v7209 = vadd.f32 %v7048, %v7208
    %v7210 = vpop.f32.mrb[0].mxu0
    %v7211 = vadd.f32 %v7050, %v7210
    %7212 = vmatprep.mubr.f32.mxu0 0.0
    %7213 = vmatmul.mubr.f32.gmra.mrb[0].mxu0 %v6336
    %v7214 = vpop.f32.mrb[0].mxu0
    %v7215 = vadd.f32 %v7054, %v7214
    %v7216 = vpop.f32.mrb[0].mxu0
    %v7217 = vadd.f32 %v7056, %v7216
    %7218 = vmatprep.mubr.f32.mxu0 0.0
    %7219 = vmatmul.mubr.f32.gmra.mrb[0].mxu0 %v6339
    %v7220 = vpop.f32.mrb[0].mxu0
    %v7221 = vadd.f32 %v7060, %v7220
    %v7222 = vpop.f32.mrb[0].mxu0
    %v7223 = vadd.f32 %v7062, %v7222
    %7224 = vmatprep.mubr.f32.mxu0 0.0
    %7225 = vmatmul.mubr.f32.gmra.mrb[0].mxu0 %v6348
    %v7226 = vpop.f32.mrb[0].mxu0
    %v7227 = vadd.f32 %v7066, %v7226
    %v7228 = vpop.f32.mrb[0].mxu0
    %v7229 = vadd.f32 %v7068, %v7228
    %7230 = vmatprep.mubr.f32.mxu0 0.0
    %7231 = vmatmul.mubr.f32.gmra.mrb[0].mxu0 %v6351
    %v7232 = vpop.f32.mrb[0].mxu0
    %v7233 = vadd.f32 %v7072, %v7232
    %v7234 = vpop.f32.mrb[0].mxu0
    %v7235 = vadd.f32 %v7074, %v7234
    %7236 = vmatprep.mubr.f32.mxu0 0.0
    %7237 = vmatmul.mubr.f32.gmra.mrb[0].mxu0 %v6360
    %v7238 = vpop.f32.mrb[0].mxu0
    %v7239 = vadd.f32 %v7078, %v7238
    %v7240 = vpop.f32.mrb[0].mxu0
    %v7241 = vadd.f32 %v7080, %v7240
    %7242 = vmatprep.mubr.f32.mxu0 0.0
    %7243 = vmatmul.mubr.f32.gmra.mrb[0].mxu0 %v6363
    %v7244 = vpop.f32.mrb[0].mxu0
    %v7245 = vadd.f32 %v7084, %v7244
    %v7246 = vpop.f32.mrb[0].mxu0
    %v7247 = vadd.f32 %v7086, %v7246
    %7248 = vmatprep.mubr.f32.mxu0 0.0
    %7249 = vmatmul.mubr.f32.gmra.mrb[0].mxu0 %v6372
    %v7250 = vpop.f32.mrb[0].mxu0
    %v7251 = vadd.f32 %v7090, %v7250
    %v7252 = vpop.f32.mrb[0].mxu0
    %v7253 = vadd.f32 %v7092, %v7252
    %7254 = vmatprep.mubr.f32.mxu0 0.0
    %7255 = vmatmul.mubr.f32.gmra.mrb[0].mxu0 %v6375
    %v7256 = vpop.f32.mrb[0].mxu0
    %v7257 = vadd.f32 %v7096, %v7256
    %v7258 = vpop.f32.mrb[0].mxu0
    %v7259 = vadd.f32 %v7098, %v7258
    %7260 = vmatprep.mubr.f32.mxu0 0.0
    %7261 = vmatmul.mubr.f32.gmra.mrb[0].mxu0 %v6384
    %v7262 = vpop.f32.mrb[0].mxu0
    %v7263 = vadd.f32 %v7102, %v7262
    %v7264 = vpop.f32.mrb[0].mxu0
    %v7265 = vadd.f32 %v7104, %v7264
    %7266 = vmatprep.mubr.f32.mxu0 0.0
    %7267 = vmatmul.mubr.f32.gmra.mrb[0].mxu0 %v6387
    %v7268 = vpop.f32.mrb[0].mxu0
    %v7269 = vadd.f32 %v7108, %v7268
    %v7270 = vpop.f32.mrb[0].mxu0
    %v7271 = vadd.f32 %v7110, %v7270
    %7272 = vmatprep.mubr.f32.mxu0 0.0
    %7273 = vmatmul.mubr.f32.gmra.mrb[0].mxu0 %v6396
    %v7274 = vpop.f32.mrb[0].mxu0
    %v7275 = vadd.f32 %v7114, %v7274
    %v7276 = vpop.f32.mrb[0].mxu0
    %v7277 = vadd.f32 %v7116, %v7276
    %7278 = vmatprep.mubr.f32.mxu0 0.0
    %7279 = vmatmul.mubr.f32.gmra.mrb[0].mxu0 %v6399
    %v7280 = vpop.f32.mrb[0].mxu0
    %v7281 = vadd.f32 %v7120, %v7280
    %v7282 = vpop.f32.mrb[0].mxu0
    %v7283 = vadd.f32 %v7122, %v7282
    %7284 = vmatprep.mubr.f32.mxu0 0.0
    %7285 = vmatmul.mubr.f32.gmra.mrb[0].mxu0 %v6408
    %v7286 = vpop.f32.mrb[0].mxu0
    %v7287 = vadd.f32 %v7126, %v7286
    %v7288 = vpop.f32.mrb[0].mxu0
    %v7289 = vadd.f32 %v7128, %v7288
    %7290 = vmatprep.mubr.f32.mxu0 0.0
    %7291 = vmatmul.mubr.f32.gmra.mrb[0].mxu0 %v6411
    %v7292 = vpop.f32.mrb[0].mxu0
    %v7293 = vadd.f32 %v7132, %v7292
    %v7294 = vpop.f32.mrb[0].mxu0
    %v7295 = vadd.f32 %v7134, %v7294
    %7296 = vdwg.mxu0
    %v7297 = vadd.f32 %v6251, %v6881
    %v7298 = vadd.f32 %v6252, %v6883
    %v7299 = vadd.f32 %v6253, %v7203
    %v7300 = vadd.f32 %v6254, %v7205
    %v7301 = vadd.f32 %v6255, %v6887
    %v7302 = vadd.f32 %v6256, %v6889
    %v7303 = vadd.f32 %v6257, %v7209
    %v7304 = vadd.f32 %v6258, %v7211
    %v7305 = vadd.f32 %v6259, %v6893
    %v7306 = vadd.f32 %v6260, %v6895
    %v7307 = vadd.f32 %v6261, %v7215
    %v7308 = vadd.f32 %v6262, %v7217
    %v7309 = vadd.f32 %v6263, %v6899
    %v7310 = vadd.f32 %v6264, %v6901
    %v7311 = vadd.f32 %v6265, %v7221
    %v7312 = vadd.f32 %v6266, %v7223
    %v7313 = vadd.f32 %v6267, %v6905
    %v7314 = vadd.f32 %v6268, %v6907
    %v7315 = vadd.f32 %v6269, %v7227
    %v7316 = vadd.f32 %v6270, %v7229
    %v7317 = vadd.f32 %v6271, %v6911
    %v7318 = vadd.f32 %v6272, %v6913
    %v7319 = vadd.f32 %v6273, %v7233
    %v7320 = vadd.f32 %v6274, %v7235
    %v7321 = vadd.f32 %v6275, %v6917
    %v7322 = vadd.f32 %v6276, %v6919
    %v7323 = vadd.f32 %v6277, %v7239
    %v7324 = vadd.f32 %v6278, %v7241
    %v7325 = vadd.f32 %v6279, %v6923
    %v7326 = vadd.f32 %v6280, %v6925
    %v7327 = vadd.f32 %v6281, %v7245
    %v7328 = vadd.f32 %v6282, %v7247
    %v7329 = vadd.f32 %v6283, %v6929
    %v7330 = vadd.f32 %v6284, %v6931
    %v7331 = vadd.f32 %v6285, %v7251
    %v7332 = vadd.f32 %v6286, %v7253
    %v7333 = vadd.f32 %v6287, %v6935
    %v7334 = vadd.f32 %v6288, %v6937
    %v7335 = vadd.f32 %v6289, %v7257
    %v7336 = vadd.f32 %v6290, %v7259
    %v7337 = vadd.f32 %v6291, %v6941
    %v7338 = vadd.f32 %v6292, %v6943
    %v7339 = vadd.f32 %v6293, %v7263
    %v7340 = vadd.f32 %v6294, %v7265
    %v7341 = vadd.f32 %v6295, %v6947
    %v7342 = vadd.f32 %v6296, %v6949
    %v7343 = vadd.f32 %v6297, %v7269
    %v7344 = vadd.f32 %v6298, %v7271
    %v7345 = vadd.f32 %v6299, %v6953
    %v7346 = vadd.f32 %v6300, %v6955
    %v7347 = vadd.f32 %v6301, %v7275
    %v7348 = vadd.f32 %v6302, %v7277
    %v7349 = vadd.f32 %v6303, %v6959
    %v7350 = vadd.f32 %v6304, %v6961
    %v7351 = vadd.f32 %v6305, %v7281
    %v7352 = vadd.f32 %v6306, %v7283
    %v7353 = vadd.f32 %v6307, %v6965
    %v7354 = vadd.f32 %v6308, %v6967
    %v7355 = vadd.f32 %v6309, %v7287
    %v7356 = vadd.f32 %v6310, %v7289
    %v7357 = vadd.f32 %v6311, %v6971
    %v7358 = vadd.f32 %v6312, %v6973
    %v7359 = vadd.f32 %v6313, %v7293
    %v7360 = vadd.f32 %v6314, %v7295
    %v7361 = vmax.f32 %v7297, %v7299
    %v7362 = vmax.f32 %v7298, %v7300
    %v7363 = vmax.f32 %v7301, %v7303
    %v7364 = vmax.f32 %v7302, %v7304
    %v7365 = vmax.f32 %v7305, %v7307
    %v7366 = vmax.f32 %v7306, %v7308
    %v7367 = vmax.f32 %v7309, %v7311
    %v7368 = vmax.f32 %v7310, %v7312
    %v7369 = vmax.f32 %v7313, %v7315
    %v7370 = vmax.f32 %v7314, %v7316
    %v7371 = vmax.f32 %v7317, %v7319
    %v7372 = vmax.f32 %v7318, %v7320
    %v7373 = vmax.f32 %v7321, %v7323
    %v7374 = vmax.f32 %v7322, %v7324
    %v7375 = vmax.f32 %v7325, %v7327
    %v7376 = vmax.f32 %v7326, %v7328
    %v7377 = vmax.f32 %v7329, %v7331
    %v7378 = vmax.f32 %v7330, %v7332
    %v7379 = vmax.f32 %v7333, %v7335
    %v7380 = vmax.f32 %v7334, %v7336
    %v7381 = vmax.f32 %v7337, %v7339
    %v7382 = vmax.f32 %v7338, %v7340
    %v7383 = vmax.f32 %v7341, %v7343
    %v7384 = vmax.f32 %v7342, %v7344
    %v7385 = vmax.f32 %v7345, %v7347
    %v7386 = vmax.f32 %v7346, %v7348
    %v7387 = vmax.f32 %v7349, %v7351
    %v7388 = vmax.f32 %v7350, %v7352
    %v7389 = vmax.f32 %v7353, %v7355
    %v7390 = vmax.f32 %v7354, %v7356
    %v7391 = vmax.f32 %v7357, %v7359
    %v7392 = vmax.f32 %v7358, %v7360
    %v7409 = vrot.slane %v7361, 1
    %v7410 = vrot.slane %v7362, 1
    %v7411 = vrot.slane %v7365, 1
    %v7412 = vrot.slane %v7366, 1
    %v7413 = vrot.slane %v7369, 1
    %v7414 = vrot.slane %v7370, 1
    %v7415 = vrot.slane %v7373, 1
    %v7416 = vrot.slane %v7374, 1
    %v7417 = vrot.slane %v7377, 1
    %v7418 = vrot.slane %v7378, 1
    %v7419 = vrot.slane %v7381, 1
    %v7420 = vrot.slane %v7382, 1
    %v7421 = vrot.slane %v7385, 1
    %v7422 = vrot.slane %v7386, 1
    %v7423 = vrot.slane %v7389, 1
    %v7424 = vrot.slane %v7390, 1
    %v7441 = vmax.f32 %v7361, %v7409
    %v7442 = vmax.f32 %v7362, %v7410
    %v7443 = vmax.f32 %v7365, %v7411
    %v7444 = vmax.f32 %v7366, %v7412
    %v7445 = vmax.f32 %v7369, %v7413
    %v7446 = vmax.f32 %v7370, %v7414
    %v7447 = vmax.f32 %v7373, %v7415
    %v7448 = vmax.f32 %v7374, %v7416
    %v7449 = vmax.f32 %v7377, %v7417
    %v7450 = vmax.f32 %v7378, %v7418
    %v7451 = vmax.f32 %v7381, %v7419
    %v7452 = vmax.f32 %v7382, %v7420
    %v7453 = vmax.f32 %v7385, %v7421
    %v7454 = vmax.f32 %v7386, %v7422
    %v7455 = vmax.f32 %v7389, %v7423
    %v7456 = vmax.f32 %v7390, %v7424
    %v7457 = vld [vmem:[%s4] sm:$0x3]
    %v7459 = vlaneseq
    %v7460 = vshrl.u32 %v7459, 7
    %v7461 = vsub.s32 0, %v7460
    %v7462 = vrot.slane %v7457, %v7461
    %v7463 = vlaneseq
    %v7464 = vshrl.u32 %v7463, 7
    %v7465 = vsub.s32 1, %v7464
    %v7466 = vrot.slane %v7457, %v7465
    %v7469 = vadd.f32 %v7441, %v7462
    %v7470 = vadd.f32 %v7442, %v7466
    %v7471 = vadd.f32 %v7443, %v7462
    %v7472 = vadd.f32 %v7444, %v7466
    %v7473 = vadd.f32 %v7445, %v7462
    %v7474 = vadd.f32 %v7446, %v7466
    %v7475 = vadd.f32 %v7447, %v7462
    %v7476 = vadd.f32 %v7448, %v7466
    %v7477 = vadd.f32 %v7449, %v7462
    %v7478 = vadd.f32 %v7450, %v7466
    %v7479 = vadd.f32 %v7451, %v7462
    %v7480 = vadd.f32 %v7452, %v7466
    %v7481 = vadd.f32 %v7453, %v7462
    %v7482 = vadd.f32 %v7454, %v7466
    %v7483 = vadd.f32 %v7455, %v7462
    %v7484 = vadd.f32 %v7456, %v7466
    %v7485 = vmax.f32 %v7469, 0.0
    %v7486 = vmax.f32 %v7470, 0.0
    %v7487 = vmax.f32 %v7471, 0.0
    %v7488 = vmax.f32 %v7472, 0.0
    %v7489 = vmax.f32 %v7473, 0.0
    %v7490 = vmax.f32 %v7474, 0.0
    %v7491 = vmax.f32 %v7475, 0.0
    %v7492 = vmax.f32 %v7476, 0.0
    %v7493 = vmax.f32 %v7477, 0.0
    %v7494 = vmax.f32 %v7478, 0.0
    %v7495 = vmax.f32 %v7479, 0.0
    %v7496 = vmax.f32 %v7480, 0.0
    %v7497 = vmax.f32 %v7481, 0.0
    %v7498 = vmax.f32 %v7482, 0.0
    %v7499 = vmax.f32 %v7483, 0.0
    %v7500 = vmax.f32 %v7484, 0.0
    %v7501 = vld [vmem:[%s5] sm:$0xff]
    %v7502 = vld [vmem:[%s5 + $0x8] sm:$0xff]
    %v7503 = vld [vmem:[%s5 + $0x10] sm:$0xff]
    %v7504 = vld [vmem:[%s5 + $0x18] sm:$0xff]
    %v7505 = vld [vmem:[%s5 + $0x20] sm:$0xff]
    %v7506 = vld [vmem:[%s5 + $0x28] sm:$0xff]
    %v7507 = vld [vmem:[%s5 + $0x30] sm:$0xff]
    %v7508 = vld [vmem:[%s5 + $0x38] sm:$0xff]
    %v7509 = vld [vmem:[%s5 + $0x40] sm:$0xff]
    %v7510 = vld [vmem:[%s5 + $0x48] sm:$0xff]
    %v7511 = vld [vmem:[%s5 + $0x50] sm:$0xff]
    %v7512 = vld [vmem:[%s5 + $0x58] sm:$0xff]
    %v7513 = vld [vmem:[%s5 + $0x60] sm:$0xff]
    %v7514 = vld [vmem:[%s5 + $0x68] sm:$0xff]
    %v7515 = vld [vmem:[%s5 + $0x70] sm:$0xff]
    %v7516 = vld [vmem:[%s5 + $0x78] sm:$0xff]
    %v7517 = vld [vmem:[%s5 + $0x80] sm:$0xff]
    %v7518 = vld [vmem:[%s5 + $0x88] sm:$0xff]
    %v7519 = vld [vmem:[%s5 + $0x90] sm:$0xff]
    %v7520 = vld [vmem:[%s5 + $0x98] sm:$0xff]
    %v7521 = vld [vmem:[%s5 + $0xa0] sm:$0xff]
    %v7522 = vld [vmem:[%s5 + $0xa8] sm:$0xff]
    %v7523 = vld [vmem:[%s5 + $0xb0] sm:$0xff]
    %v7524 = vld [vmem:[%s5 + $0xb8] sm:$0xff]
    %v7525 = vld [vmem:[%s5 + $0xc0] sm:$0xff]
    %v7526 = vld [vmem:[%s5 + $0xc8] sm:$0xff]
    %v7527 = vld [vmem:[%s5 + $0xd0] sm:$0xff]
    %v7528 = vld [vmem:[%s5 + $0xd8] sm:$0xff]
    %v7529 = vld [vmem:[%s5 + $0xe0] sm:$0xff]
    %v7530 = vld [vmem:[%s5 + $0xe8] sm:$0xff]
    %v7531 = vld [vmem:[%s5 + $0xf0] sm:$0xff]
    %v7532 = vld [vmem:[%s5 + $0xf8] sm:$0xff]
    %v7533 = vld [vmem:[%s5 + $0x100] sm:$0xff]
    %v7534 = vld [vmem:[%s5 + $0x108] sm:$0xff]
    %v7535 = vld [vmem:[%s5 + $0x110] sm:$0xff]
    %v7536 = vld [vmem:[%s5 + $0x118] sm:$0xff]
    %v7537 = vld [vmem:[%s5 + $0x120] sm:$0xff]
    %v7538 = vld [vmem:[%s5 + $0x128] sm:$0xff]
    %v7539 = vld [vmem:[%s5 + $0x130] sm:$0xff]
    %v7540 = vld [vmem:[%s5 + $0x138] sm:$0xff]
    %v7541 = vld [vmem:[%s5 + $0x140] sm:$0xff]
    %v7542 = vld [vmem:[%s5 + $0x148] sm:$0xff]
    %v7543 = vld [vmem:[%s5 + $0x150] sm:$0xff]
    %v7544 = vld [vmem:[%s5 + $0x158] sm:$0xff]
    %v7545 = vld [vmem:[%s5 + $0x160] sm:$0xff]
    %v7546 = vld [vmem:[%s5 + $0x168] sm:$0xff]
    %v7547 = vld [vmem:[%s5 + $0x170] sm:$0xff]
    %v7548 = vld [vmem:[%s5 + $0x178] sm:$0xff]
    %v7549 = vld [vmem:[%s5 + $0x180] sm:$0xff]
    %v7550 = vld [vmem:[%s5 + $0x188] sm:$0xff]
    %v7551 = vld [vmem:[%s5 + $0x190] sm:$0xff]
    %v7552 = vld [vmem:[%s5 + $0x198] sm:$0xff]
    %v7553 = vld [vmem:[%s5 + $0x1a0] sm:$0xff]
    %v7554 = vld [vmem:[%s5 + $0x1a8] sm:$0xff]
    %v7555 = vld [vmem:[%s5 + $0x1b0] sm:$0xff]
    %v7556 = vld [vmem:[%s5 + $0x1b8] sm:$0xff]
    %v7557 = vld [vmem:[%s5 + $0x1c0] sm:$0xff]
    %v7558 = vld [vmem:[%s5 + $0x1c8] sm:$0xff]
    %v7559 = vld [vmem:[%s5 + $0x1d0] sm:$0xff]
    %v7560 = vld [vmem:[%s5 + $0x1d8] sm:$0xff]
    %v7561 = vld [vmem:[%s5 + $0x1e0] sm:$0xff]
    %v7562 = vld [vmem:[%s5 + $0x1e8] sm:$0xff]
    %v7563 = vld [vmem:[%s5 + $0x1f0] sm:$0xff]
    %v7564 = vld [vmem:[%s5 + $0x1f8] sm:$0xff]
    %v7565 = vld [vmem:[%s5 + $0x200] sm:$0xff]
    %v7566 = vld [vmem:[%s5 + $0x208] sm:$0xff]
    %v7567 = vld [vmem:[%s5 + $0x210] sm:$0xff]
    %v7568 = vld [vmem:[%s5 + $0x218] sm:$0xff]
    %v7569 = vld [vmem:[%s5 + $0x220] sm:$0xff]
    %v7570 = vld [vmem:[%s5 + $0x228] sm:$0xff]
    %v7571 = vld [vmem:[%s5 + $0x230] sm:$0xff]
    %v7572 = vld [vmem:[%s5 + $0x238] sm:$0xff]
    %v7573 = vld [vmem:[%s5 + $0x240] sm:$0xff]
    %v7574 = vld [vmem:[%s5 + $0x248] sm:$0xff]
    %v7575 = vld [vmem:[%s5 + $0x250] sm:$0xff]
    %v7576 = vld [vmem:[%s5 + $0x258] sm:$0xff]
    %v7577 = vld [vmem:[%s5 + $0x260] sm:$0xff]
    %v7578 = vld [vmem:[%s5 + $0x268] sm:$0xff]
    %v7579 = vld [vmem:[%s5 + $0x270] sm:$0xff]
    %v7580 = vld [vmem:[%s5 + $0x278] sm:$0xff]
    %v7581 = vld [vmem:[%s5 + $0x280] sm:$0xff]
    %v7582 = vld [vmem:[%s5 + $0x288] sm:$0xff]
    %v7583 = vld [vmem:[%s5 + $0x290] sm:$0xff]
    %v7584 = vld [vmem:[%s5 + $0x298] sm:$0xff]
    %v7585 = vld [vmem:[%s5 + $0x2a0] sm:$0xff]
    %v7586 = vld [vmem:[%s5 + $0x2a8] sm:$0xff]
    %v7587 = vld [vmem:[%s5 + $0x2b0] sm:$0xff]
    %v7588 = vld [vmem:[%s5 + $0x2b8] sm:$0xff]
    %v7589 = vld [vmem:[%s5 + $0x2c0] sm:$0xff]
    %v7590 = vld [vmem:[%s5 + $0x2c8] sm:$0xff]
    %v7591 = vld [vmem:[%s5 + $0x2d0] sm:$0xff]
    %v7592 = vld [vmem:[%s5 + $0x2d8] sm:$0xff]
    %v7593 = vld [vmem:[%s5 + $0x2e0] sm:$0xff]
    %v7594 = vld [vmem:[%s5 + $0x2e8] sm:$0xff]
    %v7595 = vld [vmem:[%s5 + $0x2f0] sm:$0xff]
    %v7596 = vld [vmem:[%s5 + $0x2f8] sm:$0xff]
    %v7597 = vld [vmem:[%s5 + $0x300] sm:$0xff]
    %v7598 = vld [vmem:[%s5 + $0x308] sm:$0xff]
    %v7599 = vld [vmem:[%s5 + $0x310] sm:$0xff]
    %v7600 = vld [vmem:[%s5 + $0x318] sm:$0xff]
    %v7601 = vld [vmem:[%s5 + $0x320] sm:$0xff]
    %v7602 = vld [vmem:[%s5 + $0x328] sm:$0xff]
    %v7603 = vld [vmem:[%s5 + $0x330] sm:$0xff]
    %v7604 = vld [vmem:[%s5 + $0x338] sm:$0xff]
    %v7605 = vld [vmem:[%s5 + $0x340] sm:$0xff]
    %v7606 = vld [vmem:[%s5 + $0x348] sm:$0xff]
    %v7607 = vld [vmem:[%s5 + $0x350] sm:$0xff]
    %v7608 = vld [vmem:[%s5 + $0x358] sm:$0xff]
    %v7609 = vld [vmem:[%s5 + $0x360] sm:$0xff]
    %v7610 = vld [vmem:[%s5 + $0x368] sm:$0xff]
    %v7611 = vld [vmem:[%s5 + $0x370] sm:$0xff]
    %v7612 = vld [vmem:[%s5 + $0x378] sm:$0xff]
    %v7613 = vld [vmem:[%s5 + $0x380] sm:$0xff]
    %v7614 = vld [vmem:[%s5 + $0x388] sm:$0xff]
    %v7615 = vld [vmem:[%s5 + $0x390] sm:$0xff]
    %v7616 = vld [vmem:[%s5 + $0x398] sm:$0xff]
    %v7617 = vld [vmem:[%s5 + $0x3a0] sm:$0xff]
    %v7618 = vld [vmem:[%s5 + $0x3a8] sm:$0xff]
    %v7619 = vld [vmem:[%s5 + $0x3b0] sm:$0xff]
    %v7620 = vld [vmem:[%s5 + $0x3b8] sm:$0xff]
    %v7621 = vld [vmem:[%s5 + $0x3c0] sm:$0xff]
    %v7622 = vld [vmem:[%s5 + $0x3c8] sm:$0xff]
    %v7623 = vld [vmem:[%s5 + $0x3d0] sm:$0xff]
    %v7624 = vld [vmem:[%s5 + $0x3d8] sm:$0xff]
    %v7625 = vld [vmem:[%s5 + $0x3e0] sm:$0xff]
    %v7626 = vld [vmem:[%s5 + $0x3e8] sm:$0xff]
    %v7627 = vld [vmem:[%s5 + $0x3f0] sm:$0xff]
    %v7628 = vld [vmem:[%s5 + $0x3f8] sm:$0xff]
    %s7629 = scalar_lea.vmem %s5, 1024
    %v7630 = vld [vmem:[%s7629] sm:$0xff]
    %v7631 = vld [vmem:[%s7629 + $0x8] sm:$0xff]
    %v7632 = vld [vmem:[%s7629 + $0x10] sm:$0xff]
    %v7633 = vld [vmem:[%s7629 + $0x18] sm:$0xff]
    %v7634 = vld [vmem:[%s7629 + $0x20] sm:$0xff]
    %v7635 = vld [vmem:[%s7629 + $0x28] sm:$0xff]
    %v7636 = vld [vmem:[%s7629 + $0x30] sm:$0xff]
    %v7637 = vld [vmem:[%s7629 + $0x38] sm:$0xff]
    %v7638 = vld [vmem:[%s7629 + $0x40] sm:$0xff]
    %v7639 = vld [vmem:[%s7629 + $0x48] sm:$0xff]
    %v7640 = vld [vmem:[%s7629 + $0x50] sm:$0xff]
    %v7641 = vld [vmem:[%s7629 + $0x58] sm:$0xff]
    %v7642 = vld [vmem:[%s7629 + $0x60] sm:$0xff]
    %v7643 = vld [vmem:[%s7629 + $0x68] sm:$0xff]
    %v7644 = vld [vmem:[%s7629 + $0x70] sm:$0xff]
    %v7645 = vld [vmem:[%s7629 + $0x78] sm:$0xff]
    %v7646 = vld [vmem:[%s7629 + $0x80] sm:$0xff]
    %v7647 = vld [vmem:[%s7629 + $0x88] sm:$0xff]
    %v7648 = vld [vmem:[%s7629 + $0x90] sm:$0xff]
    %v7649 = vld [vmem:[%s7629 + $0x98] sm:$0xff]
    %v7650 = vld [vmem:[%s7629 + $0xa0] sm:$0xff]
    %v7651 = vld [vmem:[%s7629 + $0xa8] sm:$0xff]
    %v7652 = vld [vmem:[%s7629 + $0xb0] sm:$0xff]
    %v7653 = vld [vmem:[%s7629 + $0xb8] sm:$0xff]
    %v7654 = vld [vmem:[%s7629 + $0xc0] sm:$0xff]
    %v7655 = vld [vmem:[%s7629 + $0xc8] sm:$0xff]
    %v7656 = vld [vmem:[%s7629 + $0xd0] sm:$0xff]
    %v7657 = vld [vmem:[%s7629 + $0xd8] sm:$0xff]
    %v7658 = vld [vmem:[%s7629 + $0xe0] sm:$0xff]
    %v7659 = vld [vmem:[%s7629 + $0xe8] sm:$0xff]
    %v7660 = vld [vmem:[%s7629 + $0xf0] sm:$0xff]
    %v7661 = vld [vmem:[%s7629 + $0xf8] sm:$0xff]
    %v7662 = vld [vmem:[%s7629 + $0x100] sm:$0xff]
    %v7663 = vld [vmem:[%s7629 + $0x108] sm:$0xff]
    %v7664 = vld [vmem:[%s7629 + $0x110] sm:$0xff]
    %v7665 = vld [vmem:[%s7629 + $0x118] sm:$0xff]
    %v7666 = vld [vmem:[%s7629 + $0x120] sm:$0xff]
    %v7667 = vld [vmem:[%s7629 + $0x128] sm:$0xff]
    %v7668 = vld [vmem:[%s7629 + $0x130] sm:$0xff]
    %v7669 = vld [vmem:[%s7629 + $0x138] sm:$0xff]
    %v7670 = vld [vmem:[%s7629 + $0x140] sm:$0xff]
    %v7671 = vld [vmem:[%s7629 + $0x148] sm:$0xff]
    %v7672 = vld [vmem:[%s7629 + $0x150] sm:$0xff]
    %v7673 = vld [vmem:[%s7629 + $0x158] sm:$0xff]
    %v7674 = vld [vmem:[%s7629 + $0x160] sm:$0xff]
    %v7675 = vld [vmem:[%s7629 + $0x168] sm:$0xff]
    %v7676 = vld [vmem:[%s7629 + $0x170] sm:$0xff]
    %v7677 = vld [vmem:[%s7629 + $0x178] sm:$0xff]
    %v7678 = vld [vmem:[%s7629 + $0x180] sm:$0xff]
    %v7679 = vld [vmem:[%s7629 + $0x188] sm:$0xff]
    %v7680 = vld [vmem:[%s7629 + $0x190] sm:$0xff]
    %v7681 = vld [vmem:[%s7629 + $0x198] sm:$0xff]
    %v7682 = vld [vmem:[%s7629 + $0x1a0] sm:$0xff]
    %v7683 = vld [vmem:[%s7629 + $0x1a8] sm:$0xff]
    %v7684 = vld [vmem:[%s7629 + $0x1b0] sm:$0xff]
    %v7685 = vld [vmem:[%s7629 + $0x1b8] sm:$0xff]
    %v7686 = vld [vmem:[%s7629 + $0x1c0] sm:$0xff]
    %v7687 = vld [vmem:[%s7629 + $0x1c8] sm:$0xff]
    %v7688 = vld [vmem:[%s7629 + $0x1d0] sm:$0xff]
    %v7689 = vld [vmem:[%s7629 + $0x1d8] sm:$0xff]
    %v7690 = vld [vmem:[%s7629 + $0x1e0] sm:$0xff]
    %v7691 = vld [vmem:[%s7629 + $0x1e8] sm:$0xff]
    %v7692 = vld [vmem:[%s7629 + $0x1f0] sm:$0xff]
    %v7693 = vld [vmem:[%s7629 + $0x1f8] sm:$0xff]
    %v7694 = vld [vmem:[%s7629 + $0x200] sm:$0xff]
    %v7695 = vld [vmem:[%s7629 + $0x208] sm:$0xff]
    %v7696 = vld [vmem:[%s7629 + $0x210] sm:$0xff]
    %v7697 = vld [vmem:[%s7629 + $0x218] sm:$0xff]
    %v7698 = vld [vmem:[%s7629 + $0x220] sm:$0xff]
    %v7699 = vld [vmem:[%s7629 + $0x228] sm:$0xff]
    %v7700 = vld [vmem:[%s7629 + $0x230] sm:$0xff]
    %v7701 = vld [vmem:[%s7629 + $0x238] sm:$0xff]
    %v7702 = vld [vmem:[%s7629 + $0x240] sm:$0xff]
    %v7703 = vld [vmem:[%s7629 + $0x248] sm:$0xff]
    %v7704 = vld [vmem:[%s7629 + $0x250] sm:$0xff]
    %v7705 = vld [vmem:[%s7629 + $0x258] sm:$0xff]
    %v7706 = vld [vmem:[%s7629 + $0x260] sm:$0xff]
    %v7707 = vld [vmem:[%s7629 + $0x268] sm:$0xff]
    %v7708 = vld [vmem:[%s7629 + $0x270] sm:$0xff]
    %v7709 = vld [vmem:[%s7629 + $0x278] sm:$0xff]
    %v7710 = vld [vmem:[%s7629 + $0x280] sm:$0xff]
    %v7711 = vld [vmem:[%s7629 + $0x288] sm:$0xff]
    %v7712 = vld [vmem:[%s7629 + $0x290] sm:$0xff]
    %v7713 = vld [vmem:[%s7629 + $0x298] sm:$0xff]
    %v7714 = vld [vmem:[%s7629 + $0x2a0] sm:$0xff]
    %v7715 = vld [vmem:[%s7629 + $0x2a8] sm:$0xff]
    %v7716 = vld [vmem:[%s7629 + $0x2b0] sm:$0xff]
    %v7717 = vld [vmem:[%s7629 + $0x2b8] sm:$0xff]
    %v7718 = vld [vmem:[%s7629 + $0x2c0] sm:$0xff]
    %v7719 = vld [vmem:[%s7629 + $0x2c8] sm:$0xff]
    %v7720 = vld [vmem:[%s7629 + $0x2d0] sm:$0xff]
    %v7721 = vld [vmem:[%s7629 + $0x2d8] sm:$0xff]
    %v7722 = vld [vmem:[%s7629 + $0x2e0] sm:$0xff]
    %v7723 = vld [vmem:[%s7629 + $0x2e8] sm:$0xff]
    %v7724 = vld [vmem:[%s7629 + $0x2f0] sm:$0xff]
    %v7725 = vld [vmem:[%s7629 + $0x2f8] sm:$0xff]
    %v7726 = vld [vmem:[%s7629 + $0x300] sm:$0xff]
    %v7727 = vld [vmem:[%s7629 + $0x308] sm:$0xff]
    %v7728 = vld [vmem:[%s7629 + $0x310] sm:$0xff]
    %v7729 = vld [vmem:[%s7629 + $0x318] sm:$0xff]
    %v7730 = vld [vmem:[%s7629 + $0x320] sm:$0xff]
    %v7731 = vld [vmem:[%s7629 + $0x328] sm:$0xff]
    %v7732 = vld [vmem:[%s7629 + $0x330] sm:$0xff]
    %v7733 = vld [vmem:[%s7629 + $0x338] sm:$0xff]
    %v7734 = vld [vmem:[%s7629 + $0x340] sm:$0xff]
    %v7735 = vld [vmem:[%s7629 + $0x348] sm:$0xff]
    %v7736 = vld [vmem:[%s7629 + $0x350] sm:$0xff]
    %v7737 = vld [vmem:[%s7629 + $0x358] sm:$0xff]
    %v7738 = vld [vmem:[%s7629 + $0x360] sm:$0xff]
    %v7739 = vld [vmem:[%s7629 + $0x368] sm:$0xff]
    %v7740 = vld [vmem:[%s7629 + $0x370] sm:$0xff]
    %v7741 = vld [vmem:[%s7629 + $0x378] sm:$0xff]
    %v7742 = vld [vmem:[%s7629 + $0x380] sm:$0xff]
    %v7743 = vld [vmem:[%s7629 + $0x388] sm:$0xff]
    %v7744 = vld [vmem:[%s7629 + $0x390] sm:$0xff]
    %v7745 = vld [vmem:[%s7629 + $0x398] sm:$0xff]
    %v7746 = vld [vmem:[%s7629 + $0x3a0] sm:$0xff]
    %v7747 = vld [vmem:[%s7629 + $0x3a8] sm:$0xff]
    %v7748 = vld [vmem:[%s7629 + $0x3b0] sm:$0xff]
    %v7749 = vld [vmem:[%s7629 + $0x3b8] sm:$0xff]
    %v7750 = vld [vmem:[%s7629 + $0x3c0] sm:$0xff]
    %v7751 = vld [vmem:[%s7629 + $0x3c8] sm:$0xff]
    %v7752 = vld [vmem:[%s7629 + $0x3d0] sm:$0xff]
    %v7753 = vld [vmem:[%s7629 + $0x3d8] sm:$0xff]
    %v7754 = vld [vmem:[%s7629 + $0x3e0] sm:$0xff]
    %v7755 = vld [vmem:[%s7629 + $0x3e8] sm:$0xff]
    %v7756 = vld [vmem:[%s7629 + $0x3f0] sm:$0xff]
    %v7757 = vld [vmem:[%s7629 + $0x3f8] sm:$0xff]
    %v7774 = vrot.slane %v7485, 2
    %v7775 = vrot.slane %v7487, 1
    %vm7776 = vcmask 1041409
    %v7777 = vsel %vm7776, %v7775, %v7774
    %vm7778 = vcmask 1042434
    %v7779 = vsel %vm7778, %v7489, %v7777
    %v7780 = vrot.slane %v7491, 7
    %vm7781 = vcmask 1043459
    %v7782 = vsel %vm7781, %v7780, %v7779
    %v7783 = vrot.slane %v7493, 6
    %vm7784 = vcmask 1044484
    %v7785 = vsel %vm7784, %v7783, %v7782
    %v7786 = vrot.slane %v7495, 5
    %vm7787 = vcmask 1045509
    %v7788 = vsel %vm7787, %v7786, %v7785
    %v7789 = vrot.slane %v7497, 4
    %vm7790 = vcmask 1046534
    %v7791 = vsel %vm7790, %v7789, %v7788
    %v7792 = vrot.slane %v7499, 3
    %vm7793 = vcmask 1047559
    %v7794 = vsel %vm7793, %v7792, %v7791
    %v7795 = vrot.slane %v7486, 2
    %v7796 = vrot.slane %v7488, 1
    %v7797 = vsel %vm7776, %v7796, %v7795
    %v7798 = vsel %vm7778, %v7490, %v7797
    %v7799 = vrot.slane %v7492, 7
    %v7800 = vsel %vm7781, %v7799, %v7798
    %v7801 = vrot.slane %v7494, 6
    %v7802 = vsel %vm7784, %v7801, %v7800
    %v7803 = vrot.slane %v7496, 5
    %v7804 = vsel %vm7787, %v7803, %v7802
    %v7805 = vrot.slane %v7498, 4
    %v7806 = vsel %vm7790, %v7805, %v7804
    %v7807 = vrot.slane %v7500, 3
    %v7808 = vsel %vm7793, %v7807, %v7806
    %7811 = vmatprep.subr.mxu0 %v7631
    %7812 = vmatpush1.msra.mxu0 %v7630
    %7813 = vmatprep.subr.mxu0 %v7635
    %7814 = vmatpush1.msra.mxu0 %v7634
    %7815 = vmatprep.subr.mxu0 %v7639
    %7816 = vmatpush1.msra.mxu0 %v7638
    %7817 = vmatprep.subr.mxu0 %v7643
    %7818 = vmatpush1.msra.mxu0 %v7642
    %7819 = vmatprep.subr.mxu0 %v7647
    %7820 = vmatpush1.msra.mxu0 %v7646
    %7821 = vmatprep.subr.mxu0 %v7651
    %7822 = vmatpush1.msra.mxu0 %v7650
    %7823 = vmatprep.subr.mxu0 %v7655
    %7824 = vmatpush1.msra.mxu0 %v7654
    %7825 = vmatprep.subr.mxu0 %v7659
    %7826 = vmatpush1.msra.mxu0 %v7658
    %7827 = vmatprep.subr.mxu0 %v7663
    %7828 = vmatpush1.msra.mxu0 %v7662
    %7829 = vmatprep.subr.mxu0 %v7667
    %7830 = vmatpush1.msra.mxu0 %v7666
    %7831 = vmatprep.subr.mxu0 %v7671
    %7832 = vmatpush1.msra.mxu0 %v7670
    %7833 = vmatprep.subr.mxu0 %v7675
    %7834 = vmatpush1.msra.mxu0 %v7674
    %7835 = vmatprep.subr.mxu0 %v7679
    %7836 = vmatpush1.msra.mxu0 %v7678
    %7837 = vmatprep.subr.mxu0 %v7683
    %7838 = vmatpush1.msra.mxu0 %v7682
    %7839 = vmatprep.subr.mxu0 %v7687
    %7840 = vmatpush1.msra.mxu0 %v7686
    %7841 = vmatprep.subr.mxu0 %v7691
    %7842 = vmatpush1.msra.mxu0 %v7690
    %7843 = vmatprep.subr.mxu0 %v7695
    %7844 = vmatpush1.msra.mxu0 %v7694
    %7845 = vmatprep.subr.mxu0 %v7699
    %7846 = vmatpush1.msra.mxu0 %v7698
    %7847 = vmatprep.subr.mxu0 %v7703
    %7848 = vmatpush1.msra.mxu0 %v7702
    %7849 = vmatprep.subr.mxu0 %v7707
    %7850 = vmatpush1.msra.mxu0 %v7706
    %7851 = vmatprep.subr.mxu0 %v7711
    %7852 = vmatpush1.msra.mxu0 %v7710
    %7853 = vmatprep.subr.mxu0 %v7715
    %7854 = vmatpush1.msra.mxu0 %v7714
    %7855 = vmatprep.subr.mxu0 %v7719
    %7856 = vmatpush1.msra.mxu0 %v7718
    %7857 = vmatprep.subr.mxu0 %v7723
    %7858 = vmatpush1.msra.mxu0 %v7722
    %7859 = vmatprep.subr.mxu0 %v7727
    %7860 = vmatpush1.msra.mxu0 %v7726
    %7861 = vmatprep.subr.mxu0 %v7731
    %7862 = vmatpush1.msra.mxu0 %v7730
    %7863 = vmatprep.subr.mxu0 %v7735
    %7864 = vmatpush1.msra.mxu0 %v7734
    %7865 = vmatprep.subr.mxu0 %v7739
    %7866 = vmatpush1.msra.mxu0 %v7738
    %7867 = vmatprep.subr.mxu0 %v7743
    %7868 = vmatpush1.msra.mxu0 %v7742
    %7869 = vmatprep.subr.mxu0 %v7747
    %7870 = vmatpush1.msra.mxu0 %v7746
    %7871 = vmatprep.subr.mxu0 %v7751
    %7872 = vmatpush1.msra.mxu0 %v7750
    %7873 = vmatprep.subr.mxu0 %v7755
    %7874 = vmatpush1.msra.mxu0 %v7754
    %7875 = vmatprep.mubr.f32.mxu0 %v7808
    %7876 = vmatmul.mubr.f32.gmra.mrb[0].mxu0 %v7794
    %v7877 = vpop.f32.mrb[0].mxu0
    %v7878 = vadd.f32 0.0, %v7877
    %v7879 = vpop.f32.mrb[0].mxu0
    %v7880 = vadd.f32 0.0, %v7879
    %7881 = vdwg.mxu0
    %7882 = vmatprep.subr.mxu0 %v7633
    %7883 = vmatpush1.msra.mxu0 %v7632
    %7884 = vmatprep.subr.mxu0 %v7637
    %7885 = vmatpush1.msra.mxu0 %v7636
    %7886 = vmatprep.subr.mxu0 %v7641
    %7887 = vmatpush1.msra.mxu0 %v7640
    %7888 = vmatprep.subr.mxu0 %v7645
    %7889 = vmatpush1.msra.mxu0 %v7644
    %7890 = vmatprep.subr.mxu0 %v7649
    %7891 = vmatpush1.msra.mxu0 %v7648
    %7892 = vmatprep.subr.mxu0 %v7653
    %7893 = vmatpush1.msra.mxu0 %v7652
    %7894 = vmatprep.subr.mxu0 %v7657
    %7895 = vmatpush1.msra.mxu0 %v7656
    %7896 = vmatprep.subr.mxu0 %v7661
    %7897 = vmatpush1.msra.mxu0 %v7660
    %7898 = vmatprep.subr.mxu0 %v7665
    %7899 = vmatpush1.msra.mxu0 %v7664
    %7900 = vmatprep.subr.mxu0 %v7669
    %7901 = vmatpush1.msra.mxu0 %v7668
    %7902 = vmatprep.subr.mxu0 %v7673
    %7903 = vmatpush1.msra.mxu0 %v7672
    %7904 = vmatprep.subr.mxu0 %v7677
    %7905 = vmatpush1.msra.mxu0 %v7676
    %7906 = vmatprep.subr.mxu0 %v7681
    %7907 = vmatpush1.msra.mxu0 %v7680
    %7908 = vmatprep.subr.mxu0 %v7685
    %7909 = vmatpush1.msra.mxu0 %v7684
    %7910 = vmatprep.subr.mxu0 %v7689
    %7911 = vmatpush1.msra.mxu0 %v7688
    %7912 = vmatprep.subr.mxu0 %v7693
    %7913 = vmatpush1.msra.mxu0 %v7692
    %7914 = vmatprep.subr.mxu0 %v7697
    %7915 = vmatpush1.msra.mxu0 %v7696
    %7916 = vmatprep.subr.mxu0 %v7701
    %7917 = vmatpush1.msra.mxu0 %v7700
    %7918 = vmatprep.subr.mxu0 %v7705
    %7919 = vmatpush1.msra.mxu0 %v7704
    %7920 = vmatprep.subr.mxu0 %v7709
    %7921 = vmatpush1.msra.mxu0 %v7708
    %7922 = vmatprep.subr.mxu0 %v7713
    %7923 = vmatpush1.msra.mxu0 %v7712
    %7924 = vmatprep.subr.mxu0 %v7717
    %7925 = vmatpush1.msra.mxu0 %v7716
    %7926 = vmatprep.subr.mxu0 %v7721
    %7927 = vmatpush1.msra.mxu0 %v7720
    %7928 = vmatprep.subr.mxu0 %v7725
    %7929 = vmatpush1.msra.mxu0 %v7724
    %7930 = vmatprep.subr.mxu0 %v7729
    %7931 = vmatpush1.msra.mxu0 %v7728
    %7932 = vmatprep.subr.mxu0 %v7733
    %7933 = vmatpush1.msra.mxu0 %v7732
    %7934 = vmatprep.subr.mxu0 %v7737
    %7935 = vmatpush1.msra.mxu0 %v7736
    %7936 = vmatprep.subr.mxu0 %v7741
    %7937 = vmatpush1.msra.mxu0 %v7740
    %7938 = vmatprep.subr.mxu0 %v7745
    %7939 = vmatpush1.msra.mxu0 %v7744
    %7940 = vmatprep.subr.mxu0 %v7749
    %7941 = vmatpush1.msra.mxu0 %v7748
    %7942 = vmatprep.subr.mxu0 %v7753
    %7943 = vmatpush1.msra.mxu0 %v7752
    %7944 = vmatprep.subr.mxu0 %v7757
    %7945 = vmatpush1.msra.mxu0 %v7756
    %7946 = vmatprep.mubr.f32.mxu0 %v7808
    %7947 = vmatmul.mubr.f32.gmra.mrb[0].mxu0 %v7794
    %v7948 = vpop.f32.mrb[0].mxu0
    %v7949 = vadd.f32 0.0, %v7948
    %v7950 = vpop.f32.mrb[0].mxu0
    %v7951 = vadd.f32 0.0, %v7950
    %7952 = vdwg.mxu0
    %v7953 = vrot.slane %v7487, 7
    %v7954 = vsel %vm7776, %v7953, %v7485
    %v7955 = vrot.slane %v7489, 6
    %v7956 = vsel %vm7778, %v7955, %v7954
    %v7957 = vrot.slane %v7491, 5
    %v7958 = vsel %vm7781, %v7957, %v7956
    %v7959 = vrot.slane %v7493, 4
    %v7960 = vsel %vm7784, %v7959, %v7958
    %v7961 = vrot.slane %v7495, 3
    %v7962 = vsel %vm7787, %v7961, %v7960
    %v7963 = vrot.slane %v7497, 2
    %v7964 = vsel %vm7790, %v7963, %v7962
    %v7965 = vrot.slane %v7499, 1
    %v7966 = vsel %vm7793, %v7965, %v7964
    %v7967 = vrot.slane %v7488, 7
    %v7968 = vsel %vm7776, %v7967, %v7486
    %v7969 = vrot.slane %v7490, 6
    %v7970 = vsel %vm7778, %v7969, %v7968
    %v7971 = vrot.slane %v7492, 5
    %v7972 = vsel %vm7781, %v7971, %v7970
    %v7973 = vrot.slane %v7494, 4
    %v7974 = vsel %vm7784, %v7973, %v7972
    %v7975 = vrot.slane %v7496, 3
    %v7976 = vsel %vm7787, %v7975, %v7974
    %v7977 = vrot.slane %v7498, 2
    %v7978 = vsel %vm7790, %v7977, %v7976
    %v7979 = vrot.slane %v7500, 1
    %v7980 = vsel %vm7793, %v7979, %v7978
    %7983 = vmatprep.subr.mxu0 %v7502
    %7984 = vmatpush1.msra.mxu0 %v7501
    %7985 = vmatprep.subr.mxu0 %v7506
    %7986 = vmatpush1.msra.mxu0 %v7505
    %7987 = vmatprep.subr.mxu0 %v7510
    %7988 = vmatpush1.msra.mxu0 %v7509
    %7989 = vmatprep.subr.mxu0 %v7514
    %7990 = vmatpush1.msra.mxu0 %v7513
    %7991 = vmatprep.subr.mxu0 %v7518
    %7992 = vmatpush1.msra.mxu0 %v7517
    %7993 = vmatprep.subr.mxu0 %v7522
    %7994 = vmatpush1.msra.mxu0 %v7521
    %7995 = vmatprep.subr.mxu0 %v7526
    %7996 = vmatpush1.msra.mxu0 %v7525
    %7997 = vmatprep.subr.mxu0 %v7530
    %7998 = vmatpush1.msra.mxu0 %v7529
    %7999 = vmatprep.subr.mxu0 %v7534
    %8000 = vmatpush1.msra.mxu0 %v7533
    %8001 = vmatprep.subr.mxu0 %v7538
    %8002 = vmatpush1.msra.mxu0 %v7537
    %8003 = vmatprep.subr.mxu0 %v7542
    %8004 = vmatpush1.msra.mxu0 %v7541
    %8005 = vmatprep.subr.mxu0 %v7546
    %8006 = vmatpush1.msra.mxu0 %v7545
    %8007 = vmatprep.subr.mxu0 %v7550
    %8008 = vmatpush1.msra.mxu0 %v7549
    %8009 = vmatprep.subr.mxu0 %v7554
    %8010 = vmatpush1.msra.mxu0 %v7553
    %8011 = vmatprep.subr.mxu0 %v7558
    %8012 = vmatpush1.msra.mxu0 %v7557
    %8013 = vmatprep.subr.mxu0 %v7562
    %8014 = vmatpush1.msra.mxu0 %v7561
    %8015 = vmatprep.subr.mxu0 %v7566
    %8016 = vmatpush1.msra.mxu0 %v7565
    %8017 = vmatprep.subr.mxu0 %v7570
    %8018 = vmatpush1.msra.mxu0 %v7569
    %8019 = vmatprep.subr.mxu0 %v7574
    %8020 = vmatpush1.msra.mxu0 %v7573
    %8021 = vmatprep.subr.mxu0 %v7578
    %8022 = vmatpush1.msra.mxu0 %v7577
    %8023 = vmatprep.subr.mxu0 %v7582
    %8024 = vmatpush1.msra.mxu0 %v7581
    %8025 = vmatprep.subr.mxu0 %v7586
    %8026 = vmatpush1.msra.mxu0 %v7585
    %8027 = vmatprep.subr.mxu0 %v7590
    %8028 = vmatpush1.msra.mxu0 %v7589
    %8029 = vmatprep.subr.mxu0 %v7594
    %8030 = vmatpush1.msra.mxu0 %v7593
    %8031 = vmatprep.subr.mxu0 %v7598
    %8032 = vmatpush1.msra.mxu0 %v7597
    %8033 = vmatprep.subr.mxu0 %v7602
    %8034 = vmatpush1.msra.mxu0 %v7601
    %8035 = vmatprep.subr.mxu0 %v7606
    %8036 = vmatpush1.msra.mxu0 %v7605
    %8037 = vmatprep.subr.mxu0 %v7610
    %8038 = vmatpush1.msra.mxu0 %v7609
    %8039 = vmatprep.subr.mxu0 %v7614
    %8040 = vmatpush1.msra.mxu0 %v7613
    %8041 = vmatprep.subr.mxu0 %v7618
    %8042 = vmatpush1.msra.mxu0 %v7617
    %8043 = vmatprep.subr.mxu0 %v7622
    %8044 = vmatpush1.msra.mxu0 %v7621
    %8045 = vmatprep.subr.mxu0 %v7626
    %8046 = vmatpush1.msra.mxu0 %v7625
    %8047 = vmatprep.mubr.f32.mxu0 %v7980
    %8048 = vmatmul.mubr.f32.gmra.mrb[0].mxu0 %v7966
    %v8049 = vpop.f32.mrb[0].mxu0
    %v8050 = vadd.f32 %v7878, %v8049
    %v8051 = vpop.f32.mrb[0].mxu0
    %v8052 = vadd.f32 %v7880, %v8051
    %8053 = vdwg.mxu0
    %8054 = vmatprep.subr.mxu0 %v7504
    %8055 = vmatpush1.msra.mxu0 %v7503
    %8056 = vmatprep.subr.mxu0 %v7508
    %8057 = vmatpush1.msra.mxu0 %v7507
    %8058 = vmatprep.subr.mxu0 %v7512
    %8059 = vmatpush1.msra.mxu0 %v7511
    %8060 = vmatprep.subr.mxu0 %v7516
    %8061 = vmatpush1.msra.mxu0 %v7515
    %8062 = vmatprep.subr.mxu0 %v7520
    %8063 = vmatpush1.msra.mxu0 %v7519
    %8064 = vmatprep.subr.mxu0 %v7524
    %8065 = vmatpush1.msra.mxu0 %v7523
    %8066 = vmatprep.subr.mxu0 %v7528
    %8067 = vmatpush1.msra.mxu0 %v7527
    %8068 = vmatprep.subr.mxu0 %v7532
    %8069 = vmatpush1.msra.mxu0 %v7531
    %8070 = vmatprep.subr.mxu0 %v7536
    %8071 = vmatpush1.msra.mxu0 %v7535
    %8072 = vmatprep.subr.mxu0 %v7540
    %8073 = vmatpush1.msra.mxu0 %v7539
    %8074 = vmatprep.subr.mxu0 %v7544
    %8075 = vmatpush1.msra.mxu0 %v7543
    %8076 = vmatprep.subr.mxu0 %v7548
    %8077 = vmatpush1.msra.mxu0 %v7547
    %8078 = vmatprep.subr.mxu0 %v7552
    %8079 = vmatpush1.msra.mxu0 %v7551
    %8080 = vmatprep.subr.mxu0 %v7556
    %8081 = vmatpush1.msra.mxu0 %v7555
    %8082 = vmatprep.subr.mxu0 %v7560
    %8083 = vmatpush1.msra.mxu0 %v7559
    %8084 = vmatprep.subr.mxu0 %v7564
    %8085 = vmatpush1.msra.mxu0 %v7563
    %8086 = vmatprep.subr.mxu0 %v7568
    %8087 = vmatpush1.msra.mxu0 %v7567
    %8088 = vmatprep.subr.mxu0 %v7572
    %8089 = vmatpush1.msra.mxu0 %v7571
    %8090 = vmatprep.subr.mxu0 %v7576
    %8091 = vmatpush1.msra.mxu0 %v7575
    %8092 = vmatprep.subr.mxu0 %v7580
    %8093 = vmatpush1.msra.mxu0 %v7579
    %8094 = vmatprep.subr.mxu0 %v7584
    %8095 = vmatpush1.msra.mxu0 %v7583
    %8096 = vmatprep.subr.mxu0 %v7588
    %8097 = vmatpush1.msra.mxu0 %v7587
    %8098 = vmatprep.subr.mxu0 %v7592
    %8099 = vmatpush1.msra.mxu0 %v7591
    %8100 = vmatprep.subr.mxu0 %v7596
    %8101 = vmatpush1.msra.mxu0 %v7595
    %8102 = vmatprep.subr.mxu0 %v7600
    %8103 = vmatpush1.msra.mxu0 %v7599
    %8104 = vmatprep.subr.mxu0 %v7604
    %8105 = vmatpush1.msra.mxu0 %v7603
    %8106 = vmatprep.subr.mxu0 %v7608
    %8107 = vmatpush1.msra.mxu0 %v7607
    %8108 = vmatprep.subr.mxu0 %v7612
    %8109 = vmatpush1.msra.mxu0 %v7611
    %8110 = vmatprep.subr.mxu0 %v7616
    %8111 = vmatpush1.msra.mxu0 %v7615
    %8112 = vmatprep.subr.mxu0 %v7620
    %8113 = vmatpush1.msra.mxu0 %v7619
    %8114 = vmatprep.subr.mxu0 %v7624
    %8115 = vmatpush1.msra.mxu0 %v7623
    %8116 = vmatprep.subr.mxu0 %v7628
    %8117 = vmatpush1.msra.mxu0 %v7627
    %8118 = vmatprep.mubr.f32.mxu0 %v7980
    %8119 = vmatmul.mubr.f32.gmra.mrb[0].mxu0 %v7966
    %v8120 = vpop.f32.mrb[0].mxu0
    %v8121 = vadd.f32 %v7949, %v8120
    %v8122 = vpop.f32.mrb[0].mxu0
    %v8123 = vadd.f32 %v7951, %v8122
    %8124 = vdwg.mxu0
    %s8125 = scalar_lea.vmem %s5, 2048
    %v8126 = vld [vmem:[%s8125] sm:$0xff]
    %v8127 = vld [vmem:[%s8125 + $0x8] sm:$0xff]
    %v8128 = vld [vmem:[%s8125 + $0x10] sm:$0xff]
    %v8129 = vld [vmem:[%s8125 + $0x18] sm:$0xff]
    %v8130 = vld [vmem:[%s8125 + $0x20] sm:$0xff]
    %v8131 = vld [vmem:[%s8125 + $0x28] sm:$0xff]
    %v8132 = vld [vmem:[%s8125 + $0x30] sm:$0xff]
    %v8133 = vld [vmem:[%s8125 + $0x38] sm:$0xff]
    %v8134 = vld [vmem:[%s8125 + $0x40] sm:$0xff]
    %v8135 = vld [vmem:[%s8125 + $0x48] sm:$0xff]
    %v8136 = vld [vmem:[%s8125 + $0x50] sm:$0xff]
    %v8137 = vld [vmem:[%s8125 + $0x58] sm:$0xff]
    %v8138 = vld [vmem:[%s8125 + $0x60] sm:$0xff]
    %v8139 = vld [vmem:[%s8125 + $0x68] sm:$0xff]
    %v8140 = vld [vmem:[%s8125 + $0x70] sm:$0xff]
    %v8141 = vld [vmem:[%s8125 + $0x78] sm:$0xff]
    %v8142 = vld [vmem:[%s8125 + $0x80] sm:$0xff]
    %v8143 = vld [vmem:[%s8125 + $0x88] sm:$0xff]
    %v8144 = vld [vmem:[%s8125 + $0x90] sm:$0xff]
    %v8145 = vld [vmem:[%s8125 + $0x98] sm:$0xff]
    %v8146 = vld [vmem:[%s8125 + $0xa0] sm:$0xff]
    %v8147 = vld [vmem:[%s8125 + $0xa8] sm:$0xff]
    %v8148 = vld [vmem:[%s8125 + $0xb0] sm:$0xff]
    %v8149 = vld [vmem:[%s8125 + $0xb8] sm:$0xff]
    %v8150 = vld [vmem:[%s8125 + $0xc0] sm:$0xff]
    %v8151 = vld [vmem:[%s8125 + $0xc8] sm:$0xff]
    %v8152 = vld [vmem:[%s8125 + $0xd0] sm:$0xff]
    %v8153 = vld [vmem:[%s8125 + $0xd8] sm:$0xff]
    %v8154 = vld [vmem:[%s8125 + $0xe0] sm:$0xff]
    %v8155 = vld [vmem:[%s8125 + $0xe8] sm:$0xff]
    %v8156 = vld [vmem:[%s8125 + $0xf0] sm:$0xff]
    %v8157 = vld [vmem:[%s8125 + $0xf8] sm:$0xff]
    %v8158 = vld [vmem:[%s8125 + $0x100] sm:$0xff]
    %v8159 = vld [vmem:[%s8125 + $0x108] sm:$0xff]
    %v8160 = vld [vmem:[%s8125 + $0x110] sm:$0xff]
    %v8161 = vld [vmem:[%s8125 + $0x118] sm:$0xff]
    %v8162 = vld [vmem:[%s8125 + $0x120] sm:$0xff]
    %v8163 = vld [vmem:[%s8125 + $0x128] sm:$0xff]
    %v8164 = vld [vmem:[%s8125 + $0x130] sm:$0xff]
    %v8165 = vld [vmem:[%s8125 + $0x138] sm:$0xff]
    %v8166 = vld [vmem:[%s8125 + $0x140] sm:$0xff]
    %v8167 = vld [vmem:[%s8125 + $0x148] sm:$0xff]
    %v8168 = vld [vmem:[%s8125 + $0x150] sm:$0xff]
    %v8169 = vld [vmem:[%s8125 + $0x158] sm:$0xff]
    %v8170 = vld [vmem:[%s8125 + $0x160] sm:$0xff]
    %v8171 = vld [vmem:[%s8125 + $0x168] sm:$0xff]
    %v8172 = vld [vmem:[%s8125 + $0x170] sm:$0xff]
    %v8173 = vld [vmem:[%s8125 + $0x178] sm:$0xff]
    %v8174 = vld [vmem:[%s8125 + $0x180] sm:$0xff]
    %v8175 = vld [vmem:[%s8125 + $0x188] sm:$0xff]
    %v8176 = vld [vmem:[%s8125 + $0x190] sm:$0xff]
    %v8177 = vld [vmem:[%s8125 + $0x198] sm:$0xff]
    %v8178 = vld [vmem:[%s8125 + $0x1a0] sm:$0xff]
    %v8179 = vld [vmem:[%s8125 + $0x1a8] sm:$0xff]
    %v8180 = vld [vmem:[%s8125 + $0x1b0] sm:$0xff]
    %v8181 = vld [vmem:[%s8125 + $0x1b8] sm:$0xff]
    %v8182 = vld [vmem:[%s8125 + $0x1c0] sm:$0xff]
    %v8183 = vld [vmem:[%s8125 + $0x1c8] sm:$0xff]
    %v8184 = vld [vmem:[%s8125 + $0x1d0] sm:$0xff]
    %v8185 = vld [vmem:[%s8125 + $0x1d8] sm:$0xff]
    %v8186 = vld [vmem:[%s8125 + $0x1e0] sm:$0xff]
    %v8187 = vld [vmem:[%s8125 + $0x1e8] sm:$0xff]
    %v8188 = vld [vmem:[%s8125 + $0x1f0] sm:$0xff]
    %v8189 = vld [vmem:[%s8125 + $0x1f8] sm:$0xff]
    %v8190 = vld [vmem:[%s8125 + $0x200] sm:$0xff]
    %v8191 = vld [vmem:[%s8125 + $0x208] sm:$0xff]
    %v8192 = vld [vmem:[%s8125 + $0x210] sm:$0xff]
    %v8193 = vld [vmem:[%s8125 + $0x218] sm:$0xff]
    %v8194 = vld [vmem:[%s8125 + $0x220] sm:$0xff]
    %v8195 = vld [vmem:[%s8125 + $0x228] sm:$0xff]
    %v8196 = vld [vmem:[%s8125 + $0x230] sm:$0xff]
    %v8197 = vld [vmem:[%s8125 + $0x238] sm:$0xff]
    %v8198 = vld [vmem:[%s8125 + $0x240] sm:$0xff]
    %v8199 = vld [vmem:[%s8125 + $0x248] sm:$0xff]
    %v8200 = vld [vmem:[%s8125 + $0x250] sm:$0xff]
    %v8201 = vld [vmem:[%s8125 + $0x258] sm:$0xff]
    %v8202 = vld [vmem:[%s8125 + $0x260] sm:$0xff]
    %v8203 = vld [vmem:[%s8125 + $0x268] sm:$0xff]
    %v8204 = vld [vmem:[%s8125 + $0x270] sm:$0xff]
    %v8205 = vld [vmem:[%s8125 + $0x278] sm:$0xff]
    %v8206 = vld [vmem:[%s8125 + $0x280] sm:$0xff]
    %v8207 = vld [vmem:[%s8125 + $0x288] sm:$0xff]
    %v8208 = vld [vmem:[%s8125 + $0x290] sm:$0xff]
    %v8209 = vld [vmem:[%s8125 + $0x298] sm:$0xff]
    %v8210 = vld [vmem:[%s8125 + $0x2a0] sm:$0xff]
    %v8211 = vld [vmem:[%s8125 + $0x2a8] sm:$0xff]
    %v8212 = vld [vmem:[%s8125 + $0x2b0] sm:$0xff]
    %v8213 = vld [vmem:[%s8125 + $0x2b8] sm:$0xff]
    %v8214 = vld [vmem:[%s8125 + $0x2c0] sm:$0xff]
    %v8215 = vld [vmem:[%s8125 + $0x2c8] sm:$0xff]
    %v8216 = vld [vmem:[%s8125 + $0x2d0] sm:$0xff]
    %v8217 = vld [vmem:[%s8125 + $0x2d8] sm:$0xff]
    %v8218 = vld [vmem:[%s8125 + $0x2e0] sm:$0xff]
    %v8219 = vld [vmem:[%s8125 + $0x2e8] sm:$0xff]
    %v8220 = vld [vmem:[%s8125 + $0x2f0] sm:$0xff]
    %v8221 = vld [vmem:[%s8125 + $0x2f8] sm:$0xff]
    %v8222 = vld [vmem:[%s8125 + $0x300] sm:$0xff]
    %v8223 = vld [vmem:[%s8125 + $0x308] sm:$0xff]
    %v8224 = vld [vmem:[%s8125 + $0x310] sm:$0xff]
    %v8225 = vld [vmem:[%s8125 + $0x318] sm:$0xff]
    %v8226 = vld [vmem:[%s8125 + $0x320] sm:$0xff]
    %v8227 = vld [vmem:[%s8125 + $0x328] sm:$0xff]
    %v8228 = vld [vmem:[%s8125 + $0x330] sm:$0xff]
    %v8229 = vld [vmem:[%s8125 + $0x338] sm:$0xff]
    %v8230 = vld [vmem:[%s8125 + $0x340] sm:$0xff]
    %v8231 = vld [vmem:[%s8125 + $0x348] sm:$0xff]
    %v8232 = vld [vmem:[%s8125 + $0x350] sm:$0xff]
    %v8233 = vld [vmem:[%s8125 + $0x358] sm:$0xff]
    %v8234 = vld [vmem:[%s8125 + $0x360] sm:$0xff]
    %v8235 = vld [vmem:[%s8125 + $0x368] sm:$0xff]
    %v8236 = vld [vmem:[%s8125 + $0x370] sm:$0xff]
    %v8237 = vld [vmem:[%s8125 + $0x378] sm:$0xff]
    %v8238 = vld [vmem:[%s8125 + $0x380] sm:$0xff]
    %v8239 = vld [vmem:[%s8125 + $0x388] sm:$0xff]
    %v8240 = vld [vmem:[%s8125 + $0x390] sm:$0xff]
    %v8241 = vld [vmem:[%s8125 + $0x398] sm:$0xff]
    %v8242 = vld [vmem:[%s8125 + $0x3a0] sm:$0xff]
    %v8243 = vld [vmem:[%s8125 + $0x3a8] sm:$0xff]
    %v8244 = vld [vmem:[%s8125 + $0x3b0] sm:$0xff]
    %v8245 = vld [vmem:[%s8125 + $0x3b8] sm:$0xff]
    %v8246 = vld [vmem:[%s8125 + $0x3c0] sm:$0xff]
    %v8247 = vld [vmem:[%s8125 + $0x3c8] sm:$0xff]
    %v8248 = vld [vmem:[%s8125 + $0x3d0] sm:$0xff]
    %v8249 = vld [vmem:[%s8125 + $0x3d8] sm:$0xff]
    %v8250 = vld [vmem:[%s8125 + $0x3e0] sm:$0xff]
    %v8251 = vld [vmem:[%s8125 + $0x3e8] sm:$0xff]
    %v8252 = vld [vmem:[%s8125 + $0x3f0] sm:$0xff]
    %v8253 = vld [vmem:[%s8125 + $0x3f8] sm:$0xff]
    %v8254 = vrot.slane %v7485, 4
    %v8255 = vrot.slane %v7487, 3
    %v8256 = vsel %vm7776, %v8255, %v8254
    %v8257 = vrot.slane %v7489, 2
    %v8258 = vsel %vm7778, %v8257, %v8256
    %v8259 = vrot.slane %v7491, 1
    %v8260 = vsel %vm7781, %v8259, %v8258
    %v8261 = vsel %vm7784, %v7493, %v8260
    %v8262 = vrot.slane %v7495, 7
    %v8263 = vsel %vm7787, %v8262, %v8261
    %v8264 = vrot.slane %v7497, 6
    %v8265 = vsel %vm7790, %v8264, %v8263
    %v8266 = vrot.slane %v7499, 5
    %v8267 = vsel %vm7793, %v8266, %v8265
    %v8268 = vrot.slane %v7486, 4
    %v8269 = vrot.slane %v7488, 3
    %v8270 = vsel %vm7776, %v8269, %v8268
    %v8271 = vrot.slane %v7490, 2
    %v8272 = vsel %vm7778, %v8271, %v8270
    %v8273 = vrot.slane %v7492, 1
    %v8274 = vsel %vm7781, %v8273, %v8272
    %v8275 = vsel %vm7784, %v7494, %v8274
    %v8276 = vrot.slane %v7496, 7
    %v8277 = vsel %vm7787, %v8276, %v8275
    %v8278 = vrot.slane %v7498, 6
    %v8279 = vsel %vm7790, %v8278, %v8277
    %v8280 = vrot.slane %v7500, 5
    %v8281 = vsel %vm7793, %v8280, %v8279
    %8284 = vmatprep.subr.mxu0 %v8127
    %8285 = vmatpush1.msra.mxu0 %v8126
    %8286 = vmatprep.subr.mxu0 %v8131
    %8287 = vmatpush1.msra.mxu0 %v8130
    %8288 = vmatprep.subr.mxu0 %v8135
    %8289 = vmatpush1.msra.mxu0 %v8134
    %8290 = vmatprep.subr.mxu0 %v8139
    %8291 = vmatpush1.msra.mxu0 %v8138
    %8292 = vmatprep.subr.mxu0 %v8143
    %8293 = vmatpush1.msra.mxu0 %v8142
    %8294 = vmatprep.subr.mxu0 %v8147
    %8295 = vmatpush1.msra.mxu0 %v8146
    %8296 = vmatprep.subr.mxu0 %v8151
    %8297 = vmatpush1.msra.mxu0 %v8150
    %8298 = vmatprep.subr.mxu0 %v8155
    %8299 = vmatpush1.msra.mxu0 %v8154
    %8300 = vmatprep.subr.mxu0 %v8159
    %8301 = vmatpush1.msra.mxu0 %v8158
    %8302 = vmatprep.subr.mxu0 %v8163
    %8303 = vmatpush1.msra.mxu0 %v8162
    %8304 = vmatprep.subr.mxu0 %v8167
    %8305 = vmatpush1.msra.mxu0 %v8166
    %8306 = vmatprep.subr.mxu0 %v8171
    %8307 = vmatpush1.msra.mxu0 %v8170
    %8308 = vmatprep.subr.mxu0 %v8175
    %8309 = vmatpush1.msra.mxu0 %v8174
    %8310 = vmatprep.subr.mxu0 %v8179
    %8311 = vmatpush1.msra.mxu0 %v8178
    %8312 = vmatprep.subr.mxu0 %v8183
    %8313 = vmatpush1.msra.mxu0 %v8182
    %8314 = vmatprep.subr.mxu0 %v8187
    %8315 = vmatpush1.msra.mxu0 %v8186
    %8316 = vmatprep.subr.mxu0 %v8191
    %8317 = vmatpush1.msra.mxu0 %v8190
    %8318 = vmatprep.subr.mxu0 %v8195
    %8319 = vmatpush1.msra.mxu0 %v8194
    %8320 = vmatprep.subr.mxu0 %v8199
    %8321 = vmatpush1.msra.mxu0 %v8198
    %8322 = vmatprep.subr.mxu0 %v8203
    %8323 = vmatpush1.msra.mxu0 %v8202
    %8324 = vmatprep.subr.mxu0 %v8207
    %8325 = vmatpush1.msra.mxu0 %v8206
    %8326 = vmatprep.subr.mxu0 %v8211
    %8327 = vmatpush1.msra.mxu0 %v8210
    %8328 = vmatprep.subr.mxu0 %v8215
    %8329 = vmatpush1.msra.mxu0 %v8214
    %8330 = vmatprep.subr.mxu0 %v8219
    %8331 = vmatpush1.msra.mxu0 %v8218
    %8332 = vmatprep.subr.mxu0 %v8223
    %8333 = vmatpush1.msra.mxu0 %v8222
    %8334 = vmatprep.subr.mxu0 %v8227
    %8335 = vmatpush1.msra.mxu0 %v8226
    %8336 = vmatprep.subr.mxu0 %v8231
    %8337 = vmatpush1.msra.mxu0 %v8230
    %8338 = vmatprep.subr.mxu0 %v8235
    %8339 = vmatpush1.msra.mxu0 %v8234
    %8340 = vmatprep.subr.mxu0 %v8239
    %8341 = vmatpush1.msra.mxu0 %v8238
    %8342 = vmatprep.subr.mxu0 %v8243
    %8343 = vmatpush1.msra.mxu0 %v8242
    %8344 = vmatprep.subr.mxu0 %v8247
    %8345 = vmatpush1.msra.mxu0 %v8246
    %8346 = vmatprep.subr.mxu0 %v8251
    %8347 = vmatpush1.msra.mxu0 %v8250
    %8348 = vmatprep.mubr.f32.mxu0 %v8281
    %8349 = vmatmul.mubr.f32.gmra.mrb[0].mxu0 %v8267
    %v8350 = vpop.f32.mrb[0].mxu0
    %v8351 = vadd.f32 0.0, %v8350
    %v8352 = vpop.f32.mrb[0].mxu0
    %v8353 = vadd.f32 0.0, %v8352
    %8354 = vdwg.mxu0
    %8355 = vmatprep.subr.mxu0 %v8129
    %8356 = vmatpush1.msra.mxu0 %v8128
    %8357 = vmatprep.subr.mxu0 %v8133
    %8358 = vmatpush1.msra.mxu0 %v8132
    %8359 = vmatprep.subr.mxu0 %v8137
    %8360 = vmatpush1.msra.mxu0 %v8136
    %8361 = vmatprep.subr.mxu0 %v8141
    %8362 = vmatpush1.msra.mxu0 %v8140
    %8363 = vmatprep.subr.mxu0 %v8145
    %8364 = vmatpush1.msra.mxu0 %v8144
    %8365 = vmatprep.subr.mxu0 %v8149
    %8366 = vmatpush1.msra.mxu0 %v8148
    %8367 = vmatprep.subr.mxu0 %v8153
    %8368 = vmatpush1.msra.mxu0 %v8152
    %8369 = vmatprep.subr.mxu0 %v8157
    %8370 = vmatpush1.msra.mxu0 %v8156
    %8371 = vmatprep.subr.mxu0 %v8161
    %8372 = vmatpush1.msra.mxu0 %v8160
    %8373 = vmatprep.subr.mxu0 %v8165
    %8374 = vmatpush1.msra.mxu0 %v8164
    %8375 = vmatprep.subr.mxu0 %v8169
    %8376 = vmatpush1.msra.mxu0 %v8168
    %8377 = vmatprep.subr.mxu0 %v8173
    %8378 = vmatpush1.msra.mxu0 %v8172
    %8379 = vmatprep.subr.mxu0 %v8177
    %8380 = vmatpush1.msra.mxu0 %v8176
    %8381 = vmatprep.subr.mxu0 %v8181
    %8382 = vmatpush1.msra.mxu0 %v8180
    %8383 = vmatprep.subr.mxu0 %v8185
    %8384 = vmatpush1.msra.mxu0 %v8184
    %8385 = vmatprep.subr.mxu0 %v8189
    %8386 = vmatpush1.msra.mxu0 %v8188
    %8387 = vmatprep.subr.mxu0 %v8193
    %8388 = vmatpush1.msra.mxu0 %v8192
    %8389 = vmatprep.subr.mxu0 %v8197
    %8390 = vmatpush1.msra.mxu0 %v8196
    %8391 = vmatprep.subr.mxu0 %v8201
    %8392 = vmatpush1.msra.mxu0 %v8200
    %8393 = vmatprep.subr.mxu0 %v8205
    %8394 = vmatpush1.msra.mxu0 %v8204
    %8395 = vmatprep.subr.mxu0 %v8209
    %8396 = vmatpush1.msra.mxu0 %v8208
    %8397 = vmatprep.subr.mxu0 %v8213
    %8398 = vmatpush1.msra.mxu0 %v8212
    %8399 = vmatprep.subr.mxu0 %v8217
    %8400 = vmatpush1.msra.mxu0 %v8216
    %8401 = vmatprep.subr.mxu0 %v8221
    %8402 = vmatpush1.msra.mxu0 %v8220
    %8403 = vmatprep.subr.mxu0 %v8225
    %8404 = vmatpush1.msra.mxu0 %v8224
    %8405 = vmatprep.subr.mxu0 %v8229
    %8406 = vmatpush1.msra.mxu0 %v8228
    %8407 = vmatprep.subr.mxu0 %v8233
    %8408 = vmatpush1.msra.mxu0 %v8232
    %8409 = vmatprep.subr.mxu0 %v8237
    %8410 = vmatpush1.msra.mxu0 %v8236
    %8411 = vmatprep.subr.mxu0 %v8241
    %8412 = vmatpush1.msra.mxu0 %v8240
    %8413 = vmatprep.subr.mxu0 %v8245
    %8414 = vmatpush1.msra.mxu0 %v8244
    %8415 = vmatprep.subr.mxu0 %v8249
    %8416 = vmatpush1.msra.mxu0 %v8248
    %8417 = vmatprep.subr.mxu0 %v8253
    %8418 = vmatpush1.msra.mxu0 %v8252
    %8419 = vmatprep.mubr.f32.mxu0 %v8281
    %8420 = vmatmul.mubr.f32.gmra.mrb[0].mxu0 %v8267
    %v8421 = vpop.f32.mrb[0].mxu0
    %v8422 = vadd.f32 0.0, %v8421
    %v8423 = vpop.f32.mrb[0].mxu0
    %v8424 = vadd.f32 0.0, %v8423
    %8425 = vdwg.mxu0
    %v8426 = vadd.f32 %v8050, %v8351
    %v8427 = vadd.f32 %v8052, %v8353
    %v8428 = vadd.f32 %v8121, %v8422
    %v8429 = vadd.f32 %v8123, %v8424
    %s8430 = scalar_lea.vmem %s5, 3072
    %v8431 = vld [vmem:[%s8430] sm:$0xff]
    %v8432 = vld [vmem:[%s8430 + $0x8] sm:$0xff]
    %v8433 = vld [vmem:[%s8430 + $0x10] sm:$0xff]
    %v8434 = vld [vmem:[%s8430 + $0x18] sm:$0xff]
    %v8435 = vld [vmem:[%s8430 + $0x20] sm:$0xff]
    %v8436 = vld [vmem:[%s8430 + $0x28] sm:$0xff]
    %v8437 = vld [vmem:[%s8430 + $0x30] sm:$0xff]
    %v8438 = vld [vmem:[%s8430 + $0x38] sm:$0xff]
    %v8439 = vld [vmem:[%s8430 + $0x40] sm:$0xff]
    %v8440 = vld [vmem:[%s8430 + $0x48] sm:$0xff]
    %v8441 = vld [vmem:[%s8430 + $0x50] sm:$0xff]
    %v8442 = vld [vmem:[%s8430 + $0x58] sm:$0xff]
    %v8443 = vld [vmem:[%s8430 + $0x60] sm:$0xff]
    %v8444 = vld [vmem:[%s8430 + $0x68] sm:$0xff]
    %v8445 = vld [vmem:[%s8430 + $0x70] sm:$0xff]
    %v8446 = vld [vmem:[%s8430 + $0x78] sm:$0xff]
    %v8447 = vld [vmem:[%s8430 + $0x80] sm:$0xff]
    %v8448 = vld [vmem:[%s8430 + $0x88] sm:$0xff]
    %v8449 = vld [vmem:[%s8430 + $0x90] sm:$0xff]
    %v8450 = vld [vmem:[%s8430 + $0x98] sm:$0xff]
    %v8451 = vld [vmem:[%s8430 + $0xa0] sm:$0xff]
    %v8452 = vld [vmem:[%s8430 + $0xa8] sm:$0xff]
    %v8453 = vld [vmem:[%s8430 + $0xb0] sm:$0xff]
    %v8454 = vld [vmem:[%s8430 + $0xb8] sm:$0xff]
    %v8455 = vld [vmem:[%s8430 + $0xc0] sm:$0xff]
    %v8456 = vld [vmem:[%s8430 + $0xc8] sm:$0xff]
    %v8457 = vld [vmem:[%s8430 + $0xd0] sm:$0xff]
    %v8458 = vld [vmem:[%s8430 + $0xd8] sm:$0xff]
    %v8459 = vld [vmem:[%s8430 + $0xe0] sm:$0xff]
    %v8460 = vld [vmem:[%s8430 + $0xe8] sm:$0xff]
    %v8461 = vld [vmem:[%s8430 + $0xf0] sm:$0xff]
    %v8462 = vld [vmem:[%s8430 + $0xf8] sm:$0xff]
    %v8463 = vld [vmem:[%s8430 + $0x100] sm:$0xff]
    %v8464 = vld [vmem:[%s8430 + $0x108] sm:$0xff]
    %v8465 = vld [vmem:[%s8430 + $0x110] sm:$0xff]
    %v8466 = vld [vmem:[%s8430 + $0x118] sm:$0xff]
    %v8467 = vld [vmem:[%s8430 + $0x120] sm:$0xff]
    %v8468 = vld [vmem:[%s8430 + $0x128] sm:$0xff]
    %v8469 = vld [vmem:[%s8430 + $0x130] sm:$0xff]
    %v8470 = vld [vmem:[%s8430 + $0x138] sm:$0xff]
    %v8471 = vld [vmem:[%s8430 + $0x140] sm:$0xff]
    %v8472 = vld [vmem:[%s8430 + $0x148] sm:$0xff]
    %v8473 = vld [vmem:[%s8430 + $0x150] sm:$0xff]
    %v8474 = vld [vmem:[%s8430 + $0x158] sm:$0xff]
    %v8475 = vld [vmem:[%s8430 + $0x160] sm:$0xff]
    %v8476 = vld [vmem:[%s8430 + $0x168] sm:$0xff]
    %v8477 = vld [vmem:[%s8430 + $0x170] sm:$0xff]
    %v8478 = vld [vmem:[%s8430 + $0x178] sm:$0xff]
    %v8479 = vld [vmem:[%s8430 + $0x180] sm:$0xff]
    %v8480 = vld [vmem:[%s8430 + $0x188] sm:$0xff]
    %v8481 = vld [vmem:[%s8430 + $0x190] sm:$0xff]
    %v8482 = vld [vmem:[%s8430 + $0x198] sm:$0xff]
    %v8483 = vld [vmem:[%s8430 + $0x1a0] sm:$0xff]
    %v8484 = vld [vmem:[%s8430 + $0x1a8] sm:$0xff]
    %v8485 = vld [vmem:[%s8430 + $0x1b0] sm:$0xff]
    %v8486 = vld [vmem:[%s8430 + $0x1b8] sm:$0xff]
    %v8487 = vld [vmem:[%s8430 + $0x1c0] sm:$0xff]
    %v8488 = vld [vmem:[%s8430 + $0x1c8] sm:$0xff]
    %v8489 = vld [vmem:[%s8430 + $0x1d0] sm:$0xff]
    %v8490 = vld [vmem:[%s8430 + $0x1d8] sm:$0xff]
    %v8491 = vld [vmem:[%s8430 + $0x1e0] sm:$0xff]
    %v8492 = vld [vmem:[%s8430 + $0x1e8] sm:$0xff]
    %v8493 = vld [vmem:[%s8430 + $0x1f0] sm:$0xff]
    %v8494 = vld [vmem:[%s8430 + $0x1f8] sm:$0xff]
    %v8495 = vld [vmem:[%s8430 + $0x200] sm:$0xff]
    %v8496 = vld [vmem:[%s8430 + $0x208] sm:$0xff]
    %v8497 = vld [vmem:[%s8430 + $0x210] sm:$0xff]
    %v8498 = vld [vmem:[%s8430 + $0x218] sm:$0xff]
    %v8499 = vld [vmem:[%s8430 + $0x220] sm:$0xff]
    %v8500 = vld [vmem:[%s8430 + $0x228] sm:$0xff]
    %v8501 = vld [vmem:[%s8430 + $0x230] sm:$0xff]
    %v8502 = vld [vmem:[%s8430 + $0x238] sm:$0xff]
    %v8503 = vld [vmem:[%s8430 + $0x240] sm:$0xff]
    %v8504 = vld [vmem:[%s8430 + $0x248] sm:$0xff]
    %v8505 = vld [vmem:[%s8430 + $0x250] sm:$0xff]
    %v8506 = vld [vmem:[%s8430 + $0x258] sm:$0xff]
    %v8507 = vld [vmem:[%s8430 + $0x260] sm:$0xff]
    %v8508 = vld [vmem:[%s8430 + $0x268] sm:$0xff]
    %v8509 = vld [vmem:[%s8430 + $0x270] sm:$0xff]
    %v8510 = vld [vmem:[%s8430 + $0x278] sm:$0xff]
    %v8511 = vld [vmem:[%s8430 + $0x280] sm:$0xff]
    %v8512 = vld [vmem:[%s8430 + $0x288] sm:$0xff]
    %v8513 = vld [vmem:[%s8430 + $0x290] sm:$0xff]
    %v8514 = vld [vmem:[%s8430 + $0x298] sm:$0xff]
    %v8515 = vld [vmem:[%s8430 + $0x2a0] sm:$0xff]
    %v8516 = vld [vmem:[%s8430 + $0x2a8] sm:$0xff]
    %v8517 = vld [vmem:[%s8430 + $0x2b0] sm:$0xff]
    %v8518 = vld [vmem:[%s8430 + $0x2b8] sm:$0xff]
    %v8519 = vld [vmem:[%s8430 + $0x2c0] sm:$0xff]
    %v8520 = vld [vmem:[%s8430 + $0x2c8] sm:$0xff]
    %v8521 = vld [vmem:[%s8430 + $0x2d0] sm:$0xff]
    %v8522 = vld [vmem:[%s8430 + $0x2d8] sm:$0xff]
    %v8523 = vld [vmem:[%s8430 + $0x2e0] sm:$0xff]
    %v8524 = vld [vmem:[%s8430 + $0x2e8] sm:$0xff]
    %v8525 = vld [vmem:[%s8430 + $0x2f0] sm:$0xff]
    %v8526 = vld [vmem:[%s8430 + $0x2f8] sm:$0xff]
    %v8527 = vld [vmem:[%s8430 + $0x300] sm:$0xff]
    %v8528 = vld [vmem:[%s8430 + $0x308] sm:$0xff]
    %v8529 = vld [vmem:[%s8430 + $0x310] sm:$0xff]
    %v8530 = vld [vmem:[%s8430 + $0x318] sm:$0xff]
    %v8531 = vld [vmem:[%s8430 + $0x320] sm:$0xff]
    %v8532 = vld [vmem:[%s8430 + $0x328] sm:$0xff]
    %v8533 = vld [vmem:[%s8430 + $0x330] sm:$0xff]
    %v8534 = vld [vmem:[%s8430 + $0x338] sm:$0xff]
    %v8535 = vld [vmem:[%s8430 + $0x340] sm:$0xff]
    %v8536 = vld [vmem:[%s8430 + $0x348] sm:$0xff]
    %v8537 = vld [vmem:[%s8430 + $0x350] sm:$0xff]
    %v8538 = vld [vmem:[%s8430 + $0x358] sm:$0xff]
    %v8539 = vld [vmem:[%s8430 + $0x360] sm:$0xff]
    %v8540 = vld [vmem:[%s8430 + $0x368] sm:$0xff]
    %v8541 = vld [vmem:[%s8430 + $0x370] sm:$0xff]
    %v8542 = vld [vmem:[%s8430 + $0x378] sm:$0xff]
    %v8543 = vld [vmem:[%s8430 + $0x380] sm:$0xff]
    %v8544 = vld [vmem:[%s8430 + $0x388] sm:$0xff]
    %v8545 = vld [vmem:[%s8430 + $0x390] sm:$0xff]
    %v8546 = vld [vmem:[%s8430 + $0x398] sm:$0xff]
    %v8547 = vld [vmem:[%s8430 + $0x3a0] sm:$0xff]
    %v8548 = vld [vmem:[%s8430 + $0x3a8] sm:$0xff]
    %v8549 = vld [vmem:[%s8430 + $0x3b0] sm:$0xff]
    %v8550 = vld [vmem:[%s8430 + $0x3b8] sm:$0xff]
    %v8551 = vld [vmem:[%s8430 + $0x3c0] sm:$0xff]
    %v8552 = vld [vmem:[%s8430 + $0x3c8] sm:$0xff]
    %v8553 = vld [vmem:[%s8430 + $0x3d0] sm:$0xff]
    %v8554 = vld [vmem:[%s8430 + $0x3d8] sm:$0xff]
    %v8555 = vld [vmem:[%s8430 + $0x3e0] sm:$0xff]
    %v8556 = vld [vmem:[%s8430 + $0x3e8] sm:$0xff]
    %v8557 = vld [vmem:[%s8430 + $0x3f0] sm:$0xff]
    %v8558 = vld [vmem:[%s8430 + $0x3f8] sm:$0xff]
    %v8559 = vrot.slane %v7485, 6
    %v8560 = vrot.slane %v7487, 5
    %v8561 = vsel %vm7776, %v8560, %v8559
    %v8562 = vrot.slane %v7489, 4
    %v8563 = vsel %vm7778, %v8562, %v8561
    %v8564 = vrot.slane %v7491, 3
    %v8565 = vsel %vm7781, %v8564, %v8563
    %v8566 = vrot.slane %v7493, 2
    %v8567 = vsel %vm7784, %v8566, %v8565
    %v8568 = vrot.slane %v7495, 1
    %v8569 = vsel %vm7787, %v8568, %v8567
    %v8570 = vsel %vm7790, %v7497, %v8569
    %v8571 = vrot.slane %v7499, 7
    %v8572 = vsel %vm7793, %v8571, %v8570
    %v8573 = vrot.slane %v7486, 6
    %v8574 = vrot.slane %v7488, 5
    %v8575 = vsel %vm7776, %v8574, %v8573
    %v8576 = vrot.slane %v7490, 4
    %v8577 = vsel %vm7778, %v8576, %v8575
    %v8578 = vrot.slane %v7492, 3
    %v8579 = vsel %vm7781, %v8578, %v8577
    %v8580 = vrot.slane %v7494, 2
    %v8581 = vsel %vm7784, %v8580, %v8579
    %v8582 = vrot.slane %v7496, 1
    %v8583 = vsel %vm7787, %v8582, %v8581
    %v8584 = vsel %vm7790, %v7498, %v8583
    %v8585 = vrot.slane %v7500, 7
    %v8586 = vsel %vm7793, %v8585, %v8584
    %8589 = vmatprep.subr.mxu0 %v8432
    %8590 = vmatpush1.msra.mxu0 %v8431
    %8591 = vmatprep.subr.mxu0 %v8436
    %8592 = vmatpush1.msra.mxu0 %v8435
    %8593 = vmatprep.subr.mxu0 %v8440
    %8594 = vmatpush1.msra.mxu0 %v8439
    %8595 = vmatprep.subr.mxu0 %v8444
    %8596 = vmatpush1.msra.mxu0 %v8443
    %8597 = vmatprep.subr.mxu0 %v8448
    %8598 = vmatpush1.msra.mxu0 %v8447
    %8599 = vmatprep.subr.mxu0 %v8452
    %8600 = vmatpush1.msra.mxu0 %v8451
    %8601 = vmatprep.subr.mxu0 %v8456
    %8602 = vmatpush1.msra.mxu0 %v8455
    %8603 = vmatprep.subr.mxu0 %v8460
    %8604 = vmatpush1.msra.mxu0 %v8459
    %8605 = vmatprep.subr.mxu0 %v8464
    %8606 = vmatpush1.msra.mxu0 %v8463
    %8607 = vmatprep.subr.mxu0 %v8468
    %8608 = vmatpush1.msra.mxu0 %v8467
    %8609 = vmatprep.subr.mxu0 %v8472
    %8610 = vmatpush1.msra.mxu0 %v8471
    %8611 = vmatprep.subr.mxu0 %v8476
    %8612 = vmatpush1.msra.mxu0 %v8475
    %8613 = vmatprep.subr.mxu0 %v8480
    %8614 = vmatpush1.msra.mxu0 %v8479
    %8615 = vmatprep.subr.mxu0 %v8484
    %8616 = vmatpush1.msra.mxu0 %v8483
    %8617 = vmatprep.subr.mxu0 %v8488
    %8618 = vmatpush1.msra.mxu0 %v8487
    %8619 = vmatprep.subr.mxu0 %v8492
    %8620 = vmatpush1.msra.mxu0 %v8491
    %8621 = vmatprep.subr.mxu0 %v8496
    %8622 = vmatpush1.msra.mxu0 %v8495
    %8623 = vmatprep.subr.mxu0 %v8500
    %8624 = vmatpush1.msra.mxu0 %v8499
    %8625 = vmatprep.subr.mxu0 %v8504
    %8626 = vmatpush1.msra.mxu0 %v8503
    %8627 = vmatprep.subr.mxu0 %v8508
    %8628 = vmatpush1.msra.mxu0 %v8507
    %8629 = vmatprep.subr.mxu0 %v8512
    %8630 = vmatpush1.msra.mxu0 %v8511
    %8631 = vmatprep.subr.mxu0 %v8516
    %8632 = vmatpush1.msra.mxu0 %v8515
    %8633 = vmatprep.subr.mxu0 %v8520
    %8634 = vmatpush1.msra.mxu0 %v8519
    %8635 = vmatprep.subr.mxu0 %v8524
    %8636 = vmatpush1.msra.mxu0 %v8523
    %8637 = vmatprep.subr.mxu0 %v8528
    %8638 = vmatpush1.msra.mxu0 %v8527
    %8639 = vmatprep.subr.mxu0 %v8532
    %8640 = vmatpush1.msra.mxu0 %v8531
    %8641 = vmatprep.subr.mxu0 %v8536
    %8642 = vmatpush1.msra.mxu0 %v8535
    %8643 = vmatprep.subr.mxu0 %v8540
    %8644 = vmatpush1.msra.mxu0 %v8539
    %8645 = vmatprep.subr.mxu0 %v8544
    %8646 = vmatpush1.msra.mxu0 %v8543
    %8647 = vmatprep.subr.mxu0 %v8548
    %8648 = vmatpush1.msra.mxu0 %v8547
    %8649 = vmatprep.subr.mxu0 %v8552
    %8650 = vmatpush1.msra.mxu0 %v8551
    %8651 = vmatprep.subr.mxu0 %v8556
    %8652 = vmatpush1.msra.mxu0 %v8555
    %8653 = vmatprep.mubr.f32.mxu0 %v8586
    %8654 = vmatmul.mubr.f32.gmra.mrb[0].mxu0 %v8572
    %v8655 = vpop.f32.mrb[0].mxu0
    %v8656 = vadd.f32 0.0, %v8655
    %v8657 = vpop.f32.mrb[0].mxu0
    %v8658 = vadd.f32 0.0, %v8657
    %8659 = vdwg.mxu0
    %8660 = vmatprep.subr.mxu0 %v8434
    %8661 = vmatpush1.msra.mxu0 %v8433
    %8662 = vmatprep.subr.mxu0 %v8438
    %8663 = vmatpush1.msra.mxu0 %v8437
    %8664 = vmatprep.subr.mxu0 %v8442
    %8665 = vmatpush1.msra.mxu0 %v8441
    %8666 = vmatprep.subr.mxu0 %v8446
    %8667 = vmatpush1.msra.mxu0 %v8445
    %8668 = vmatprep.subr.mxu0 %v8450
    %8669 = vmatpush1.msra.mxu0 %v8449
    %8670 = vmatprep.subr.mxu0 %v8454
    %8671 = vmatpush1.msra.mxu0 %v8453
    %8672 = vmatprep.subr.mxu0 %v8458
    %8673 = vmatpush1.msra.mxu0 %v8457
    %8674 = vmatprep.subr.mxu0 %v8462
    %8675 = vmatpush1.msra.mxu0 %v8461
    %8676 = vmatprep.subr.mxu0 %v8466
    %8677 = vmatpush1.msra.mxu0 %v8465
    %8678 = vmatprep.subr.mxu0 %v8470
    %8679 = vmatpush1.msra.mxu0 %v8469
    %8680 = vmatprep.subr.mxu0 %v8474
    %8681 = vmatpush1.msra.mxu0 %v8473
    %8682 = vmatprep.subr.mxu0 %v8478
    %8683 = vmatpush1.msra.mxu0 %v8477
    %8684 = vmatprep.subr.mxu0 %v8482
    %8685 = vmatpush1.msra.mxu0 %v8481
    %8686 = vmatprep.subr.mxu0 %v8486
    %8687 = vmatpush1.msra.mxu0 %v8485
    %8688 = vmatprep.subr.mxu0 %v8490
    %8689 = vmatpush1.msra.mxu0 %v8489
    %8690 = vmatprep.subr.mxu0 %v8494
    %8691 = vmatpush1.msra.mxu0 %v8493
    %8692 = vmatprep.subr.mxu0 %v8498
    %8693 = vmatpush1.msra.mxu0 %v8497
    %8694 = vmatprep.subr.mxu0 %v8502
    %8695 = vmatpush1.msra.mxu0 %v8501
    %8696 = vmatprep.subr.mxu0 %v8506
    %8697 = vmatpush1.msra.mxu0 %v8505
    %8698 = vmatprep.subr.mxu0 %v8510
    %8699 = vmatpush1.msra.mxu0 %v8509
    %8700 = vmatprep.subr.mxu0 %v8514
    %8701 = vmatpush1.msra.mxu0 %v8513
    %8702 = vmatprep.subr.mxu0 %v8518
    %8703 = vmatpush1.msra.mxu0 %v8517
    %8704 = vmatprep.subr.mxu0 %v8522
    %8705 = vmatpush1.msra.mxu0 %v8521
    %8706 = vmatprep.subr.mxu0 %v8526
    %8707 = vmatpush1.msra.mxu0 %v8525
    %8708 = vmatprep.subr.mxu0 %v8530
    %8709 = vmatpush1.msra.mxu0 %v8529
    %8710 = vmatprep.subr.mxu0 %v8534
    %8711 = vmatpush1.msra.mxu0 %v8533
    %8712 = vmatprep.subr.mxu0 %v8538
    %8713 = vmatpush1.msra.mxu0 %v8537
    %8714 = vmatprep.subr.mxu0 %v8542
    %8715 = vmatpush1.msra.mxu0 %v8541
    %8716 = vmatprep.subr.mxu0 %v8546
    %8717 = vmatpush1.msra.mxu0 %v8545
    %8718 = vmatprep.subr.mxu0 %v8550
    %8719 = vmatpush1.msra.mxu0 %v8549
    %8720 = vmatprep.subr.mxu0 %v8554
    %8721 = vmatpush1.msra.mxu0 %v8553
    %8722 = vmatprep.subr.mxu0 %v8558
    %8723 = vmatpush1.msra.mxu0 %v8557
    %8724 = vmatprep.mubr.f32.mxu0 %v8586
    %8725 = vmatmul.mubr.f32.gmra.mrb[0].mxu0 %v8572
    %v8726 = vpop.f32.mrb[0].mxu0
    %v8727 = vadd.f32 0.0, %v8726
    %v8728 = vpop.f32.mrb[0].mxu0
    %v8729 = vadd.f32 0.0, %v8728
    %8730 = vdwg.mxu0
    %v8731 = vadd.f32 %v8426, %v8656
    %v8732 = vadd.f32 %v8427, %v8658
    %v8733 = vadd.f32 %v8428, %v8727
    %v8734 = vadd.f32 %v8429, %v8729
    %v8751 = vrot.slane %v7363, 1
    %v8752 = vrot.slane %v7364, 1
    %v8753 = vrot.slane %v7367, 1
    %v8754 = vrot.slane %v7368, 1
    %v8755 = vrot.slane %v7371, 1
    %v8756 = vrot.slane %v7372, 1
    %v8757 = vrot.slane %v7375, 1
    %v8758 = vrot.slane %v7376, 1
    %v8759 = vrot.slane %v7379, 1
    %v8760 = vrot.slane %v7380, 1
    %v8761 = vrot.slane %v7383, 1
    %v8762 = vrot.slane %v7384, 1
    %v8763 = vrot.slane %v7387, 1
    %v8764 = vrot.slane %v7388, 1
    %v8765 = vrot.slane %v7391, 1
    %v8766 = vrot.slane %v7392, 1
    %v8783 = vmax.f32 %v7363, %v8751
    %v8784 = vmax.f32 %v7364, %v8752
    %v8785 = vmax.f32 %v7367, %v8753
    %v8786 = vmax.f32 %v7368, %v8754
    %v8787 = vmax.f32 %v7371, %v8755
    %v8788 = vmax.f32 %v7372, %v8756
    %v8789 = vmax.f32 %v7375, %v8757
    %v8790 = vmax.f32 %v7376, %v8758
    %v8791 = vmax.f32 %v7379, %v8759
    %v8792 = vmax.f32 %v7380, %v8760
    %v8793 = vmax.f32 %v7383, %v8761
    %v8794 = vmax.f32 %v7384, %v8762
    %v8795 = vmax.f32 %v7387, %v8763
    %v8796 = vmax.f32 %v7388, %v8764
    %v8797 = vmax.f32 %v7391, %v8765
    %v8798 = vmax.f32 %v7392, %v8766
    %v8799 = vadd.f32 %v8783, %v7462
    %v8800 = vadd.f32 %v8784, %v7466
    %v8801 = vadd.f32 %v8785, %v7462
    %v8802 = vadd.f32 %v8786, %v7466
    %v8803 = vadd.f32 %v8787, %v7462
    %v8804 = vadd.f32 %v8788, %v7466
    %v8805 = vadd.f32 %v8789, %v7462
    %v8806 = vadd.f32 %v8790, %v7466
    %v8807 = vadd.f32 %v8791, %v7462
    %v8808 = vadd.f32 %v8792, %v7466
    %v8809 = vadd.f32 %v8793, %v7462
    %v8810 = vadd.f32 %v8794, %v7466
    %v8811 = vadd.f32 %v8795, %v7462
    %v8812 = vadd.f32 %v8796, %v7466
    %v8813 = vadd.f32 %v8797, %v7462
    %v8814 = vadd.f32 %v8798, %v7466
    %v8815 = vmax.f32 %v8799, 0.0
    %v8816 = vmax.f32 %v8800, 0.0
    %v8817 = vmax.f32 %v8801, 0.0
    %v8818 = vmax.f32 %v8802, 0.0
    %v8819 = vmax.f32 %v8803, 0.0
    %v8820 = vmax.f32 %v8804, 0.0
    %v8821 = vmax.f32 %v8805, 0.0
    %v8822 = vmax.f32 %v8806, 0.0
    %v8823 = vmax.f32 %v8807, 0.0
    %v8824 = vmax.f32 %v8808, 0.0
    %v8825 = vmax.f32 %v8809, 0.0
    %v8826 = vmax.f32 %v8810, 0.0
    %v8827 = vmax.f32 %v8811, 0.0
    %v8828 = vmax.f32 %v8812, 0.0
    %v8829 = vmax.f32 %v8813, 0.0
    %v8830 = vmax.f32 %v8814, 0.0
    %s8831 = scalar_lea.vmem %s5, 4096
    %v8832 = vld [vmem:[%s8831] sm:$0xff]
    %v8833 = vld [vmem:[%s8831 + $0x8] sm:$0xff]
    %v8834 = vld [vmem:[%s8831 + $0x10] sm:$0xff]
    %v8835 = vld [vmem:[%s8831 + $0x18] sm:$0xff]
    %v8836 = vld [vmem:[%s8831 + $0x20] sm:$0xff]
    %v8837 = vld [vmem:[%s8831 + $0x28] sm:$0xff]
    %v8838 = vld [vmem:[%s8831 + $0x30] sm:$0xff]
    %v8839 = vld [vmem:[%s8831 + $0x38] sm:$0xff]
    %v8840 = vld [vmem:[%s8831 + $0x40] sm:$0xff]
    %v8841 = vld [vmem:[%s8831 + $0x48] sm:$0xff]
    %v8842 = vld [vmem:[%s8831 + $0x50] sm:$0xff]
    %v8843 = vld [vmem:[%s8831 + $0x58] sm:$0xff]
    %v8844 = vld [vmem:[%s8831 + $0x60] sm:$0xff]
    %v8845 = vld [vmem:[%s8831 + $0x68] sm:$0xff]
    %v8846 = vld [vmem:[%s8831 + $0x70] sm:$0xff]
    %v8847 = vld [vmem:[%s8831 + $0x78] sm:$0xff]
    %v8848 = vld [vmem:[%s8831 + $0x80] sm:$0xff]
    %v8849 = vld [vmem:[%s8831 + $0x88] sm:$0xff]
    %v8850 = vld [vmem:[%s8831 + $0x90] sm:$0xff]
    %v8851 = vld [vmem:[%s8831 + $0x98] sm:$0xff]
    %v8852 = vld [vmem:[%s8831 + $0xa0] sm:$0xff]
    %v8853 = vld [vmem:[%s8831 + $0xa8] sm:$0xff]
    %v8854 = vld [vmem:[%s8831 + $0xb0] sm:$0xff]
    %v8855 = vld [vmem:[%s8831 + $0xb8] sm:$0xff]
    %v8856 = vld [vmem:[%s8831 + $0xc0] sm:$0xff]
    %v8857 = vld [vmem:[%s8831 + $0xc8] sm:$0xff]
    %v8858 = vld [vmem:[%s8831 + $0xd0] sm:$0xff]
    %v8859 = vld [vmem:[%s8831 + $0xd8] sm:$0xff]
    %v8860 = vld [vmem:[%s8831 + $0xe0] sm:$0xff]
    %v8861 = vld [vmem:[%s8831 + $0xe8] sm:$0xff]
    %v8862 = vld [vmem:[%s8831 + $0xf0] sm:$0xff]
    %v8863 = vld [vmem:[%s8831 + $0xf8] sm:$0xff]
    %v8864 = vld [vmem:[%s8831 + $0x100] sm:$0xff]
    %v8865 = vld [vmem:[%s8831 + $0x108] sm:$0xff]
    %v8866 = vld [vmem:[%s8831 + $0x110] sm:$0xff]
    %v8867 = vld [vmem:[%s8831 + $0x118] sm:$0xff]
    %v8868 = vld [vmem:[%s8831 + $0x120] sm:$0xff]
    %v8869 = vld [vmem:[%s8831 + $0x128] sm:$0xff]
    %v8870 = vld [vmem:[%s8831 + $0x130] sm:$0xff]
    %v8871 = vld [vmem:[%s8831 + $0x138] sm:$0xff]
    %v8872 = vld [vmem:[%s8831 + $0x140] sm:$0xff]
    %v8873 = vld [vmem:[%s8831 + $0x148] sm:$0xff]
    %v8874 = vld [vmem:[%s8831 + $0x150] sm:$0xff]
    %v8875 = vld [vmem:[%s8831 + $0x158] sm:$0xff]
    %v8876 = vld [vmem:[%s8831 + $0x160] sm:$0xff]
    %v8877 = vld [vmem:[%s8831 + $0x168] sm:$0xff]
    %v8878 = vld [vmem:[%s8831 + $0x170] sm:$0xff]
    %v8879 = vld [vmem:[%s8831 + $0x178] sm:$0xff]
    %v8880 = vld [vmem:[%s8831 + $0x180] sm:$0xff]
    %v8881 = vld [vmem:[%s8831 + $0x188] sm:$0xff]
    %v8882 = vld [vmem:[%s8831 + $0x190] sm:$0xff]
    %v8883 = vld [vmem:[%s8831 + $0x198] sm:$0xff]
    %v8884 = vld [vmem:[%s8831 + $0x1a0] sm:$0xff]
    %v8885 = vld [vmem:[%s8831 + $0x1a8] sm:$0xff]
    %v8886 = vld [vmem:[%s8831 + $0x1b0] sm:$0xff]
    %v8887 = vld [vmem:[%s8831 + $0x1b8] sm:$0xff]
    %v8888 = vld [vmem:[%s8831 + $0x1c0] sm:$0xff]
    %v8889 = vld [vmem:[%s8831 + $0x1c8] sm:$0xff]
    %v8890 = vld [vmem:[%s8831 + $0x1d0] sm:$0xff]
    %v8891 = vld [vmem:[%s8831 + $0x1d8] sm:$0xff]
    %v8892 = vld [vmem:[%s8831 + $0x1e0] sm:$0xff]
    %v8893 = vld [vmem:[%s8831 + $0x1e8] sm:$0xff]
    %v8894 = vld [vmem:[%s8831 + $0x1f0] sm:$0xff]
    %v8895 = vld [vmem:[%s8831 + $0x1f8] sm:$0xff]
    %v8896 = vld [vmem:[%s8831 + $0x200] sm:$0xff]
    %v8897 = vld [vmem:[%s8831 + $0x208] sm:$0xff]
    %v8898 = vld [vmem:[%s8831 + $0x210] sm:$0xff]
    %v8899 = vld [vmem:[%s8831 + $0x218] sm:$0xff]
    %v8900 = vld [vmem:[%s8831 + $0x220] sm:$0xff]
    %v8901 = vld [vmem:[%s8831 + $0x228] sm:$0xff]
    %v8902 = vld [vmem:[%s8831 + $0x230] sm:$0xff]
    %v8903 = vld [vmem:[%s8831 + $0x238] sm:$0xff]
    %v8904 = vld [vmem:[%s8831 + $0x240] sm:$0xff]
    %v8905 = vld [vmem:[%s8831 + $0x248] sm:$0xff]
    %v8906 = vld [vmem:[%s8831 + $0x250] sm:$0xff]
    %v8907 = vld [vmem:[%s8831 + $0x258] sm:$0xff]
    %v8908 = vld [vmem:[%s8831 + $0x260] sm:$0xff]
    %v8909 = vld [vmem:[%s8831 + $0x268] sm:$0xff]
    %v8910 = vld [vmem:[%s8831 + $0x270] sm:$0xff]
    %v8911 = vld [vmem:[%s8831 + $0x278] sm:$0xff]
    %v8912 = vld [vmem:[%s8831 + $0x280] sm:$0xff]
    %v8913 = vld [vmem:[%s8831 + $0x288] sm:$0xff]
    %v8914 = vld [vmem:[%s8831 + $0x290] sm:$0xff]
    %v8915 = vld [vmem:[%s8831 + $0x298] sm:$0xff]
    %v8916 = vld [vmem:[%s8831 + $0x2a0] sm:$0xff]
    %v8917 = vld [vmem:[%s8831 + $0x2a8] sm:$0xff]
    %v8918 = vld [vmem:[%s8831 + $0x2b0] sm:$0xff]
    %v8919 = vld [vmem:[%s8831 + $0x2b8] sm:$0xff]
    %v8920 = vld [vmem:[%s8831 + $0x2c0] sm:$0xff]
    %v8921 = vld [vmem:[%s8831 + $0x2c8] sm:$0xff]
    %v8922 = vld [vmem:[%s8831 + $0x2d0] sm:$0xff]
    %v8923 = vld [vmem:[%s8831 + $0x2d8] sm:$0xff]
    %v8924 = vld [vmem:[%s8831 + $0x2e0] sm:$0xff]
    %v8925 = vld [vmem:[%s8831 + $0x2e8] sm:$0xff]
    %v8926 = vld [vmem:[%s8831 + $0x2f0] sm:$0xff]
    %v8927 = vld [vmem:[%s8831 + $0x2f8] sm:$0xff]
    %v8928 = vld [vmem:[%s8831 + $0x300] sm:$0xff]
    %v8929 = vld [vmem:[%s8831 + $0x308] sm:$0xff]
    %v8930 = vld [vmem:[%s8831 + $0x310] sm:$0xff]
    %v8931 = vld [vmem:[%s8831 + $0x318] sm:$0xff]
    %v8932 = vld [vmem:[%s8831 + $0x320] sm:$0xff]
    %v8933 = vld [vmem:[%s8831 + $0x328] sm:$0xff]
    %v8934 = vld [vmem:[%s8831 + $0x330] sm:$0xff]
    %v8935 = vld [vmem:[%s8831 + $0x338] sm:$0xff]
    %v8936 = vld [vmem:[%s8831 + $0x340] sm:$0xff]
    %v8937 = vld [vmem:[%s8831 + $0x348] sm:$0xff]
    %v8938 = vld [vmem:[%s8831 + $0x350] sm:$0xff]
    %v8939 = vld [vmem:[%s8831 + $0x358] sm:$0xff]
    %v8940 = vld [vmem:[%s8831 + $0x360] sm:$0xff]
    %v8941 = vld [vmem:[%s8831 + $0x368] sm:$0xff]
    %v8942 = vld [vmem:[%s8831 + $0x370] sm:$0xff]
    %v8943 = vld [vmem:[%s8831 + $0x378] sm:$0xff]
    %v8944 = vld [vmem:[%s8831 + $0x380] sm:$0xff]
    %v8945 = vld [vmem:[%s8831 + $0x388] sm:$0xff]
    %v8946 = vld [vmem:[%s8831 + $0x390] sm:$0xff]
    %v8947 = vld [vmem:[%s8831 + $0x398] sm:$0xff]
    %v8948 = vld [vmem:[%s8831 + $0x3a0] sm:$0xff]
    %v8949 = vld [vmem:[%s8831 + $0x3a8] sm:$0xff]
    %v8950 = vld [vmem:[%s8831 + $0x3b0] sm:$0xff]
    %v8951 = vld [vmem:[%s8831 + $0x3b8] sm:$0xff]
    %v8952 = vld [vmem:[%s8831 + $0x3c0] sm:$0xff]
    %v8953 = vld [vmem:[%s8831 + $0x3c8] sm:$0xff]
    %v8954 = vld [vmem:[%s8831 + $0x3d0] sm:$0xff]
    %v8955 = vld [vmem:[%s8831 + $0x3d8] sm:$0xff]
    %v8956 = vld [vmem:[%s8831 + $0x3e0] sm:$0xff]
    %v8957 = vld [vmem:[%s8831 + $0x3e8] sm:$0xff]
    %v8958 = vld [vmem:[%s8831 + $0x3f0] sm:$0xff]
    %v8959 = vld [vmem:[%s8831 + $0x3f8] sm:$0xff]
    %v8976 = vrot.slane %v8817, 7
    %v8977 = vsel %vm7776, %v8976, %v8815
    %v8978 = vrot.slane %v8819, 6
    %v8979 = vsel %vm7778, %v8978, %v8977
    %v8980 = vrot.slane %v8821, 5
    %v8981 = vsel %vm7781, %v8980, %v8979
    %v8982 = vrot.slane %v8823, 4
    %v8983 = vsel %vm7784, %v8982, %v8981
    %v8984 = vrot.slane %v8825, 3
    %v8985 = vsel %vm7787, %v8984, %v8983
    %v8986 = vrot.slane %v8827, 2
    %v8987 = vsel %vm7790, %v8986, %v8985
    %v8988 = vrot.slane %v8829, 1
    %v8989 = vsel %vm7793, %v8988, %v8987
    %v8990 = vrot.slane %v8818, 7
    %v8991 = vsel %vm7776, %v8990, %v8816
    %v8992 = vrot.slane %v8820, 6
    %v8993 = vsel %vm7778, %v8992, %v8991
    %v8994 = vrot.slane %v8822, 5
    %v8995 = vsel %vm7781, %v8994, %v8993
    %v8996 = vrot.slane %v8824, 4
    %v8997 = vsel %vm7784, %v8996, %v8995
    %v8998 = vrot.slane %v8826, 3
    %v8999 = vsel %vm7787, %v8998, %v8997
    %v9000 = vrot.slane %v8828, 2
    %v9001 = vsel %vm7790, %v9000, %v8999
    %v9002 = vrot.slane %v8830, 1
    %v9003 = vsel %vm7793, %v9002, %v9001
    %9006 = vmatprep.subr.mxu0 %v8833
    %9007 = vmatpush1.msra.mxu0 %v8832
    %9008 = vmatprep.subr.mxu0 %v8837
    %9009 = vmatpush1.msra.mxu0 %v8836
    %9010 = vmatprep.subr.mxu0 %v8841
    %9011 = vmatpush1.msra.mxu0 %v8840
    %9012 = vmatprep.subr.mxu0 %v8845
    %9013 = vmatpush1.msra.mxu0 %v8844
    %9014 = vmatprep.subr.mxu0 %v8849
    %9015 = vmatpush1.msra.mxu0 %v8848
    %9016 = vmatprep.subr.mxu0 %v8853
    %9017 = vmatpush1.msra.mxu0 %v8852
    %9018 = vmatprep.subr.mxu0 %v8857
    %9019 = vmatpush1.msra.mxu0 %v8856
    %9020 = vmatprep.subr.mxu0 %v8861
    %9021 = vmatpush1.msra.mxu0 %v8860
    %9022 = vmatprep.subr.mxu0 %v8865
    %9023 = vmatpush1.msra.mxu0 %v8864
    %9024 = vmatprep.subr.mxu0 %v8869
    %9025 = vmatpush1.msra.mxu0 %v8868
    %9026 = vmatprep.subr.mxu0 %v8873
    %9027 = vmatpush1.msra.mxu0 %v8872
    %9028 = vmatprep.subr.mxu0 %v8877
    %9029 = vmatpush1.msra.mxu0 %v8876
    %9030 = vmatprep.subr.mxu0 %v8881
    %9031 = vmatpush1.msra.mxu0 %v8880
    %9032 = vmatprep.subr.mxu0 %v8885
    %9033 = vmatpush1.msra.mxu0 %v8884
    %9034 = vmatprep.subr.mxu0 %v8889
    %9035 = vmatpush1.msra.mxu0 %v8888
    %9036 = vmatprep.subr.mxu0 %v8893
    %9037 = vmatpush1.msra.mxu0 %v8892
    %9038 = vmatprep.subr.mxu0 %v8897
    %9039 = vmatpush1.msra.mxu0 %v8896
    %9040 = vmatprep.subr.mxu0 %v8901
    %9041 = vmatpush1.msra.mxu0 %v8900
    %9042 = vmatprep.subr.mxu0 %v8905
    %9043 = vmatpush1.msra.mxu0 %v8904
    %9044 = vmatprep.subr.mxu0 %v8909
    %9045 = vmatpush1.msra.mxu0 %v8908
    %9046 = vmatprep.subr.mxu0 %v8913
    %9047 = vmatpush1.msra.mxu0 %v8912
    %9048 = vmatprep.subr.mxu0 %v8917
    %9049 = vmatpush1.msra.mxu0 %v8916
    %9050 = vmatprep.subr.mxu0 %v8921
    %9051 = vmatpush1.msra.mxu0 %v8920
    %9052 = vmatprep.subr.mxu0 %v8925
    %9053 = vmatpush1.msra.mxu0 %v8924
    %9054 = vmatprep.subr.mxu0 %v8929
    %9055 = vmatpush1.msra.mxu0 %v8928
    %9056 = vmatprep.subr.mxu0 %v8933
    %9057 = vmatpush1.msra.mxu0 %v8932
    %9058 = vmatprep.subr.mxu0 %v8937
    %9059 = vmatpush1.msra.mxu0 %v8936
    %9060 = vmatprep.subr.mxu0 %v8941
    %9061 = vmatpush1.msra.mxu0 %v8940
    %9062 = vmatprep.subr.mxu0 %v8945
    %9063 = vmatpush1.msra.mxu0 %v8944
    %9064 = vmatprep.subr.mxu0 %v8949
    %9065 = vmatpush1.msra.mxu0 %v8948
    %9066 = vmatprep.subr.mxu0 %v8953
    %9067 = vmatpush1.msra.mxu0 %v8952
    %9068 = vmatprep.subr.mxu0 %v8957
    %9069 = vmatpush1.msra.mxu0 %v8956
    %9070 = vmatprep.mubr.f32.mxu0 %v9003
    %9071 = vmatmul.mubr.f32.gmra.mrb[0].mxu0 %v8989
    %v9072 = vpop.f32.mrb[0].mxu0
    %v9073 = vadd.f32 0.0, %v9072
    %v9074 = vpop.f32.mrb[0].mxu0
    %v9075 = vadd.f32 0.0, %v9074
    %9076 = vdwg.mxu0
    %9077 = vmatprep.subr.mxu0 %v8835
    %9078 = vmatpush1.msra.mxu0 %v8834
    %9079 = vmatprep.subr.mxu0 %v8839
    %9080 = vmatpush1.msra.mxu0 %v8838
    %9081 = vmatprep.subr.mxu0 %v8843
    %9082 = vmatpush1.msra.mxu0 %v8842
    %9083 = vmatprep.subr.mxu0 %v8847
    %9084 = vmatpush1.msra.mxu0 %v8846
    %9085 = vmatprep.subr.mxu0 %v8851
    %9086 = vmatpush1.msra.mxu0 %v8850
    %9087 = vmatprep.subr.mxu0 %v8855
    %9088 = vmatpush1.msra.mxu0 %v8854
    %9089 = vmatprep.subr.mxu0 %v8859
    %9090 = vmatpush1.msra.mxu0 %v8858
    %9091 = vmatprep.subr.mxu0 %v8863
    %9092 = vmatpush1.msra.mxu0 %v8862
    %9093 = vmatprep.subr.mxu0 %v8867
    %9094 = vmatpush1.msra.mxu0 %v8866
    %9095 = vmatprep.subr.mxu0 %v8871
    %9096 = vmatpush1.msra.mxu0 %v8870
    %9097 = vmatprep.subr.mxu0 %v8875
    %9098 = vmatpush1.msra.mxu0 %v8874
    %9099 = vmatprep.subr.mxu0 %v8879
    %9100 = vmatpush1.msra.mxu0 %v8878
    %9101 = vmatprep.subr.mxu0 %v8883
    %9102 = vmatpush1.msra.mxu0 %v8882
    %9103 = vmatprep.subr.mxu0 %v8887
    %9104 = vmatpush1.msra.mxu0 %v8886
    %9105 = vmatprep.subr.mxu0 %v8891
    %9106 = vmatpush1.msra.mxu0 %v8890
    %9107 = vmatprep.subr.mxu0 %v8895
    %9108 = vmatpush1.msra.mxu0 %v8894
    %9109 = vmatprep.subr.mxu0 %v8899
    %9110 = vmatpush1.msra.mxu0 %v8898
    %9111 = vmatprep.subr.mxu0 %v8903
    %9112 = vmatpush1.msra.mxu0 %v8902
    %9113 = vmatprep.subr.mxu0 %v8907
    %9114 = vmatpush1.msra.mxu0 %v8906
    %9115 = vmatprep.subr.mxu0 %v8911
    %9116 = vmatpush1.msra.mxu0 %v8910
    %9117 = vmatprep.subr.mxu0 %v8915
    %9118 = vmatpush1.msra.mxu0 %v8914
    %9119 = vmatprep.subr.mxu0 %v8919
    %9120 = vmatpush1.msra.mxu0 %v8918
    %9121 = vmatprep.subr.mxu0 %v8923
    %9122 = vmatpush1.msra.mxu0 %v8922
    %9123 = vmatprep.subr.mxu0 %v8927
    %9124 = vmatpush1.msra.mxu0 %v8926
    %9125 = vmatprep.subr.mxu0 %v8931
    %9126 = vmatpush1.msra.mxu0 %v8930
    %9127 = vmatprep.subr.mxu0 %v8935
    %9128 = vmatpush1.msra.mxu0 %v8934
    %9129 = vmatprep.subr.mxu0 %v8939
    %9130 = vmatpush1.msra.mxu0 %v8938
    %9131 = vmatprep.subr.mxu0 %v8943
    %9132 = vmatpush1.msra.mxu0 %v8942
    %9133 = vmatprep.subr.mxu0 %v8947
    %9134 = vmatpush1.msra.mxu0 %v8946
    %9135 = vmatprep.subr.mxu0 %v8951
    %9136 = vmatpush1.msra.mxu0 %v8950
    %9137 = vmatprep.subr.mxu0 %v8955
    %9138 = vmatpush1.msra.mxu0 %v8954
    %9139 = vmatprep.subr.mxu0 %v8959
    %9140 = vmatpush1.msra.mxu0 %v8958
    %9141 = vmatprep.mubr.f32.mxu0 %v9003
    %9142 = vmatmul.mubr.f32.gmra.mrb[0].mxu0 %v8989
    %v9143 = vpop.f32.mrb[0].mxu0
    %v9144 = vadd.f32 0.0, %v9143
    %v9145 = vpop.f32.mrb[0].mxu0
    %v9146 = vadd.f32 0.0, %v9145
    %9147 = vdwg.mxu0
    %v9148 = vadd.f32 %v8731, %v9073
    %v9149 = vadd.f32 %v8732, %v9075
    %v9150 = vadd.f32 %v8733, %v9144
    %v9151 = vadd.f32 %v8734, %v9146
    %v9152 = vld [vmem:[%s6] sm:$0xf]
    %v9154 = vlaneseq
    %v9155 = vshrl.u32 %v9154, 7
    %v9156 = vsub.s32 0, %v9155
    %v9157 = vrot.slane %v9152, %v9156
    %v9158 = vlaneseq
    %v9159 = vshrl.u32 %v9158, 7
    %v9160 = vsub.s32 1, %v9159
    %v9161 = vrot.slane %v9152, %v9160
    %v9162 = vlaneseq
    %v9163 = vshrl.u32 %v9162, 7
    %v9164 = vsub.s32 2, %v9163
    %v9165 = vrot.slane %v9152, %v9164
    %v9166 = vlaneseq
    %v9167 = vshrl.u32 %v9166, 7
    %v9168 = vsub.s32 3, %v9167
    %v9169 = vrot.slane %v9152, %v9168
    %v9174 = vadd.f32 %v9148, %v9157
    %v9175 = vadd.f32 %v9149, %v9161
    %v9176 = vadd.f32 %v9150, %v9165
    %v9177 = vadd.f32 %v9151, %v9169
    %v9178 = vmax.f32 %v9174, 0.0
    %v9179 = vmax.f32 %v9175, 0.0
    %v9180 = vmax.f32 %v9176, 0.0
    %v9181 = vmax.f32 %v9177, 0.0
    %v9182 = vld [vmem:[%s7] sm:$0xff]
    %v9183 = vld [vmem:[%s7 + $0x8] sm:$0xff]
    %v9184 = vld [vmem:[%s7 + $0x10] sm:$0xff]
    %v9185 = vld [vmem:[%s7 + $0x18] sm:$0xff]
    %v9186 = vld [vmem:[%s7 + $0x20] sm:$0xff]
    %v9187 = vld [vmem:[%s7 + $0x28] sm:$0xff]
    %v9188 = vld [vmem:[%s7 + $0x30] sm:$0xff]
    %v9189 = vld [vmem:[%s7 + $0x38] sm:$0xff]
    %v9190 = vld [vmem:[%s7 + $0x40] sm:$0xff]
    %v9191 = vld [vmem:[%s7 + $0x48] sm:$0xff]
    %v9192 = vld [vmem:[%s7 + $0x50] sm:$0xff]
    %v9193 = vld [vmem:[%s7 + $0x58] sm:$0xff]
    %v9194 = vld [vmem:[%s7 + $0x60] sm:$0xff]
    %v9195 = vld [vmem:[%s7 + $0x68] sm:$0xff]
    %v9196 = vld [vmem:[%s7 + $0x70] sm:$0xff]
    %v9197 = vld [vmem:[%s7 + $0x78] sm:$0xff]
    %v9198 = vld [vmem:[%s7 + $0x80] sm:$0xff]
    %v9199 = vld [vmem:[%s7 + $0x88] sm:$0xff]
    %v9200 = vld [vmem:[%s7 + $0x90] sm:$0xff]
    %v9201 = vld [vmem:[%s7 + $0x98] sm:$0xff]
    %v9202 = vld [vmem:[%s7 + $0xa0] sm:$0xff]
    %v9203 = vld [vmem:[%s7 + $0xa8] sm:$0xff]
    %v9204 = vld [vmem:[%s7 + $0xb0] sm:$0xff]
    %v9205 = vld [vmem:[%s7 + $0xb8] sm:$0xff]
    %v9206 = vld [vmem:[%s7 + $0xc0] sm:$0xff]
    %v9207 = vld [vmem:[%s7 + $0xc8] sm:$0xff]
    %v9208 = vld [vmem:[%s7 + $0xd0] sm:$0xff]
    %v9209 = vld [vmem:[%s7 + $0xd8] sm:$0xff]
    %v9210 = vld [vmem:[%s7 + $0xe0] sm:$0xff]
    %v9211 = vld [vmem:[%s7 + $0xe8] sm:$0xff]
    %v9212 = vld [vmem:[%s7 + $0xf0] sm:$0xff]
    %v9213 = vld [vmem:[%s7 + $0xf8] sm:$0xff]
    %v9214 = vld [vmem:[%s7 + $0x100] sm:$0xff]
    %v9215 = vld [vmem:[%s7 + $0x108] sm:$0xff]
    %v9216 = vld [vmem:[%s7 + $0x110] sm:$0xff]
    %v9217 = vld [vmem:[%s7 + $0x118] sm:$0xff]
    %v9218 = vld [vmem:[%s7 + $0x120] sm:$0xff]
    %v9219 = vld [vmem:[%s7 + $0x128] sm:$0xff]
    %v9220 = vld [vmem:[%s7 + $0x130] sm:$0xff]
    %v9221 = vld [vmem:[%s7 + $0x138] sm:$0xff]
    %v9222 = vld [vmem:[%s7 + $0x140] sm:$0xff]
    %v9223 = vld [vmem:[%s7 + $0x148] sm:$0xff]
    %v9224 = vld [vmem:[%s7 + $0x150] sm:$0xff]
    %v9225 = vld [vmem:[%s7 + $0x158] sm:$0xff]
    %v9226 = vld [vmem:[%s7 + $0x160] sm:$0xff]
    %v9227 = vld [vmem:[%s7 + $0x168] sm:$0xff]
    %v9228 = vld [vmem:[%s7 + $0x170] sm:$0xff]
    %v9229 = vld [vmem:[%s7 + $0x178] sm:$0xff]
    %v9230 = vld [vmem:[%s7 + $0x180] sm:$0xff]
    %v9231 = vld [vmem:[%s7 + $0x188] sm:$0xff]
    %v9232 = vld [vmem:[%s7 + $0x190] sm:$0xff]
    %v9233 = vld [vmem:[%s7 + $0x198] sm:$0xff]
    %v9234 = vld [vmem:[%s7 + $0x1a0] sm:$0xff]
    %v9235 = vld [vmem:[%s7 + $0x1a8] sm:$0xff]
    %v9236 = vld [vmem:[%s7 + $0x1b0] sm:$0xff]
    %v9237 = vld [vmem:[%s7 + $0x1b8] sm:$0xff]
    %v9238 = vld [vmem:[%s7 + $0x1c0] sm:$0xff]
    %v9239 = vld [vmem:[%s7 + $0x1c8] sm:$0xff]
    %v9240 = vld [vmem:[%s7 + $0x1d0] sm:$0xff]
    %v9241 = vld [vmem:[%s7 + $0x1d8] sm:$0xff]
    %v9242 = vld [vmem:[%s7 + $0x1e0] sm:$0xff]
    %v9243 = vld [vmem:[%s7 + $0x1e8] sm:$0xff]
    %v9244 = vld [vmem:[%s7 + $0x1f0] sm:$0xff]
    %v9245 = vld [vmem:[%s7 + $0x1f8] sm:$0xff]
    %v9246 = vld [vmem:[%s8] sm:$0x1]
    %v9248 = vlaneseq
    %v9249 = vshrl.u32 %v9248, 7
    %v9250 = vsub.s32 0, %v9249
    %v9251 = vrot.slane %v9246, %v9250
    %9253 = vmatprep.subr.mxu0 0.0
    %9254 = vmatpush1.msra.mxu0 %v9182
    %9255 = vmatprep.subr.mxu0 0.0
    %9256 = vmatpush1.msra.mxu0 %v9183
    %9257 = vmatprep.subr.mxu0 0.0
    %9258 = vmatpush1.msra.mxu0 %v9184
    %9259 = vmatprep.subr.mxu0 0.0
    %9260 = vmatpush1.msra.mxu0 %v9185
    %9261 = vmatprep.subr.mxu0 0.0
    %9262 = vmatpush1.msra.mxu0 %v9186
    %9263 = vmatprep.subr.mxu0 0.0
    %9264 = vmatpush1.msra.mxu0 %v9187
    %9265 = vmatprep.subr.mxu0 0.0
    %9266 = vmatpush1.msra.mxu0 %v9188
    %9267 = vmatprep.subr.mxu0 0.0
    %9268 = vmatpush1.msra.mxu0 %v9189
    %9269 = vmatprep.subr.mxu0 0.0
    %9270 = vmatpush1.msra.mxu0 %v9190
    %9271 = vmatprep.subr.mxu0 0.0
    %9272 = vmatpush1.msra.mxu0 %v9191
    %9273 = vmatprep.subr.mxu0 0.0
    %9274 = vmatpush1.msra.mxu0 %v9192
    %9275 = vmatprep.subr.mxu0 0.0
    %9276 = vmatpush1.msra.mxu0 %v9193
    %9277 = vmatprep.subr.mxu0 0.0
    %9278 = vmatpush1.msra.mxu0 %v9194
    %9279 = vmatprep.subr.mxu0 0.0
    %9280 = vmatpush1.msra.mxu0 %v9195
    %9281 = vmatprep.subr.mxu0 0.0
    %9282 = vmatpush1.msra.mxu0 %v9196
    %9283 = vmatprep.subr.mxu0 0.0
    %9284 = vmatpush1.msra.mxu0 %v9197
    %9285 = vmatprep.subr.mxu0 0.0
    %9286 = vmatpush1.msra.mxu0 %v9198
    %9287 = vmatprep.subr.mxu0 0.0
    %9288 = vmatpush1.msra.mxu0 %v9199
    %9289 = vmatprep.subr.mxu0 0.0
    %9290 = vmatpush1.msra.mxu0 %v9200
    %9291 = vmatprep.subr.mxu0 0.0
    %9292 = vmatpush1.msra.mxu0 %v9201
    %9293 = vmatprep.subr.mxu0 0.0
    %9294 = vmatpush1.msra.mxu0 %v9202
    %9295 = vmatprep.subr.mxu0 0.0
    %9296 = vmatpush1.msra.mxu0 %v9203
    %9297 = vmatprep.subr.mxu0 0.0
    %9298 = vmatpush1.msra.mxu0 %v9204
    %9299 = vmatprep.subr.mxu0 0.0
    %9300 = vmatpush1.msra.mxu0 %v9205
    %9301 = vmatprep.subr.mxu0 0.0
    %9302 = vmatpush1.msra.mxu0 %v9206
    %9303 = vmatprep.subr.mxu0 0.0
    %9304 = vmatpush1.msra.mxu0 %v9207
    %9305 = vmatprep.subr.mxu0 0.0
    %9306 = vmatpush1.msra.mxu0 %v9208
    %9307 = vmatprep.subr.mxu0 0.0
    %9308 = vmatpush1.msra.mxu0 %v9209
    %9309 = vmatprep.subr.mxu0 0.0
    %9310 = vmatpush1.msra.mxu0 %v9210
    %9311 = vmatprep.subr.mxu0 0.0
    %9312 = vmatpush1.msra.mxu0 %v9211
    %9313 = vmatprep.subr.mxu0 0.0
    %9314 = vmatpush1.msra.mxu0 %v9212
    %9315 = vmatprep.subr.mxu0 0.0
    %9316 = vmatpush1.msra.mxu0 %v9213
    %9317 = vmatprep.mubr.f32.mxu0 %v9179
    %9318 = vmatmul.mubr.f32.gmra.mrb[0].mxu0 %v9178
    %v9319 = vpop.f32.mrb[0].mxu0
    %v9320 = vadd.f32 %v9251, %v9319
    %v9321 = vpop.f32.mrb[0].mxu0
    %9322 = vdwg.mxu0
    %9323 = vmatprep.subr.mxu0 0.0
    %9324 = vmatpush1.msra.mxu0 %v9214
    %9325 = vmatprep.subr.mxu0 0.0
    %9326 = vmatpush1.msra.mxu0 %v9215
    %9327 = vmatprep.subr.mxu0 0.0
    %9328 = vmatpush1.msra.mxu0 %v9216
    %9329 = vmatprep.subr.mxu0 0.0
    %9330 = vmatpush1.msra.mxu0 %v9217
    %9331 = vmatprep.subr.mxu0 0.0
    %9332 = vmatpush1.msra.mxu0 %v9218
    %9333 = vmatprep.subr.mxu0 0.0
    %9334 = vmatpush1.msra.mxu0 %v9219
    %9335 = vmatprep.subr.mxu0 0.0
    %9336 = vmatpush1.msra.mxu0 %v9220
    %9337 = vmatprep.subr.mxu0 0.0
    %9338 = vmatpush1.msra.mxu0 %v9221
    %9339 = vmatprep.subr.mxu0 0.0
    %9340 = vmatpush1.msra.mxu0 %v9222
    %9341 = vmatprep.subr.mxu0 0.0
    %9342 = vmatpush1.msra.mxu0 %v9223
    %9343 = vmatprep.subr.mxu0 0.0
    %9344 = vmatpush1.msra.mxu0 %v9224
    %9345 = vmatprep.subr.mxu0 0.0
    %9346 = vmatpush1.msra.mxu0 %v9225
    %9347 = vmatprep.subr.mxu0 0.0
    %9348 = vmatpush1.msra.mxu0 %v9226
    %9349 = vmatprep.subr.mxu0 0.0
    %9350 = vmatpush1.msra.mxu0 %v9227
    %9351 = vmatprep.subr.mxu0 0.0
    %9352 = vmatpush1.msra.mxu0 %v9228
    %9353 = vmatprep.subr.mxu0 0.0
    %9354 = vmatpush1.msra.mxu0 %v9229
    %9355 = vmatprep.subr.mxu0 0.0
    %9356 = vmatpush1.msra.mxu0 %v9230
    %9357 = vmatprep.subr.mxu0 0.0
    %9358 = vmatpush1.msra.mxu0 %v9231
    %9359 = vmatprep.subr.mxu0 0.0
    %9360 = vmatpush1.msra.mxu0 %v9232
    %9361 = vmatprep.subr.mxu0 0.0
    %9362 = vmatpush1.msra.mxu0 %v9233
    %9363 = vmatprep.subr.mxu0 0.0
    %9364 = vmatpush1.msra.mxu0 %v9234
    %9365 = vmatprep.subr.mxu0 0.0
    %9366 = vmatpush1.msra.mxu0 %v9235
    %9367 = vmatprep.subr.mxu0 0.0
    %9368 = vmatpush1.msra.mxu0 %v9236
    %9369 = vmatprep.subr.mxu0 0.0
    %9370 = vmatpush1.msra.mxu0 %v9237
    %9371 = vmatprep.subr.mxu0 0.0
    %9372 = vmatpush1.msra.mxu0 %v9238
    %9373 = vmatprep.subr.mxu0 0.0
    %9374 = vmatpush1.msra.mxu0 %v9239
    %9375 = vmatprep.subr.mxu0 0.0
    %9376 = vmatpush1.msra.mxu0 %v9240
    %9377 = vmatprep.subr.mxu0 0.0
    %9378 = vmatpush1.msra.mxu0 %v9241
    %9379 = vmatprep.subr.mxu0 0.0
    %9380 = vmatpush1.msra.mxu0 %v9242
    %9381 = vmatprep.subr.mxu0 0.0
    %9382 = vmatpush1.msra.mxu0 %v9243
    %9383 = vmatprep.subr.mxu0 0.0
    %9384 = vmatpush1.msra.mxu0 %v9244
    %9385 = vmatprep.subr.mxu0 0.0
    %9386 = vmatpush1.msra.mxu0 %v9245
    %9387 = vmatprep.mubr.f32.mxu0 %v9181
    %9388 = vmatmul.mubr.f32.gmra.mrb[0].mxu0 %v9180
    %v9389 = vpop.f32.mrb[0].mxu0
    %v9390 = vadd.f32 %v9320, %v9389
    %v9391 = vpop.f32.mrb[0].mxu0
    %9392 = vdwg.mxu0
    %9393 = vst [vmem:[%s9] sm:$0xff] %v9390
    // Predicated region
    $region42: #{lenet_forward.1} parent=1 // pred_check
      _
    $region43: #{lenet_forward.1} parent=1 // pred_check_branch
      %9395 = sbr.rel (0) target = $region45
    $region44: #{lenet_forward.1} parent=1 // pred_region
      _
    $region45: #{lenet_forward.1} parent=1 // pred_fallthru
      _
    // Predicated region
    $region46: #{lenet_forward.1} parent=1 // pred_check
      _
    $region47: #{lenet_forward.1} parent=1 // pred_check_branch
      %9397 = sbr.rel (0) target = $region49
    $region48: #{lenet_forward.1} parent=1 // pred_region
      _
    $region49: #{lenet_forward.1} parent=1 // pred_fallthru
      _
    %9398 = vsyncpa [#allocation3], 1

</llo_original>
